<compile_context>
chip_gen: v5e
topology: v5e:2x2
jax: 0.10.0
libtpu: 0.0.40
codegen_flags: <defaults>
</compile_context>

<pallas_src>
import functools

import numpy as np
import jax
import jax.numpy as jnp
from jax.experimental import pallas as pl
from jax.experimental.pallas import tpu as pltpu

NEG_INF = -1e9  # additive mask for cross-window pairs (exp underflows to 0)


# ----------------------------- helpers (in-kernel) ---------------------------

def _layernorm(x, gamma, beta, eps=1e-5):
    mu = jnp.mean(x, axis=-1, keepdims=True)
    var = jnp.mean(jnp.square(x - mu), axis=-1, keepdims=True)
    return (x - mu) * jax.lax.rsqrt(var + eps) * gamma + beta


def _gelu_exact(x):
    # erf-based ("exact") GELU as in nn.GELU(); erf via the A&S 7.1.26 rational
    # approximation.  The division runs on the EUP via pl.reciprocal.
    z = x * 0.7071067811865476
    a = jnp.abs(z)
    t = pl.reciprocal(1.0 + 0.3275911 * a, approx=True)
    poly = t * (0.254829592 + t * (-0.284496736 + t * (1.421413741
              + t * (-1.453152027 + t * 1.061405429))))
    e = 1.0 - poly * jnp.exp(-a * a)
    erf = jnp.where(z >= 0.0, e, -e)
    return 0.5 * x * (1.0 + erf)


# ----------------------------- fused Pallas kernel ---------------------------

def swin_block_kernel(x_ref, relb_ref, mask_ref,
                      g1_ref, b1_ref, wqkv_ref, bqkv_ref, wproj_ref, bproj_ref,
                      g2_ref, b2_ref, w1_ref, b1f_ref, w2_ref, b2f_ref,
                      o_ref, *, num_heads, head_dim, num_groups):
    """One (already shifted, if SW-MSA) image per grid step.

    x_ref    : (1, L, C) f32   tokens, row-major, shifted order
    relb_ref : (nH, T, T) f32  relative-position bias in window-row layout
    mask_ref : (Gb, T, T) f32  shift mask (+ -1e9 for cross-window pairs)
    wqkv_ref : (C, 3C) bf16 (Q columns pre-scaled) ; wproj_ref : (nH, hd, C) bf16
    w1_ref   : (C, hidden) bf16 ; w2_ref : (hidden, C) bf16
    """
    nH, hd, G = num_heads, head_dim, num_groups
    C = nH * hd
    L = x_ref.shape[1]
    T = L // G                                     # tokens per window-row group

    x = x_ref[0]                                   # (L, C) f32
    xn = _layernorm(x, g1_ref[...], b1_ref[...])   # fused norm1

    # fused QKV projection: one bf16 matmul with M = L; scale already folded
    # into the Q columns of the weight/bias -> single bf16 cast afterwards.
    qkv = jnp.dot(xn.astype(jnp.bfloat16), wqkv_ref[...],
                  preferred_element_type=jnp.float32) + bqkv_ref[...]  # (L,3C)
    qkv = qkv.astype(jnp.bfloat16).reshape(G, T, 3 * C)   # row-major regroup

    acc = None
    for h in range(nH):                            # static unroll over heads
        qh = qkv[:, :, h * hd:(h + 1) * hd]
        kh = qkv[:, :, C + h * hd:C + (h + 1) * hd]
        vh = qkv[:, :, 2 * C + h * hd:2 * C + (h + 1) * hd]

        # batched (over window rows) q @ k^T : (G,T,hd) x (G,T,hd) -> (G,T,T)
        s = jax.lax.dot_general(qh, kh, (((2,), (2,)), ((0,), (0,))),
                                preferred_element_type=jnp.float32)
        # factorized additive bias: rel-pos (per head) + window/shift mask
        s = s + relb_ref[h] + mask_ref[...]

        m = jnp.max(s, axis=-1, keepdims=True)     # softmax kept in f32
        e = jnp.exp(s - m)
        inv = pl.reciprocal(jnp.sum(e, axis=-1, keepdims=True), approx=True)
        p = (e * inv).astype(jnp.bfloat16)         # masked cols -> exactly 0

        # batched attn @ v : (G,T,T) x (G,T,hd) -> (G,T,hd)
        oh = jax.lax.dot_general(p, vh, (((2,), (1,)), ((0,), (0,))),
                                 preferred_element_type=jnp.float32)

        # per-head slice of the output projection, accumulated over heads
        # (== the fused (L,C)@(C,C) projection, no unaligned lane concat).
        ph = jnp.dot(oh.reshape(L, hd).astype(jnp.bfloat16), wproj_ref[h],
                     preferred_element_type=jnp.float32)               # (L,C)
        acc = ph if acc is None else acc + ph

    # residual #1 (shortcut is the shifted-order input itself)
    x1 = x + acc + bproj_ref[...]                                      # (L, C)

    # fused LayerNorm2 -> fc1 -> GELU -> fc2 -> residual #2
    xn2 = _layernorm(x1, g2_ref[...], b2_ref[...])
    hmid = jnp.dot(xn2.astype(jnp.bfloat16), w1_ref[...],
                   preferred_element_type=jnp.float32) + b1f_ref[...]
    hmid = _gelu_exact(hmid)
    y = jnp.dot(hmid.astype(jnp.bfloat16), w2_ref[...],
                preferred_element_type=jnp.float32) + b2f_ref[...]
    o_ref[0] = x1 + y


# ----------------------------- host-side glue ---------------------------------

def make_relative_position_index(ws):
    coords = np.stack(np.meshgrid(np.arange(ws), np.arange(ws), indexing="ij"))
    coords_flat = coords.reshape(2, -1)                        # (2, N)
    rel = coords_flat[:, :, None] - coords_flat[:, None, :]    # (2, N, N)
    rel = rel.transpose(1, 2, 0).astype(np.int64)
    rel[:, :, 0] += ws - 1
    rel[:, :, 1] += ws - 1
    rel[:, :, 0] *= 2 * ws - 1
    return rel.sum(-1).astype(np.int32)                        # (N, N)


def calculate_mask(H, W, ws, shift):
    img_mask = np.zeros((1, H, W, 1), np.float32)
    slices = (slice(0, -ws), slice(-ws, -shift), slice(-shift, None))
    cnt = 0
    for hs in slices:
        for wss in slices:
            img_mask[:, hs, wss, :] = cnt
            cnt += 1
    mw = (img_mask.reshape(1, H // ws, ws, W // ws, ws, 1)
          .transpose(0, 1, 3, 2, 4, 5).reshape(-1, ws * ws))
    am = mw[:, None, :] - mw[:, :, None]
    am = np.where(am != 0, -100.0, 0.0).astype(np.float32)
    return jnp.asarray(am)                                     # (nW, N, N)


@functools.lru_cache(maxsize=None)
def _single_buffer_ok():
    """Probe whether pipeline_mode=pl.Buffered(1) is supported on this JAX.

    Single-buffering the constant-index_map operands buys nothing at toy shapes
    but keeps VMEM residency flat when the config is scaled up (v7x: 64 MiB).
    Silent fallback keeps the script runnable on any JAX/Pallas version.
    """
    if not hasattr(pl, "Buffered"):
        return False
    try:
        def k(x_ref, o_ref):
            o_ref[...] = x_ref[...] + 1.0
        f = pl.pallas_call(
            k,
            out_shape=jax.ShapeDtypeStruct((8, 128), jnp.float32),
            grid=(2,),
            in_specs=[pl.BlockSpec((8, 128), lambda i: (0, 0),
                                   pipeline_mode=pl.Buffered(1))],
            out_specs=pl.BlockSpec((8, 128), lambda i: (0, 0)),
        )
        jax.block_until_ready(f(jnp.zeros((8, 128), jnp.float32)))
        return True
    except Exception:
        return False


def _const_spec(shape):
    """BlockSpec for an operand that is identical at every grid step."""
    ndim = len(shape)
    idx = lambda b: (0,) * ndim
    if _single_buffer_ok():
        return pl.BlockSpec(shape, idx, pipeline_mode=pl.Buffered(1))
    return pl.BlockSpec(shape, idx)


def swin_forward_pallas(x, x_size, p, *, window_size, shift_size, num_heads,
                        rel_index, attn_mask):
    H, W = x_size
    B, L, C = x.shape
    ws = window_size
    nH = num_heads
    hd = C // nH
    N = ws * ws
    G = H // ws                    # window rows per image
    WJ = W // ws                   # windows per row
    T = ws * W                     # tokens per window-row group
    hidden = p["w1"].shape[1]
    scale = float(hd) ** -0.5

    # ---- cyclic shift (cheap token permutation, 64 KiB here) -----------------
    # Everything after the attention (residuals, LN2, MLP) is per-token, hence
    # permutation-equivariant: the whole fused kernel runs in shifted order and
    # the single inverse roll happens once at the very end.
    if shift_size > 0:
        xs = jnp.roll(x.reshape(B, H, W, C), (-shift_size, -shift_size),
                      axis=(1, 2)).reshape(B, L, C)
    else:
        xs = x

    # ---- factorized additive bias (VMEM-resident, constant index_map) --------
    # token t inside a row group: t = r*W + col ; window column wj = col//ws ;
    # index inside the window n = r*ws + col%ws.  Cross-window pairs get -1e9.
    t_idx = np.arange(T)
    col = t_idx % W
    n_of_t = ((t_idx // W) * ws + (col % ws)).astype(np.int32)      # (T,)
    wj_of_t = (col // ws).astype(np.int32)                          # (T,)
    same_window = wj_of_t[:, None] == wj_of_t[None, :]              # (T, T)

    rel_bias = (p["rpb"][rel_index.reshape(-1)]
                .reshape(N, N, nH).transpose(2, 0, 1))              # (nH,N,N)
    rel_part = rel_bias[:, n_of_t[:, None], n_of_t[None, :]]        # (nH,T,T)
    rel_part = rel_part.astype(jnp.float32)

    if shift_size > 0 and attn_mask is not None:
        widx = np.arange(G)[:, None] * WJ + wj_of_t[None, :]        # (G,T)
        shift_vals = attn_mask[widx[:, :, None],
                               n_of_t[None, :, None],
                               n_of_t[None, None, :]]               # (G,T,T)
        mask_part = jnp.where(same_window[None], shift_vals, NEG_INF)
    else:
        mask_part = jnp.where(same_window[None], 0.0, NEG_INF)      # (1,T,T)
    mask_part = mask_part.astype(jnp.float32)
    Gb = mask_part.shape[0]

    # ---- parameters: matmul weights pre-cast to bf16; scale folded into Q ----
    qscale = jnp.concatenate([jnp.full((C,), scale, jnp.float32),
                              jnp.ones((2 * C,), jnp.float32)])
    wqkv_bf = (p["wqkv"] * qscale[None, :]).astype(jnp.bfloat16)    # (C, 3C)
    bqkv = (p["bqkv"] * qscale).reshape(1, 3 * C).astype(jnp.float32)
    wproj_bf = p["wproj"].reshape(nH, hd, C).astype(jnp.bfloat16)   # (nH,hd,C)
    bproj = p["bproj"].reshape(1, C).astype(jnp.float32)
    g1 = p["norm1_w"].reshape(1, C).astype(jnp.float32)
    b1 = p["norm1_b"].reshape(1, C).astype(jnp.float32)
    g2 = p["norm2_w"].reshape(1, C).astype(jnp.float32)
    b2 = p["norm2_b"].reshape(1, C).astype(jnp.float32)
    w1_bf = p["w1"].astype(jnp.bfloat16)                            # (C,hidden)
    b1f = p["b1"].reshape(1, hidden).astype(jnp.float32)
    w2_bf = p["w2"].astype(jnp.bfloat16)                            # (hidden,C)
    b2f = p["b2"].reshape(1, C).astype(jnp.float32)

    kern = functools.partial(swin_block_kernel, num_heads=nH, head_dim=hd,
                             num_groups=G)
    out = pl.pallas_call(
        kern,
        out_shape=jax.ShapeDtypeStruct((B, L, C), jnp.float32),
        grid=(B,),
        in_specs=[
            pl.BlockSpec((1, L, C), lambda b: (b, 0, 0)),            # tokens
            _const_spec((nH, T, T)),                                 # rel bias
            _const_spec((Gb, T, T)),                                 # shift mask
            _const_spec((1, C)),                                     # norm1 gamma
            _const_spec((1, C)),                                     # norm1 beta
            _const_spec((C, 3 * C)),                                 # Wqkv bf16
            _const_spec((1, 3 * C)),                                 # bqkv
            _const_spec((nH, hd, C)),                                # Wproj bf16
            _const_spec((1, C)),                                     # bproj
            _const_spec((1, C)),                                     # norm2 gamma
            _const_spec((1, C)),                                     # norm2 beta
            _const_spec((C, hidden)),                                # W1 bf16
            _const_spec((1, hidden)),                                # b1
            _const_spec((hidden, C)),                                # W2 bf16
            _const_spec((1, C)),                                     # b2
        ],
        out_specs=pl.BlockSpec((1, L, C), lambda b: (b, 0, 0)),
        compiler_params=pltpu.CompilerParams(
            dimension_semantics=("parallel",)),
    )(xs, rel_part, mask_part, g1, b1, wqkv_bf, bqkv, wproj_bf, bproj,
      g2, b2, w1_bf, b1f, w2_bf, b2f)

    # ---- undo the cyclic shift (pure token permutation) ----------------------
    if shift_size > 0:
        out = jnp.roll(out.reshape(B, H, W, C), (shift_size, shift_size),
                       axis=(1, 2)).reshape(B, L, C)
    return out


# ----------------------------- pure-JAX reference -----------------------------

def reference_forward(x, x_size, p, ws, shift, nH, rel_index, attn_mask):
    H, W = x_size
    B, L, C = x.shape
    hd = C // nH
    N = ws * ws

    def ln(v, w, b):
        mu = jnp.mean(v, -1, keepdims=True)
        var = jnp.mean(jnp.square(v - mu), -1, keepdims=True)
        return (v - mu) / jnp.sqrt(var + 1e-5) * w + b

    shortcut = x
    xn = ln(x, p["norm1_w"], p["norm1_b"])
    xi = xn.reshape(B, H, W, C)
    if shift > 0:
        xi = jnp.roll(xi, (-shift, -shift), (1, 2))
    xw = (xi.reshape(B, H // ws, ws, W // ws, ws, C)
            .transpose(0, 1, 3, 2, 4, 5).reshape(-1, N, C))
    B_ = xw.shape[0]
    qkv = ((xw @ p["wqkv"] + p["bqkv"])
           .reshape(B_, N, 3, nH, hd).transpose(2, 0, 3, 1, 4))
    q, k, v = qkv[0] * hd ** -0.5, qkv[1], qkv[2]
    attn = q @ jnp.swapaxes(k, -2, -1)
    rel_bias = (p["rpb"][rel_index.reshape(-1)]
                .reshape(N, N, nH).transpose(2, 0, 1))
    attn = attn + rel_bias[None]
    if attn_mask is not None:
        nW = attn_mask.shape[0]
        attn = (attn.reshape(B_ // nW, nW, nH, N, N)
                + attn_mask[None, :, None]).reshape(B_, nH, N, N)
    attn = jax.nn.softmax(attn, -1)
    o = (attn @ v).transpose(0, 2, 1, 3).reshape(B_, N, C)
    o = o @ p["wproj"] + p["bproj"]
    o = (o.reshape(B, H // ws, W // ws, ws, ws, C)
          .transpose(0, 1, 3, 2, 4, 5).reshape(B, H, W, C))
    if shift > 0:
        o = jnp.roll(o, (shift, shift), (1, 2))
    x1 = shortcut + o.reshape(B, L, C)
    xn2 = ln(x1, p["norm2_w"], p["norm2_b"])
    h = xn2 @ p["w1"] + p["b1"]
    h = 0.5 * h * (1.0 + jax.lax.erf(h / jnp.sqrt(2.0)))
    return x1 + h @ p["w2"] + p["b2"]


# ----------------------------- main --------------------------------------------

if __name__ == "__main__":
    # Small, consistent config: dim=32, heads=4, window=4, 16x16 image, B=2.
    B, dim, nH, ws = 2, 32, 4, 4
    H = W = 16
    L = H * W
    hidden = int(dim * 4.0)                        # mlp_ratio = 4.0

    _single_buffer_ok()                            # warm the capability probe

    key = jax.random.PRNGKey(0)
    ks = jax.random.split(key, 16)

    def lin(k_, fan_in, shape):
        return jax.random.normal(k_, shape, jnp.float32) / np.sqrt(fan_in)

    params = {
        "norm1_w": 1.0 + 0.1 * jax.random.normal(ks[0], (dim,), jnp.float32),
        "norm1_b": 0.05 * jax.random.normal(ks[1], (dim,), jnp.float32),
        "wqkv":    lin(ks[2], dim, (dim, 3 * dim)),
        "bqkv":    0.02 * jax.random.normal(ks[3], (3 * dim,), jnp.float32),
        # std=0.5 (vs the module's 0.02 init) so bias-indexing bugs are visible
        # well above the bf16 matmul noise floor.
        "rpb":     0.5 * jax.random.normal(ks[4], ((2 * ws - 1) ** 2, nH),
                                           jnp.float32),
        "wproj":   lin(ks[5], dim, (dim, dim)),
        "bproj":   0.02 * jax.random.normal(ks[6], (dim,), jnp.float32),
        "norm2_w": 1.0 + 0.1 * jax.random.normal(ks[7], (dim,), jnp.float32),
        "norm2_b": 0.05 * jax.random.normal(ks[8], (dim,), jnp.float32),
        "w1":      lin(ks[9], dim, (dim, hidden)),
        "b1":      0.02 * jax.random.normal(ks[10], (hidden,), jnp.float32),
        "w2":      lin(ks[11], hidden, (hidden, dim)),
        "b2":      0.02 * jax.random.normal(ks[12], (dim,), jnp.float32),
    }
    x = jax.random.normal(ks[13], (B, L, dim), jnp.float32)

    rel_index = make_relative_position_index(ws)

    # Check both W-MSA (shift=0, the module default) and SW-MSA (shift=2).
    for shift in (0, 2):
        attn_mask = calculate_mask(H, W, ws, shift) if shift > 0 else None
        fwd = jax.jit(functools.partial(
            swin_forward_pallas, x_size=(H, W), p=params, window_size=ws,
            shift_size=shift, num_heads=nH, rel_index=rel_index,
            attn_mask=attn_mask))
        out = fwd(x)
        jax.block_until_ready(out)

        with jax.default_matmul_precision("highest"):
            ref = reference_forward(x, (H, W), params, ws, shift, nH,
                                    rel_index, attn_mask)
        err = float(jnp.max(jnp.abs(out - ref)))
        assert out.shape == (B, L, dim), out.shape
        # bf16 MXU operands + approx reciprocal vs an f32-highest reference.
        assert err < 5e-2, f"shift={shift}: max abs error vs reference: {err}"

    print("KERNEL_OK")
</pallas_src>

<mosaic_0001>
module attributes {stable_mosaic.version = 11 : i64} {
  func.func @k(%arg0: i32, %arg1: memref<8x128xf32, #tpu.memory_space<vmem>>, %arg2: memref<8x128xf32, #tpu.memory_space<vmem>>) attributes {dimension_semantics = [#tpu.dimension_semantics<arbitrary>], iteration_bounds = array<i64: 2>, scalar_prefetch = 0 : i64, scratch_operands = 0 : i64, tpu.core_type = #tpu.core_type<tc>, window_params = [{pipeline_mode = #tpu.pipeline_mode<synchronous>, transform_indices = @transform_0, window_bounds = array<i64: 8, 128>}, {pipeline_mode = #tpu.pipeline_mode<synchronous>, transform_indices = @transform_1, window_bounds = array<i64: 8, 128>}]} {
    %c0 = arith.constant 0 : index
    %c0_0 = arith.constant 0 : index
    %0 = vector.load %arg1[%c0, %c0_0] : memref<8x128xf32, #tpu.memory_space<vmem>>, vector<8x128xf32>
    %cst = arith.constant 1.000000e+00 : f32
    %1 = vector.broadcast %cst : f32 to vector<8x128xf32>
    %2 = arith.addf %0, %1 : vector<8x128xf32>
    %c0_1 = arith.constant 0 : index
    %c0_2 = arith.constant 0 : index
    %3 = vector.load %arg2[%c0_1, %c0_2] : memref<8x128xf32, #tpu.memory_space<vmem>>, vector<8x128xf32>
    tpu.vector_store %arg2[%c0_1, %c0_2], %2 {strides = array<i32>} : memref<8x128xf32, #tpu.memory_space<vmem>>, vector<8x128xf32>,
    return
  }
  func.func @transform_0(%arg0: i32) -> (i32, i32) {
    %c0_i32 = arith.constant 0 : i32
    %c0_i32_0 = arith.constant 0 : i32
    %c0_i32_1 = arith.constant 0 : i32
    return %c0_i32, %c0_i32_0 : i32, i32
  }
  func.func @transform_1(%arg0: i32) -> (i32, i32) {
    %c0_i32 = arith.constant 0 : i32
    %c0_i32_0 = arith.constant 0 : i32
    %c0_i32_1 = arith.constant 0 : i32
    return %c0_i32, %c0_i32_0 : i32, i32
  }
}

module attributes {stable_mosaic.version = 11 : i64} {
  func.func @swin_block_kernel(%arg0: i32, %arg1: memref<1x256x32xf32, #tpu.memory_space<vmem>>, %arg2: memref<4x64x64xf32, #tpu.memory_space<vmem>>, %arg3: memref<1x64x64xf32, #tpu.memory_space<vmem>>, %arg4: memref<1x32xf32, #tpu.memory_space<vmem>>, %arg5: memref<1x32xf32, #tpu.memory_space<vmem>>, %arg6: memref<32x96xbf16, #tpu.memory_space<vmem>>, %arg7: memref<1x96xf32, #tpu.memory_space<vmem>>, %arg8: memref<4x8x32xbf16, #tpu.memory_space<vmem>>, %arg9: memref<1x32xf32, #tpu.memory_space<vmem>>, %arg10: memref<1x32xf32, #tpu.memory_space<vmem>>, %arg11: memref<1x32xf32, #tpu.memory_space<vmem>>, %arg12: memref<32x128xbf16, #tpu.memory_space<vmem>>, %arg13: memref<1x128xf32, #tpu.memory_space<vmem>>, %arg14: memref<128x32xbf16, #tpu.memory_space<vmem>>, %arg15: memref<1x32xf32, #tpu.memory_space<vmem>>, %arg16: memref<1x256x32xf32, #tpu.memory_space<vmem>>) attributes {dimension_semantics = [#tpu.dimension_semantics<parallel>], iteration_bounds = array<i64: 2>, scalar_prefetch = 0 : i64, scratch_operands = 0 : i64, tpu.core_type = #tpu.core_type<tc>, window_params = [{transform_indices = @transform_0, window_bounds = array<i64: 1, 256, 32>}, {pipeline_mode = #tpu.pipeline_mode<synchronous>, transform_indices = @transform_1, window_bounds = array<i64: 4, 64, 64>}, {pipeline_mode = #tpu.pipeline_mode<synchronous>, transform_indices = @transform_2, window_bounds = array<i64: 1, 64, 64>}, {pipeline_mode = #tpu.pipeline_mode<synchronous>, transform_indices = @transform_3, window_bounds = array<i64: 1, 32>}, {pipeline_mode = #tpu.pipeline_mode<synchronous>, transform_indices = @transform_4, window_bounds = array<i64: 1, 32>}, {pipeline_mode = #tpu.pipeline_mode<synchronous>, transform_indices = @transform_5, window_bounds = array<i64: 32, 96>}, {pipeline_mode = #tpu.pipeline_mode<synchronous>, transform_indices = @transform_6, window_bounds = array<i64: 1, 96>}, {pipeline_mode = #tpu.pipeline_mode<synchronous>, transform_indices = @transform_7, window_bounds = array<i64: 4, 8, 32>}, {pipeline_mode = #tpu.pipeline_mode<synchronous>, transform_indices = @transform_8, window_bounds = array<i64: 1, 32>}, {pipeline_mode = #tpu.pipeline_mode<synchronous>, transform_indices = @transform_9, window_bounds = array<i64: 1, 32>}, {pipeline_mode = #tpu.pipeline_mode<synchronous>, transform_indices = @transform_10, window_bounds = array<i64: 1, 32>}, {pipeline_mode = #tpu.pipeline_mode<synchronous>, transform_indices = @transform_11, window_bounds = array<i64: 32, 128>}, {pipeline_mode = #tpu.pipeline_mode<synchronous>, transform_indices = @transform_12, window_bounds = array<i64: 1, 128>}, {pipeline_mode = #tpu.pipeline_mode<synchronous>, transform_indices = @transform_13, window_bounds = array<i64: 128, 32>}, {pipeline_mode = #tpu.pipeline_mode<synchronous>, transform_indices = @transform_14, window_bounds = array<i64: 1, 32>}, {transform_indices = @transform_15, window_bounds = array<i64: 1, 256, 32>}]} {
    %c0 = arith.constant 0 : index
    %c0_0 = arith.constant 0 : index
    %c0_1 = arith.constant 0 : index
    %0 = vector.load %arg1[%c0, %c0_0, %c0_1] : memref<1x256x32xf32, #tpu.memory_space<vmem>>, vector<1x256x32xf32>
    %1 = vector.shape_cast %0 : vector<1x256x32xf32> to vector<256x32xf32>
    %c0_2 = arith.constant 0 : index
    %c0_3 = arith.constant 0 : index
    %2 = vector.load %arg4[%c0_2, %c0_3] : memref<1x32xf32, #tpu.memory_space<vmem>>, vector<1x32xf32>
    %c0_4 = arith.constant 0 : index
    %c0_5 = arith.constant 0 : index
    %3 = vector.load %arg5[%c0_4, %c0_5] : memref<1x32xf32, #tpu.memory_space<vmem>>, vector<1x32xf32>
    %cst = arith.constant dense<0.000000e+00> : vector<256xf32>
    %4 = vector.multi_reduction <add>, %1, %cst [1] : vector<256x32xf32> to vector<256xf32>
    %5 = vector.shape_cast %4 : vector<256xf32> to vector<256x1xf32>
    %cst_6 = arith.constant 3.200000e+01 : f32
    %6 = vector.broadcast %cst_6 : f32 to vector<256x1xf32>
    %7 = arith.divf %5, %6 : vector<256x1xf32>
    %8 = vector.broadcast %7 : vector<256x1xf32> to vector<256x32xf32>
    %9 = arith.subf %1, %8 : vector<256x32xf32>
    %10 = arith.mulf %9, %9 : vector<256x32xf32>
    %cst_7 = arith.constant dense<0.000000e+00> : vector<256xf32>
    %11 = vector.multi_reduction <add>, %10, %cst_7 [1] : vector<256x32xf32> to vector<256xf32>
    %12 = vector.shape_cast %11 : vector<256xf32> to vector<256x1xf32>
    %cst_8 = arith.constant 3.200000e+01 : f32
    %13 = vector.broadcast %cst_8 : f32 to vector<256x1xf32>
    %14 = arith.divf %12, %13 : vector<256x1xf32>
    %15 = vector.broadcast %7 : vector<256x1xf32> to vector<256x32xf32>
    %16 = arith.subf %1, %15 : vector<256x32xf32>
    %cst_9 = arith.constant 9.99999974E-6 : f32
    %17 = vector.broadcast %cst_9 : f32 to vector<256x1xf32>
    %18 = arith.addf %14, %17 : vector<256x1xf32>
    %19 = math.rsqrt %18 : vector<256x1xf32>
    %20 = vector.broadcast %19 : vector<256x1xf32> to vector<256x32xf32>
    %21 = arith.mulf %16, %20 : vector<256x32xf32>
    %22 = vector.broadcast %2 : vector<1x32xf32> to vector<256x32xf32>
    %23 = arith.mulf %21, %22 : vector<256x32xf32>
    %24 = vector.broadcast %3 : vector<1x32xf32> to vector<256x32xf32>
    %25 = arith.addf %23, %24 : vector<256x32xf32>
    %26 = arith.truncf %25 : vector<256x32xf32> to vector<256x32xbf16>
    %c0_10 = arith.constant 0 : index
    %c0_11 = arith.constant 0 : index
    %27 = vector.load %arg6[%c0_10, %c0_11] : memref<32x96xbf16, #tpu.memory_space<vmem>>, vector<32x96xbf16>
    %cst_12 = arith.constant dense<0.000000e+00> : vector<256x96xf32>
    %28 = tpu.matmul %26, %27, %cst_12 {dimension_numbers = #tpu.dot_dimension_numbers<[1], [0], [0], [1], [0, 0, 1, 1], [], []>} : vector<256x32xbf16>, vector<32x96xbf16>, vector<256x96xf32> -> vector<256x96xf32>
    %c0_13 = arith.constant 0 : index
    %c0_14 = arith.constant 0 : index
    %29 = vector.load %arg7[%c0_13, %c0_14] : memref<1x96xf32, #tpu.memory_space<vmem>>, vector<1x96xf32>
    %30 = vector.broadcast %29 : vector<1x96xf32> to vector<256x96xf32>
    %31 = arith.addf %28, %30 : vector<256x96xf32>
    %32 = arith.truncf %31 : vector<256x96xf32> to vector<256x96xbf16>
    %33 = vector.shape_cast %32 : vector<256x96xbf16> to vector<4x64x96xbf16>
    %34 = vector.extract_strided_slice %33 {offsets = [0, 0, 0], sizes = [4, 64, 8], strides = [1, 1, 1]} : vector<4x64x96xbf16> to vector<4x64x8xbf16>
    %35 = vector.extract_strided_slice %33 {offsets = [0, 0, 32], sizes = [4, 64, 8], strides = [1, 1, 1]} : vector<4x64x96xbf16> to vector<4x64x8xbf16>
    %36 = vector.extract_strided_slice %33 {offsets = [0, 0, 64], sizes = [4, 64, 8], strides = [1, 1, 1]} : vector<4x64x96xbf16> to vector<4x64x8xbf16>
    %cst_15 = arith.constant dense<0.000000e+00> : vector<4x64x64xf32>
    %37 = tpu.matmul %34, %35, %cst_15 {dimension_numbers = #tpu.dot_dimension_numbers<[2], [2], [1], [1], [0, 0, 0, 1, 1, 1], [0], [0]>} : vector<4x64x8xbf16>, vector<4x64x8xbf16>, vector<4x64x64xf32> -> vector<4x64x64xf32>
    %c0_16 = arith.constant 0 : index
    %c0_17 = arith.constant 0 : index
    %c0_18 = arith.constant 0 : index
    %38 = vector.load %arg2[%c0_16, %c0_17, %c0_18] : memref<4x64x64xf32, #tpu.memory_space<vmem>>, vector<1x64x64xf32>
    %39 = vector.shape_cast %38 : vector<1x64x64xf32> to vector<64x64xf32>
    %40 = vector.shape_cast %39 : vector<64x64xf32> to vector<1x64x64xf32>
    %41 = vector.broadcast %40 : vector<1x64x64xf32> to vector<4x64x64xf32>
    %42 = arith.addf %37, %41 : vector<4x64x64xf32>
    %c0_19 = arith.constant 0 : index
    %c0_20 = arith.constant 0 : index
    %c0_21 = arith.constant 0 : index
    %43 = vector.load %arg3[%c0_19, %c0_20, %c0_21] : memref<1x64x64xf32, #tpu.memory_space<vmem>>, vector<1x64x64xf32>
    %44 = vector.broadcast %43 : vector<1x64x64xf32> to vector<4x64x64xf32>
    %45 = arith.addf %42, %44 : vector<4x64x64xf32>
    %cst_22 = arith.constant dense<0xFF800000> : vector<4x64xf32>
    %46 = vector.multi_reduction <maximumf>, %45, %cst_22 [2] : vector<4x64x64xf32> to vector<4x64xf32>
    %47 = vector.shape_cast %46 : vector<4x64xf32> to vector<4x64x1xf32>
    %48 = vector.broadcast %47 : vector<4x64x1xf32> to vector<4x64x64xf32>
    %49 = arith.subf %45, %48 : vector<4x64x64xf32>
    %50 = math.exp %49 : vector<4x64x64xf32>
    %cst_23 = arith.constant dense<0.000000e+00> : vector<4x64xf32>
    %51 = vector.multi_reduction <add>, %50, %cst_23 [2] : vector<4x64x64xf32> to vector<4x64xf32>
    %52 = vector.shape_cast %51 : vector<4x64xf32> to vector<4x64x1xf32>
    %53 = tpu.reciprocal %52 {approx = true} : vector<4x64x1xf32> -> vector<4x64x1xf32>
    %54 = vector.broadcast %53 : vector<4x64x1xf32> to vector<4x64x64xf32>
    %55 = arith.mulf %50, %54 : vector<4x64x64xf32>
    %56 = arith.truncf %55 : vector<4x64x64xf32> to vector<4x64x64xbf16>
    %cst_24 = arith.constant dense<0.000000e+00> : vector<4x64x8xf32>
    %57 = tpu.matmul %56, %36, %cst_24 {dimension_numbers = #tpu.dot_dimension_numbers<[2], [1], [1], [2], [0, 0, 0, 1, 1, 2], [0], [0]>} : vector<4x64x64xbf16>, vector<4x64x8xbf16>, vector<4x64x8xf32> -> vector<4x64x8xf32>
    %58 = vector.shape_cast %57 : vector<4x64x8xf32> to vector<256x8xf32>
    %59 = arith.truncf %58 : vector<256x8xf32> to vector<256x8xbf16>
    %c0_25 = arith.constant 0 : index
    %c0_26 = arith.constant 0 : index
    %c0_27 = arith.constant 0 : index
    %60 = vector.load %arg8[%c0_25, %c0_26, %c0_27] : memref<4x8x32xbf16, #tpu.memory_space<vmem>>, vector<1x8x32xbf16>
    %61 = vector.shape_cast %60 : vector<1x8x32xbf16> to vector<8x32xbf16>
    %cst_28 = arith.constant dense<0.000000e+00> : vector<256x32xf32>
    %62 = tpu.matmul %59, %61, %cst_28 {dimension_numbers = #tpu.dot_dimension_numbers<[1], [0], [0], [1], [0, 0, 1, 1], [], []>} : vector<256x8xbf16>, vector<8x32xbf16>, vector<256x32xf32> -> vector<256x32xf32>
    %63 = vector.extract_strided_slice %33 {offsets = [0, 0, 8], sizes = [4, 64, 8], strides = [1, 1, 1]} : vector<4x64x96xbf16> to vector<4x64x8xbf16>
    %64 = vector.extract_strided_slice %33 {offsets = [0, 0, 40], sizes = [4, 64, 8], strides = [1, 1, 1]} : vector<4x64x96xbf16> to vector<4x64x8xbf16>
    %65 = vector.extract_strided_slice %33 {offsets = [0, 0, 72], sizes = [4, 64, 8], strides = [1, 1, 1]} : vector<4x64x96xbf16> to vector<4x64x8xbf16>
    %cst_29 = arith.constant dense<0.000000e+00> : vector<4x64x64xf32>
    %66 = tpu.matmul %63, %64, %cst_29 {dimension_numbers = #tpu.dot_dimension_numbers<[2], [2], [1], [1], [0, 0, 0, 1, 1, 1], [0], [0]>} : vector<4x64x8xbf16>, vector<4x64x8xbf16>, vector<4x64x64xf32> -> vector<4x64x64xf32>
    %c1 = arith.constant 1 : index
    %c0_30 = arith.constant 0 : index
    %c0_31 = arith.constant 0 : index
    %67 = vector.load %arg2[%c1, %c0_30, %c0_31] : memref<4x64x64xf32, #tpu.memory_space<vmem>>, vector<1x64x64xf32>
    %68 = vector.shape_cast %67 : vector<1x64x64xf32> to vector<64x64xf32>
    %69 = vector.shape_cast %68 : vector<64x64xf32> to vector<1x64x64xf32>
    %70 = vector.broadcast %69 : vector<1x64x64xf32> to vector<4x64x64xf32>
    %71 = arith.addf %66, %70 : vector<4x64x64xf32>
    %c0_32 = arith.constant 0 : index
    %c0_33 = arith.constant 0 : index
    %c0_34 = arith.constant 0 : index
    %72 = vector.load %arg3[%c0_32, %c0_33, %c0_34] : memref<1x64x64xf32, #tpu.memory_space<vmem>>, vector<1x64x64xf32>
    %73 = vector.broadcast %72 : vector<1x64x64xf32> to vector<4x64x64xf32>
    %74 = arith.addf %71, %73 : vector<4x64x64xf32>
    %cst_35 = arith.constant dense<0xFF800000> : vector<4x64xf32>
    %75 = vector.multi_reduction <maximumf>, %74, %cst_35 [2] : vector<4x64x64xf32> to vector<4x64xf32>
    %76 = vector.shape_cast %75 : vector<4x64xf32> to vector<4x64x1xf32>
    %77 = vector.broadcast %76 : vector<4x64x1xf32> to vector<4x64x64xf32>
    %78 = arith.subf %74, %77 : vector<4x64x64xf32>
    %79 = math.exp %78 : vector<4x64x64xf32>
    %cst_36 = arith.constant dense<0.000000e+00> : vector<4x64xf32>
    %80 = vector.multi_reduction <add>, %79, %cst_36 [2] : vector<4x64x64xf32> to vector<4x64xf32>
    %81 = vector.shape_cast %80 : vector<4x64xf32> to vector<4x64x1xf32>
    %82 = tpu.reciprocal %81 {approx = true} : vector<4x64x1xf32> -> vector<4x64x1xf32>
    %83 = vector.broadcast %82 : vector<4x64x1xf32> to vector<4x64x64xf32>
    %84 = arith.mulf %79, %83 : vector<4x64x64xf32>
    %85 = arith.truncf %84 : vector<4x64x64xf32> to vector<4x64x64xbf16>
    %cst_37 = arith.constant dense<0.000000e+00> : vector<4x64x8xf32>
    %86 = tpu.matmul %85, %65, %cst_37 {dimension_numbers = #tpu.dot_dimension_numbers<[2], [1], [1], [2], [0, 0, 0, 1, 1, 2], [0], [0]>} : vector<4x64x64xbf16>, vector<4x64x8xbf16>, vector<4x64x8xf32> -> vector<4x64x8xf32>
    %87 = vector.shape_cast %86 : vector<4x64x8xf32> to vector<256x8xf32>
    %88 = arith.truncf %87 : vector<256x8xf32> to vector<256x8xbf16>
    %c1_38 = arith.constant 1 : index
    %c0_39 = arith.constant 0 : index
    %c0_40 = arith.constant 0 : index
    %89 = vector.load %arg8[%c1_38, %c0_39, %c0_40] : memref<4x8x32xbf16, #tpu.memory_space<vmem>>, vector<1x8x32xbf16>
    %90 = vector.shape_cast %89 : vector<1x8x32xbf16> to vector<8x32xbf16>
    %cst_41 = arith.constant dense<0.000000e+00> : vector<256x32xf32>
    %91 = tpu.matmul %88, %90, %cst_41 {dimension_numbers = #tpu.dot_dimension_numbers<[1], [0], [0], [1], [0, 0, 1, 1], [], []>} : vector<256x8xbf16>, vector<8x32xbf16>, vector<256x32xf32> -> vector<256x32xf32>
    %92 = arith.addf %62, %91 : vector<256x32xf32>
    %93 = vector.extract_strided_slice %33 {offsets = [0, 0, 16], sizes = [4, 64, 8], strides = [1, 1, 1]} : vector<4x64x96xbf16> to vector<4x64x8xbf16>
    %94 = vector.extract_strided_slice %33 {offsets = [0, 0, 48], sizes = [4, 64, 8], strides = [1, 1, 1]} : vector<4x64x96xbf16> to vector<4x64x8xbf16>
    %95 = vector.extract_strided_slice %33 {offsets = [0, 0, 80], sizes = [4, 64, 8], strides = [1, 1, 1]} : vector<4x64x96xbf16> to vector<4x64x8xbf16>
    %cst_42 = arith.constant dense<0.000000e+00> : vector<4x64x64xf32>
    %96 = tpu.matmul %93, %94, %cst_42 {dimension_numbers = #tpu.dot_dimension_numbers<[2], [2], [1], [1], [0, 0, 0, 1, 1, 1], [0], [0]>} : vector<4x64x8xbf16>, vector<4x64x8xbf16>, vector<4x64x64xf32> -> vector<4x64x64xf32>
    %c2 = arith.constant 2 : index
    %c0_43 = arith.constant 0 : index
    %c0_44 = arith.constant 0 : index
    %97 = vector.load %arg2[%c2, %c0_43, %c0_44] : memref<4x64x64xf32, #tpu.memory_space<vmem>>, vector<1x64x64xf32>
    %98 = vector.shape_cast %97 : vector<1x64x64xf32> to vector<64x64xf32>
    %99 = vector.shape_cast %98 : vector<64x64xf32> to vector<1x64x64xf32>
    %100 = vector.broadcast %99 : vector<1x64x64xf32> to vector<4x64x64xf32>
    %101 = arith.addf %96, %100 : vector<4x64x64xf32>
    %c0_45 = arith.constant 0 : index
    %c0_46 = arith.constant 0 : index
    %c0_47 = arith.constant 0 : index
    %102 = vector.load %arg3[%c0_45, %c0_46, %c0_47] : memref<1x64x64xf32, #tpu.memory_space<vmem>>, vector<1x64x64xf32>
    %103 = vector.broadcast %102 : vector<1x64x64xf32> to vector<4x64x64xf32>
    %104 = arith.addf %101, %103 : vector<4x64x64xf32>
    %cst_48 = arith.constant dense<0xFF800000> : vector<4x64xf32>
    %105 = vector.multi_reduction <maximumf>, %104, %cst_48 [2] : vector<4x64x64xf32> to vector<4x64xf32>
    %106 = vector.shape_cast %105 : vector<4x64xf32> to vector<4x64x1xf32>
    %107 = vector.broadcast %106 : vector<4x64x1xf32> to vector<4x64x64xf32>
    %108 = arith.subf %104, %107 : vector<4x64x64xf32>
    %109 = math.exp %108 : vector<4x64x64xf32>
    %cst_49 = arith.constant dense<0.000000e+00> : vector<4x64xf32>
    %110 = vector.multi_reduction <add>, %109, %cst_49 [2] : vector<4x64x64xf32> to vector<4x64xf32>
    %111 = vector.shape_cast %110 : vector<4x64xf32> to vector<4x64x1xf32>
    %112 = tpu.reciprocal %111 {approx = true} : vector<4x64x1xf32> -> vector<4x64x1xf32>
    %113 = vector.broadcast %112 : vector<4x64x1xf32> to vector<4x64x64xf32>
    %114 = arith.mulf %109, %113 : vector<4x64x64xf32>
    %115 = arith.truncf %114 : vector<4x64x64xf32> to vector<4x64x64xbf16>
    %cst_50 = arith.constant dense<0.000000e+00> : vector<4x64x8xf32>
    %116 = tpu.matmul %115, %95, %cst_50 {dimension_numbers = #tpu.dot_dimension_numbers<[2], [1], [1], [2], [0, 0, 0, 1, 1, 2], [0], [0]>} : vector<4x64x64xbf16>, vector<4x64x8xbf16>, vector<4x64x8xf32> -> vector<4x64x8xf32>
    %117 = vector.shape_cast %116 : vector<4x64x8xf32> to vector<256x8xf32>
    %118 = arith.truncf %117 : vector<256x8xf32> to vector<256x8xbf16>
    %c2_51 = arith.constant 2 : index
    %c0_52 = arith.constant 0 : index
    %c0_53 = arith.constant 0 : index
    %119 = vector.load %arg8[%c2_51, %c0_52, %c0_53] : memref<4x8x32xbf16, #tpu.memory_space<vmem>>, vector<1x8x32xbf16>
    %120 = vector.shape_cast %119 : vector<1x8x32xbf16> to vector<8x32xbf16>
    %cst_54 = arith.constant dense<0.000000e+00> : vector<256x32xf32>
    %121 = tpu.matmul %118, %120, %cst_54 {dimension_numbers = #tpu.dot_dimension_numbers<[1], [0], [0], [1], [0, 0, 1, 1], [], []>} : vector<256x8xbf16>, vector<8x32xbf16>, vector<256x32xf32> -> vector<256x32xf32>
    %122 = arith.addf %92, %121 : vector<256x32xf32>
    %123 = vector.extract_strided_slice %33 {offsets = [0, 0, 24], sizes = [4, 64, 8], strides = [1, 1, 1]} : vector<4x64x96xbf16> to vector<4x64x8xbf16>
    %124 = vector.extract_strided_slice %33 {offsets = [0, 0, 56], sizes = [4, 64, 8], strides = [1, 1, 1]} : vector<4x64x96xbf16> to vector<4x64x8xbf16>
    %125 = vector.extract_strided_slice %33 {offsets = [0, 0, 88], sizes = [4, 64, 8], strides = [1, 1, 1]} : vector<4x64x96xbf16> to vector<4x64x8xbf16>
    %cst_55 = arith.constant dense<0.000000e+00> : vector<4x64x64xf32>
    %126 = tpu.matmul %123, %124, %cst_55 {dimension_numbers = #tpu.dot_dimension_numbers<[2], [2], [1], [1], [0, 0, 0, 1, 1, 1], [0], [0]>} : vector<4x64x8xbf16>, vector<4x64x8xbf16>, vector<4x64x64xf32> -> vector<4x64x64xf32>
    %c3 = arith.constant 3 : index
    %c0_56 = arith.constant 0 : index
    %c0_57 = arith.constant 0 : index
    %127 = vector.load %arg2[%c3, %c0_56, %c0_57] : memref<4x64x64xf32, #tpu.memory_space<vmem>>, vector<1x64x64xf32>
    %128 = vector.shape_cast %127 : vector<1x64x64xf32> to vector<64x64xf32>
    %129 = vector.shape_cast %128 : vector<64x64xf32> to vector<1x64x64xf32>
    %130 = vector.broadcast %129 : vector<1x64x64xf32> to vector<4x64x64xf32>
    %131 = arith.addf %126, %130 : vector<4x64x64xf32>
    %c0_58 = arith.constant 0 : index
    %c0_59 = arith.constant 0 : index
    %c0_60 = arith.constant 0 : index
    %132 = vector.load %arg3[%c0_58, %c0_59, %c0_60] : memref<1x64x64xf32, #tpu.memory_space<vmem>>, vector<1x64x64xf32>
    %133 = vector.broadcast %132 : vector<1x64x64xf32> to vector<4x64x64xf32>
    %134 = arith.addf %131, %133 : vector<4x64x64xf32>
    %cst_61 = arith.constant dense<0xFF800000> : vector<4x64xf32>
    %135 = vector.multi_reduction <maximumf>, %134, %cst_61 [2] : vector<4x64x64xf32> to vector<4x64xf32>
    %136 = vector.shape_cast %135 : vector<4x64xf32> to vector<4x64x1xf32>
    %137 = vector.broadcast %136 : vector<4x64x1xf32> to vector<4x64x64xf32>
    %138 = arith.subf %134, %137 : vector<4x64x64xf32>
    %139 = math.exp %138 : vector<4x64x64xf32>
    %cst_62 = arith.constant dense<0.000000e+00> : vector<4x64xf32>
    %140 = vector.multi_reduction <add>, %139, %cst_62 [2] : vector<4x64x64xf32> to vector<4x64xf32>
    %141 = vector.shape_cast %140 : vector<4x64xf32> to vector<4x64x1xf32>
    %142 = tpu.reciprocal %141 {approx = true} : vector<4x64x1xf32> -> vector<4x64x1xf32>
    %143 = vector.broadcast %142 : vector<4x64x1xf32> to vector<4x64x64xf32>
    %144 = arith.mulf %139, %143 : vector<4x64x64xf32>
    %145 = arith.truncf %144 : vector<4x64x64xf32> to vector<4x64x64xbf16>
    %cst_63 = arith.constant dense<0.000000e+00> : vector<4x64x8xf32>
    %146 = tpu.matmul %145, %125, %cst_63 {dimension_numbers = #tpu.dot_dimension_numbers<[2], [1], [1], [2], [0, 0, 0, 1, 1, 2], [0], [0]>} : vector<4x64x64xbf16>, vector<4x64x8xbf16>, vector<4x64x8xf32> -> vector<4x64x8xf32>
    %147 = vector.shape_cast %146 : vector<4x64x8xf32> to vector<256x8xf32>
    %148 = arith.truncf %147 : vector<256x8xf32> to vector<256x8xbf16>
    %c3_64 = arith.constant 3 : index
    %c0_65 = arith.constant 0 : index
    %c0_66 = arith.constant 0 : index
    %149 = vector.load %arg8[%c3_64, %c0_65, %c0_66] : memref<4x8x32xbf16, #tpu.memory_space<vmem>>, vector<1x8x32xbf16>
    %150 = vector.shape_cast %149 : vector<1x8x32xbf16> to vector<8x32xbf16>
    %cst_67 = arith.constant dense<0.000000e+00> : vector<256x32xf32>
    %151 = tpu.matmul %148, %150, %cst_67 {dimension_numbers = #tpu.dot_dimension_numbers<[1], [0], [0], [1], [0, 0, 1, 1], [], []>} : vector<256x8xbf16>, vector<8x32xbf16>, vector<256x32xf32> -> vector<256x32xf32>
    %152 = arith.addf %122, %151 : vector<256x32xf32>
    %153 = arith.addf %1, %152 : vector<256x32xf32>
    %c0_68 = arith.constant 0 : index
    %c0_69 = arith.constant 0 : index
    %154 = vector.load %arg9[%c0_68, %c0_69] : memref<1x32xf32, #tpu.memory_space<vmem>>, vector<1x32xf32>
    %155 = vector.broadcast %154 : vector<1x32xf32> to vector<256x32xf32>
    %156 = arith.addf %153, %155 : vector<256x32xf32>
    %c0_70 = arith.constant 0 : index
    %c0_71 = arith.constant 0 : index
    %157 = vector.load %arg10[%c0_70, %c0_71] : memref<1x32xf32, #tpu.memory_space<vmem>>, vector<1x32xf32>
    %c0_72 = arith.constant 0 : index
    %c0_73 = arith.constant 0 : index
    %158 = vector.load %arg11[%c0_72, %c0_73] : memref<1x32xf32, #tpu.memory_space<vmem>>, vector<1x32xf32>
    %cst_74 = arith.constant dense<0.000000e+00> : vector<256xf32>
    %159 = vector.multi_reduction <add>, %156, %cst_74 [1] : vector<256x32xf32> to vector<256xf32>
    %160 = vector.shape_cast %159 : vector<256xf32> to vector<256x1xf32>
    %cst_75 = arith.constant 3.200000e+01 : f32
    %161 = vector.broadcast %cst_75 : f32 to vector<256x1xf32>
    %162 = arith.divf %160, %161 : vector<256x1xf32>
    %163 = vector.broadcast %162 : vector<256x1xf32> to vector<256x32xf32>
    %164 = arith.subf %156, %163 : vector<256x32xf32>
    %165 = arith.mulf %164, %164 : vector<256x32xf32>
    %cst_76 = arith.constant dense<0.000000e+00> : vector<256xf32>
    %166 = vector.multi_reduction <add>, %165, %cst_76 [1] : vector<256x32xf32> to vector<256xf32>
    %167 = vector.shape_cast %166 : vector<256xf32> to vector<256x1xf32>
    %cst_77 = arith.constant 3.200000e+01 : f32
    %168 = vector.broadcast %cst_77 : f32 to vector<256x1xf32>
    %169 = arith.divf %167, %168 : vector<256x1xf32>
    %170 = vector.broadcast %162 : vector<256x1xf32> to vector<256x32xf32>
    %171 = arith.subf %156, %170 : vector<256x32xf32>
    %cst_78 = arith.constant 9.99999974E-6 : f32
    %172 = vector.broadcast %cst_78 : f32 to vector<256x1xf32>
    %173 = arith.addf %169, %172 : vector<256x1xf32>
    %174 = math.rsqrt %173 : vector<256x1xf32>
    %175 = vector.broadcast %174 : vector<256x1xf32> to vector<256x32xf32>
    %176 = arith.mulf %171, %175 : vector<256x32xf32>
    %177 = vector.broadcast %157 : vector<1x32xf32> to vector<256x32xf32>
    %178 = arith.mulf %176, %177 : vector<256x32xf32>
    %179 = vector.broadcast %158 : vector<1x32xf32> to vector<256x32xf32>
    %180 = arith.addf %178, %179 : vector<256x32xf32>
    %181 = arith.truncf %180 : vector<256x32xf32> to vector<256x32xbf16>
    %c0_79 = arith.constant 0 : index
    %c0_80 = arith.constant 0 : index
    %182 = vector.load %arg12[%c0_79, %c0_80] : memref<32x128xbf16, #tpu.memory_space<vmem>>, vector<32x128xbf16>
    %cst_81 = arith.constant dense<0.000000e+00> : vector<256x128xf32>
    %183 = tpu.matmul %181, %182, %cst_81 {dimension_numbers = #tpu.dot_dimension_numbers<[1], [0], [0], [1], [0, 0, 1, 1], [], []>} : vector<256x32xbf16>, vector<32x128xbf16>, vector<256x128xf32> -> vector<256x128xf32>
    %c0_82 = arith.constant 0 : index
    %c0_83 = arith.constant 0 : index
    %184 = vector.load %arg13[%c0_82, %c0_83] : memref<1x128xf32, #tpu.memory_space<vmem>>, vector<1x128xf32>
    %185 = vector.broadcast %184 : vector<1x128xf32> to vector<256x128xf32>
    %186 = arith.addf %183, %185 : vector<256x128xf32>
    %cst_84 = arith.constant 0.707106769 : f32
    %187 = vector.broadcast %cst_84 : f32 to vector<256x128xf32>
    %188 = arith.mulf %186, %187 : vector<256x128xf32>
    %189 = math.absf %188 : vector<256x128xf32>
    %cst_85 = arith.constant 0.327591091 : f32
    %190 = vector.broadcast %cst_85 : f32 to vector<256x128xf32>
    %191 = arith.mulf %190, %189 : vector<256x128xf32>
    %cst_86 = arith.constant 1.000000e+00 : f32
    %192 = vector.broadcast %cst_86 : f32 to vector<256x128xf32>
    %193 = arith.addf %192, %191 : vector<256x128xf32>
    %194 = tpu.reciprocal %193 {approx = true} : vector<256x128xf32> -> vector<256x128xf32>
    %cst_87 = arith.constant 1.06140542 : f32
    %195 = vector.broadcast %cst_87 : f32 to vector<256x128xf32>
    %196 = arith.mulf %194, %195 : vector<256x128xf32>
    %cst_88 = arith.constant -1.45315206 : f32
    %197 = vector.broadcast %cst_88 : f32 to vector<256x128xf32>
    %198 = arith.addf %197, %196 : vector<256x128xf32>
    %199 = arith.mulf %194, %198 : vector<256x128xf32>
    %cst_89 = arith.constant 1.42141378 : f32
    %200 = vector.broadcast %cst_89 : f32 to vector<256x128xf32>
    %201 = arith.addf %200, %199 : vector<256x128xf32>
    %202 = arith.mulf %194, %201 : vector<256x128xf32>
    %cst_90 = arith.constant -0.284496725 : f32
    %203 = vector.broadcast %cst_90 : f32 to vector<256x128xf32>
    %204 = arith.addf %203, %202 : vector<256x128xf32>
    %205 = arith.mulf %194, %204 : vector<256x128xf32>
    %cst_91 = arith.constant 0.254829586 : f32
    %206 = vector.broadcast %cst_91 : f32 to vector<256x128xf32>
    %207 = arith.addf %206, %205 : vector<256x128xf32>
    %208 = arith.mulf %194, %207 : vector<256x128xf32>
    %cst_92 = arith.constant 0.000000e+00 : f32
    %209 = vector.broadcast %cst_92 : f32 to vector<256x128xf32>
    %210 = arith.subf %209, %189 : vector<256x128xf32>
    %211 = arith.mulf %210, %189 : vector<256x128xf32>
    %212 = math.exp %211 : vector<256x128xf32>
    %213 = arith.mulf %208, %212 : vector<256x128xf32>
    %cst_93 = arith.constant 1.000000e+00 : f32
    %214 = vector.broadcast %cst_93 : f32 to vector<256x128xf32>
    %215 = arith.subf %214, %213 : vector<256x128xf32>
    %cst_94 = arith.constant 0.000000e+00 : f32
    %216 = vector.broadcast %cst_94 : f32 to vector<256x128xf32>
    %217 = arith.cmpf oge, %188, %216 : vector<256x128xf32>
    %cst_95 = arith.constant 0.000000e+00 : f32
    %218 = vector.broadcast %cst_95 : f32 to vector<256x128xf32>
    %219 = arith.subf %218, %215 : vector<256x128xf32>
    %220 = arith.select %217, %215, %219 : vector<256x128xi1>, vector<256x128xf32>
    %cst_96 = arith.constant 5.000000e-01 : f32
    %221 = vector.broadcast %cst_96 : f32 to vector<256x128xf32>
    %222 = arith.mulf %221, %186 : vector<256x128xf32>
    %cst_97 = arith.constant 1.000000e+00 : f32
    %223 = vector.broadcast %cst_97 : f32 to vector<256x128xf32>
    %224 = arith.addf %223, %220 : vector<256x128xf32>
    %225 = arith.mulf %222, %224 : vector<256x128xf32>
    %226 = arith.truncf %225 : vector<256x128xf32> to vector<256x128xbf16>
    %c0_98 = arith.constant 0 : index
    %c0_99 = arith.constant 0 : index
    %227 = vector.load %arg14[%c0_98, %c0_99] : memref<128x32xbf16, #tpu.memory_space<vmem>>, vector<128x32xbf16>
    %cst_100 = arith.constant dense<0.000000e+00> : vector<256x32xf32>
    %228 = tpu.matmul %226, %227, %cst_100 {dimension_numbers = #tpu.dot_dimension_numbers<[1], [0], [0], [1], [0, 0, 1, 1], [], []>} : vector<256x128xbf16>, vector<128x32xbf16>, vector<256x32xf32> -> vector<256x32xf32>
    %c0_101 = arith.constant 0 : index
    %c0_102 = arith.constant 0 : index
    %229 = vector.load %arg15[%c0_101, %c0_102] : memref<1x32xf32, #tpu.memory_space<vmem>>, vector<1x32xf32>
    %230 = vector.broadcast %229 : vector<1x32xf32> to vector<256x32xf32>
    %231 = arith.addf %228, %230 : vector<256x32xf32>
    %232 = arith.addf %156, %231 : vector<256x32xf32>
    %c0_103 = arith.constant 0 : index
    %c0_104 = arith.constant 0 : index
    %c0_105 = arith.constant 0 : index
    %233 = vector.load %arg16[%c0_103, %c0_104, %c0_105] : memref<1x256x32xf32, #tpu.memory_space<vmem>>, vector<1x256x32xf32>
    %234 = vector.shape_cast %233 : vector<1x256x32xf32> to vector<256x32xf32>
    %235 = vector.shape_cast %232 : vector<256x32xf32> to vector<1x256x32xf32>
    tpu.vector_store %arg16[%c0_103, %c0_104, %c0_105], %235 {strides = array<i32>} : memref<1x256x32xf32, #tpu.memory_space<vmem>>, vector<1x256x32xf32>,
    return
  }
  func.func @transform_0(%arg0: i32) -> (i32, i32, i32) {
    %c0_i32 = arith.constant 0 : i32
    %c0_i32_0 = arith.constant 0 : i32
    %c0_i32_1 = arith.constant 0 : i32
    return %arg0, %c0_i32, %c0_i32_0 : i32, i32, i32
  }
  func.func @transform_1(%arg0: i32) -> (i32, i32, i32) {
    %c0_i32 = arith.constant 0 : i32
    %c0_i32_0 = arith.constant 0 : i32
    %c0_i32_1 = arith.constant 0 : i32
    %c0_i32_2 = arith.constant 0 : i32
    return %c0_i32, %c0_i32_0, %c0_i32_1 : i32, i32, i32
  }
  func.func @transform_2(%arg0: i32) -> (i32, i32, i32) {
    %c0_i32 = arith.constant 0 : i32
    %c0_i32_0 = arith.constant 0 : i32
    %c0_i32_1 = arith.constant 0 : i32
    %c0_i32_2 = arith.constant 0 : i32
    return %c0_i32, %c0_i32_0, %c0_i32_1 : i32, i32, i32
  }
  func.func @transform_3(%arg0: i32) -> (i32, i32) {
    %c0_i32 = arith.constant 0 : i32
    %c0_i32_0 = arith.constant 0 : i32
    %c0_i32_1 = arith.constant 0 : i32
    return %c0_i32, %c0_i32_0 : i32, i32
  }
  func.func @transform_4(%arg0: i32) -> (i32, i32) {
    %c0_i32 = arith.constant 0 : i32
    %c0_i32_0 = arith.constant 0 : i32
    %c0_i32_1 = arith.constant 0 : i32
    return %c0_i32, %c0_i32_0 : i32, i32
  }
  func.func @transform_5(%arg0: i32) -> (i32, i32) {
    %c0_i32 = arith.constant 0 : i32
    %c0_i32_0 = arith.constant 0 : i32
    %c0_i32_1 = arith.constant 0 : i32
    return %c0_i32, %c0_i32_0 : i32, i32
  }
  func.func @transform_6(%arg0: i32) -> (i32, i32) {
    %c0_i32 = arith.constant 0 : i32
    %c0_i32_0 = arith.constant 0 : i32
    %c0_i32_1 = arith.constant 0 : i32
    return %c0_i32, %c0_i32_0 : i32, i32
  }
  func.func @transform_7(%arg0: i32) -> (i32, i32, i32) {
    %c0_i32 = arith.constant 0 : i32
    %c0_i32_0 = arith.constant 0 : i32
    %c0_i32_1 = arith.constant 0 : i32
    %c0_i32_2 = arith.constant 0 : i32
    return %c0_i32, %c0_i32_0, %c0_i32_1 : i32, i32, i32
  }
  func.func @transform_8(%arg0: i32) -> (i32, i32) {
    %c0_i32 = arith.constant 0 : i32
    %c0_i32_0 = arith.constant 0 : i32
    %c0_i32_1 = arith.constant 0 : i32
    return %c0_i32, %c0_i32_0 : i32, i32
  }
  func.func @transform_9(%arg0: i32) -> (i32, i32) {
    %c0_i32 = arith.constant 0 : i32
    %c0_i32_0 = arith.constant 0 : i32
    %c0_i32_1 = arith.constant 0 : i32
    return %c0_i32, %c0_i32_0 : i32, i32
  }
  func.func @transform_10(%arg0: i32) -> (i32, i32) {
    %c0_i32 = arith.constant 0 : i32
    %c0_i32_0 = arith.constant 0 : i32
    %c0_i32_1 = arith.constant 0 : i32
    return %c0_i32, %c0_i32_0 : i32, i32
  }
  func.func @transform_11(%arg0: i32) -> (i32, i32) {
    %c0_i32 = arith.constant 0 : i32
    %c0_i32_0 = arith.constant 0 : i32
    %c0_i32_1 = arith.constant 0 : i32
    return %c0_i32, %c0_i32_0 : i32, i32
  }
  func.func @transform_12(%arg0: i32) -> (i32, i32) {
    %c0_i32 = arith.constant 0 : i32
    %c0_i32_0 = arith.constant 0 : i32
    %c0_i32_1 = arith.constant 0 : i32
    return %c0_i32, %c0_i32_0 : i32, i32
  }
  func.func @transform_13(%arg0: i32) -> (i32, i32) {
    %c0_i32 = arith.constant 0 : i32
    %c0_i32_0 = arith.constant 0 : i32
    %c0_i32_1 = arith.constant 0 : i32
    return %c0_i32, %c0_i32_0 : i32, i32
  }
  func.func @transform_14(%arg0: i32) -> (i32, i32) {
    %c0_i32 = arith.constant 0 : i32
    %c0_i32_0 = arith.constant 0 : i32
    %c0_i32_1 = arith.constant 0 : i32
    return %c0_i32, %c0_i32_0 : i32, i32
  }
  func.func @transform_15(%arg0: i32) -> (i32, i32, i32) {
    %c0_i32 = arith.constant 0 : i32
    %c0_i32_0 = arith.constant 0 : i32
    %c0_i32_1 = arith.constant 0 : i32
    return %arg0, %c0_i32, %c0_i32_0 : i32, i32, i32
  }
}

</mosaic_0001>

<llo_original>
// kernel: tpu_custom_call.1
$region0: #{tpu_custom_call.1}
  #allocation0 [shape = 'u32[]', space=smem, size = 0x4, offset = 0x4, fixed_abs, tag = 'smem constant byte address 0x4 - core index']
  #allocation1 [shape = 'u32[72,128]{1,0:T(1,128)}', space=vmem, size = 0x9000, scoped, tag = 'internal scratch']
  %s0 = inlined_call_operand.hbm [shape: f32[8,128], index: 0, kind: input, shape index: {}]
  %s1 = inlined_call_operand.hbm [shape: f32[8,128], index: 1, kind: output, shape index: {}]
  %s2 = sld [smem:[#allocation0]]
  $region41: #{tpu_custom_call.1} parent=0
    _
  %s4 = ssub.s32 1, %s2
  %s5 = scalar_select 0, %s4, %s2
  $region1: #{tpu_custom_call.1} parent=0
    #allocation2 [shape = 'u8[4096]{0}', space=vmem, size = 0x1000, scoped, tag = 'input window, operand 0, single buffered']
    #allocation3 [shape = 's32[2]{0}', space=sflag, size = 0x8, scoped, tag = 'scoped memory for tpu_custom_call.1']
    #allocation4 [shape = 's32[2]{0}', space=sflag, size = 0x8, scoped, tag = 'scoped memory for tpu_custom_call.1']
    #allocation5 [shape = 'u8[4096]{0}', space=vmem, size = 0x1000, scoped, tag = 'output window, operand 0, single buffered']
    %6 = vsyncpa [#allocation3], 0
    %7 = vsyncpa [#allocation4], 0
    loop: start=0, step=1, limit=4
    $region2: #{tpu_custom_call.1} parent=1 // loop_pre_header
      _
    $region3: #{tpu_custom_call.1} parent=1 // loop_header
      %s9 = sphi 0, %s13
      %p10 = scmp.ge.s32.totalorder %s9, 4
      %s17 = sphi 0, %s17
      %s19 = sphi 0, %s17
      %s20 = sphi 0, %s19
      %s34 = sphi 0, %s20
      %s38 = sphi 0, %s38
      %s40 = sphi 0, %s38
      %s41 = sphi 0, %s40
      %s55 = sphi 0, %s41
    $region4: #{tpu_custom_call.1} parent=1 // loop_header_branch
      %12 = sbr.rel (%p10) target = $region8
    $region5: #{tpu_custom_call.1} parent=1 // loop_body
      %s14 = ssub.s32 %s9, 1
      %s15 = ssub.s32 %s9, 2
      %s16 = sadd.s32 %s9, 1
      %s18 = sadd.s32 %s17, 1
      %p21 = scmp.eq.s32.totalorder %s9, 1
      %p22 = scmp.ne.s32.totalorder %s17, %s19
      %p23 = scmp.eq.s32.totalorder %s9, 0
      %p24 = por %p22, %p23
      %p25 = scmp.ne.s32.totalorder %s17, %s19
      %p26 = scmp.eq.s32.totalorder %s14, 1
      %p27 = por %p25, %p26
      %p28 = scmp.ne.s32.totalorder %s19, %s20
      %p29 = scmp.eq.s32.totalorder %s14, 0
      %p30 = por %p28, %p29
      %p31 = scmp.ne.s32.totalorder %s19, %s20
      %p32 = scmp.eq.s32.totalorder %s15, 1
      %p33 = por %p31, %p32
      %p35 = scmp.ne.s32.totalorder %s20, %s34
      %p36 = scmp.eq.s32.totalorder %s15, 0
      %p37 = por %p35, %p36
      %s39 = sadd.s32 %s38, 1
      %p42 = scmp.eq.s32.totalorder %s9, 1
      %p43 = scmp.ne.s32.totalorder %s38, %s40
      %p44 = scmp.eq.s32.totalorder %s9, 0
      %p45 = por %p43, %p44
      %p46 = scmp.ne.s32.totalorder %s38, %s40
      %p47 = scmp.eq.s32.totalorder %s14, 1
      %p48 = por %p46, %p47
      %p49 = scmp.ne.s32.totalorder %s40, %s41
      %p50 = scmp.eq.s32.totalorder %s14, 0
      %p51 = por %p49, %p50
      %p52 = scmp.ne.s32.totalorder %s40, %s41
      %p53 = scmp.eq.s32.totalorder %s15, 1
      %p54 = por %p52, %p53
      %p56 = scmp.ne.s32.totalorder %s41, %s55
      %p57 = scmp.eq.s32.totalorder %s15, 0
      %p58 = por %p56, %p57
      %p59 = scmp.le.s32.totalorder 1, %s9
      %p60 = scmp.lt.s32.totalorder %s9, 3
      %p61 = pnand %p59, %p60
      %p62 = pneg %p61
      // Predicated region
      $region9: #{tpu_custom_call.1} parent=5 // pred_check
        _
      $region10: #{tpu_custom_call.1} parent=5 // pred_check_branch
        %64 = sbr.rel (%p61) target = $region12
      $region11: #{tpu_custom_call.1} parent=5 // pred_region
        %s65 = ssub.s32 %s9, 1
        // Predicated region
        $region13: #{tpu_custom_call.1} parent=11 // pred_check
          %p66 = pneg %p30
        $region14: #{tpu_custom_call.1} parent=11 // pred_check_branch
          %68 = sbr.rel (%p66) target = $region16
        $region15: #{tpu_custom_call.1} parent=11 // pred_region
          %70 = vsyncadd [#allocation3], 0
          %s72 = sshll.u32 %s0, 4
          %s73 = int_to_ptr.hbm [resolvable:$true] %s72
          %s74 = sshll.u32 [#allocation2], 4
          %s75 = int_to_ptr.vmem [resolvable:$true] %s74
          %77 = dma.hbm_to_vmem [thread:$0]  %s73, 128, %s75, [#allocation3]
        $region16: #{tpu_custom_call.1} parent=11 // pred_fallthru
          _
      $region12: #{tpu_custom_call.1} parent=5 // pred_fallthru
        _
      %p78 = scmp.lt.s32.totalorder %s9, 2
      // Predicated region
      $region17: #{tpu_custom_call.1} parent=5 // pred_check
        %p79 = pneg %p78
      $region18: #{tpu_custom_call.1} parent=5 // pred_check_branch
        %81 = sbr.rel (%p79) target = $region20
      $region19: #{tpu_custom_call.1} parent=5 // pred_region
        _
      $region20: #{tpu_custom_call.1} parent=5 // pred_fallthru
        _
      %p82 = scmp.le.s32.totalorder 1, %s9
      %p83 = scmp.lt.s32.totalorder %s9, 3
      %p84 = pnand %p82, %p83
      %p85 = pneg %p84
      // Predicated region
      $region21: #{tpu_custom_call.1} parent=5 // pred_check
        _
      $region22: #{tpu_custom_call.1} parent=5 // pred_check_branch
        %87 = sbr.rel (%p84) target = $region24
      $region23: #{tpu_custom_call.1} parent=5 // pred_region
        %s88 = ssub.s32 %s9, 1
        // Predicated region
        $region25: #{tpu_custom_call.1} parent=23 // pred_check
          %p89 = pneg %p30
        $region26: #{tpu_custom_call.1} parent=23 // pred_check_branch
          %91 = sbr.rel (%p89) target = $region28
        $region27: #{tpu_custom_call.1} parent=23 // pred_region
          %93 = dma.done [#allocation3], 128
        $region28: #{tpu_custom_call.1} parent=23 // pred_fallthru
          _
        %p94 = pneg %p30
        %p95 = pneg %p27
        %p96 = pneg %p51
        %p97 = pneg %p48
        %v98 = vld [vmem:[#allocation2] sm:$0xff]
        %v99 = vadd.f32 %v98, 1.0
        %100 = vst [vmem:[#allocation5] sm:$0xff] %v99
        // Predicated region
        $region29: #{tpu_custom_call.1} parent=23 // pred_check
          %p101 = pneg %p48
        $region30: #{tpu_custom_call.1} parent=23 // pred_check_branch
          %103 = sbr.rel (%p101) target = $region32
        $region31: #{tpu_custom_call.1} parent=23 // pred_region
          %105 = vsyncadd [#allocation4], 0
          %s107 = sshll.u32 [#allocation5], 4
          %s108 = int_to_ptr.vmem [resolvable:$true] %s107
          %s109 = sshll.u32 %s1, 4
          %s110 = int_to_ptr.hbm [resolvable:$true] %s109
          %112 = dma.vmem_to_hbm [thread:$0]  %s108, 128, %s110, [#allocation4]
        $region32: #{tpu_custom_call.1} parent=23 // pred_fallthru
          _
        // Predicated region
        $region33: #{tpu_custom_call.1} parent=23 // pred_check
          %p113 = pneg %p48
        $region34: #{tpu_custom_call.1} parent=23 // pred_check_branch
          %115 = sbr.rel (%p113) target = $region36
        $region35: #{tpu_custom_call.1} parent=23 // pred_region
          %117 = dma.done [#allocation4], 128
        $region36: #{tpu_custom_call.1} parent=23 // pred_fallthru
          _
      $region24: #{tpu_custom_call.1} parent=5 // pred_fallthru
        _
      %p118 = scmp.le.s32.totalorder 2, %s9
      // Predicated region
      $region37: #{tpu_custom_call.1} parent=5 // pred_check
        %p119 = pneg %p118
      $region38: #{tpu_custom_call.1} parent=5 // pred_check_branch
        %121 = sbr.rel (%p119) target = $region40
      $region39: #{tpu_custom_call.1} parent=5 // pred_region
        %s122 = ssub.s32 %s9, 2
      $region40: #{tpu_custom_call.1} parent=5 // pred_fallthru
        _
    $region6: #{tpu_custom_call.1} parent=1 // loop_footer
      %s13 = sadd.s32 1, %s9
    $region7: #{tpu_custom_call.1} parent=1 // loop_footer_branch
      %8 = sbr.rel target = $region3
    $region8: #{tpu_custom_call.1} parent=1 // loop_exit
      _
    %123 = vsyncpa [#allocation3], 1
    %s124 = scalar_lea.sflag [#allocation3], 1
    %125 = vsyncpa %s124, 1
    %126 = vsyncpa [#allocation4], 1
    %s127 = scalar_lea.sflag [#allocation4], 1
    %128 = vsyncpa %s127, 1

// kernel: swin_forward_pallas.1
$region0: #{swin_forward_pallas.1}
  #allocation0 [shape = 'u32[]', space=smem, size = 0x4, offset = 0x4, fixed_abs, tag = 'smem constant byte address 0x4 - core index']
  #allocation1 [shape = 'u32[72,128]{1,0:T(1,128)}', space=vmem, size = 0x9000, scoped, tag = 'internal scratch']
  %s0 = inlined_call_operand.vmem [shape: f32[2,256,32], index: 0, kind: input, shape index: {}]
  %s1 = inlined_call_operand.vmem [shape: f32[4,64,64], index: 1, kind: input, shape index: {}]
  %s2 = inlined_call_operand.vmem [shape: f32[1,64,64], index: 2, kind: input, shape index: {}]
  %s3 = inlined_call_operand.vmem [shape: f32[1,32], index: 3, kind: input, shape index: {}]
  %s4 = inlined_call_operand.vmem [shape: f32[1,32], index: 4, kind: input, shape index: {}]
  %s5 = inlined_call_operand.vmem [shape: bf16[32,96], index: 5, kind: input, shape index: {}]
  %s6 = inlined_call_operand.vmem [shape: f32[1,96], index: 6, kind: input, shape index: {}]
  %s7 = inlined_call_operand.vmem [shape: bf16[4,8,32], index: 7, kind: input, shape index: {}]
  %s8 = inlined_call_operand.vmem [shape: f32[1,32], index: 8, kind: input, shape index: {}]
  %s9 = inlined_call_operand.vmem [shape: f32[1,32], index: 9, kind: input, shape index: {}]
  %s10 = inlined_call_operand.vmem [shape: f32[1,32], index: 10, kind: input, shape index: {}]
  %s11 = inlined_call_operand.vmem [shape: bf16[32,128], index: 11, kind: input, shape index: {}]
  %s12 = inlined_call_operand.vmem [shape: f32[1,128], index: 12, kind: input, shape index: {}]
  %s13 = inlined_call_operand.vmem [shape: bf16[128,32], index: 13, kind: input, shape index: {}]
  %s14 = inlined_call_operand.vmem [shape: f32[1,32], index: 14, kind: input, shape index: {}]
  %s15 = inlined_call_operand.vmem [shape: f32[2,256,32], index: 15, kind: output, shape index: {}]
  %s16 = sld [smem:[#allocation0]]
  $region93: #{swin_forward_pallas.1} parent=0
    _
  %s18 = ssub.s32 1, %s16
  %s19 = scalar_select 0, %s18, %s16
  loop: start=0, step=1, limit=4
  $region2: #{swin_forward_pallas.1} parent=0 // loop_pre_header
    _
  $region3: #{swin_forward_pallas.1} parent=0 // loop_header
    %s21 = sphi 0, %s25
    %p22 = scmp.ge.s32.totalorder %s21, 4
    %s31 = sphi 0, %s33
    %s34 = sphi 0, %s31
    %s35 = sphi 0, %s34
    %s51 = sphi 0, %s35
    %s55 = sphi 0, %s55
    %s57 = sphi 0, %s55
    %s58 = sphi 0, %s57
    %s72 = sphi 0, %s58
    %s76 = sphi 0, %s76
    %s78 = sphi 0, %s76
    %s79 = sphi 0, %s78
    %s93 = sphi 0, %s79
    %s97 = sphi 0, %s97
    %s99 = sphi 0, %s97
    %s100 = sphi 0, %s99
    %s114 = sphi 0, %s100
    %s118 = sphi 0, %s118
    %s120 = sphi 0, %s118
    %s121 = sphi 0, %s120
    %s135 = sphi 0, %s121
    %s139 = sphi 0, %s139
    %s141 = sphi 0, %s139
    %s142 = sphi 0, %s141
    %s156 = sphi 0, %s142
    %s160 = sphi 0, %s160
    %s162 = sphi 0, %s160
    %s163 = sphi 0, %s162
    %s177 = sphi 0, %s163
    %s181 = sphi 0, %s181
    %s183 = sphi 0, %s181
    %s184 = sphi 0, %s183
    %s198 = sphi 0, %s184
    %s202 = sphi 0, %s202
    %s204 = sphi 0, %s202
    %s205 = sphi 0, %s204
    %s219 = sphi 0, %s205
    %s223 = sphi 0, %s223
    %s225 = sphi 0, %s223
    %s226 = sphi 0, %s225
    %s240 = sphi 0, %s226
    %s244 = sphi 0, %s244
    %s246 = sphi 0, %s244
    %s247 = sphi 0, %s246
    %s261 = sphi 0, %s247
    %s265 = sphi 0, %s265
    %s267 = sphi 0, %s265
    %s268 = sphi 0, %s267
    %s282 = sphi 0, %s268
    %s286 = sphi 0, %s286
    %s288 = sphi 0, %s286
    %s289 = sphi 0, %s288
    %s303 = sphi 0, %s289
    %s307 = sphi 0, %s307
    %s309 = sphi 0, %s307
    %s310 = sphi 0, %s309
    %s324 = sphi 0, %s310
    %s328 = sphi 0, %s328
    %s330 = sphi 0, %s328
    %s331 = sphi 0, %s330
    %s345 = sphi 0, %s331
    %s351 = sphi 0, %s353
    %s354 = sphi 0, %s351
    %s355 = sphi 0, %s354
    %s371 = sphi 0, %s355
  $region4: #{swin_forward_pallas.1} parent=0 // loop_header_branch
    %24 = sbr.rel (%p22) target = $region8
  $region5: #{swin_forward_pallas.1} parent=0 // loop_body
    %s26 = ssub.s32 %s21, 1
    %s27 = ssub.s32 %s21, 2
    %s28 = sadd.s32 %s21, 1
    %s29 = ssub.s32 %s21, %s28
    %p30 = scmp.eq.s32.totalorder %s29, 0
    %s32 = sadd.s32 %s31, 1
    %s33 = scalar_select %p30, %s31, %s32
    %p36 = pneg %p30
    %p37 = scmp.eq.s32.totalorder %s21, 1
    %p38 = por %p36, %p37
    %p39 = scmp.ne.s32.totalorder %s31, %s34
    %p40 = scmp.eq.s32.totalorder %s21, 0
    %p41 = por %p39, %p40
    %p42 = scmp.ne.s32.totalorder %s31, %s34
    %p43 = scmp.eq.s32.totalorder %s26, 1
    %p44 = por %p42, %p43
    %p45 = scmp.ne.s32.totalorder %s34, %s35
    %p46 = scmp.eq.s32.totalorder %s26, 0
    %p47 = por %p45, %p46
    %p48 = scmp.ne.s32.totalorder %s34, %s35
    %p49 = scmp.eq.s32.totalorder %s27, 1
    %p50 = por %p48, %p49
    %p52 = scmp.ne.s32.totalorder %s35, %s51
    %p53 = scmp.eq.s32.totalorder %s27, 0
    %p54 = por %p52, %p53
    %s56 = sadd.s32 %s55, 1
    %p59 = scmp.eq.s32.totalorder %s21, 1
    %p60 = scmp.ne.s32.totalorder %s55, %s57
    %p61 = scmp.eq.s32.totalorder %s21, 0
    %p62 = por %p60, %p61
    %p63 = scmp.ne.s32.totalorder %s55, %s57
    %p64 = scmp.eq.s32.totalorder %s26, 1
    %p65 = por %p63, %p64
    %p66 = scmp.ne.s32.totalorder %s57, %s58
    %p67 = scmp.eq.s32.totalorder %s26, 0
    %p68 = por %p66, %p67
    %p69 = scmp.ne.s32.totalorder %s57, %s58
    %p70 = scmp.eq.s32.totalorder %s27, 1
    %p71 = por %p69, %p70
    %p73 = scmp.ne.s32.totalorder %s58, %s72
    %p74 = scmp.eq.s32.totalorder %s27, 0
    %p75 = por %p73, %p74
    %s77 = sadd.s32 %s76, 1
    %p80 = scmp.eq.s32.totalorder %s21, 1
    %p81 = scmp.ne.s32.totalorder %s76, %s78
    %p82 = scmp.eq.s32.totalorder %s21, 0
    %p83 = por %p81, %p82
    %p84 = scmp.ne.s32.totalorder %s76, %s78
    %p85 = scmp.eq.s32.totalorder %s26, 1
    %p86 = por %p84, %p85
    %p87 = scmp.ne.s32.totalorder %s78, %s79
    %p88 = scmp.eq.s32.totalorder %s26, 0
    %p89 = por %p87, %p88
    %p90 = scmp.ne.s32.totalorder %s78, %s79
    %p91 = scmp.eq.s32.totalorder %s27, 1
    %p92 = por %p90, %p91
    %p94 = scmp.ne.s32.totalorder %s79, %s93
    %p95 = scmp.eq.s32.totalorder %s27, 0
    %p96 = por %p94, %p95
    %s98 = sadd.s32 %s97, 1
    %p101 = scmp.eq.s32.totalorder %s21, 1
    %p102 = scmp.ne.s32.totalorder %s97, %s99
    %p103 = scmp.eq.s32.totalorder %s21, 0
    %p104 = por %p102, %p103
    %p105 = scmp.ne.s32.totalorder %s97, %s99
    %p106 = scmp.eq.s32.totalorder %s26, 1
    %p107 = por %p105, %p106
    %p108 = scmp.ne.s32.totalorder %s99, %s100
    %p109 = scmp.eq.s32.totalorder %s26, 0
    %p110 = por %p108, %p109
    %p111 = scmp.ne.s32.totalorder %s99, %s100
    %p112 = scmp.eq.s32.totalorder %s27, 1
    %p113 = por %p111, %p112
    %p115 = scmp.ne.s32.totalorder %s100, %s114
    %p116 = scmp.eq.s32.totalorder %s27, 0
    %p117 = por %p115, %p116
    %s119 = sadd.s32 %s118, 1
    %p122 = scmp.eq.s32.totalorder %s21, 1
    %p123 = scmp.ne.s32.totalorder %s118, %s120
    %p124 = scmp.eq.s32.totalorder %s21, 0
    %p125 = por %p123, %p124
    %p126 = scmp.ne.s32.totalorder %s118, %s120
    %p127 = scmp.eq.s32.totalorder %s26, 1
    %p128 = por %p126, %p127
    %p129 = scmp.ne.s32.totalorder %s120, %s121
    %p130 = scmp.eq.s32.totalorder %s26, 0
    %p131 = por %p129, %p130
    %p132 = scmp.ne.s32.totalorder %s120, %s121
    %p133 = scmp.eq.s32.totalorder %s27, 1
    %p134 = por %p132, %p133
    %p136 = scmp.ne.s32.totalorder %s121, %s135
    %p137 = scmp.eq.s32.totalorder %s27, 0
    %p138 = por %p136, %p137
    %s140 = sadd.s32 %s139, 1
    %p143 = scmp.eq.s32.totalorder %s21, 1
    %p144 = scmp.ne.s32.totalorder %s139, %s141
    %p145 = scmp.eq.s32.totalorder %s21, 0
    %p146 = por %p144, %p145
    %p147 = scmp.ne.s32.totalorder %s139, %s141
    %p148 = scmp.eq.s32.totalorder %s26, 1
    %p149 = por %p147, %p148
    %p150 = scmp.ne.s32.totalorder %s141, %s142
    %p151 = scmp.eq.s32.totalorder %s26, 0
    %p152 = por %p150, %p151
    %p153 = scmp.ne.s32.totalorder %s141, %s142
    %p154 = scmp.eq.s32.totalorder %s27, 1
    %p155 = por %p153, %p154
    %p157 = scmp.ne.s32.totalorder %s142, %s156
    %p158 = scmp.eq.s32.totalorder %s27, 0
    %p159 = por %p157, %p158
    %s161 = sadd.s32 %s160, 1
    %p164 = scmp.eq.s32.totalorder %s21, 1
    %p165 = scmp.ne.s32.totalorder %s160, %s162
    %p166 = scmp.eq.s32.totalorder %s21, 0
    %p167 = por %p165, %p166
    %p168 = scmp.ne.s32.totalorder %s160, %s162
    %p169 = scmp.eq.s32.totalorder %s26, 1
    %p170 = por %p168, %p169
    %p171 = scmp.ne.s32.totalorder %s162, %s163
    %p172 = scmp.eq.s32.totalorder %s26, 0
    %p173 = por %p171, %p172
    %p174 = scmp.ne.s32.totalorder %s162, %s163
    %p175 = scmp.eq.s32.totalorder %s27, 1
    %p176 = por %p174, %p175
    %p178 = scmp.ne.s32.totalorder %s163, %s177
    %p179 = scmp.eq.s32.totalorder %s27, 0
    %p180 = por %p178, %p179
    %s182 = sadd.s32 %s181, 1
    %p185 = scmp.eq.s32.totalorder %s21, 1
    %p186 = scmp.ne.s32.totalorder %s181, %s183
    %p187 = scmp.eq.s32.totalorder %s21, 0
    %p188 = por %p186, %p187
    %p189 = scmp.ne.s32.totalorder %s181, %s183
    %p190 = scmp.eq.s32.totalorder %s26, 1
    %p191 = por %p189, %p190
    %p192 = scmp.ne.s32.totalorder %s183, %s184
    %p193 = scmp.eq.s32.totalorder %s26, 0
    %p194 = por %p192, %p193
    %p195 = scmp.ne.s32.totalorder %s183, %s184
    %p196 = scmp.eq.s32.totalorder %s27, 1
    %p197 = por %p195, %p196
    %p199 = scmp.ne.s32.totalorder %s184, %s198
    %p200 = scmp.eq.s32.totalorder %s27, 0
    %p201 = por %p199, %p200
    %s203 = sadd.s32 %s202, 1
    %p206 = scmp.eq.s32.totalorder %s21, 1
    %p207 = scmp.ne.s32.totalorder %s202, %s204
    %p208 = scmp.eq.s32.totalorder %s21, 0
    %p209 = por %p207, %p208
    %p210 = scmp.ne.s32.totalorder %s202, %s204
    %p211 = scmp.eq.s32.totalorder %s26, 1
    %p212 = por %p210, %p211
    %p213 = scmp.ne.s32.totalorder %s204, %s205
    %p214 = scmp.eq.s32.totalorder %s26, 0
    %p215 = por %p213, %p214
    %p216 = scmp.ne.s32.totalorder %s204, %s205
    %p217 = scmp.eq.s32.totalorder %s27, 1
    %p218 = por %p216, %p217
    %p220 = scmp.ne.s32.totalorder %s205, %s219
    %p221 = scmp.eq.s32.totalorder %s27, 0
    %p222 = por %p220, %p221
    %s224 = sadd.s32 %s223, 1
    %p227 = scmp.eq.s32.totalorder %s21, 1
    %p228 = scmp.ne.s32.totalorder %s223, %s225
    %p229 = scmp.eq.s32.totalorder %s21, 0
    %p230 = por %p228, %p229
    %p231 = scmp.ne.s32.totalorder %s223, %s225
    %p232 = scmp.eq.s32.totalorder %s26, 1
    %p233 = por %p231, %p232
    %p234 = scmp.ne.s32.totalorder %s225, %s226
    %p235 = scmp.eq.s32.totalorder %s26, 0
    %p236 = por %p234, %p235
    %p237 = scmp.ne.s32.totalorder %s225, %s226
    %p238 = scmp.eq.s32.totalorder %s27, 1
    %p239 = por %p237, %p238
    %p241 = scmp.ne.s32.totalorder %s226, %s240
    %p242 = scmp.eq.s32.totalorder %s27, 0
    %p243 = por %p241, %p242
    %s245 = sadd.s32 %s244, 1
    %p248 = scmp.eq.s32.totalorder %s21, 1
    %p249 = scmp.ne.s32.totalorder %s244, %s246
    %p250 = scmp.eq.s32.totalorder %s21, 0
    %p251 = por %p249, %p250
    %p252 = scmp.ne.s32.totalorder %s244, %s246
    %p253 = scmp.eq.s32.totalorder %s26, 1
    %p254 = por %p252, %p253
    %p255 = scmp.ne.s32.totalorder %s246, %s247
    %p256 = scmp.eq.s32.totalorder %s26, 0
    %p257 = por %p255, %p256
    %p258 = scmp.ne.s32.totalorder %s246, %s247
    %p259 = scmp.eq.s32.totalorder %s27, 1
    %p260 = por %p258, %p259
    %p262 = scmp.ne.s32.totalorder %s247, %s261
    %p263 = scmp.eq.s32.totalorder %s27, 0
    %p264 = por %p262, %p263
    %s266 = sadd.s32 %s265, 1
    %p269 = scmp.eq.s32.totalorder %s21, 1
    %p270 = scmp.ne.s32.totalorder %s265, %s267
    %p271 = scmp.eq.s32.totalorder %s21, 0
    %p272 = por %p270, %p271
    %p273 = scmp.ne.s32.totalorder %s265, %s267
    %p274 = scmp.eq.s32.totalorder %s26, 1
    %p275 = por %p273, %p274
    %p276 = scmp.ne.s32.totalorder %s267, %s268
    %p277 = scmp.eq.s32.totalorder %s26, 0
    %p278 = por %p276, %p277
    %p279 = scmp.ne.s32.totalorder %s267, %s268
    %p280 = scmp.eq.s32.totalorder %s27, 1
    %p281 = por %p279, %p280
    %p283 = scmp.ne.s32.totalorder %s268, %s282
    %p284 = scmp.eq.s32.totalorder %s27, 0
    %p285 = por %p283, %p284
    %s287 = sadd.s32 %s286, 1
    %p290 = scmp.eq.s32.totalorder %s21, 1
    %p291 = scmp.ne.s32.totalorder %s286, %s288
    %p292 = scmp.eq.s32.totalorder %s21, 0
    %p293 = por %p291, %p292
    %p294 = scmp.ne.s32.totalorder %s286, %s288
    %p295 = scmp.eq.s32.totalorder %s26, 1
    %p296 = por %p294, %p295
    %p297 = scmp.ne.s32.totalorder %s288, %s289
    %p298 = scmp.eq.s32.totalorder %s26, 0
    %p299 = por %p297, %p298
    %p300 = scmp.ne.s32.totalorder %s288, %s289
    %p301 = scmp.eq.s32.totalorder %s27, 1
    %p302 = por %p300, %p301
    %p304 = scmp.ne.s32.totalorder %s289, %s303
    %p305 = scmp.eq.s32.totalorder %s27, 0
    %p306 = por %p304, %p305
    %s308 = sadd.s32 %s307, 1
    %p311 = scmp.eq.s32.totalorder %s21, 1
    %p312 = scmp.ne.s32.totalorder %s307, %s309
    %p313 = scmp.eq.s32.totalorder %s21, 0
    %p314 = por %p312, %p313
    %p315 = scmp.ne.s32.totalorder %s307, %s309
    %p316 = scmp.eq.s32.totalorder %s26, 1
    %p317 = por %p315, %p316
    %p318 = scmp.ne.s32.totalorder %s309, %s310
    %p319 = scmp.eq.s32.totalorder %s26, 0
    %p320 = por %p318, %p319
    %p321 = scmp.ne.s32.totalorder %s309, %s310
    %p322 = scmp.eq.s32.totalorder %s27, 1
    %p323 = por %p321, %p322
    %p325 = scmp.ne.s32.totalorder %s310, %s324
    %p326 = scmp.eq.s32.totalorder %s27, 0
    %p327 = por %p325, %p326
    %s329 = sadd.s32 %s328, 1
    %p332 = scmp.eq.s32.totalorder %s21, 1
    %p333 = scmp.ne.s32.totalorder %s328, %s330
    %p334 = scmp.eq.s32.totalorder %s21, 0
    %p335 = por %p333, %p334
    %p336 = scmp.ne.s32.totalorder %s328, %s330
    %p337 = scmp.eq.s32.totalorder %s26, 1
    %p338 = por %p336, %p337
    %p339 = scmp.ne.s32.totalorder %s330, %s331
    %p340 = scmp.eq.s32.totalorder %s26, 0
    %p341 = por %p339, %p340
    %p342 = scmp.ne.s32.totalorder %s330, %s331
    %p343 = scmp.eq.s32.totalorder %s27, 1
    %p344 = por %p342, %p343
    %p346 = scmp.ne.s32.totalorder %s331, %s345
    %p347 = scmp.eq.s32.totalorder %s27, 0
    %p348 = por %p346, %p347
    %s349 = ssub.s32 %s21, %s28
    %p350 = scmp.eq.s32.totalorder %s349, 0
    %s352 = sadd.s32 %s351, 1
    %s353 = scalar_select %p350, %s351, %s352
    %p356 = pneg %p350
    %p357 = scmp.eq.s32.totalorder %s21, 1
    %p358 = por %p356, %p357
    %p359 = scmp.ne.s32.totalorder %s351, %s354
    %p360 = scmp.eq.s32.totalorder %s21, 0
    %p361 = por %p359, %p360
    %p362 = scmp.ne.s32.totalorder %s351, %s354
    %p363 = scmp.eq.s32.totalorder %s26, 1
    %p364 = por %p362, %p363
    %p365 = scmp.ne.s32.totalorder %s354, %s355
    %p366 = scmp.eq.s32.totalorder %s26, 0
    %p367 = por %p365, %p366
    %p368 = scmp.ne.s32.totalorder %s354, %s355
    %p369 = scmp.eq.s32.totalorder %s27, 1
    %p370 = por %p368, %p369
    %p372 = scmp.ne.s32.totalorder %s355, %s371
    %p373 = scmp.eq.s32.totalorder %s27, 0
    %p374 = por %p372, %p373
    %p375 = scmp.le.s32.totalorder 1, %s21
    %p376 = scmp.lt.s32.totalorder %s21, 3
    %p377 = pnand %p375, %p376
    %p378 = pneg %p377
    // Predicated region
    $region9: #{swin_forward_pallas.1} parent=5 // pred_check
      _
    $region10: #{swin_forward_pallas.1} parent=5 // pred_check_branch
      %380 = sbr.rel (%p377) target = $region12
    $region11: #{swin_forward_pallas.1} parent=5 // pred_region
      %s381 = ssub.s32 %s21, 1
      // Predicated region
      $region13: #{swin_forward_pallas.1} parent=11 // pred_check
        %p382 = pneg %p68
      $region14: #{swin_forward_pallas.1} parent=11 // pred_check_branch
        %384 = sbr.rel (%p382) target = $region16
      $region15: #{swin_forward_pallas.1} parent=11 // pred_region
        _
      $region16: #{swin_forward_pallas.1} parent=11 // pred_fallthru
        _
      // Predicated region
      $region17: #{swin_forward_pallas.1} parent=11 // pred_check
        %p385 = pneg %p89
      $region18: #{swin_forward_pallas.1} parent=11 // pred_check_branch
        %387 = sbr.rel (%p385) target = $region20
      $region19: #{swin_forward_pallas.1} parent=11 // pred_region
        _
      $region20: #{swin_forward_pallas.1} parent=11 // pred_fallthru
        _
      // Predicated region
      $region21: #{swin_forward_pallas.1} parent=11 // pred_check
        %p388 = pneg %p110
      $region22: #{swin_forward_pallas.1} parent=11 // pred_check_branch
        %390 = sbr.rel (%p388) target = $region24
      $region23: #{swin_forward_pallas.1} parent=11 // pred_region
        _
      $region24: #{swin_forward_pallas.1} parent=11 // pred_fallthru
        _
      // Predicated region
      $region25: #{swin_forward_pallas.1} parent=11 // pred_check
        %p391 = pneg %p131
      $region26: #{swin_forward_pallas.1} parent=11 // pred_check_branch
        %393 = sbr.rel (%p391) target = $region28
      $region27: #{swin_forward_pallas.1} parent=11 // pred_region
        _
      $region28: #{swin_forward_pallas.1} parent=11 // pred_fallthru
        _
      // Predicated region
      $region29: #{swin_forward_pallas.1} parent=11 // pred_check
        %p394 = pneg %p152
      $region30: #{swin_forward_pallas.1} parent=11 // pred_check_branch
        %396 = sbr.rel (%p394) target = $region32
      $region31: #{swin_forward_pallas.1} parent=11 // pred_region
        _
      $region32: #{swin_forward_pallas.1} parent=11 // pred_fallthru
        _
      // Predicated region
      $region33: #{swin_forward_pallas.1} parent=11 // pred_check
        %p397 = pneg %p173
      $region34: #{swin_forward_pallas.1} parent=11 // pred_check_branch
        %399 = sbr.rel (%p397) target = $region36
      $region35: #{swin_forward_pallas.1} parent=11 // pred_region
        _
      $region36: #{swin_forward_pallas.1} parent=11 // pred_fallthru
        _
      // Predicated region
      $region37: #{swin_forward_pallas.1} parent=11 // pred_check
        %p400 = pneg %p194
      $region38: #{swin_forward_pallas.1} parent=11 // pred_check_branch
        %402 = sbr.rel (%p400) target = $region40
      $region39: #{swin_forward_pallas.1} parent=11 // pred_region
        _
      $region40: #{swin_forward_pallas.1} parent=11 // pred_fallthru
        _
      // Predicated region
      $region41: #{swin_forward_pallas.1} parent=11 // pred_check
        %p403 = pneg %p215
      $region42: #{swin_forward_pallas.1} parent=11 // pred_check_branch
        %405 = sbr.rel (%p403) target = $region44
      $region43: #{swin_forward_pallas.1} parent=11 // pred_region
        _
      $region44: #{swin_forward_pallas.1} parent=11 // pred_fallthru
        _
      // Predicated region
      $region45: #{swin_forward_pallas.1} parent=11 // pred_check
        %p406 = pneg %p236
      $region46: #{swin_forward_pallas.1} parent=11 // pred_check_branch
        %408 = sbr.rel (%p406) target = $region48
      $region47: #{swin_forward_pallas.1} parent=11 // pred_region
        _
      $region48: #{swin_forward_pallas.1} parent=11 // pred_fallthru
        _
      // Predicated region
      $region49: #{swin_forward_pallas.1} parent=11 // pred_check
        %p409 = pneg %p257
      $region50: #{swin_forward_pallas.1} parent=11 // pred_check_branch
        %411 = sbr.rel (%p409) target = $region52
      $region51: #{swin_forward_pallas.1} parent=11 // pred_region
        _
      $region52: #{swin_forward_pallas.1} parent=11 // pred_fallthru
        _
      // Predicated region
      $region53: #{swin_forward_pallas.1} parent=11 // pred_check
        %p412 = pneg %p278
      $region54: #{swin_forward_pallas.1} parent=11 // pred_check_branch
        %414 = sbr.rel (%p412) target = $region56
      $region55: #{swin_forward_pallas.1} parent=11 // pred_region
        _
      $region56: #{swin_forward_pallas.1} parent=11 // pred_fallthru
        _
      // Predicated region
      $region57: #{swin_forward_pallas.1} parent=11 // pred_check
        %p415 = pneg %p299
      $region58: #{swin_forward_pallas.1} parent=11 // pred_check_branch
        %417 = sbr.rel (%p415) target = $region60
      $region59: #{swin_forward_pallas.1} parent=11 // pred_region
        _
      $region60: #{swin_forward_pallas.1} parent=11 // pred_fallthru
        _
      // Predicated region
      $region61: #{swin_forward_pallas.1} parent=11 // pred_check
        %p418 = pneg %p320
      $region62: #{swin_forward_pallas.1} parent=11 // pred_check_branch
        %420 = sbr.rel (%p418) target = $region64
      $region63: #{swin_forward_pallas.1} parent=11 // pred_region
        _
      $region64: #{swin_forward_pallas.1} parent=11 // pred_fallthru
        _
      // Predicated region
      $region65: #{swin_forward_pallas.1} parent=11 // pred_check
        %p421 = pneg %p341
      $region66: #{swin_forward_pallas.1} parent=11 // pred_check_branch
        %423 = sbr.rel (%p421) target = $region68
      $region67: #{swin_forward_pallas.1} parent=11 // pred_region
        _
      $region68: #{swin_forward_pallas.1} parent=11 // pred_fallthru
        _
    $region12: #{swin_forward_pallas.1} parent=5 // pred_fallthru
      _
    %p424 = scmp.lt.s32.totalorder %s21, 2
    // Predicated region
    $region69: #{swin_forward_pallas.1} parent=5 // pred_check
      %p425 = pneg %p424
    $region70: #{swin_forward_pallas.1} parent=5 // pred_check_branch
      %427 = sbr.rel (%p425) target = $region72
    $region71: #{swin_forward_pallas.1} parent=5 // pred_region
      // Predicated region
      $region73: #{swin_forward_pallas.1} parent=71 // pred_check
        %p428 = pneg %p41
      $region74: #{swin_forward_pallas.1} parent=71 // pred_check_branch
        %430 = sbr.rel (%p428) target = $region76
      $region75: #{swin_forward_pallas.1} parent=71 // pred_region
        %p431 = scmp.lt.s32.totalorder %s21, 1
        %s432 = scalar_select %p431, %s21, 1
        %s433 = smul.addr %s432, 32
        %s434 = smul.addr %s433, 8
        %s435 = scalar_lea.vmem %s0, %s434
      $region76: #{swin_forward_pallas.1} parent=71 // pred_fallthru
        _
    $region72: #{swin_forward_pallas.1} parent=5 // pred_fallthru
      _
    %p436 = scmp.le.s32.totalorder 1, %s21
    %p437 = scmp.lt.s32.totalorder %s21, 3
    %p438 = pnand %p436, %p437
    %p439 = pneg %p438
    // Predicated region
    $region77: #{swin_forward_pallas.1} parent=5 // pred_check
      _
    $region78: #{swin_forward_pallas.1} parent=5 // pred_check_branch
      %441 = sbr.rel (%p438) target = $region80
    $region79: #{swin_forward_pallas.1} parent=5 // pred_region
      %s442 = ssub.s32 %s21, 1
      %p443 = scmp.lt.s32.totalorder %s26, 1
      %s444 = scalar_select %p443, %s26, 1
      %s445 = smul.addr %s444, 32
      %s446 = smul.addr %s445, 8
      %s447 = scalar_lea.vmem %s0, %s446
      %p448 = pneg %p47
      %p449 = pneg %p44
      %p450 = pneg %p68
      %p451 = pneg %p65
      %p452 = pneg %p89
      %p453 = pneg %p86
      %p454 = pneg %p110
      %p455 = pneg %p107
      %p456 = pneg %p131
      %p457 = pneg %p128
      %p458 = pneg %p152
      %p459 = pneg %p149
      %p460 = pneg %p173
      %p461 = pneg %p170
      %p462 = pneg %p194
      %p463 = pneg %p191
      %p464 = pneg %p215
      %p465 = pneg %p212
      %p466 = pneg %p236
      %p467 = pneg %p233
      %p468 = pneg %p257
      %p469 = pneg %p254
      %p470 = pneg %p278
      %p471 = pneg %p275
      %p472 = pneg %p299
      %p473 = pneg %p296
      %p474 = pneg %p320
      %p475 = pneg %p317
      %p476 = pneg %p341
      %p477 = pneg %p338
      %p478 = pneg %p367
      %p479 = pneg %p364
      %p480 = scmp.lt.s32.totalorder %s26, 1
      %s481 = scalar_select %p480, %s26, 1
      %s482 = smul.addr %s481, 32
      %s483 = smul.addr %s482, 8
      %s484 = scalar_lea.vmem %s15, %s483
      %p485 = scmp.lt.s32.totalorder %s26, 1
      %s486 = scalar_select %p485, %s26, 1
      %s487 = smul.addr %s486, 32
      %s488 = smul.addr %s487, 8
      %s489 = scalar_lea.vmem %s0, %s488
      %p490 = scmp.lt.s32.totalorder %s26, 1
      %s491 = scalar_select %p490, %s26, 1
      %s492 = smul.addr %s491, 32
      %s493 = smul.addr %s492, 8
      %s494 = scalar_lea.vmem %s15, %s493
      %v496 = vld [vmem:[%s489] sm:$0xff]
      %v497 = vld [vmem:[%s489 + $0x8] sm:$0xff]
      %v498 = vld [vmem:[%s489 + $0x10] sm:$0xff]
      %v499 = vld [vmem:[%s489 + $0x18] sm:$0xff]
      %v500 = vld [vmem:[%s489 + $0x20] sm:$0xff]
      %v501 = vld [vmem:[%s489 + $0x28] sm:$0xff]
      %v502 = vld [vmem:[%s489 + $0x30] sm:$0xff]
      %v503 = vld [vmem:[%s489 + $0x38] sm:$0xff]
      %v504 = vld [vmem:[%s489 + $0x40] sm:$0xff]
      %v505 = vld [vmem:[%s489 + $0x48] sm:$0xff]
      %v506 = vld [vmem:[%s489 + $0x50] sm:$0xff]
      %v507 = vld [vmem:[%s489 + $0x58] sm:$0xff]
      %v508 = vld [vmem:[%s489 + $0x60] sm:$0xff]
      %v509 = vld [vmem:[%s489 + $0x68] sm:$0xff]
      %v510 = vld [vmem:[%s489 + $0x70] sm:$0xff]
      %v511 = vld [vmem:[%s489 + $0x78] sm:$0xff]
      %v512 = vld [vmem:[%s489 + $0x80] sm:$0xff]
      %v513 = vld [vmem:[%s489 + $0x88] sm:$0xff]
      %v514 = vld [vmem:[%s489 + $0x90] sm:$0xff]
      %v515 = vld [vmem:[%s489 + $0x98] sm:$0xff]
      %v516 = vld [vmem:[%s489 + $0xa0] sm:$0xff]
      %v517 = vld [vmem:[%s489 + $0xa8] sm:$0xff]
      %v518 = vld [vmem:[%s489 + $0xb0] sm:$0xff]
      %v519 = vld [vmem:[%s489 + $0xb8] sm:$0xff]
      %v520 = vld [vmem:[%s489 + $0xc0] sm:$0xff]
      %v521 = vld [vmem:[%s489 + $0xc8] sm:$0xff]
      %v522 = vld [vmem:[%s489 + $0xd0] sm:$0xff]
      %v523 = vld [vmem:[%s489 + $0xd8] sm:$0xff]
      %v524 = vld [vmem:[%s489 + $0xe0] sm:$0xff]
      %v525 = vld [vmem:[%s489 + $0xe8] sm:$0xff]
      %v526 = vld [vmem:[%s489 + $0xf0] sm:$0xff]
      %v527 = vld [vmem:[%s489 + $0xf8] sm:$0xff]
      %v528 = vld [vmem:[%s3] sm:$0x1]
      %v529 = vld [vmem:[%s4] sm:$0x1]
      %vm530 = vcmask 261120
      %v531 = vsel %vm530, %v496, 0.0
      %532 = vadd.xlane.f32.xlu0 %v531
      %v533 = vpop.xlane.xlu0 %532
      %v534 = vsel %vm530, %v497, 0.0
      %535 = vadd.xlane.f32.xlu0 %v534
      %v536 = vpop.xlane.xlu0 %535
      %v537 = vsel %vm530, %v498, 0.0
      %538 = vadd.xlane.f32.xlu0 %v537
      %v539 = vpop.xlane.xlu0 %538
      %v540 = vsel %vm530, %v499, 0.0
      %541 = vadd.xlane.f32.xlu0 %v540
      %v542 = vpop.xlane.xlu0 %541
      %v543 = vsel %vm530, %v500, 0.0
      %544 = vadd.xlane.f32.xlu0 %v543
      %v545 = vpop.xlane.xlu0 %544
      %v546 = vsel %vm530, %v501, 0.0
      %547 = vadd.xlane.f32.xlu0 %v546
      %v548 = vpop.xlane.xlu0 %547
      %v549 = vsel %vm530, %v502, 0.0
      %550 = vadd.xlane.f32.xlu0 %v549
      %v551 = vpop.xlane.xlu0 %550
      %v552 = vsel %vm530, %v503, 0.0
      %553 = vadd.xlane.f32.xlu0 %v552
      %v554 = vpop.xlane.xlu0 %553
      %v555 = vsel %vm530, %v504, 0.0
      %556 = vadd.xlane.f32.xlu0 %v555
      %v557 = vpop.xlane.xlu0 %556
      %v558 = vsel %vm530, %v505, 0.0
      %559 = vadd.xlane.f32.xlu0 %v558
      %v560 = vpop.xlane.xlu0 %559
      %v561 = vsel %vm530, %v506, 0.0
      %562 = vadd.xlane.f32.xlu0 %v561
      %v563 = vpop.xlane.xlu0 %562
      %v564 = vsel %vm530, %v507, 0.0
      %565 = vadd.xlane.f32.xlu0 %v564
      %v566 = vpop.xlane.xlu0 %565
      %v567 = vsel %vm530, %v508, 0.0
      %568 = vadd.xlane.f32.xlu0 %v567
      %v569 = vpop.xlane.xlu0 %568
      %v570 = vsel %vm530, %v509, 0.0
      %571 = vadd.xlane.f32.xlu0 %v570
      %v572 = vpop.xlane.xlu0 %571
      %v573 = vsel %vm530, %v510, 0.0
      %574 = vadd.xlane.f32.xlu0 %v573
      %v575 = vpop.xlane.xlu0 %574
      %v576 = vsel %vm530, %v511, 0.0
      %577 = vadd.xlane.f32.xlu0 %v576
      %v578 = vpop.xlane.xlu0 %577
      %v579 = vsel %vm530, %v512, 0.0
      %580 = vadd.xlane.f32.xlu0 %v579
      %v581 = vpop.xlane.xlu0 %580
      %v582 = vsel %vm530, %v513, 0.0
      %583 = vadd.xlane.f32.xlu0 %v582
      %v584 = vpop.xlane.xlu0 %583
      %v585 = vsel %vm530, %v514, 0.0
      %586 = vadd.xlane.f32.xlu0 %v585
      %v587 = vpop.xlane.xlu0 %586
      %v588 = vsel %vm530, %v515, 0.0
      %589 = vadd.xlane.f32.xlu0 %v588
      %v590 = vpop.xlane.xlu0 %589
      %v591 = vsel %vm530, %v516, 0.0
      %592 = vadd.xlane.f32.xlu0 %v591
      %v593 = vpop.xlane.xlu0 %592
      %v594 = vsel %vm530, %v517, 0.0
      %595 = vadd.xlane.f32.xlu0 %v594
      %v596 = vpop.xlane.xlu0 %595
      %v597 = vsel %vm530, %v518, 0.0
      %598 = vadd.xlane.f32.xlu0 %v597
      %v599 = vpop.xlane.xlu0 %598
      %v600 = vsel %vm530, %v519, 0.0
      %601 = vadd.xlane.f32.xlu0 %v600
      %v602 = vpop.xlane.xlu0 %601
      %v603 = vsel %vm530, %v520, 0.0
      %604 = vadd.xlane.f32.xlu0 %v603
      %v605 = vpop.xlane.xlu0 %604
      %v606 = vsel %vm530, %v521, 0.0
      %607 = vadd.xlane.f32.xlu0 %v606
      %v608 = vpop.xlane.xlu0 %607
      %v609 = vsel %vm530, %v522, 0.0
      %610 = vadd.xlane.f32.xlu0 %v609
      %v611 = vpop.xlane.xlu0 %610
      %v612 = vsel %vm530, %v523, 0.0
      %613 = vadd.xlane.f32.xlu0 %v612
      %v614 = vpop.xlane.xlu0 %613
      %v615 = vsel %vm530, %v524, 0.0
      %616 = vadd.xlane.f32.xlu0 %v615
      %v617 = vpop.xlane.xlu0 %616
      %v618 = vsel %vm530, %v525, 0.0
      %619 = vadd.xlane.f32.xlu0 %v618
      %v620 = vpop.xlane.xlu0 %619
      %v621 = vsel %vm530, %v526, 0.0
      %622 = vadd.xlane.f32.xlu0 %v621
      %v623 = vpop.xlane.xlu0 %622
      %v624 = vsel %vm530, %v527, 0.0
      %625 = vadd.xlane.f32.xlu0 %v624
      %v626 = vpop.xlane.xlu0 %625
      %v627 = vrcp.pop 32.0
      %v628 = vmul.f32 32.0, %v627
      %v629 = vsub.f32 1.0, %v628
      %v630 = vmul.f32 %v627, %v629
      %v631 = vadd.f32 %v627, %v630
      %vm632 = vweird.f32 %v627
      %v633 = vsel %vm632, %v627, %v631
      %v634 = vmul.f32 %v533, %v633
      %v635 = vmul.f32 %v536, %v633
      %v636 = vmul.f32 %v539, %v633
      %v637 = vmul.f32 %v542, %v633
      %v638 = vmul.f32 %v545, %v633
      %v639 = vmul.f32 %v548, %v633
      %v640 = vmul.f32 %v551, %v633
      %v641 = vmul.f32 %v554, %v633
      %v642 = vmul.f32 %v557, %v633
      %v643 = vmul.f32 %v560, %v633
      %v644 = vmul.f32 %v563, %v633
      %v645 = vmul.f32 %v566, %v633
      %v646 = vmul.f32 %v569, %v633
      %v647 = vmul.f32 %v572, %v633
      %v648 = vmul.f32 %v575, %v633
      %v649 = vmul.f32 %v578, %v633
      %v650 = vmul.f32 %v581, %v633
      %v651 = vmul.f32 %v584, %v633
      %v652 = vmul.f32 %v587, %v633
      %v653 = vmul.f32 %v590, %v633
      %v654 = vmul.f32 %v593, %v633
      %v655 = vmul.f32 %v596, %v633
      %v656 = vmul.f32 %v599, %v633
      %v657 = vmul.f32 %v602, %v633
      %v658 = vmul.f32 %v605, %v633
      %v659 = vmul.f32 %v608, %v633
      %v660 = vmul.f32 %v611, %v633
      %v661 = vmul.f32 %v614, %v633
      %v662 = vmul.f32 %v617, %v633
      %v663 = vmul.f32 %v620, %v633
      %v664 = vmul.f32 %v623, %v633
      %v665 = vmul.f32 %v626, %v633
      %v666 = vsub.f32 %v496, %v634
      %v667 = vsub.f32 %v497, %v635
      %v668 = vsub.f32 %v498, %v636
      %v669 = vsub.f32 %v499, %v637
      %v670 = vsub.f32 %v500, %v638
      %v671 = vsub.f32 %v501, %v639
      %v672 = vsub.f32 %v502, %v640
      %v673 = vsub.f32 %v503, %v641
      %v674 = vsub.f32 %v504, %v642
      %v675 = vsub.f32 %v505, %v643
      %v676 = vsub.f32 %v506, %v644
      %v677 = vsub.f32 %v507, %v645
      %v678 = vsub.f32 %v508, %v646
      %v679 = vsub.f32 %v509, %v647
      %v680 = vsub.f32 %v510, %v648
      %v681 = vsub.f32 %v511, %v649
      %v682 = vsub.f32 %v512, %v650
      %v683 = vsub.f32 %v513, %v651
      %v684 = vsub.f32 %v514, %v652
      %v685 = vsub.f32 %v515, %v653
      %v686 = vsub.f32 %v516, %v654
      %v687 = vsub.f32 %v517, %v655
      %v688 = vsub.f32 %v518, %v656
      %v689 = vsub.f32 %v519, %v657
      %v690 = vsub.f32 %v520, %v658
      %v691 = vsub.f32 %v521, %v659
      %v692 = vsub.f32 %v522, %v660
      %v693 = vsub.f32 %v523, %v661
      %v694 = vsub.f32 %v524, %v662
      %v695 = vsub.f32 %v525, %v663
      %v696 = vsub.f32 %v526, %v664
      %v697 = vsub.f32 %v527, %v665
      %v698 = vmul.f32 %v666, %v666
      %v699 = vmul.f32 %v667, %v667
      %v700 = vmul.f32 %v668, %v668
      %v701 = vmul.f32 %v669, %v669
      %v702 = vmul.f32 %v670, %v670
      %v703 = vmul.f32 %v671, %v671
      %v704 = vmul.f32 %v672, %v672
      %v705 = vmul.f32 %v673, %v673
      %v706 = vmul.f32 %v674, %v674
      %v707 = vmul.f32 %v675, %v675
      %v708 = vmul.f32 %v676, %v676
      %v709 = vmul.f32 %v677, %v677
      %v710 = vmul.f32 %v678, %v678
      %v711 = vmul.f32 %v679, %v679
      %v712 = vmul.f32 %v680, %v680
      %v713 = vmul.f32 %v681, %v681
      %v714 = vmul.f32 %v682, %v682
      %v715 = vmul.f32 %v683, %v683
      %v716 = vmul.f32 %v684, %v684
      %v717 = vmul.f32 %v685, %v685
      %v718 = vmul.f32 %v686, %v686
      %v719 = vmul.f32 %v687, %v687
      %v720 = vmul.f32 %v688, %v688
      %v721 = vmul.f32 %v689, %v689
      %v722 = vmul.f32 %v690, %v690
      %v723 = vmul.f32 %v691, %v691
      %v724 = vmul.f32 %v692, %v692
      %v725 = vmul.f32 %v693, %v693
      %v726 = vmul.f32 %v694, %v694
      %v727 = vmul.f32 %v695, %v695
      %v728 = vmul.f32 %v696, %v696
      %v729 = vmul.f32 %v697, %v697
      %v730 = vsel %vm530, %v698, 0.0
      %731 = vadd.xlane.f32.xlu0 %v730
      %v732 = vpop.xlane.xlu0 %731
      %v733 = vsel %vm530, %v699, 0.0
      %734 = vadd.xlane.f32.xlu0 %v733
      %v735 = vpop.xlane.xlu0 %734
      %v736 = vsel %vm530, %v700, 0.0
      %737 = vadd.xlane.f32.xlu0 %v736
      %v738 = vpop.xlane.xlu0 %737
      %v739 = vsel %vm530, %v701, 0.0
      %740 = vadd.xlane.f32.xlu0 %v739
      %v741 = vpop.xlane.xlu0 %740
      %v742 = vsel %vm530, %v702, 0.0
      %743 = vadd.xlane.f32.xlu0 %v742
      %v744 = vpop.xlane.xlu0 %743
      %v745 = vsel %vm530, %v703, 0.0
      %746 = vadd.xlane.f32.xlu0 %v745
      %v747 = vpop.xlane.xlu0 %746
      %v748 = vsel %vm530, %v704, 0.0
      %749 = vadd.xlane.f32.xlu0 %v748
      %v750 = vpop.xlane.xlu0 %749
      %v751 = vsel %vm530, %v705, 0.0
      %752 = vadd.xlane.f32.xlu0 %v751
      %v753 = vpop.xlane.xlu0 %752
      %v754 = vsel %vm530, %v706, 0.0
      %755 = vadd.xlane.f32.xlu0 %v754
      %v756 = vpop.xlane.xlu0 %755
      %v757 = vsel %vm530, %v707, 0.0
      %758 = vadd.xlane.f32.xlu0 %v757
      %v759 = vpop.xlane.xlu0 %758
      %v760 = vsel %vm530, %v708, 0.0
      %761 = vadd.xlane.f32.xlu0 %v760
      %v762 = vpop.xlane.xlu0 %761
      %v763 = vsel %vm530, %v709, 0.0
      %764 = vadd.xlane.f32.xlu0 %v763
      %v765 = vpop.xlane.xlu0 %764
      %v766 = vsel %vm530, %v710, 0.0
      %767 = vadd.xlane.f32.xlu0 %v766
      %v768 = vpop.xlane.xlu0 %767
      %v769 = vsel %vm530, %v711, 0.0
      %770 = vadd.xlane.f32.xlu0 %v769
      %v771 = vpop.xlane.xlu0 %770
      %v772 = vsel %vm530, %v712, 0.0
      %773 = vadd.xlane.f32.xlu0 %v772
      %v774 = vpop.xlane.xlu0 %773
      %v775 = vsel %vm530, %v713, 0.0
      %776 = vadd.xlane.f32.xlu0 %v775
      %v777 = vpop.xlane.xlu0 %776
      %v778 = vsel %vm530, %v714, 0.0
      %779 = vadd.xlane.f32.xlu0 %v778
      %v780 = vpop.xlane.xlu0 %779
      %v781 = vsel %vm530, %v715, 0.0
      %782 = vadd.xlane.f32.xlu0 %v781
      %v783 = vpop.xlane.xlu0 %782
      %v784 = vsel %vm530, %v716, 0.0
      %785 = vadd.xlane.f32.xlu0 %v784
      %v786 = vpop.xlane.xlu0 %785
      %v787 = vsel %vm530, %v717, 0.0
      %788 = vadd.xlane.f32.xlu0 %v787
      %v789 = vpop.xlane.xlu0 %788
      %v790 = vsel %vm530, %v718, 0.0
      %791 = vadd.xlane.f32.xlu0 %v790
      %v792 = vpop.xlane.xlu0 %791
      %v793 = vsel %vm530, %v719, 0.0
      %794 = vadd.xlane.f32.xlu0 %v793
      %v795 = vpop.xlane.xlu0 %794
      %v796 = vsel %vm530, %v720, 0.0
      %797 = vadd.xlane.f32.xlu0 %v796
      %v798 = vpop.xlane.xlu0 %797
      %v799 = vsel %vm530, %v721, 0.0
      %800 = vadd.xlane.f32.xlu0 %v799
      %v801 = vpop.xlane.xlu0 %800
      %v802 = vsel %vm530, %v722, 0.0
      %803 = vadd.xlane.f32.xlu0 %v802
      %v804 = vpop.xlane.xlu0 %803
      %v805 = vsel %vm530, %v723, 0.0
      %806 = vadd.xlane.f32.xlu0 %v805
      %v807 = vpop.xlane.xlu0 %806
      %v808 = vsel %vm530, %v724, 0.0
      %809 = vadd.xlane.f32.xlu0 %v808
      %v810 = vpop.xlane.xlu0 %809
      %v811 = vsel %vm530, %v725, 0.0
      %812 = vadd.xlane.f32.xlu0 %v811
      %v813 = vpop.xlane.xlu0 %812
      %v814 = vsel %vm530, %v726, 0.0
      %815 = vadd.xlane.f32.xlu0 %v814
      %v816 = vpop.xlane.xlu0 %815
      %v817 = vsel %vm530, %v727, 0.0
      %818 = vadd.xlane.f32.xlu0 %v817
      %v819 = vpop.xlane.xlu0 %818
      %v820 = vsel %vm530, %v728, 0.0
      %821 = vadd.xlane.f32.xlu0 %v820
      %v822 = vpop.xlane.xlu0 %821
      %v823 = vsel %vm530, %v729, 0.0
      %824 = vadd.xlane.f32.xlu0 %v823
      %v825 = vpop.xlane.xlu0 %824
      %v826 = vmul.f32 %v732, %v633
      %v827 = vmul.f32 %v735, %v633
      %v828 = vmul.f32 %v738, %v633
      %v829 = vmul.f32 %v741, %v633
      %v830 = vmul.f32 %v744, %v633
      %v831 = vmul.f32 %v747, %v633
      %v832 = vmul.f32 %v750, %v633
      %v833 = vmul.f32 %v753, %v633
      %v834 = vmul.f32 %v756, %v633
      %v835 = vmul.f32 %v759, %v633
      %v836 = vmul.f32 %v762, %v633
      %v837 = vmul.f32 %v765, %v633
      %v838 = vmul.f32 %v768, %v633
      %v839 = vmul.f32 %v771, %v633
      %v840 = vmul.f32 %v774, %v633
      %v841 = vmul.f32 %v777, %v633
      %v842 = vmul.f32 %v780, %v633
      %v843 = vmul.f32 %v783, %v633
      %v844 = vmul.f32 %v786, %v633
      %v845 = vmul.f32 %v789, %v633
      %v846 = vmul.f32 %v792, %v633
      %v847 = vmul.f32 %v795, %v633
      %v848 = vmul.f32 %v798, %v633
      %v849 = vmul.f32 %v801, %v633
      %v850 = vmul.f32 %v804, %v633
      %v851 = vmul.f32 %v807, %v633
      %v852 = vmul.f32 %v810, %v633
      %v853 = vmul.f32 %v813, %v633
      %v854 = vmul.f32 %v816, %v633
      %v855 = vmul.f32 %v819, %v633
      %v856 = vmul.f32 %v822, %v633
      %v857 = vmul.f32 %v825, %v633
      %v858 = vadd.f32 %v826, 1e-05
      %v859 = vadd.f32 %v827, 1e-05
      %v860 = vadd.f32 %v828, 1e-05
      %v861 = vadd.f32 %v829, 1e-05
      %v862 = vadd.f32 %v830, 1e-05
      %v863 = vadd.f32 %v831, 1e-05
      %v864 = vadd.f32 %v832, 1e-05
      %v865 = vadd.f32 %v833, 1e-05
      %v866 = vadd.f32 %v834, 1e-05
      %v867 = vadd.f32 %v835, 1e-05
      %v868 = vadd.f32 %v836, 1e-05
      %v869 = vadd.f32 %v837, 1e-05
      %v870 = vadd.f32 %v838, 1e-05
      %v871 = vadd.f32 %v839, 1e-05
      %v872 = vadd.f32 %v840, 1e-05
      %v873 = vadd.f32 %v841, 1e-05
      %v874 = vadd.f32 %v842, 1e-05
      %v875 = vadd.f32 %v843, 1e-05
      %v876 = vadd.f32 %v844, 1e-05
      %v877 = vadd.f32 %v845, 1e-05
      %v878 = vadd.f32 %v846, 1e-05
      %v879 = vadd.f32 %v847, 1e-05
      %v880 = vadd.f32 %v848, 1e-05
      %v881 = vadd.f32 %v849, 1e-05
      %v882 = vadd.f32 %v850, 1e-05
      %v883 = vadd.f32 %v851, 1e-05
      %v884 = vadd.f32 %v852, 1e-05
      %v885 = vadd.f32 %v853, 1e-05
      %v886 = vadd.f32 %v854, 1e-05
      %v887 = vadd.f32 %v855, 1e-05
      %v888 = vadd.f32 %v856, 1e-05
      %v889 = vadd.f32 %v857, 1e-05
      %v890 = vrsqrt.pop %v858
      %v891 = vmul.f32 %v890, %v858
      %v892 = vmul.f32 %v891, %v890
      %v893 = vmul.f32 0.5, %v892
      %v894 = vsub.f32 1.5, %v893
      %v895 = vmul.f32 %v890, %v894
      %vm896 = vweird.f32 %v858
      %vm897 = vweird.f32 %v890
      %vm898 = vmor %vm896, %vm897
      %v899 = vsel %vm898, %v890, %v895
      %v900 = vrsqrt.pop %v859
      %v901 = vmul.f32 %v900, %v859
      %v902 = vmul.f32 %v901, %v900
      %v903 = vmul.f32 0.5, %v902
      %v904 = vsub.f32 1.5, %v903
      %v905 = vmul.f32 %v900, %v904
      %vm906 = vweird.f32 %v859
      %vm907 = vweird.f32 %v900
      %vm908 = vmor %vm906, %vm907
      %v909 = vsel %vm908, %v900, %v905
      %v910 = vrsqrt.pop %v860
      %v911 = vmul.f32 %v910, %v860
      %v912 = vmul.f32 %v911, %v910
      %v913 = vmul.f32 0.5, %v912
      %v914 = vsub.f32 1.5, %v913
      %v915 = vmul.f32 %v910, %v914
      %vm916 = vweird.f32 %v860
      %vm917 = vweird.f32 %v910
      %vm918 = vmor %vm916, %vm917
      %v919 = vsel %vm918, %v910, %v915
      %v920 = vrsqrt.pop %v861
      %v921 = vmul.f32 %v920, %v861
      %v922 = vmul.f32 %v921, %v920
      %v923 = vmul.f32 0.5, %v922
      %v924 = vsub.f32 1.5, %v923
      %v925 = vmul.f32 %v920, %v924
      %vm926 = vweird.f32 %v861
      %vm927 = vweird.f32 %v920
      %vm928 = vmor %vm926, %vm927
      %v929 = vsel %vm928, %v920, %v925
      %v930 = vrsqrt.pop %v862
      %v931 = vmul.f32 %v930, %v862
      %v932 = vmul.f32 %v931, %v930
      %v933 = vmul.f32 0.5, %v932
      %v934 = vsub.f32 1.5, %v933
      %v935 = vmul.f32 %v930, %v934
      %vm936 = vweird.f32 %v862
      %vm937 = vweird.f32 %v930
      %vm938 = vmor %vm936, %vm937
      %v939 = vsel %vm938, %v930, %v935
      %v940 = vrsqrt.pop %v863
      %v941 = vmul.f32 %v940, %v863
      %v942 = vmul.f32 %v941, %v940
      %v943 = vmul.f32 0.5, %v942
      %v944 = vsub.f32 1.5, %v943
      %v945 = vmul.f32 %v940, %v944
      %vm946 = vweird.f32 %v863
      %vm947 = vweird.f32 %v940
      %vm948 = vmor %vm946, %vm947
      %v949 = vsel %vm948, %v940, %v945
      %v950 = vrsqrt.pop %v864
      %v951 = vmul.f32 %v950, %v864
      %v952 = vmul.f32 %v951, %v950
      %v953 = vmul.f32 0.5, %v952
      %v954 = vsub.f32 1.5, %v953
      %v955 = vmul.f32 %v950, %v954
      %vm956 = vweird.f32 %v864
      %vm957 = vweird.f32 %v950
      %vm958 = vmor %vm956, %vm957
      %v959 = vsel %vm958, %v950, %v955
      %v960 = vrsqrt.pop %v865
      %v961 = vmul.f32 %v960, %v865
      %v962 = vmul.f32 %v961, %v960
      %v963 = vmul.f32 0.5, %v962
      %v964 = vsub.f32 1.5, %v963
      %v965 = vmul.f32 %v960, %v964
      %vm966 = vweird.f32 %v865
      %vm967 = vweird.f32 %v960
      %vm968 = vmor %vm966, %vm967
      %v969 = vsel %vm968, %v960, %v965
      %v970 = vrsqrt.pop %v866
      %v971 = vmul.f32 %v970, %v866
      %v972 = vmul.f32 %v971, %v970
      %v973 = vmul.f32 0.5, %v972
      %v974 = vsub.f32 1.5, %v973
      %v975 = vmul.f32 %v970, %v974
      %vm976 = vweird.f32 %v866
      %vm977 = vweird.f32 %v970
      %vm978 = vmor %vm976, %vm977
      %v979 = vsel %vm978, %v970, %v975
      %v980 = vrsqrt.pop %v867
      %v981 = vmul.f32 %v980, %v867
      %v982 = vmul.f32 %v981, %v980
      %v983 = vmul.f32 0.5, %v982
      %v984 = vsub.f32 1.5, %v983
      %v985 = vmul.f32 %v980, %v984
      %vm986 = vweird.f32 %v867
      %vm987 = vweird.f32 %v980
      %vm988 = vmor %vm986, %vm987
      %v989 = vsel %vm988, %v980, %v985
      %v990 = vrsqrt.pop %v868
      %v991 = vmul.f32 %v990, %v868
      %v992 = vmul.f32 %v991, %v990
      %v993 = vmul.f32 0.5, %v992
      %v994 = vsub.f32 1.5, %v993
      %v995 = vmul.f32 %v990, %v994
      %vm996 = vweird.f32 %v868
      %vm997 = vweird.f32 %v990
      %vm998 = vmor %vm996, %vm997
      %v999 = vsel %vm998, %v990, %v995
      %v1000 = vrsqrt.pop %v869
      %v1001 = vmul.f32 %v1000, %v869
      %v1002 = vmul.f32 %v1001, %v1000
      %v1003 = vmul.f32 0.5, %v1002
      %v1004 = vsub.f32 1.5, %v1003
      %v1005 = vmul.f32 %v1000, %v1004
      %vm1006 = vweird.f32 %v869
      %vm1007 = vweird.f32 %v1000
      %vm1008 = vmor %vm1006, %vm1007
      %v1009 = vsel %vm1008, %v1000, %v1005
      %v1010 = vrsqrt.pop %v870
      %v1011 = vmul.f32 %v1010, %v870
      %v1012 = vmul.f32 %v1011, %v1010
      %v1013 = vmul.f32 0.5, %v1012
      %v1014 = vsub.f32 1.5, %v1013
      %v1015 = vmul.f32 %v1010, %v1014
      %vm1016 = vweird.f32 %v870
      %vm1017 = vweird.f32 %v1010
      %vm1018 = vmor %vm1016, %vm1017
      %v1019 = vsel %vm1018, %v1010, %v1015
      %v1020 = vrsqrt.pop %v871
      %v1021 = vmul.f32 %v1020, %v871
      %v1022 = vmul.f32 %v1021, %v1020
      %v1023 = vmul.f32 0.5, %v1022
      %v1024 = vsub.f32 1.5, %v1023
      %v1025 = vmul.f32 %v1020, %v1024
      %vm1026 = vweird.f32 %v871
      %vm1027 = vweird.f32 %v1020
      %vm1028 = vmor %vm1026, %vm1027
      %v1029 = vsel %vm1028, %v1020, %v1025
      %v1030 = vrsqrt.pop %v872
      %v1031 = vmul.f32 %v1030, %v872
      %v1032 = vmul.f32 %v1031, %v1030
      %v1033 = vmul.f32 0.5, %v1032
      %v1034 = vsub.f32 1.5, %v1033
      %v1035 = vmul.f32 %v1030, %v1034
      %vm1036 = vweird.f32 %v872
      %vm1037 = vweird.f32 %v1030
      %vm1038 = vmor %vm1036, %vm1037
      %v1039 = vsel %vm1038, %v1030, %v1035
      %v1040 = vrsqrt.pop %v873
      %v1041 = vmul.f32 %v1040, %v873
      %v1042 = vmul.f32 %v1041, %v1040
      %v1043 = vmul.f32 0.5, %v1042
      %v1044 = vsub.f32 1.5, %v1043
      %v1045 = vmul.f32 %v1040, %v1044
      %vm1046 = vweird.f32 %v873
      %vm1047 = vweird.f32 %v1040
      %vm1048 = vmor %vm1046, %vm1047
      %v1049 = vsel %vm1048, %v1040, %v1045
      %v1050 = vrsqrt.pop %v874
      %v1051 = vmul.f32 %v1050, %v874
      %v1052 = vmul.f32 %v1051, %v1050
      %v1053 = vmul.f32 0.5, %v1052
      %v1054 = vsub.f32 1.5, %v1053
      %v1055 = vmul.f32 %v1050, %v1054
      %vm1056 = vweird.f32 %v874
      %vm1057 = vweird.f32 %v1050
      %vm1058 = vmor %vm1056, %vm1057
      %v1059 = vsel %vm1058, %v1050, %v1055
      %v1060 = vrsqrt.pop %v875
      %v1061 = vmul.f32 %v1060, %v875
      %v1062 = vmul.f32 %v1061, %v1060
      %v1063 = vmul.f32 0.5, %v1062
      %v1064 = vsub.f32 1.5, %v1063
      %v1065 = vmul.f32 %v1060, %v1064
      %vm1066 = vweird.f32 %v875
      %vm1067 = vweird.f32 %v1060
      %vm1068 = vmor %vm1066, %vm1067
      %v1069 = vsel %vm1068, %v1060, %v1065
      %v1070 = vrsqrt.pop %v876
      %v1071 = vmul.f32 %v1070, %v876
      %v1072 = vmul.f32 %v1071, %v1070
      %v1073 = vmul.f32 0.5, %v1072
      %v1074 = vsub.f32 1.5, %v1073
      %v1075 = vmul.f32 %v1070, %v1074
      %vm1076 = vweird.f32 %v876
      %vm1077 = vweird.f32 %v1070
      %vm1078 = vmor %vm1076, %vm1077
      %v1079 = vsel %vm1078, %v1070, %v1075
      %v1080 = vrsqrt.pop %v877
      %v1081 = vmul.f32 %v1080, %v877
      %v1082 = vmul.f32 %v1081, %v1080
      %v1083 = vmul.f32 0.5, %v1082
      %v1084 = vsub.f32 1.5, %v1083
      %v1085 = vmul.f32 %v1080, %v1084
      %vm1086 = vweird.f32 %v877
      %vm1087 = vweird.f32 %v1080
      %vm1088 = vmor %vm1086, %vm1087
      %v1089 = vsel %vm1088, %v1080, %v1085
      %v1090 = vrsqrt.pop %v878
      %v1091 = vmul.f32 %v1090, %v878
      %v1092 = vmul.f32 %v1091, %v1090
      %v1093 = vmul.f32 0.5, %v1092
      %v1094 = vsub.f32 1.5, %v1093
      %v1095 = vmul.f32 %v1090, %v1094
      %vm1096 = vweird.f32 %v878
      %vm1097 = vweird.f32 %v1090
      %vm1098 = vmor %vm1096, %vm1097
      %v1099 = vsel %vm1098, %v1090, %v1095
      %v1100 = vrsqrt.pop %v879
      %v1101 = vmul.f32 %v1100, %v879
      %v1102 = vmul.f32 %v1101, %v1100
      %v1103 = vmul.f32 0.5, %v1102
      %v1104 = vsub.f32 1.5, %v1103
      %v1105 = vmul.f32 %v1100, %v1104
      %vm1106 = vweird.f32 %v879
      %vm1107 = vweird.f32 %v1100
      %vm1108 = vmor %vm1106, %vm1107
      %v1109 = vsel %vm1108, %v1100, %v1105
      %v1110 = vrsqrt.pop %v880
      %v1111 = vmul.f32 %v1110, %v880
      %v1112 = vmul.f32 %v1111, %v1110
      %v1113 = vmul.f32 0.5, %v1112
      %v1114 = vsub.f32 1.5, %v1113
      %v1115 = vmul.f32 %v1110, %v1114
      %vm1116 = vweird.f32 %v880
      %vm1117 = vweird.f32 %v1110
      %vm1118 = vmor %vm1116, %vm1117
      %v1119 = vsel %vm1118, %v1110, %v1115
      %v1120 = vrsqrt.pop %v881
      %v1121 = vmul.f32 %v1120, %v881
      %v1122 = vmul.f32 %v1121, %v1120
      %v1123 = vmul.f32 0.5, %v1122
      %v1124 = vsub.f32 1.5, %v1123
      %v1125 = vmul.f32 %v1120, %v1124
      %vm1126 = vweird.f32 %v881
      %vm1127 = vweird.f32 %v1120
      %vm1128 = vmor %vm1126, %vm1127
      %v1129 = vsel %vm1128, %v1120, %v1125
      %v1130 = vrsqrt.pop %v882
      %v1131 = vmul.f32 %v1130, %v882
      %v1132 = vmul.f32 %v1131, %v1130
      %v1133 = vmul.f32 0.5, %v1132
      %v1134 = vsub.f32 1.5, %v1133
      %v1135 = vmul.f32 %v1130, %v1134
      %vm1136 = vweird.f32 %v882
      %vm1137 = vweird.f32 %v1130
      %vm1138 = vmor %vm1136, %vm1137
      %v1139 = vsel %vm1138, %v1130, %v1135
      %v1140 = vrsqrt.pop %v883
      %v1141 = vmul.f32 %v1140, %v883
      %v1142 = vmul.f32 %v1141, %v1140
      %v1143 = vmul.f32 0.5, %v1142
      %v1144 = vsub.f32 1.5, %v1143
      %v1145 = vmul.f32 %v1140, %v1144
      %vm1146 = vweird.f32 %v883
      %vm1147 = vweird.f32 %v1140
      %vm1148 = vmor %vm1146, %vm1147
      %v1149 = vsel %vm1148, %v1140, %v1145
      %v1150 = vrsqrt.pop %v884
      %v1151 = vmul.f32 %v1150, %v884
      %v1152 = vmul.f32 %v1151, %v1150
      %v1153 = vmul.f32 0.5, %v1152
      %v1154 = vsub.f32 1.5, %v1153
      %v1155 = vmul.f32 %v1150, %v1154
      %vm1156 = vweird.f32 %v884
      %vm1157 = vweird.f32 %v1150
      %vm1158 = vmor %vm1156, %vm1157
      %v1159 = vsel %vm1158, %v1150, %v1155
      %v1160 = vrsqrt.pop %v885
      %v1161 = vmul.f32 %v1160, %v885
      %v1162 = vmul.f32 %v1161, %v1160
      %v1163 = vmul.f32 0.5, %v1162
      %v1164 = vsub.f32 1.5, %v1163
      %v1165 = vmul.f32 %v1160, %v1164
      %vm1166 = vweird.f32 %v885
      %vm1167 = vweird.f32 %v1160
      %vm1168 = vmor %vm1166, %vm1167
      %v1169 = vsel %vm1168, %v1160, %v1165
      %v1170 = vrsqrt.pop %v886
      %v1171 = vmul.f32 %v1170, %v886
      %v1172 = vmul.f32 %v1171, %v1170
      %v1173 = vmul.f32 0.5, %v1172
      %v1174 = vsub.f32 1.5, %v1173
      %v1175 = vmul.f32 %v1170, %v1174
      %vm1176 = vweird.f32 %v886
      %vm1177 = vweird.f32 %v1170
      %vm1178 = vmor %vm1176, %vm1177
      %v1179 = vsel %vm1178, %v1170, %v1175
      %v1180 = vrsqrt.pop %v887
      %v1181 = vmul.f32 %v1180, %v887
      %v1182 = vmul.f32 %v1181, %v1180
      %v1183 = vmul.f32 0.5, %v1182
      %v1184 = vsub.f32 1.5, %v1183
      %v1185 = vmul.f32 %v1180, %v1184
      %vm1186 = vweird.f32 %v887
      %vm1187 = vweird.f32 %v1180
      %vm1188 = vmor %vm1186, %vm1187
      %v1189 = vsel %vm1188, %v1180, %v1185
      %v1190 = vrsqrt.pop %v888
      %v1191 = vmul.f32 %v1190, %v888
      %v1192 = vmul.f32 %v1191, %v1190
      %v1193 = vmul.f32 0.5, %v1192
      %v1194 = vsub.f32 1.5, %v1193
      %v1195 = vmul.f32 %v1190, %v1194
      %vm1196 = vweird.f32 %v888
      %vm1197 = vweird.f32 %v1190
      %vm1198 = vmor %vm1196, %vm1197
      %v1199 = vsel %vm1198, %v1190, %v1195
      %v1200 = vrsqrt.pop %v889
      %v1201 = vmul.f32 %v1200, %v889
      %v1202 = vmul.f32 %v1201, %v1200
      %v1203 = vmul.f32 0.5, %v1202
      %v1204 = vsub.f32 1.5, %v1203
      %v1205 = vmul.f32 %v1200, %v1204
      %vm1206 = vweird.f32 %v889
      %vm1207 = vweird.f32 %v1200
      %vm1208 = vmor %vm1206, %vm1207
      %v1209 = vsel %vm1208, %v1200, %v1205
      %v1210 = vmul.f32 %v666, %v899
      %v1211 = vmul.f32 %v667, %v909
      %v1212 = vmul.f32 %v668, %v919
      %v1213 = vmul.f32 %v669, %v929
      %v1214 = vmul.f32 %v670, %v939
      %v1215 = vmul.f32 %v671, %v949
      %v1216 = vmul.f32 %v672, %v959
      %v1217 = vmul.f32 %v673, %v969
      %v1218 = vmul.f32 %v674, %v979
      %v1219 = vmul.f32 %v675, %v989
      %v1220 = vmul.f32 %v676, %v999
      %v1221 = vmul.f32 %v677, %v1009
      %v1222 = vmul.f32 %v678, %v1019
      %v1223 = vmul.f32 %v679, %v1029
      %v1224 = vmul.f32 %v680, %v1039
      %v1225 = vmul.f32 %v681, %v1049
      %v1226 = vmul.f32 %v682, %v1059
      %v1227 = vmul.f32 %v683, %v1069
      %v1228 = vmul.f32 %v684, %v1079
      %v1229 = vmul.f32 %v685, %v1089
      %v1230 = vmul.f32 %v686, %v1099
      %v1231 = vmul.f32 %v687, %v1109
      %v1232 = vmul.f32 %v688, %v1119
      %v1233 = vmul.f32 %v689, %v1129
      %v1234 = vmul.f32 %v690, %v1139
      %v1235 = vmul.f32 %v691, %v1149
      %v1236 = vmul.f32 %v692, %v1159
      %v1237 = vmul.f32 %v693, %v1169
      %v1238 = vmul.f32 %v694, %v1179
      %v1239 = vmul.f32 %v695, %v1189
      %v1240 = vmul.f32 %v696, %v1199
      %v1241 = vmul.f32 %v697, %v1209
      %v1243 = vperm.slane %v528, 0
      %v1245 = vmul.f32 %v1210, %v1243
      %v1246 = vmul.f32 %v1211, %v1243
      %v1247 = vmul.f32 %v1212, %v1243
      %v1248 = vmul.f32 %v1213, %v1243
      %v1249 = vmul.f32 %v1214, %v1243
      %v1250 = vmul.f32 %v1215, %v1243
      %v1251 = vmul.f32 %v1216, %v1243
      %v1252 = vmul.f32 %v1217, %v1243
      %v1253 = vmul.f32 %v1218, %v1243
      %v1254 = vmul.f32 %v1219, %v1243
      %v1255 = vmul.f32 %v1220, %v1243
      %v1256 = vmul.f32 %v1221, %v1243
      %v1257 = vmul.f32 %v1222, %v1243
      %v1258 = vmul.f32 %v1223, %v1243
      %v1259 = vmul.f32 %v1224, %v1243
      %v1260 = vmul.f32 %v1225, %v1243
      %v1261 = vmul.f32 %v1226, %v1243
      %v1262 = vmul.f32 %v1227, %v1243
      %v1263 = vmul.f32 %v1228, %v1243
      %v1264 = vmul.f32 %v1229, %v1243
      %v1265 = vmul.f32 %v1230, %v1243
      %v1266 = vmul.f32 %v1231, %v1243
      %v1267 = vmul.f32 %v1232, %v1243
      %v1268 = vmul.f32 %v1233, %v1243
      %v1269 = vmul.f32 %v1234, %v1243
      %v1270 = vmul.f32 %v1235, %v1243
      %v1271 = vmul.f32 %v1236, %v1243
      %v1272 = vmul.f32 %v1237, %v1243
      %v1273 = vmul.f32 %v1238, %v1243
      %v1274 = vmul.f32 %v1239, %v1243
      %v1275 = vmul.f32 %v1240, %v1243
      %v1276 = vmul.f32 %v1241, %v1243
      %v1278 = vperm.slane %v529, 0
      %v1280 = vadd.f32 %v1245, %v1278
      %v1281 = vadd.f32 %v1246, %v1278
      %v1282 = vadd.f32 %v1247, %v1278
      %v1283 = vadd.f32 %v1248, %v1278
      %v1284 = vadd.f32 %v1249, %v1278
      %v1285 = vadd.f32 %v1250, %v1278
      %v1286 = vadd.f32 %v1251, %v1278
      %v1287 = vadd.f32 %v1252, %v1278
      %v1288 = vadd.f32 %v1253, %v1278
      %v1289 = vadd.f32 %v1254, %v1278
      %v1290 = vadd.f32 %v1255, %v1278
      %v1291 = vadd.f32 %v1256, %v1278
      %v1292 = vadd.f32 %v1257, %v1278
      %v1293 = vadd.f32 %v1258, %v1278
      %v1294 = vadd.f32 %v1259, %v1278
      %v1295 = vadd.f32 %v1260, %v1278
      %v1296 = vadd.f32 %v1261, %v1278
      %v1297 = vadd.f32 %v1262, %v1278
      %v1298 = vadd.f32 %v1263, %v1278
      %v1299 = vadd.f32 %v1264, %v1278
      %v1300 = vadd.f32 %v1265, %v1278
      %v1301 = vadd.f32 %v1266, %v1278
      %v1302 = vadd.f32 %v1267, %v1278
      %v1303 = vadd.f32 %v1268, %v1278
      %v1304 = vadd.f32 %v1269, %v1278
      %v1305 = vadd.f32 %v1270, %v1278
      %v1306 = vadd.f32 %v1271, %v1278
      %v1307 = vadd.f32 %v1272, %v1278
      %v1308 = vadd.f32 %v1273, %v1278
      %v1309 = vadd.f32 %v1274, %v1278
      %v1310 = vadd.f32 %v1275, %v1278
      %v1311 = vadd.f32 %v1276, %v1278
      %v1312 = vpack.c.bf16 %v1281, %v1280
      %v1313 = vpack.c.bf16 %v1283, %v1282
      %v1314 = vpack.c.bf16 %v1285, %v1284
      %v1315 = vpack.c.bf16 %v1287, %v1286
      %v1316 = vpack.c.bf16 %v1289, %v1288
      %v1317 = vpack.c.bf16 %v1291, %v1290
      %v1318 = vpack.c.bf16 %v1293, %v1292
      %v1319 = vpack.c.bf16 %v1295, %v1294
      %v1320 = vpack.c.bf16 %v1297, %v1296
      %v1321 = vpack.c.bf16 %v1299, %v1298
      %v1322 = vpack.c.bf16 %v1301, %v1300
      %v1323 = vpack.c.bf16 %v1303, %v1302
      %v1324 = vpack.c.bf16 %v1305, %v1304
      %v1325 = vpack.c.bf16 %v1307, %v1306
      %v1326 = vpack.c.bf16 %v1309, %v1308
      %v1327 = vpack.c.bf16 %v1311, %v1310
      %v1328 = vld [vmem:[%s5] sm:$0xf]
      %v1329 = vld [vmem:[%s5 + $0x4] sm:$0xf]
      %v1330 = vld [vmem:[%s5 + $0x8] sm:$0xf]
      %v1331 = vld [vmem:[%s5 + $0xc] sm:$0xf]
      %v1332 = vld [vmem:[%s6] sm:$0x1]
      %v1334 = vperm.slane %v1332, 0
      %v1340 = vunpack.c.l.b16 %v1328
      %v1341 = vunpack.c.l.b16 %v1329
      %v1342 = vunpack.c.l.b16 %v1330
      %v1343 = vunpack.c.l.b16 %v1331
      %v1344 = vpack.c.b16 %v1341, %v1340
      %v1345 = vpack.c.b16 %v1343, %v1342
      %v1349 = vsel %vm530, %v1312, 0
      %v1352 = vsel %vm530, %v1313, 0
      %v1355 = vsel %vm530, %v1314, 0
      %v1358 = vsel %vm530, %v1315, 0
      %v1361 = vsel %vm530, %v1316, 0
      %v1364 = vsel %vm530, %v1317, 0
      %v1367 = vsel %vm530, %v1318, 0
      %v1370 = vsel %vm530, %v1319, 0
      %v1373 = vsel %vm530, %v1320, 0
      %v1376 = vsel %vm530, %v1321, 0
      %v1379 = vsel %vm530, %v1322, 0
      %v1382 = vsel %vm530, %v1323, 0
      %v1385 = vsel %vm530, %v1324, 0
      %v1388 = vsel %vm530, %v1325, 0
      %v1391 = vsel %vm530, %v1326, 0
      %v1394 = vsel %vm530, %v1327, 0
      %1396 = vmatpush.bf16.msra.mxu0 0
      %1397 = vmatpush.bf16.msra.mxu0 0
      %1398 = vmatpush.bf16.msra.mxu0 0
      %1399 = vmatpush.bf16.msra.mxu0 0
      %1400 = vmatpush.bf16.msra.mxu0 0
      %1401 = vmatpush.bf16.msra.mxu0 0
      %1402 = vmatpush.bf16.msra.mxu0 %v1345
      %1403 = vmatpush.bf16.msra.mxu0 %v1344
      %1404 = vmatmul.bf16.gmra.mxu0 %v1349
      %v1405 = vpop.f32.mrf.mxu0
      %v1406 = vadd.f32 %v1334, %v1405
      %v1407 = vpop.f32.mrf.mxu0
      %v1408 = vadd.f32 %v1334, %v1407
      %1409 = vmatmul.bf16.gmra.mxu0 %v1352
      %v1410 = vpop.f32.mrf.mxu0
      %v1411 = vadd.f32 %v1334, %v1410
      %v1412 = vpop.f32.mrf.mxu0
      %v1413 = vadd.f32 %v1334, %v1412
      %1414 = vmatmul.bf16.gmra.mxu0 %v1355
      %v1415 = vpop.f32.mrf.mxu0
      %v1416 = vadd.f32 %v1334, %v1415
      %v1417 = vpop.f32.mrf.mxu0
      %v1418 = vadd.f32 %v1334, %v1417
      %1419 = vmatmul.bf16.gmra.mxu0 %v1358
      %v1420 = vpop.f32.mrf.mxu0
      %v1421 = vadd.f32 %v1334, %v1420
      %v1422 = vpop.f32.mrf.mxu0
      %v1423 = vadd.f32 %v1334, %v1422
      %1424 = vmatmul.bf16.gmra.mxu0 %v1361
      %v1425 = vpop.f32.mrf.mxu0
      %v1426 = vadd.f32 %v1334, %v1425
      %v1427 = vpop.f32.mrf.mxu0
      %v1428 = vadd.f32 %v1334, %v1427
      %1429 = vmatmul.bf16.gmra.mxu0 %v1364
      %v1430 = vpop.f32.mrf.mxu0
      %v1431 = vadd.f32 %v1334, %v1430
      %v1432 = vpop.f32.mrf.mxu0
      %v1433 = vadd.f32 %v1334, %v1432
      %1434 = vmatmul.bf16.gmra.mxu0 %v1367
      %v1435 = vpop.f32.mrf.mxu0
      %v1436 = vadd.f32 %v1334, %v1435
      %v1437 = vpop.f32.mrf.mxu0
      %v1438 = vadd.f32 %v1334, %v1437
      %1439 = vmatmul.bf16.gmra.mxu0 %v1370
      %v1440 = vpop.f32.mrf.mxu0
      %v1441 = vadd.f32 %v1334, %v1440
      %v1442 = vpop.f32.mrf.mxu0
      %v1443 = vadd.f32 %v1334, %v1442
      %1444 = vmatmul.bf16.gmra.mxu0 %v1373
      %v1445 = vpop.f32.mrf.mxu0
      %v1446 = vadd.f32 %v1334, %v1445
      %v1447 = vpop.f32.mrf.mxu0
      %v1448 = vadd.f32 %v1334, %v1447
      %1449 = vmatmul.bf16.gmra.mxu0 %v1376
      %v1450 = vpop.f32.mrf.mxu0
      %v1451 = vadd.f32 %v1334, %v1450
      %v1452 = vpop.f32.mrf.mxu0
      %v1453 = vadd.f32 %v1334, %v1452
      %1454 = vmatmul.bf16.gmra.mxu0 %v1379
      %v1455 = vpop.f32.mrf.mxu0
      %v1456 = vadd.f32 %v1334, %v1455
      %v1457 = vpop.f32.mrf.mxu0
      %v1458 = vadd.f32 %v1334, %v1457
      %1459 = vmatmul.bf16.gmra.mxu0 %v1382
      %v1460 = vpop.f32.mrf.mxu0
      %v1461 = vadd.f32 %v1334, %v1460
      %v1462 = vpop.f32.mrf.mxu0
      %v1463 = vadd.f32 %v1334, %v1462
      %1464 = vmatmul.bf16.gmra.mxu0 %v1385
      %v1465 = vpop.f32.mrf.mxu0
      %v1466 = vadd.f32 %v1334, %v1465
      %v1467 = vpop.f32.mrf.mxu0
      %v1468 = vadd.f32 %v1334, %v1467
      %1469 = vmatmul.bf16.gmra.mxu0 %v1388
      %v1470 = vpop.f32.mrf.mxu0
      %v1471 = vadd.f32 %v1334, %v1470
      %v1472 = vpop.f32.mrf.mxu0
      %v1473 = vadd.f32 %v1334, %v1472
      %1474 = vmatmul.bf16.gmra.mxu0 %v1391
      %v1475 = vpop.f32.mrf.mxu0
      %v1476 = vadd.f32 %v1334, %v1475
      %v1477 = vpop.f32.mrf.mxu0
      %v1478 = vadd.f32 %v1334, %v1477
      %1479 = vmatmul.bf16.gmra.mxu0 %v1394
      %v1480 = vpop.f32.mrf.mxu0
      %v1481 = vadd.f32 %v1334, %v1480
      %v1482 = vpop.f32.mrf.mxu0
      %v1483 = vadd.f32 %v1334, %v1482
      %1484 = vdwg.mxu0
      %v1485 = vpack.c.bf16 %v1406, %v1406
      %v1486 = vpack.c.bf16 %v1408, %v1408
      %v1487 = vpack.c.bf16 %v1411, %v1411
      %v1488 = vpack.c.bf16 %v1413, %v1413
      %v1489 = vpack.c.bf16 %v1416, %v1416
      %v1490 = vpack.c.bf16 %v1418, %v1418
      %v1491 = vpack.c.bf16 %v1421, %v1421
      %v1492 = vpack.c.bf16 %v1423, %v1423
      %v1493 = vpack.c.bf16 %v1426, %v1426
      %v1494 = vpack.c.bf16 %v1428, %v1428
      %v1495 = vpack.c.bf16 %v1431, %v1431
      %v1496 = vpack.c.bf16 %v1433, %v1433
      %v1497 = vpack.c.bf16 %v1436, %v1436
      %v1498 = vpack.c.bf16 %v1438, %v1438
      %v1499 = vpack.c.bf16 %v1441, %v1441
      %v1500 = vpack.c.bf16 %v1443, %v1443
      %v1501 = vpack.c.bf16 %v1446, %v1446
      %v1502 = vpack.c.bf16 %v1448, %v1448
      %v1503 = vpack.c.bf16 %v1451, %v1451
      %v1504 = vpack.c.bf16 %v1453, %v1453
      %v1505 = vpack.c.bf16 %v1456, %v1456
      %v1506 = vpack.c.bf16 %v1458, %v1458
      %v1507 = vpack.c.bf16 %v1461, %v1461
      %v1508 = vpack.c.bf16 %v1463, %v1463
      %v1509 = vpack.c.bf16 %v1466, %v1466
      %v1510 = vpack.c.bf16 %v1468, %v1468
      %v1511 = vpack.c.bf16 %v1471, %v1471
      %v1512 = vpack.c.bf16 %v1473, %v1473
      %v1513 = vpack.c.bf16 %v1476, %v1476
      %v1514 = vpack.c.bf16 %v1478, %v1478
      %v1515 = vpack.c.bf16 %v1481, %v1481
      %v1516 = vpack.c.bf16 %v1483, %v1483
      %v1517 = vld [vmem:[%s1] sm:$0xff]
      %v1518 = vld [vmem:[%s1 + $0x8] sm:$0xff]
      %v1519 = vld [vmem:[%s1 + $0x10] sm:$0xff]
      %v1520 = vld [vmem:[%s1 + $0x18] sm:$0xff]
      %v1521 = vld [vmem:[%s1 + $0x20] sm:$0xff]
      %v1522 = vld [vmem:[%s1 + $0x28] sm:$0xff]
      %v1523 = vld [vmem:[%s1 + $0x30] sm:$0xff]
      %v1524 = vld [vmem:[%s1 + $0x38] sm:$0xff]
      %v1533 = vunpack.c.l.b16 %v1485
      %v1534 = vunpack.c.l.b16 %v1486
      %v1535 = vunpack.c.l.b16 %v1487
      %v1536 = vunpack.c.l.b16 %v1488
      %v1537 = vunpack.c.l.b16 %v1489
      %v1538 = vunpack.c.l.b16 %v1490
      %v1539 = vunpack.c.l.b16 %v1491
      %v1540 = vunpack.c.l.b16 %v1492
      %v1541 = vpack.c.b16 %v1534, %v1533
      %v1542 = vpack.c.b16 %v1536, %v1535
      %v1543 = vpack.c.b16 %v1538, %v1537
      %v1544 = vpack.c.b16 %v1540, %v1539
      %1545 = vrot.lane.b32.xlu0 %v1541, 96
      %v1546 = vpop.permute.xlu0 %1545
      %1547 = vrot.lane.b32.xlu0 %v1542, 96
      %v1548 = vpop.permute.xlu0 %1547
      %1549 = vrot.lane.b32.xlu0 %v1543, 96
      %v1550 = vpop.permute.xlu0 %1549
      %1551 = vrot.lane.b32.xlu0 %v1544, 96
      %v1552 = vpop.permute.xlu0 %1551
      %vm1553 = vcmask 64512
      %v1555 = vsel %vm1553, %v1541, 0
      %v1558 = vsel %vm1553, %v1542, 0
      %v1561 = vsel %vm1553, %v1543, 0
      %v1564 = vsel %vm1553, %v1544, 0
      %v1567 = vsel %vm1553, %v1546, 0
      %v1570 = vsel %vm1553, %v1548, 0
      %v1573 = vsel %vm1553, %v1550, 0
      %v1576 = vsel %vm1553, %v1552, 0
      %1578 = vmatpush.bf16.xpose.msra.mxu0 0
      %1579 = vmatpush.bf16.xpose.msra.mxu0 0
      %1580 = vmatpush.bf16.xpose.msra.mxu0 0
      %1581 = vmatpush.bf16.xpose.msra.mxu0 0
      %1582 = vmatpush.bf16.xpose.msra.mxu0 %v1576
      %1583 = vmatpush.bf16.xpose.msra.mxu0 %v1573
      %1584 = vmatpush.bf16.xpose.msra.mxu0 %v1570
      %1585 = vmatpush.bf16.xpose.msra.mxu0 %v1567
      %1586 = vmatmul.bf16.gmra.mxu0 %v1555
      %v1587 = vpop.f32.mrf.mxu0
      %v1588 = vadd.f32 %v1517, %v1587
      %v1589 = vpop.f32.mrf.mxu0
      %v1590 = vadd.f32 %v1518, %v1589
      %1591 = vmatmul.bf16.gmra.mxu0 %v1558
      %v1592 = vpop.f32.mrf.mxu0
      %v1593 = vadd.f32 %v1519, %v1592
      %v1594 = vpop.f32.mrf.mxu0
      %v1595 = vadd.f32 %v1520, %v1594
      %1596 = vmatmul.bf16.gmra.mxu0 %v1561
      %v1597 = vpop.f32.mrf.mxu0
      %v1598 = vadd.f32 %v1521, %v1597
      %v1599 = vpop.f32.mrf.mxu0
      %v1600 = vadd.f32 %v1522, %v1599
      %1601 = vmatmul.bf16.gmra.mxu0 %v1564
      %v1602 = vpop.f32.mrf.mxu0
      %v1603 = vadd.f32 %v1523, %v1602
      %v1604 = vpop.f32.mrf.mxu0
      %v1605 = vadd.f32 %v1524, %v1604
      %1606 = vdwg.mxu0
      %v1615 = vunpack.c.l.b16 %v1493
      %v1616 = vunpack.c.l.b16 %v1494
      %v1617 = vunpack.c.l.b16 %v1495
      %v1618 = vunpack.c.l.b16 %v1496
      %v1619 = vunpack.c.l.b16 %v1497
      %v1620 = vunpack.c.l.b16 %v1498
      %v1621 = vunpack.c.l.b16 %v1499
      %v1622 = vunpack.c.l.b16 %v1500
      %v1623 = vpack.c.b16 %v1616, %v1615
      %v1624 = vpack.c.b16 %v1618, %v1617
      %v1625 = vpack.c.b16 %v1620, %v1619
      %v1626 = vpack.c.b16 %v1622, %v1621
      %1627 = vrot.lane.b32.xlu0 %v1623, 96
      %v1628 = vpop.permute.xlu0 %1627
      %1629 = vrot.lane.b32.xlu0 %v1624, 96
      %v1630 = vpop.permute.xlu0 %1629
      %1631 = vrot.lane.b32.xlu0 %v1625, 96
      %v1632 = vpop.permute.xlu0 %1631
      %1633 = vrot.lane.b32.xlu0 %v1626, 96
      %v1634 = vpop.permute.xlu0 %1633
      %v1636 = vsel %vm1553, %v1623, 0
      %v1639 = vsel %vm1553, %v1624, 0
      %v1642 = vsel %vm1553, %v1625, 0
      %v1645 = vsel %vm1553, %v1626, 0
      %v1648 = vsel %vm1553, %v1628, 0
      %v1651 = vsel %vm1553, %v1630, 0
      %v1654 = vsel %vm1553, %v1632, 0
      %v1657 = vsel %vm1553, %v1634, 0
      %1659 = vmatpush.bf16.xpose.msra.mxu0 0
      %1660 = vmatpush.bf16.xpose.msra.mxu0 0
      %1661 = vmatpush.bf16.xpose.msra.mxu0 0
      %1662 = vmatpush.bf16.xpose.msra.mxu0 0
      %1663 = vmatpush.bf16.xpose.msra.mxu0 %v1657
      %1664 = vmatpush.bf16.xpose.msra.mxu0 %v1654
      %1665 = vmatpush.bf16.xpose.msra.mxu0 %v1651
      %1666 = vmatpush.bf16.xpose.msra.mxu0 %v1648
      %1667 = vmatmul.bf16.gmra.mxu0 %v1636
      %v1668 = vpop.f32.mrf.mxu0
      %v1669 = vadd.f32 %v1517, %v1668
      %v1670 = vpop.f32.mrf.mxu0
      %v1671 = vadd.f32 %v1518, %v1670
      %1672 = vmatmul.bf16.gmra.mxu0 %v1639
      %v1673 = vpop.f32.mrf.mxu0
      %v1674 = vadd.f32 %v1519, %v1673
      %v1675 = vpop.f32.mrf.mxu0
      %v1676 = vadd.f32 %v1520, %v1675
      %1677 = vmatmul.bf16.gmra.mxu0 %v1642
      %v1678 = vpop.f32.mrf.mxu0
      %v1679 = vadd.f32 %v1521, %v1678
      %v1680 = vpop.f32.mrf.mxu0
      %v1681 = vadd.f32 %v1522, %v1680
      %1682 = vmatmul.bf16.gmra.mxu0 %v1645
      %v1683 = vpop.f32.mrf.mxu0
      %v1684 = vadd.f32 %v1523, %v1683
      %v1685 = vpop.f32.mrf.mxu0
      %v1686 = vadd.f32 %v1524, %v1685
      %1687 = vdwg.mxu0
      %v1696 = vunpack.c.l.b16 %v1501
      %v1697 = vunpack.c.l.b16 %v1502
      %v1698 = vunpack.c.l.b16 %v1503
      %v1699 = vunpack.c.l.b16 %v1504
      %v1700 = vunpack.c.l.b16 %v1505
      %v1701 = vunpack.c.l.b16 %v1506
      %v1702 = vunpack.c.l.b16 %v1507
      %v1703 = vunpack.c.l.b16 %v1508
      %v1704 = vpack.c.b16 %v1697, %v1696
      %v1705 = vpack.c.b16 %v1699, %v1698
      %v1706 = vpack.c.b16 %v1701, %v1700
      %v1707 = vpack.c.b16 %v1703, %v1702
      %1708 = vrot.lane.b32.xlu0 %v1704, 96
      %v1709 = vpop.permute.xlu0 %1708
      %1710 = vrot.lane.b32.xlu0 %v1705, 96
      %v1711 = vpop.permute.xlu0 %1710
      %1712 = vrot.lane.b32.xlu0 %v1706, 96
      %v1713 = vpop.permute.xlu0 %1712
      %1714 = vrot.lane.b32.xlu0 %v1707, 96
      %v1715 = vpop.permute.xlu0 %1714
      %v1717 = vsel %vm1553, %v1704, 0
      %v1720 = vsel %vm1553, %v1705, 0
      %v1723 = vsel %vm1553, %v1706, 0
      %v1726 = vsel %vm1553, %v1707, 0
      %v1729 = vsel %vm1553, %v1709, 0
      %v1732 = vsel %vm1553, %v1711, 0
      %v1735 = vsel %vm1553, %v1713, 0
      %v1738 = vsel %vm1553, %v1715, 0
      %1740 = vmatpush.bf16.xpose.msra.mxu0 0
      %1741 = vmatpush.bf16.xpose.msra.mxu0 0
      %1742 = vmatpush.bf16.xpose.msra.mxu0 0
      %1743 = vmatpush.bf16.xpose.msra.mxu0 0
      %1744 = vmatpush.bf16.xpose.msra.mxu0 %v1738
      %1745 = vmatpush.bf16.xpose.msra.mxu0 %v1735
      %1746 = vmatpush.bf16.xpose.msra.mxu0 %v1732
      %1747 = vmatpush.bf16.xpose.msra.mxu0 %v1729
      %1748 = vmatmul.bf16.gmra.mxu0 %v1717
      %v1749 = vpop.f32.mrf.mxu0
      %v1750 = vadd.f32 %v1517, %v1749
      %v1751 = vpop.f32.mrf.mxu0
      %v1752 = vadd.f32 %v1518, %v1751
      %1753 = vmatmul.bf16.gmra.mxu0 %v1720
      %v1754 = vpop.f32.mrf.mxu0
      %v1755 = vadd.f32 %v1519, %v1754
      %v1756 = vpop.f32.mrf.mxu0
      %v1757 = vadd.f32 %v1520, %v1756
      %1758 = vmatmul.bf16.gmra.mxu0 %v1723
      %v1759 = vpop.f32.mrf.mxu0
      %v1760 = vadd.f32 %v1521, %v1759
      %v1761 = vpop.f32.mrf.mxu0
      %v1762 = vadd.f32 %v1522, %v1761
      %1763 = vmatmul.bf16.gmra.mxu0 %v1726
      %v1764 = vpop.f32.mrf.mxu0
      %v1765 = vadd.f32 %v1523, %v1764
      %v1766 = vpop.f32.mrf.mxu0
      %v1767 = vadd.f32 %v1524, %v1766
      %1768 = vdwg.mxu0
      %v1777 = vunpack.c.l.b16 %v1509
      %v1778 = vunpack.c.l.b16 %v1510
      %v1779 = vunpack.c.l.b16 %v1511
      %v1780 = vunpack.c.l.b16 %v1512
      %v1781 = vunpack.c.l.b16 %v1513
      %v1782 = vunpack.c.l.b16 %v1514
      %v1783 = vunpack.c.l.b16 %v1515
      %v1784 = vunpack.c.l.b16 %v1516
      %v1785 = vpack.c.b16 %v1778, %v1777
      %v1786 = vpack.c.b16 %v1780, %v1779
      %v1787 = vpack.c.b16 %v1782, %v1781
      %v1788 = vpack.c.b16 %v1784, %v1783
      %1789 = vrot.lane.b32.xlu0 %v1785, 96
      %v1790 = vpop.permute.xlu0 %1789
      %1791 = vrot.lane.b32.xlu0 %v1786, 96
      %v1792 = vpop.permute.xlu0 %1791
      %1793 = vrot.lane.b32.xlu0 %v1787, 96
      %v1794 = vpop.permute.xlu0 %1793
      %1795 = vrot.lane.b32.xlu0 %v1788, 96
      %v1796 = vpop.permute.xlu0 %1795
      %v1798 = vsel %vm1553, %v1785, 0
      %v1801 = vsel %vm1553, %v1786, 0
      %v1804 = vsel %vm1553, %v1787, 0
      %v1807 = vsel %vm1553, %v1788, 0
      %v1810 = vsel %vm1553, %v1790, 0
      %v1813 = vsel %vm1553, %v1792, 0
      %v1816 = vsel %vm1553, %v1794, 0
      %v1819 = vsel %vm1553, %v1796, 0
      %1821 = vmatpush.bf16.xpose.msra.mxu0 0
      %1822 = vmatpush.bf16.xpose.msra.mxu0 0
      %1823 = vmatpush.bf16.xpose.msra.mxu0 0
      %1824 = vmatpush.bf16.xpose.msra.mxu0 0
      %1825 = vmatpush.bf16.xpose.msra.mxu0 %v1819
      %1826 = vmatpush.bf16.xpose.msra.mxu0 %v1816
      %1827 = vmatpush.bf16.xpose.msra.mxu0 %v1813
      %1828 = vmatpush.bf16.xpose.msra.mxu0 %v1810
      %1829 = vmatmul.bf16.gmra.mxu0 %v1798
      %v1830 = vpop.f32.mrf.mxu0
      %v1831 = vadd.f32 %v1517, %v1830
      %v1832 = vpop.f32.mrf.mxu0
      %v1833 = vadd.f32 %v1518, %v1832
      %1834 = vmatmul.bf16.gmra.mxu0 %v1801
      %v1835 = vpop.f32.mrf.mxu0
      %v1836 = vadd.f32 %v1519, %v1835
      %v1837 = vpop.f32.mrf.mxu0
      %v1838 = vadd.f32 %v1520, %v1837
      %1839 = vmatmul.bf16.gmra.mxu0 %v1804
      %v1840 = vpop.f32.mrf.mxu0
      %v1841 = vadd.f32 %v1521, %v1840
      %v1842 = vpop.f32.mrf.mxu0
      %v1843 = vadd.f32 %v1522, %v1842
      %1844 = vmatmul.bf16.gmra.mxu0 %v1807
      %v1845 = vpop.f32.mrf.mxu0
      %v1846 = vadd.f32 %v1523, %v1845
      %v1847 = vpop.f32.mrf.mxu0
      %v1848 = vadd.f32 %v1524, %v1847
      %1849 = vdwg.mxu0
      %v1850 = vld [vmem:[%s2] sm:$0xff]
      %v1851 = vld [vmem:[%s2 + $0x8] sm:$0xff]
      %v1852 = vld [vmem:[%s2 + $0x10] sm:$0xff]
      %v1853 = vld [vmem:[%s2 + $0x18] sm:$0xff]
      %v1854 = vld [vmem:[%s2 + $0x20] sm:$0xff]
      %v1855 = vld [vmem:[%s2 + $0x28] sm:$0xff]
      %v1856 = vld [vmem:[%s2 + $0x30] sm:$0xff]
      %v1857 = vld [vmem:[%s2 + $0x38] sm:$0xff]
      %v1858 = vadd.f32 %v1588, %v1850
      %v1859 = vadd.f32 %v1590, %v1851
      %v1860 = vadd.f32 %v1593, %v1852
      %v1861 = vadd.f32 %v1595, %v1853
      %v1862 = vadd.f32 %v1598, %v1854
      %v1863 = vadd.f32 %v1600, %v1855
      %v1864 = vadd.f32 %v1603, %v1856
      %v1865 = vadd.f32 %v1605, %v1857
      %v1866 = vadd.f32 %v1669, %v1850
      %v1867 = vadd.f32 %v1671, %v1851
      %v1868 = vadd.f32 %v1674, %v1852
      %v1869 = vadd.f32 %v1676, %v1853
      %v1870 = vadd.f32 %v1679, %v1854
      %v1871 = vadd.f32 %v1681, %v1855
      %v1872 = vadd.f32 %v1684, %v1856
      %v1873 = vadd.f32 %v1686, %v1857
      %v1874 = vadd.f32 %v1750, %v1850
      %v1875 = vadd.f32 %v1752, %v1851
      %v1876 = vadd.f32 %v1755, %v1852
      %v1877 = vadd.f32 %v1757, %v1853
      %v1878 = vadd.f32 %v1760, %v1854
      %v1879 = vadd.f32 %v1762, %v1855
      %v1880 = vadd.f32 %v1765, %v1856
      %v1881 = vadd.f32 %v1767, %v1857
      %v1882 = vadd.f32 %v1831, %v1850
      %v1883 = vadd.f32 %v1833, %v1851
      %v1884 = vadd.f32 %v1836, %v1852
      %v1885 = vadd.f32 %v1838, %v1853
      %v1886 = vadd.f32 %v1841, %v1854
      %v1887 = vadd.f32 %v1843, %v1855
      %v1888 = vadd.f32 %v1846, %v1856
      %v1889 = vadd.f32 %v1848, %v1857
      %vm1890 = vcmask 523264
      %v1891 = vsel %vm1890, %v1858, -inf
      %1892 = vmax.xlane.f32.xlu0 %v1891
      %v1893 = vpop.xlane.xlu0 %1892
      %v1894 = vsel %vm1890, %v1859, -inf
      %1895 = vmax.xlane.f32.xlu0 %v1894
      %v1896 = vpop.xlane.xlu0 %1895
      %v1897 = vsel %vm1890, %v1860, -inf
      %1898 = vmax.xlane.f32.xlu0 %v1897
      %v1899 = vpop.xlane.xlu0 %1898
      %v1900 = vsel %vm1890, %v1861, -inf
      %1901 = vmax.xlane.f32.xlu0 %v1900
      %v1902 = vpop.xlane.xlu0 %1901
      %v1903 = vsel %vm1890, %v1862, -inf
      %1904 = vmax.xlane.f32.xlu0 %v1903
      %v1905 = vpop.xlane.xlu0 %1904
      %v1906 = vsel %vm1890, %v1863, -inf
      %1907 = vmax.xlane.f32.xlu0 %v1906
      %v1908 = vpop.xlane.xlu0 %1907
      %v1909 = vsel %vm1890, %v1864, -inf
      %1910 = vmax.xlane.f32.xlu0 %v1909
      %v1911 = vpop.xlane.xlu0 %1910
      %v1912 = vsel %vm1890, %v1865, -inf
      %1913 = vmax.xlane.f32.xlu0 %v1912
      %v1914 = vpop.xlane.xlu0 %1913
      %v1915 = vsel %vm1890, %v1866, -inf
      %1916 = vmax.xlane.f32.xlu0 %v1915
      %v1917 = vpop.xlane.xlu0 %1916
      %v1918 = vsel %vm1890, %v1867, -inf
      %1919 = vmax.xlane.f32.xlu0 %v1918
      %v1920 = vpop.xlane.xlu0 %1919
      %v1921 = vsel %vm1890, %v1868, -inf
      %1922 = vmax.xlane.f32.xlu0 %v1921
      %v1923 = vpop.xlane.xlu0 %1922
      %v1924 = vsel %vm1890, %v1869, -inf
      %1925 = vmax.xlane.f32.xlu0 %v1924
      %v1926 = vpop.xlane.xlu0 %1925
      %v1927 = vsel %vm1890, %v1870, -inf
      %1928 = vmax.xlane.f32.xlu0 %v1927
      %v1929 = vpop.xlane.xlu0 %1928
      %v1930 = vsel %vm1890, %v1871, -inf
      %1931 = vmax.xlane.f32.xlu0 %v1930
      %v1932 = vpop.xlane.xlu0 %1931
      %v1933 = vsel %vm1890, %v1872, -inf
      %1934 = vmax.xlane.f32.xlu0 %v1933
      %v1935 = vpop.xlane.xlu0 %1934
      %v1936 = vsel %vm1890, %v1873, -inf
      %1937 = vmax.xlane.f32.xlu0 %v1936
      %v1938 = vpop.xlane.xlu0 %1937
      %v1939 = vsel %vm1890, %v1874, -inf
      %1940 = vmax.xlane.f32.xlu0 %v1939
      %v1941 = vpop.xlane.xlu0 %1940
      %v1942 = vsel %vm1890, %v1875, -inf
      %1943 = vmax.xlane.f32.xlu0 %v1942
      %v1944 = vpop.xlane.xlu0 %1943
      %v1945 = vsel %vm1890, %v1876, -inf
      %1946 = vmax.xlane.f32.xlu0 %v1945
      %v1947 = vpop.xlane.xlu0 %1946
      %v1948 = vsel %vm1890, %v1877, -inf
      %1949 = vmax.xlane.f32.xlu0 %v1948
      %v1950 = vpop.xlane.xlu0 %1949
      %v1951 = vsel %vm1890, %v1878, -inf
      %1952 = vmax.xlane.f32.xlu0 %v1951
      %v1953 = vpop.xlane.xlu0 %1952
      %v1954 = vsel %vm1890, %v1879, -inf
      %1955 = vmax.xlane.f32.xlu0 %v1954
      %v1956 = vpop.xlane.xlu0 %1955
      %v1957 = vsel %vm1890, %v1880, -inf
      %1958 = vmax.xlane.f32.xlu0 %v1957
      %v1959 = vpop.xlane.xlu0 %1958
      %v1960 = vsel %vm1890, %v1881, -inf
      %1961 = vmax.xlane.f32.xlu0 %v1960
      %v1962 = vpop.xlane.xlu0 %1961
      %v1963 = vsel %vm1890, %v1882, -inf
      %1964 = vmax.xlane.f32.xlu0 %v1963
      %v1965 = vpop.xlane.xlu0 %1964
      %v1966 = vsel %vm1890, %v1883, -inf
      %1967 = vmax.xlane.f32.xlu0 %v1966
      %v1968 = vpop.xlane.xlu0 %1967
      %v1969 = vsel %vm1890, %v1884, -inf
      %1970 = vmax.xlane.f32.xlu0 %v1969
      %v1971 = vpop.xlane.xlu0 %1970
      %v1972 = vsel %vm1890, %v1885, -inf
      %1973 = vmax.xlane.f32.xlu0 %v1972
      %v1974 = vpop.xlane.xlu0 %1973
      %v1975 = vsel %vm1890, %v1886, -inf
      %1976 = vmax.xlane.f32.xlu0 %v1975
      %v1977 = vpop.xlane.xlu0 %1976
      %v1978 = vsel %vm1890, %v1887, -inf
      %1979 = vmax.xlane.f32.xlu0 %v1978
      %v1980 = vpop.xlane.xlu0 %1979
      %v1981 = vsel %vm1890, %v1888, -inf
      %1982 = vmax.xlane.f32.xlu0 %v1981
      %v1983 = vpop.xlane.xlu0 %1982
      %v1984 = vsel %vm1890, %v1889, -inf
      %1985 = vmax.xlane.f32.xlu0 %v1984
      %v1986 = vpop.xlane.xlu0 %1985
      %v1987 = vsub.f32 %v1858, %v1893
      %v1988 = vsub.f32 %v1859, %v1896
      %v1989 = vsub.f32 %v1860, %v1899
      %v1990 = vsub.f32 %v1861, %v1902
      %v1991 = vsub.f32 %v1862, %v1905
      %v1992 = vsub.f32 %v1863, %v1908
      %v1993 = vsub.f32 %v1864, %v1911
      %v1994 = vsub.f32 %v1865, %v1914
      %v1995 = vsub.f32 %v1866, %v1917
      %v1996 = vsub.f32 %v1867, %v1920
      %v1997 = vsub.f32 %v1868, %v1923
      %v1998 = vsub.f32 %v1869, %v1926
      %v1999 = vsub.f32 %v1870, %v1929
      %v2000 = vsub.f32 %v1871, %v1932
      %v2001 = vsub.f32 %v1872, %v1935
      %v2002 = vsub.f32 %v1873, %v1938
      %v2003 = vsub.f32 %v1874, %v1941
      %v2004 = vsub.f32 %v1875, %v1944
      %v2005 = vsub.f32 %v1876, %v1947
      %v2006 = vsub.f32 %v1877, %v1950
      %v2007 = vsub.f32 %v1878, %v1953
      %v2008 = vsub.f32 %v1879, %v1956
      %v2009 = vsub.f32 %v1880, %v1959
      %v2010 = vsub.f32 %v1881, %v1962
      %v2011 = vsub.f32 %v1882, %v1965
      %v2012 = vsub.f32 %v1883, %v1968
      %v2013 = vsub.f32 %v1884, %v1971
      %v2014 = vsub.f32 %v1885, %v1974
      %v2015 = vsub.f32 %v1886, %v1977
      %v2016 = vsub.f32 %v1887, %v1980
      %v2017 = vsub.f32 %v1888, %v1983
      %v2018 = vsub.f32 %v1889, %v1986
      %v2019 = vmul.f32 %v1987, 1.442695
      %v2020 = vpow.pop %v2019
      %v2021 = vmul.f32 %v1988, 1.442695
      %v2022 = vpow.pop %v2021
      %v2023 = vmul.f32 %v1989, 1.442695
      %v2024 = vpow.pop %v2023
      %v2025 = vmul.f32 %v1990, 1.442695
      %v2026 = vpow.pop %v2025
      %v2027 = vmul.f32 %v1991, 1.442695
      %v2028 = vpow.pop %v2027
      %v2029 = vmul.f32 %v1992, 1.442695
      %v2030 = vpow.pop %v2029
      %v2031 = vmul.f32 %v1993, 1.442695
      %v2032 = vpow.pop %v2031
      %v2033 = vmul.f32 %v1994, 1.442695
      %v2034 = vpow.pop %v2033
      %v2035 = vmul.f32 %v1995, 1.442695
      %v2036 = vpow.pop %v2035
      %v2037 = vmul.f32 %v1996, 1.442695
      %v2038 = vpow.pop %v2037
      %v2039 = vmul.f32 %v1997, 1.442695
      %v2040 = vpow.pop %v2039
      %v2041 = vmul.f32 %v1998, 1.442695
      %v2042 = vpow.pop %v2041
      %v2043 = vmul.f32 %v1999, 1.442695
      %v2044 = vpow.pop %v2043
      %v2045 = vmul.f32 %v2000, 1.442695
      %v2046 = vpow.pop %v2045
      %v2047 = vmul.f32 %v2001, 1.442695
      %v2048 = vpow.pop %v2047
      %v2049 = vmul.f32 %v2002, 1.442695
      %v2050 = vpow.pop %v2049
      %v2051 = vmul.f32 %v2003, 1.442695
      %v2052 = vpow.pop %v2051
      %v2053 = vmul.f32 %v2004, 1.442695
      %v2054 = vpow.pop %v2053
      %v2055 = vmul.f32 %v2005, 1.442695
      %v2056 = vpow.pop %v2055
      %v2057 = vmul.f32 %v2006, 1.442695
      %v2058 = vpow.pop %v2057
      %v2059 = vmul.f32 %v2007, 1.442695
      %v2060 = vpow.pop %v2059
      %v2061 = vmul.f32 %v2008, 1.442695
      %v2062 = vpow.pop %v2061
      %v2063 = vmul.f32 %v2009, 1.442695
      %v2064 = vpow.pop %v2063
      %v2065 = vmul.f32 %v2010, 1.442695
      %v2066 = vpow.pop %v2065
      %v2067 = vmul.f32 %v2011, 1.442695
      %v2068 = vpow.pop %v2067
      %v2069 = vmul.f32 %v2012, 1.442695
      %v2070 = vpow.pop %v2069
      %v2071 = vmul.f32 %v2013, 1.442695
      %v2072 = vpow.pop %v2071
      %v2073 = vmul.f32 %v2014, 1.442695
      %v2074 = vpow.pop %v2073
      %v2075 = vmul.f32 %v2015, 1.442695
      %v2076 = vpow.pop %v2075
      %v2077 = vmul.f32 %v2016, 1.442695
      %v2078 = vpow.pop %v2077
      %v2079 = vmul.f32 %v2017, 1.442695
      %v2080 = vpow.pop %v2079
      %v2081 = vmul.f32 %v2018, 1.442695
      %v2082 = vpow.pop %v2081
      %v2083 = vsel %vm1890, %v2020, 0.0
      %2084 = vadd.xlane.f32.xlu0 %v2083
      %v2085 = vpop.xlane.xlu0 %2084
      %v2086 = vsel %vm1890, %v2022, 0.0
      %2087 = vadd.xlane.f32.xlu0 %v2086
      %v2088 = vpop.xlane.xlu0 %2087
      %v2089 = vsel %vm1890, %v2024, 0.0
      %2090 = vadd.xlane.f32.xlu0 %v2089
      %v2091 = vpop.xlane.xlu0 %2090
      %v2092 = vsel %vm1890, %v2026, 0.0
      %2093 = vadd.xlane.f32.xlu0 %v2092
      %v2094 = vpop.xlane.xlu0 %2093
      %v2095 = vsel %vm1890, %v2028, 0.0
      %2096 = vadd.xlane.f32.xlu0 %v2095
      %v2097 = vpop.xlane.xlu0 %2096
      %v2098 = vsel %vm1890, %v2030, 0.0
      %2099 = vadd.xlane.f32.xlu0 %v2098
      %v2100 = vpop.xlane.xlu0 %2099
      %v2101 = vsel %vm1890, %v2032, 0.0
      %2102 = vadd.xlane.f32.xlu0 %v2101
      %v2103 = vpop.xlane.xlu0 %2102
      %v2104 = vsel %vm1890, %v2034, 0.0
      %2105 = vadd.xlane.f32.xlu0 %v2104
      %v2106 = vpop.xlane.xlu0 %2105
      %v2107 = vsel %vm1890, %v2036, 0.0
      %2108 = vadd.xlane.f32.xlu0 %v2107
      %v2109 = vpop.xlane.xlu0 %2108
      %v2110 = vsel %vm1890, %v2038, 0.0
      %2111 = vadd.xlane.f32.xlu0 %v2110
      %v2112 = vpop.xlane.xlu0 %2111
      %v2113 = vsel %vm1890, %v2040, 0.0
      %2114 = vadd.xlane.f32.xlu0 %v2113
      %v2115 = vpop.xlane.xlu0 %2114
      %v2116 = vsel %vm1890, %v2042, 0.0
      %2117 = vadd.xlane.f32.xlu0 %v2116
      %v2118 = vpop.xlane.xlu0 %2117
      %v2119 = vsel %vm1890, %v2044, 0.0
      %2120 = vadd.xlane.f32.xlu0 %v2119
      %v2121 = vpop.xlane.xlu0 %2120
      %v2122 = vsel %vm1890, %v2046, 0.0
      %2123 = vadd.xlane.f32.xlu0 %v2122
      %v2124 = vpop.xlane.xlu0 %2123
      %v2125 = vsel %vm1890, %v2048, 0.0
      %2126 = vadd.xlane.f32.xlu0 %v2125
      %v2127 = vpop.xlane.xlu0 %2126
      %v2128 = vsel %vm1890, %v2050, 0.0
      %2129 = vadd.xlane.f32.xlu0 %v2128
      %v2130 = vpop.xlane.xlu0 %2129
      %v2131 = vsel %vm1890, %v2052, 0.0
      %2132 = vadd.xlane.f32.xlu0 %v2131
      %v2133 = vpop.xlane.xlu0 %2132
      %v2134 = vsel %vm1890, %v2054, 0.0
      %2135 = vadd.xlane.f32.xlu0 %v2134
      %v2136 = vpop.xlane.xlu0 %2135
      %v2137 = vsel %vm1890, %v2056, 0.0
      %2138 = vadd.xlane.f32.xlu0 %v2137
      %v2139 = vpop.xlane.xlu0 %2138
      %v2140 = vsel %vm1890, %v2058, 0.0
      %2141 = vadd.xlane.f32.xlu0 %v2140
      %v2142 = vpop.xlane.xlu0 %2141
      %v2143 = vsel %vm1890, %v2060, 0.0
      %2144 = vadd.xlane.f32.xlu0 %v2143
      %v2145 = vpop.xlane.xlu0 %2144
      %v2146 = vsel %vm1890, %v2062, 0.0
      %2147 = vadd.xlane.f32.xlu0 %v2146
      %v2148 = vpop.xlane.xlu0 %2147
      %v2149 = vsel %vm1890, %v2064, 0.0
      %2150 = vadd.xlane.f32.xlu0 %v2149
      %v2151 = vpop.xlane.xlu0 %2150
      %v2152 = vsel %vm1890, %v2066, 0.0
      %2153 = vadd.xlane.f32.xlu0 %v2152
      %v2154 = vpop.xlane.xlu0 %2153
      %v2155 = vsel %vm1890, %v2068, 0.0
      %2156 = vadd.xlane.f32.xlu0 %v2155
      %v2157 = vpop.xlane.xlu0 %2156
      %v2158 = vsel %vm1890, %v2070, 0.0
      %2159 = vadd.xlane.f32.xlu0 %v2158
      %v2160 = vpop.xlane.xlu0 %2159
      %v2161 = vsel %vm1890, %v2072, 0.0
      %2162 = vadd.xlane.f32.xlu0 %v2161
      %v2163 = vpop.xlane.xlu0 %2162
      %v2164 = vsel %vm1890, %v2074, 0.0
      %2165 = vadd.xlane.f32.xlu0 %v2164
      %v2166 = vpop.xlane.xlu0 %2165
      %v2167 = vsel %vm1890, %v2076, 0.0
      %2168 = vadd.xlane.f32.xlu0 %v2167
      %v2169 = vpop.xlane.xlu0 %2168
      %v2170 = vsel %vm1890, %v2078, 0.0
      %2171 = vadd.xlane.f32.xlu0 %v2170
      %v2172 = vpop.xlane.xlu0 %2171
      %v2173 = vsel %vm1890, %v2080, 0.0
      %2174 = vadd.xlane.f32.xlu0 %v2173
      %v2175 = vpop.xlane.xlu0 %2174
      %v2176 = vsel %vm1890, %v2082, 0.0
      %2177 = vadd.xlane.f32.xlu0 %v2176
      %v2178 = vpop.xlane.xlu0 %2177
      %v2179 = vrcp.pop %v2085
      %v2180 = vrcp.pop %v2088
      %v2181 = vrcp.pop %v2091
      %v2182 = vrcp.pop %v2094
      %v2183 = vrcp.pop %v2097
      %v2184 = vrcp.pop %v2100
      %v2185 = vrcp.pop %v2103
      %v2186 = vrcp.pop %v2106
      %v2187 = vrcp.pop %v2109
      %v2188 = vrcp.pop %v2112
      %v2189 = vrcp.pop %v2115
      %v2190 = vrcp.pop %v2118
      %v2191 = vrcp.pop %v2121
      %v2192 = vrcp.pop %v2124
      %v2193 = vrcp.pop %v2127
      %v2194 = vrcp.pop %v2130
      %v2195 = vrcp.pop %v2133
      %v2196 = vrcp.pop %v2136
      %v2197 = vrcp.pop %v2139
      %v2198 = vrcp.pop %v2142
      %v2199 = vrcp.pop %v2145
      %v2200 = vrcp.pop %v2148
      %v2201 = vrcp.pop %v2151
      %v2202 = vrcp.pop %v2154
      %v2203 = vrcp.pop %v2157
      %v2204 = vrcp.pop %v2160
      %v2205 = vrcp.pop %v2163
      %v2206 = vrcp.pop %v2166
      %v2207 = vrcp.pop %v2169
      %v2208 = vrcp.pop %v2172
      %v2209 = vrcp.pop %v2175
      %v2210 = vrcp.pop %v2178
      %v2211 = vmul.f32 %v2020, %v2179
      %v2212 = vmul.f32 %v2022, %v2180
      %v2213 = vmul.f32 %v2024, %v2181
      %v2214 = vmul.f32 %v2026, %v2182
      %v2215 = vmul.f32 %v2028, %v2183
      %v2216 = vmul.f32 %v2030, %v2184
      %v2217 = vmul.f32 %v2032, %v2185
      %v2218 = vmul.f32 %v2034, %v2186
      %v2219 = vmul.f32 %v2036, %v2187
      %v2220 = vmul.f32 %v2038, %v2188
      %v2221 = vmul.f32 %v2040, %v2189
      %v2222 = vmul.f32 %v2042, %v2190
      %v2223 = vmul.f32 %v2044, %v2191
      %v2224 = vmul.f32 %v2046, %v2192
      %v2225 = vmul.f32 %v2048, %v2193
      %v2226 = vmul.f32 %v2050, %v2194
      %v2227 = vmul.f32 %v2052, %v2195
      %v2228 = vmul.f32 %v2054, %v2196
      %v2229 = vmul.f32 %v2056, %v2197
      %v2230 = vmul.f32 %v2058, %v2198
      %v2231 = vmul.f32 %v2060, %v2199
      %v2232 = vmul.f32 %v2062, %v2200
      %v2233 = vmul.f32 %v2064, %v2201
      %v2234 = vmul.f32 %v2066, %v2202
      %v2235 = vmul.f32 %v2068, %v2203
      %v2236 = vmul.f32 %v2070, %v2204
      %v2237 = vmul.f32 %v2072, %v2205
      %v2238 = vmul.f32 %v2074, %v2206
      %v2239 = vmul.f32 %v2076, %v2207
      %v2240 = vmul.f32 %v2078, %v2208
      %v2241 = vmul.f32 %v2080, %v2209
      %v2242 = vmul.f32 %v2082, %v2210
      %v2243 = vpack.c.bf16 %v2211, %v2211
      %v2244 = vpack.c.bf16 %v2212, %v2212
      %v2245 = vpack.c.bf16 %v2213, %v2213
      %v2246 = vpack.c.bf16 %v2214, %v2214
      %v2247 = vpack.c.bf16 %v2215, %v2215
      %v2248 = vpack.c.bf16 %v2216, %v2216
      %v2249 = vpack.c.bf16 %v2217, %v2217
      %v2250 = vpack.c.bf16 %v2218, %v2218
      %v2251 = vpack.c.bf16 %v2219, %v2219
      %v2252 = vpack.c.bf16 %v2220, %v2220
      %v2253 = vpack.c.bf16 %v2221, %v2221
      %v2254 = vpack.c.bf16 %v2222, %v2222
      %v2255 = vpack.c.bf16 %v2223, %v2223
      %v2256 = vpack.c.bf16 %v2224, %v2224
      %v2257 = vpack.c.bf16 %v2225, %v2225
      %v2258 = vpack.c.bf16 %v2226, %v2226
      %v2259 = vpack.c.bf16 %v2227, %v2227
      %v2260 = vpack.c.bf16 %v2228, %v2228
      %v2261 = vpack.c.bf16 %v2229, %v2229
      %v2262 = vpack.c.bf16 %v2230, %v2230
      %v2263 = vpack.c.bf16 %v2231, %v2231
      %v2264 = vpack.c.bf16 %v2232, %v2232
      %v2265 = vpack.c.bf16 %v2233, %v2233
      %v2266 = vpack.c.bf16 %v2234, %v2234
      %v2267 = vpack.c.bf16 %v2235, %v2235
      %v2268 = vpack.c.bf16 %v2236, %v2236
      %v2269 = vpack.c.bf16 %v2237, %v2237
      %v2270 = vpack.c.bf16 %v2238, %v2238
      %v2271 = vpack.c.bf16 %v2239, %v2239
      %v2272 = vpack.c.bf16 %v2240, %v2240
      %v2273 = vpack.c.bf16 %v2241, %v2241
      %v2274 = vpack.c.bf16 %v2242, %v2242
      %v2283 = vunpack.c.l.b16 %v2243
      %v2284 = vunpack.c.l.b16 %v2244
      %v2285 = vunpack.c.l.b16 %v2245
      %v2286 = vunpack.c.l.b16 %v2246
      %v2287 = vunpack.c.l.b16 %v2247
      %v2288 = vunpack.c.l.b16 %v2248
      %v2289 = vunpack.c.l.b16 %v2249
      %v2290 = vunpack.c.l.b16 %v2250
      %v2291 = vpack.c.b16 %v2284, %v2283
      %v2292 = vpack.c.b16 %v2286, %v2285
      %v2293 = vpack.c.b16 %v2288, %v2287
      %v2294 = vpack.c.b16 %v2290, %v2289
      %2295 = vrot.lane.b32.xlu0 %v1541, 64
      %v2296 = vpop.permute.xlu0 %2295
      %2297 = vrot.lane.b32.xlu0 %v1542, 64
      %v2298 = vpop.permute.xlu0 %2297
      %2299 = vrot.lane.b32.xlu0 %v1543, 64
      %v2300 = vpop.permute.xlu0 %2299
      %2301 = vrot.lane.b32.xlu0 %v1544, 64
      %v2302 = vpop.permute.xlu0 %2301
      %v2308 = vsel %vm1890, %v2291, 0
      %v2311 = vsel %vm1890, %v2292, 0
      %v2314 = vsel %vm1890, %v2293, 0
      %v2317 = vsel %vm1890, %v2294, 0
      %2319 = vmatpush.bf16.msra.mxu0 0
      %2320 = vmatpush.bf16.msra.mxu0 0
      %2321 = vmatpush.bf16.msra.mxu0 0
      %2322 = vmatpush.bf16.msra.mxu0 0
      %2323 = vmatpush.bf16.msra.mxu0 %v2302
      %2324 = vmatpush.bf16.msra.mxu0 %v2300
      %2325 = vmatpush.bf16.msra.mxu0 %v2298
      %2326 = vmatpush.bf16.msra.mxu0 %v2296
      %2327 = vmatmul.bf16.gmra.mxu0 %v2308
      %v2328 = vpop.f32.mrf.mxu0
      %v2329 = vadd.f32 0.0, %v2328
      %v2330 = vpop.f32.mrf.mxu0
      %v2331 = vadd.f32 0.0, %v2330
      %2332 = vmatmul.bf16.gmra.mxu0 %v2311
      %v2333 = vpop.f32.mrf.mxu0
      %v2334 = vadd.f32 0.0, %v2333
      %v2335 = vpop.f32.mrf.mxu0
      %v2336 = vadd.f32 0.0, %v2335
      %2337 = vmatmul.bf16.gmra.mxu0 %v2314
      %v2338 = vpop.f32.mrf.mxu0
      %v2339 = vadd.f32 0.0, %v2338
      %v2340 = vpop.f32.mrf.mxu0
      %v2341 = vadd.f32 0.0, %v2340
      %2342 = vmatmul.bf16.gmra.mxu0 %v2317
      %v2343 = vpop.f32.mrf.mxu0
      %v2344 = vadd.f32 0.0, %v2343
      %v2345 = vpop.f32.mrf.mxu0
      %v2346 = vadd.f32 0.0, %v2345
      %2347 = vdwg.mxu0
      %v2356 = vunpack.c.l.b16 %v2251
      %v2357 = vunpack.c.l.b16 %v2252
      %v2358 = vunpack.c.l.b16 %v2253
      %v2359 = vunpack.c.l.b16 %v2254
      %v2360 = vunpack.c.l.b16 %v2255
      %v2361 = vunpack.c.l.b16 %v2256
      %v2362 = vunpack.c.l.b16 %v2257
      %v2363 = vunpack.c.l.b16 %v2258
      %v2364 = vpack.c.b16 %v2357, %v2356
      %v2365 = vpack.c.b16 %v2359, %v2358
      %v2366 = vpack.c.b16 %v2361, %v2360
      %v2367 = vpack.c.b16 %v2363, %v2362
      %2368 = vrot.lane.b32.xlu0 %v1623, 64
      %v2369 = vpop.permute.xlu0 %2368
      %2370 = vrot.lane.b32.xlu0 %v1624, 64
      %v2371 = vpop.permute.xlu0 %2370
      %2372 = vrot.lane.b32.xlu0 %v1625, 64
      %v2373 = vpop.permute.xlu0 %2372
      %2374 = vrot.lane.b32.xlu0 %v1626, 64
      %v2375 = vpop.permute.xlu0 %2374
      %v2381 = vsel %vm1890, %v2364, 0
      %v2384 = vsel %vm1890, %v2365, 0
      %v2387 = vsel %vm1890, %v2366, 0
      %v2390 = vsel %vm1890, %v2367, 0
      %2392 = vmatpush.bf16.msra.mxu0 0
      %2393 = vmatpush.bf16.msra.mxu0 0
      %2394 = vmatpush.bf16.msra.mxu0 0
      %2395 = vmatpush.bf16.msra.mxu0 0
      %2396 = vmatpush.bf16.msra.mxu0 %v2375
      %2397 = vmatpush.bf16.msra.mxu0 %v2373
      %2398 = vmatpush.bf16.msra.mxu0 %v2371
      %2399 = vmatpush.bf16.msra.mxu0 %v2369
      %2400 = vmatmul.bf16.gmra.mxu0 %v2381
      %v2401 = vpop.f32.mrf.mxu0
      %v2402 = vadd.f32 0.0, %v2401
      %v2403 = vpop.f32.mrf.mxu0
      %v2404 = vadd.f32 0.0, %v2403
      %2405 = vmatmul.bf16.gmra.mxu0 %v2384
      %v2406 = vpop.f32.mrf.mxu0
      %v2407 = vadd.f32 0.0, %v2406
      %v2408 = vpop.f32.mrf.mxu0
      %v2409 = vadd.f32 0.0, %v2408
      %2410 = vmatmul.bf16.gmra.mxu0 %v2387
      %v2411 = vpop.f32.mrf.mxu0
      %v2412 = vadd.f32 0.0, %v2411
      %v2413 = vpop.f32.mrf.mxu0
      %v2414 = vadd.f32 0.0, %v2413
      %2415 = vmatmul.bf16.gmra.mxu0 %v2390
      %v2416 = vpop.f32.mrf.mxu0
      %v2417 = vadd.f32 0.0, %v2416
      %v2418 = vpop.f32.mrf.mxu0
      %v2419 = vadd.f32 0.0, %v2418
      %2420 = vdwg.mxu0
      %v2429 = vunpack.c.l.b16 %v2259
      %v2430 = vunpack.c.l.b16 %v2260
      %v2431 = vunpack.c.l.b16 %v2261
      %v2432 = vunpack.c.l.b16 %v2262
      %v2433 = vunpack.c.l.b16 %v2263
      %v2434 = vunpack.c.l.b16 %v2264
      %v2435 = vunpack.c.l.b16 %v2265
      %v2436 = vunpack.c.l.b16 %v2266
      %v2437 = vpack.c.b16 %v2430, %v2429
      %v2438 = vpack.c.b16 %v2432, %v2431
      %v2439 = vpack.c.b16 %v2434, %v2433
      %v2440 = vpack.c.b16 %v2436, %v2435
      %2441 = vrot.lane.b32.xlu0 %v1704, 64
      %v2442 = vpop.permute.xlu0 %2441
      %2443 = vrot.lane.b32.xlu0 %v1705, 64
      %v2444 = vpop.permute.xlu0 %2443
      %2445 = vrot.lane.b32.xlu0 %v1706, 64
      %v2446 = vpop.permute.xlu0 %2445
      %2447 = vrot.lane.b32.xlu0 %v1707, 64
      %v2448 = vpop.permute.xlu0 %2447
      %v2454 = vsel %vm1890, %v2437, 0
      %v2457 = vsel %vm1890, %v2438, 0
      %v2460 = vsel %vm1890, %v2439, 0
      %v2463 = vsel %vm1890, %v2440, 0
      %2465 = vmatpush.bf16.msra.mxu0 0
      %2466 = vmatpush.bf16.msra.mxu0 0
      %2467 = vmatpush.bf16.msra.mxu0 0
      %2468 = vmatpush.bf16.msra.mxu0 0
      %2469 = vmatpush.bf16.msra.mxu0 %v2448
      %2470 = vmatpush.bf16.msra.mxu0 %v2446
      %2471 = vmatpush.bf16.msra.mxu0 %v2444
      %2472 = vmatpush.bf16.msra.mxu0 %v2442
      %2473 = vmatmul.bf16.gmra.mxu0 %v2454
      %v2474 = vpop.f32.mrf.mxu0
      %v2475 = vadd.f32 0.0, %v2474
      %v2476 = vpop.f32.mrf.mxu0
      %v2477 = vadd.f32 0.0, %v2476
      %2478 = vmatmul.bf16.gmra.mxu0 %v2457
      %v2479 = vpop.f32.mrf.mxu0
      %v2480 = vadd.f32 0.0, %v2479
      %v2481 = vpop.f32.mrf.mxu0
      %v2482 = vadd.f32 0.0, %v2481
      %2483 = vmatmul.bf16.gmra.mxu0 %v2460
      %v2484 = vpop.f32.mrf.mxu0
      %v2485 = vadd.f32 0.0, %v2484
      %v2486 = vpop.f32.mrf.mxu0
      %v2487 = vadd.f32 0.0, %v2486
      %2488 = vmatmul.bf16.gmra.mxu0 %v2463
      %v2489 = vpop.f32.mrf.mxu0
      %v2490 = vadd.f32 0.0, %v2489
      %v2491 = vpop.f32.mrf.mxu0
      %v2492 = vadd.f32 0.0, %v2491
      %2493 = vdwg.mxu0
      %v2502 = vunpack.c.l.b16 %v2267
      %v2503 = vunpack.c.l.b16 %v2268
      %v2504 = vunpack.c.l.b16 %v2269
      %v2505 = vunpack.c.l.b16 %v2270
      %v2506 = vunpack.c.l.b16 %v2271
      %v2507 = vunpack.c.l.b16 %v2272
      %v2508 = vunpack.c.l.b16 %v2273
      %v2509 = vunpack.c.l.b16 %v2274
      %v2510 = vpack.c.b16 %v2503, %v2502
      %v2511 = vpack.c.b16 %v2505, %v2504
      %v2512 = vpack.c.b16 %v2507, %v2506
      %v2513 = vpack.c.b16 %v2509, %v2508
      %2514 = vrot.lane.b32.xlu0 %v1785, 64
      %v2515 = vpop.permute.xlu0 %2514
      %2516 = vrot.lane.b32.xlu0 %v1786, 64
      %v2517 = vpop.permute.xlu0 %2516
      %2518 = vrot.lane.b32.xlu0 %v1787, 64
      %v2519 = vpop.permute.xlu0 %2518
      %2520 = vrot.lane.b32.xlu0 %v1788, 64
      %v2521 = vpop.permute.xlu0 %2520
      %v2527 = vsel %vm1890, %v2510, 0
      %v2530 = vsel %vm1890, %v2511, 0
      %v2533 = vsel %vm1890, %v2512, 0
      %v2536 = vsel %vm1890, %v2513, 0
      %2538 = vmatpush.bf16.msra.mxu0 0
      %2539 = vmatpush.bf16.msra.mxu0 0
      %2540 = vmatpush.bf16.msra.mxu0 0
      %2541 = vmatpush.bf16.msra.mxu0 0
      %2542 = vmatpush.bf16.msra.mxu0 %v2521
      %2543 = vmatpush.bf16.msra.mxu0 %v2519
      %2544 = vmatpush.bf16.msra.mxu0 %v2517
      %2545 = vmatpush.bf16.msra.mxu0 %v2515
      %2546 = vmatmul.bf16.gmra.mxu0 %v2527
      %v2547 = vpop.f32.mrf.mxu0
      %v2548 = vadd.f32 0.0, %v2547
      %v2549 = vpop.f32.mrf.mxu0
      %v2550 = vadd.f32 0.0, %v2549
      %2551 = vmatmul.bf16.gmra.mxu0 %v2530
      %v2552 = vpop.f32.mrf.mxu0
      %v2553 = vadd.f32 0.0, %v2552
      %v2554 = vpop.f32.mrf.mxu0
      %v2555 = vadd.f32 0.0, %v2554
      %2556 = vmatmul.bf16.gmra.mxu0 %v2533
      %v2557 = vpop.f32.mrf.mxu0
      %v2558 = vadd.f32 0.0, %v2557
      %v2559 = vpop.f32.mrf.mxu0
      %v2560 = vadd.f32 0.0, %v2559
      %2561 = vmatmul.bf16.gmra.mxu0 %v2536
      %v2562 = vpop.f32.mrf.mxu0
      %v2563 = vadd.f32 0.0, %v2562
      %v2564 = vpop.f32.mrf.mxu0
      %v2565 = vadd.f32 0.0, %v2564
      %2566 = vdwg.mxu0
      %v2567 = vpack.c.bf16 %v2331, %v2329
      %v2568 = vpack.c.bf16 %v2336, %v2334
      %v2569 = vpack.c.bf16 %v2341, %v2339
      %v2570 = vpack.c.bf16 %v2346, %v2344
      %v2571 = vpack.c.bf16 %v2404, %v2402
      %v2572 = vpack.c.bf16 %v2409, %v2407
      %v2573 = vpack.c.bf16 %v2414, %v2412
      %v2574 = vpack.c.bf16 %v2419, %v2417
      %v2575 = vpack.c.bf16 %v2477, %v2475
      %v2576 = vpack.c.bf16 %v2482, %v2480
      %v2577 = vpack.c.bf16 %v2487, %v2485
      %v2578 = vpack.c.bf16 %v2492, %v2490
      %v2579 = vpack.c.bf16 %v2550, %v2548
      %v2580 = vpack.c.bf16 %v2555, %v2553
      %v2581 = vpack.c.bf16 %v2560, %v2558
      %v2582 = vpack.c.bf16 %v2565, %v2563
      %v2583 = vld [vmem:[%s7] sm:$0xf]
      %s2584 = scalar_lea.vmem %s1, 64
      %v2585 = vld [vmem:[%s2584] sm:$0xff]
      %v2586 = vld [vmem:[%s2584 + $0x8] sm:$0xff]
      %v2587 = vld [vmem:[%s2584 + $0x10] sm:$0xff]
      %v2588 = vld [vmem:[%s2584 + $0x18] sm:$0xff]
      %v2589 = vld [vmem:[%s2584 + $0x20] sm:$0xff]
      %v2590 = vld [vmem:[%s2584 + $0x28] sm:$0xff]
      %v2591 = vld [vmem:[%s2584 + $0x30] sm:$0xff]
      %v2592 = vld [vmem:[%s2584 + $0x38] sm:$0xff]
      %2593 = vrot.lane.b32.xlu0 %v1541, 120
      %v2594 = vpop.permute.xlu0 %2593
      %2595 = vrot.lane.b32.xlu0 %v1542, 120
      %v2596 = vpop.permute.xlu0 %2595
      %2597 = vrot.lane.b32.xlu0 %v1543, 120
      %v2598 = vpop.permute.xlu0 %2597
      %2599 = vrot.lane.b32.xlu0 %v1544, 120
      %v2600 = vpop.permute.xlu0 %2599
      %2601 = vrot.lane.b32.xlu0 %v1541, 88
      %v2602 = vpop.permute.xlu0 %2601
      %2603 = vrot.lane.b32.xlu0 %v1542, 88
      %v2604 = vpop.permute.xlu0 %2603
      %2605 = vrot.lane.b32.xlu0 %v1543, 88
      %v2606 = vpop.permute.xlu0 %2605
      %2607 = vrot.lane.b32.xlu0 %v1544, 88
      %v2608 = vpop.permute.xlu0 %2607
      %v2610 = vsel %vm1553, %v2594, 0
      %v2613 = vsel %vm1553, %v2596, 0
      %v2616 = vsel %vm1553, %v2598, 0
      %v2619 = vsel %vm1553, %v2600, 0
      %v2622 = vsel %vm1553, %v2602, 0
      %v2625 = vsel %vm1553, %v2604, 0
      %v2628 = vsel %vm1553, %v2606, 0
      %v2631 = vsel %vm1553, %v2608, 0
      %2633 = vmatpush.bf16.xpose.msra.mxu0 0
      %2634 = vmatpush.bf16.xpose.msra.mxu0 0
      %2635 = vmatpush.bf16.xpose.msra.mxu0 0
      %2636 = vmatpush.bf16.xpose.msra.mxu0 0
      %2637 = vmatpush.bf16.xpose.msra.mxu0 %v2631
      %2638 = vmatpush.bf16.xpose.msra.mxu0 %v2628
      %2639 = vmatpush.bf16.xpose.msra.mxu0 %v2625
      %2640 = vmatpush.bf16.xpose.msra.mxu0 %v2622
      %2641 = vmatmul.bf16.gmra.mxu0 %v2610
      %v2642 = vpop.f32.mrf.mxu0
      %v2643 = vadd.f32 %v2585, %v2642
      %v2644 = vpop.f32.mrf.mxu0
      %v2645 = vadd.f32 %v2586, %v2644
      %2646 = vmatmul.bf16.gmra.mxu0 %v2613
      %v2647 = vpop.f32.mrf.mxu0
      %v2648 = vadd.f32 %v2587, %v2647
      %v2649 = vpop.f32.mrf.mxu0
      %v2650 = vadd.f32 %v2588, %v2649
      %2651 = vmatmul.bf16.gmra.mxu0 %v2616
      %v2652 = vpop.f32.mrf.mxu0
      %v2653 = vadd.f32 %v2589, %v2652
      %v2654 = vpop.f32.mrf.mxu0
      %v2655 = vadd.f32 %v2590, %v2654
      %2656 = vmatmul.bf16.gmra.mxu0 %v2619
      %v2657 = vpop.f32.mrf.mxu0
      %v2658 = vadd.f32 %v2591, %v2657
      %v2659 = vpop.f32.mrf.mxu0
      %v2660 = vadd.f32 %v2592, %v2659
      %2661 = vdwg.mxu0
      %2662 = vrot.lane.b32.xlu0 %v1623, 120
      %v2663 = vpop.permute.xlu0 %2662
      %2664 = vrot.lane.b32.xlu0 %v1624, 120
      %v2665 = vpop.permute.xlu0 %2664
      %2666 = vrot.lane.b32.xlu0 %v1625, 120
      %v2667 = vpop.permute.xlu0 %2666
      %2668 = vrot.lane.b32.xlu0 %v1626, 120
      %v2669 = vpop.permute.xlu0 %2668
      %2670 = vrot.lane.b32.xlu0 %v1623, 88
      %v2671 = vpop.permute.xlu0 %2670
      %2672 = vrot.lane.b32.xlu0 %v1624, 88
      %v2673 = vpop.permute.xlu0 %2672
      %2674 = vrot.lane.b32.xlu0 %v1625, 88
      %v2675 = vpop.permute.xlu0 %2674
      %2676 = vrot.lane.b32.xlu0 %v1626, 88
      %v2677 = vpop.permute.xlu0 %2676
      %v2679 = vsel %vm1553, %v2663, 0
      %v2682 = vsel %vm1553, %v2665, 0
      %v2685 = vsel %vm1553, %v2667, 0
      %v2688 = vsel %vm1553, %v2669, 0
      %v2691 = vsel %vm1553, %v2671, 0
      %v2694 = vsel %vm1553, %v2673, 0
      %v2697 = vsel %vm1553, %v2675, 0
      %v2700 = vsel %vm1553, %v2677, 0
      %2702 = vmatpush.bf16.xpose.msra.mxu0 0
      %2703 = vmatpush.bf16.xpose.msra.mxu0 0
      %2704 = vmatpush.bf16.xpose.msra.mxu0 0
      %2705 = vmatpush.bf16.xpose.msra.mxu0 0
      %2706 = vmatpush.bf16.xpose.msra.mxu0 %v2700
      %2707 = vmatpush.bf16.xpose.msra.mxu0 %v2697
      %2708 = vmatpush.bf16.xpose.msra.mxu0 %v2694
      %2709 = vmatpush.bf16.xpose.msra.mxu0 %v2691
      %2710 = vmatmul.bf16.gmra.mxu0 %v2679
      %v2711 = vpop.f32.mrf.mxu0
      %v2712 = vadd.f32 %v2585, %v2711
      %v2713 = vpop.f32.mrf.mxu0
      %v2714 = vadd.f32 %v2586, %v2713
      %2715 = vmatmul.bf16.gmra.mxu0 %v2682
      %v2716 = vpop.f32.mrf.mxu0
      %v2717 = vadd.f32 %v2587, %v2716
      %v2718 = vpop.f32.mrf.mxu0
      %v2719 = vadd.f32 %v2588, %v2718
      %2720 = vmatmul.bf16.gmra.mxu0 %v2685
      %v2721 = vpop.f32.mrf.mxu0
      %v2722 = vadd.f32 %v2589, %v2721
      %v2723 = vpop.f32.mrf.mxu0
      %v2724 = vadd.f32 %v2590, %v2723
      %2725 = vmatmul.bf16.gmra.mxu0 %v2688
      %v2726 = vpop.f32.mrf.mxu0
      %v2727 = vadd.f32 %v2591, %v2726
      %v2728 = vpop.f32.mrf.mxu0
      %v2729 = vadd.f32 %v2592, %v2728
      %2730 = vdwg.mxu0
      %2731 = vrot.lane.b32.xlu0 %v1704, 120
      %v2732 = vpop.permute.xlu0 %2731
      %2733 = vrot.lane.b32.xlu0 %v1705, 120
      %v2734 = vpop.permute.xlu0 %2733
      %2735 = vrot.lane.b32.xlu0 %v1706, 120
      %v2736 = vpop.permute.xlu0 %2735
      %2737 = vrot.lane.b32.xlu0 %v1707, 120
      %v2738 = vpop.permute.xlu0 %2737
      %2739 = vrot.lane.b32.xlu0 %v1704, 88
      %v2740 = vpop.permute.xlu0 %2739
      %2741 = vrot.lane.b32.xlu0 %v1705, 88
      %v2742 = vpop.permute.xlu0 %2741
      %2743 = vrot.lane.b32.xlu0 %v1706, 88
      %v2744 = vpop.permute.xlu0 %2743
      %2745 = vrot.lane.b32.xlu0 %v1707, 88
      %v2746 = vpop.permute.xlu0 %2745
      %v2748 = vsel %vm1553, %v2732, 0
      %v2751 = vsel %vm1553, %v2734, 0
      %v2754 = vsel %vm1553, %v2736, 0
      %v2757 = vsel %vm1553, %v2738, 0
      %v2760 = vsel %vm1553, %v2740, 0
      %v2763 = vsel %vm1553, %v2742, 0
      %v2766 = vsel %vm1553, %v2744, 0
      %v2769 = vsel %vm1553, %v2746, 0
      %2771 = vmatpush.bf16.xpose.msra.mxu0 0
      %2772 = vmatpush.bf16.xpose.msra.mxu0 0
      %2773 = vmatpush.bf16.xpose.msra.mxu0 0
      %2774 = vmatpush.bf16.xpose.msra.mxu0 0
      %2775 = vmatpush.bf16.xpose.msra.mxu0 %v2769
      %2776 = vmatpush.bf16.xpose.msra.mxu0 %v2766
      %2777 = vmatpush.bf16.xpose.msra.mxu0 %v2763
      %2778 = vmatpush.bf16.xpose.msra.mxu0 %v2760
      %2779 = vmatmul.bf16.gmra.mxu0 %v2748
      %v2780 = vpop.f32.mrf.mxu0
      %v2781 = vadd.f32 %v2585, %v2780
      %v2782 = vpop.f32.mrf.mxu0
      %v2783 = vadd.f32 %v2586, %v2782
      %2784 = vmatmul.bf16.gmra.mxu0 %v2751
      %v2785 = vpop.f32.mrf.mxu0
      %v2786 = vadd.f32 %v2587, %v2785
      %v2787 = vpop.f32.mrf.mxu0
      %v2788 = vadd.f32 %v2588, %v2787
      %2789 = vmatmul.bf16.gmra.mxu0 %v2754
      %v2790 = vpop.f32.mrf.mxu0
      %v2791 = vadd.f32 %v2589, %v2790
      %v2792 = vpop.f32.mrf.mxu0
      %v2793 = vadd.f32 %v2590, %v2792
      %2794 = vmatmul.bf16.gmra.mxu0 %v2757
      %v2795 = vpop.f32.mrf.mxu0
      %v2796 = vadd.f32 %v2591, %v2795
      %v2797 = vpop.f32.mrf.mxu0
      %v2798 = vadd.f32 %v2592, %v2797
      %2799 = vdwg.mxu0
      %2800 = vrot.lane.b32.xlu0 %v1785, 120
      %v2801 = vpop.permute.xlu0 %2800
      %2802 = vrot.lane.b32.xlu0 %v1786, 120
      %v2803 = vpop.permute.xlu0 %2802
      %2804 = vrot.lane.b32.xlu0 %v1787, 120
      %v2805 = vpop.permute.xlu0 %2804
      %2806 = vrot.lane.b32.xlu0 %v1788, 120
      %v2807 = vpop.permute.xlu0 %2806
      %2808 = vrot.lane.b32.xlu0 %v1785, 88
      %v2809 = vpop.permute.xlu0 %2808
      %2810 = vrot.lane.b32.xlu0 %v1786, 88
      %v2811 = vpop.permute.xlu0 %2810
      %2812 = vrot.lane.b32.xlu0 %v1787, 88
      %v2813 = vpop.permute.xlu0 %2812
      %2814 = vrot.lane.b32.xlu0 %v1788, 88
      %v2815 = vpop.permute.xlu0 %2814
      %v2817 = vsel %vm1553, %v2801, 0
      %v2820 = vsel %vm1553, %v2803, 0
      %v2823 = vsel %vm1553, %v2805, 0
      %v2826 = vsel %vm1553, %v2807, 0
      %v2829 = vsel %vm1553, %v2809, 0
      %v2832 = vsel %vm1553, %v2811, 0
      %v2835 = vsel %vm1553, %v2813, 0
      %v2838 = vsel %vm1553, %v2815, 0
      %2840 = vmatpush.bf16.xpose.msra.mxu0 0
      %2841 = vmatpush.bf16.xpose.msra.mxu0 0
      %2842 = vmatpush.bf16.xpose.msra.mxu0 0
      %2843 = vmatpush.bf16.xpose.msra.mxu0 0
      %2844 = vmatpush.bf16.xpose.msra.mxu0 %v2838
      %2845 = vmatpush.bf16.xpose.msra.mxu0 %v2835
      %2846 = vmatpush.bf16.xpose.msra.mxu0 %v2832
      %2847 = vmatpush.bf16.xpose.msra.mxu0 %v2829
      %2848 = vmatmul.bf16.gmra.mxu0 %v2817
      %v2849 = vpop.f32.mrf.mxu0
      %v2850 = vadd.f32 %v2585, %v2849
      %v2851 = vpop.f32.mrf.mxu0
      %v2852 = vadd.f32 %v2586, %v2851
      %2853 = vmatmul.bf16.gmra.mxu0 %v2820
      %v2854 = vpop.f32.mrf.mxu0
      %v2855 = vadd.f32 %v2587, %v2854
      %v2856 = vpop.f32.mrf.mxu0
      %v2857 = vadd.f32 %v2588, %v2856
      %2858 = vmatmul.bf16.gmra.mxu0 %v2823
      %v2859 = vpop.f32.mrf.mxu0
      %v2860 = vadd.f32 %v2589, %v2859
      %v2861 = vpop.f32.mrf.mxu0
      %v2862 = vadd.f32 %v2590, %v2861
      %2863 = vmatmul.bf16.gmra.mxu0 %v2826
      %v2864 = vpop.f32.mrf.mxu0
      %v2865 = vadd.f32 %v2591, %v2864
      %v2866 = vpop.f32.mrf.mxu0
      %v2867 = vadd.f32 %v2592, %v2866
      %2868 = vdwg.mxu0
      %v2869 = vadd.f32 %v2643, %v1850
      %v2870 = vadd.f32 %v2645, %v1851
      %v2871 = vadd.f32 %v2648, %v1852
      %v2872 = vadd.f32 %v2650, %v1853
      %v2873 = vadd.f32 %v2653, %v1854
      %v2874 = vadd.f32 %v2655, %v1855
      %v2875 = vadd.f32 %v2658, %v1856
      %v2876 = vadd.f32 %v2660, %v1857
      %v2877 = vadd.f32 %v2712, %v1850
      %v2878 = vadd.f32 %v2714, %v1851
      %v2879 = vadd.f32 %v2717, %v1852
      %v2880 = vadd.f32 %v2719, %v1853
      %v2881 = vadd.f32 %v2722, %v1854
      %v2882 = vadd.f32 %v2724, %v1855
      %v2883 = vadd.f32 %v2727, %v1856
      %v2884 = vadd.f32 %v2729, %v1857
      %v2885 = vadd.f32 %v2781, %v1850
      %v2886 = vadd.f32 %v2783, %v1851
      %v2887 = vadd.f32 %v2786, %v1852
      %v2888 = vadd.f32 %v2788, %v1853
      %v2889 = vadd.f32 %v2791, %v1854
      %v2890 = vadd.f32 %v2793, %v1855
      %v2891 = vadd.f32 %v2796, %v1856
      %v2892 = vadd.f32 %v2798, %v1857
      %v2893 = vadd.f32 %v2850, %v1850
      %v2894 = vadd.f32 %v2852, %v1851
      %v2895 = vadd.f32 %v2855, %v1852
      %v2896 = vadd.f32 %v2857, %v1853
      %v2897 = vadd.f32 %v2860, %v1854
      %v2898 = vadd.f32 %v2862, %v1855
      %v2899 = vadd.f32 %v2865, %v1856
      %v2900 = vadd.f32 %v2867, %v1857
      %v2901 = vsel %vm1890, %v2869, -inf
      %2902 = vmax.xlane.f32.xlu0 %v2901
      %v2903 = vpop.xlane.xlu0 %2902
      %v2904 = vsel %vm1890, %v2870, -inf
      %2905 = vmax.xlane.f32.xlu0 %v2904
      %v2906 = vpop.xlane.xlu0 %2905
      %v2907 = vsel %vm1890, %v2871, -inf
      %2908 = vmax.xlane.f32.xlu0 %v2907
      %v2909 = vpop.xlane.xlu0 %2908
      %v2910 = vsel %vm1890, %v2872, -inf
      %2911 = vmax.xlane.f32.xlu0 %v2910
      %v2912 = vpop.xlane.xlu0 %2911
      %v2913 = vsel %vm1890, %v2873, -inf
      %2914 = vmax.xlane.f32.xlu0 %v2913
      %v2915 = vpop.xlane.xlu0 %2914
      %v2916 = vsel %vm1890, %v2874, -inf
      %2917 = vmax.xlane.f32.xlu0 %v2916
      %v2918 = vpop.xlane.xlu0 %2917
      %v2919 = vsel %vm1890, %v2875, -inf
      %2920 = vmax.xlane.f32.xlu0 %v2919
      %v2921 = vpop.xlane.xlu0 %2920
      %v2922 = vsel %vm1890, %v2876, -inf
      %2923 = vmax.xlane.f32.xlu0 %v2922
      %v2924 = vpop.xlane.xlu0 %2923
      %v2925 = vsel %vm1890, %v2877, -inf
      %2926 = vmax.xlane.f32.xlu0 %v2925
      %v2927 = vpop.xlane.xlu0 %2926
      %v2928 = vsel %vm1890, %v2878, -inf
      %2929 = vmax.xlane.f32.xlu0 %v2928
      %v2930 = vpop.xlane.xlu0 %2929
      %v2931 = vsel %vm1890, %v2879, -inf
      %2932 = vmax.xlane.f32.xlu0 %v2931
      %v2933 = vpop.xlane.xlu0 %2932
      %v2934 = vsel %vm1890, %v2880, -inf
      %2935 = vmax.xlane.f32.xlu0 %v2934
      %v2936 = vpop.xlane.xlu0 %2935
      %v2937 = vsel %vm1890, %v2881, -inf
      %2938 = vmax.xlane.f32.xlu0 %v2937
      %v2939 = vpop.xlane.xlu0 %2938
      %v2940 = vsel %vm1890, %v2882, -inf
      %2941 = vmax.xlane.f32.xlu0 %v2940
      %v2942 = vpop.xlane.xlu0 %2941
      %v2943 = vsel %vm1890, %v2883, -inf
      %2944 = vmax.xlane.f32.xlu0 %v2943
      %v2945 = vpop.xlane.xlu0 %2944
      %v2946 = vsel %vm1890, %v2884, -inf
      %2947 = vmax.xlane.f32.xlu0 %v2946
      %v2948 = vpop.xlane.xlu0 %2947
      %v2949 = vsel %vm1890, %v2885, -inf
      %2950 = vmax.xlane.f32.xlu0 %v2949
      %v2951 = vpop.xlane.xlu0 %2950
      %v2952 = vsel %vm1890, %v2886, -inf
      %2953 = vmax.xlane.f32.xlu0 %v2952
      %v2954 = vpop.xlane.xlu0 %2953
      %v2955 = vsel %vm1890, %v2887, -inf
      %2956 = vmax.xlane.f32.xlu0 %v2955
      %v2957 = vpop.xlane.xlu0 %2956
      %v2958 = vsel %vm1890, %v2888, -inf
      %2959 = vmax.xlane.f32.xlu0 %v2958
      %v2960 = vpop.xlane.xlu0 %2959
      %v2961 = vsel %vm1890, %v2889, -inf
      %2962 = vmax.xlane.f32.xlu0 %v2961
      %v2963 = vpop.xlane.xlu0 %2962
      %v2964 = vsel %vm1890, %v2890, -inf
      %2965 = vmax.xlane.f32.xlu0 %v2964
      %v2966 = vpop.xlane.xlu0 %2965
      %v2967 = vsel %vm1890, %v2891, -inf
      %2968 = vmax.xlane.f32.xlu0 %v2967
      %v2969 = vpop.xlane.xlu0 %2968
      %v2970 = vsel %vm1890, %v2892, -inf
      %2971 = vmax.xlane.f32.xlu0 %v2970
      %v2972 = vpop.xlane.xlu0 %2971
      %v2973 = vsel %vm1890, %v2893, -inf
      %2974 = vmax.xlane.f32.xlu0 %v2973
      %v2975 = vpop.xlane.xlu0 %2974
      %v2976 = vsel %vm1890, %v2894, -inf
      %2977 = vmax.xlane.f32.xlu0 %v2976
      %v2978 = vpop.xlane.xlu0 %2977
      %v2979 = vsel %vm1890, %v2895, -inf
      %2980 = vmax.xlane.f32.xlu0 %v2979
      %v2981 = vpop.xlane.xlu0 %2980
      %v2982 = vsel %vm1890, %v2896, -inf
      %2983 = vmax.xlane.f32.xlu0 %v2982
      %v2984 = vpop.xlane.xlu0 %2983
      %v2985 = vsel %vm1890, %v2897, -inf
      %2986 = vmax.xlane.f32.xlu0 %v2985
      %v2987 = vpop.xlane.xlu0 %2986
      %v2988 = vsel %vm1890, %v2898, -inf
      %2989 = vmax.xlane.f32.xlu0 %v2988
      %v2990 = vpop.xlane.xlu0 %2989
      %v2991 = vsel %vm1890, %v2899, -inf
      %2992 = vmax.xlane.f32.xlu0 %v2991
      %v2993 = vpop.xlane.xlu0 %2992
      %v2994 = vsel %vm1890, %v2900, -inf
      %2995 = vmax.xlane.f32.xlu0 %v2994
      %v2996 = vpop.xlane.xlu0 %2995
      %v2997 = vsub.f32 %v2869, %v2903
      %v2998 = vsub.f32 %v2870, %v2906
      %v2999 = vsub.f32 %v2871, %v2909
      %v3000 = vsub.f32 %v2872, %v2912
      %v3001 = vsub.f32 %v2873, %v2915
      %v3002 = vsub.f32 %v2874, %v2918
      %v3003 = vsub.f32 %v2875, %v2921
      %v3004 = vsub.f32 %v2876, %v2924
      %v3005 = vsub.f32 %v2877, %v2927
      %v3006 = vsub.f32 %v2878, %v2930
      %v3007 = vsub.f32 %v2879, %v2933
      %v3008 = vsub.f32 %v2880, %v2936
      %v3009 = vsub.f32 %v2881, %v2939
      %v3010 = vsub.f32 %v2882, %v2942
      %v3011 = vsub.f32 %v2883, %v2945
      %v3012 = vsub.f32 %v2884, %v2948
      %v3013 = vsub.f32 %v2885, %v2951
      %v3014 = vsub.f32 %v2886, %v2954
      %v3015 = vsub.f32 %v2887, %v2957
      %v3016 = vsub.f32 %v2888, %v2960
      %v3017 = vsub.f32 %v2889, %v2963
      %v3018 = vsub.f32 %v2890, %v2966
      %v3019 = vsub.f32 %v2891, %v2969
      %v3020 = vsub.f32 %v2892, %v2972
      %v3021 = vsub.f32 %v2893, %v2975
      %v3022 = vsub.f32 %v2894, %v2978
      %v3023 = vsub.f32 %v2895, %v2981
      %v3024 = vsub.f32 %v2896, %v2984
      %v3025 = vsub.f32 %v2897, %v2987
      %v3026 = vsub.f32 %v2898, %v2990
      %v3027 = vsub.f32 %v2899, %v2993
      %v3028 = vsub.f32 %v2900, %v2996
      %v3029 = vmul.f32 %v2997, 1.442695
      %v3030 = vpow.pop %v3029
      %v3031 = vmul.f32 %v2998, 1.442695
      %v3032 = vpow.pop %v3031
      %v3033 = vmul.f32 %v2999, 1.442695
      %v3034 = vpow.pop %v3033
      %v3035 = vmul.f32 %v3000, 1.442695
      %v3036 = vpow.pop %v3035
      %v3037 = vmul.f32 %v3001, 1.442695
      %v3038 = vpow.pop %v3037
      %v3039 = vmul.f32 %v3002, 1.442695
      %v3040 = vpow.pop %v3039
      %v3041 = vmul.f32 %v3003, 1.442695
      %v3042 = vpow.pop %v3041
      %v3043 = vmul.f32 %v3004, 1.442695
      %v3044 = vpow.pop %v3043
      %v3045 = vmul.f32 %v3005, 1.442695
      %v3046 = vpow.pop %v3045
      %v3047 = vmul.f32 %v3006, 1.442695
      %v3048 = vpow.pop %v3047
      %v3049 = vmul.f32 %v3007, 1.442695
      %v3050 = vpow.pop %v3049
      %v3051 = vmul.f32 %v3008, 1.442695
      %v3052 = vpow.pop %v3051
      %v3053 = vmul.f32 %v3009, 1.442695
      %v3054 = vpow.pop %v3053
      %v3055 = vmul.f32 %v3010, 1.442695
      %v3056 = vpow.pop %v3055
      %v3057 = vmul.f32 %v3011, 1.442695
      %v3058 = vpow.pop %v3057
      %v3059 = vmul.f32 %v3012, 1.442695
      %v3060 = vpow.pop %v3059
      %v3061 = vmul.f32 %v3013, 1.442695
      %v3062 = vpow.pop %v3061
      %v3063 = vmul.f32 %v3014, 1.442695
      %v3064 = vpow.pop %v3063
      %v3065 = vmul.f32 %v3015, 1.442695
      %v3066 = vpow.pop %v3065
      %v3067 = vmul.f32 %v3016, 1.442695
      %v3068 = vpow.pop %v3067
      %v3069 = vmul.f32 %v3017, 1.442695
      %v3070 = vpow.pop %v3069
      %v3071 = vmul.f32 %v3018, 1.442695
      %v3072 = vpow.pop %v3071
      %v3073 = vmul.f32 %v3019, 1.442695
      %v3074 = vpow.pop %v3073
      %v3075 = vmul.f32 %v3020, 1.442695
      %v3076 = vpow.pop %v3075
      %v3077 = vmul.f32 %v3021, 1.442695
      %v3078 = vpow.pop %v3077
      %v3079 = vmul.f32 %v3022, 1.442695
      %v3080 = vpow.pop %v3079
      %v3081 = vmul.f32 %v3023, 1.442695
      %v3082 = vpow.pop %v3081
      %v3083 = vmul.f32 %v3024, 1.442695
      %v3084 = vpow.pop %v3083
      %v3085 = vmul.f32 %v3025, 1.442695
      %v3086 = vpow.pop %v3085
      %v3087 = vmul.f32 %v3026, 1.442695
      %v3088 = vpow.pop %v3087
      %v3089 = vmul.f32 %v3027, 1.442695
      %v3090 = vpow.pop %v3089
      %v3091 = vmul.f32 %v3028, 1.442695
      %v3092 = vpow.pop %v3091
      %v3093 = vsel %vm1890, %v3030, 0.0
      %3094 = vadd.xlane.f32.xlu0 %v3093
      %v3095 = vpop.xlane.xlu0 %3094
      %v3096 = vsel %vm1890, %v3032, 0.0
      %3097 = vadd.xlane.f32.xlu0 %v3096
      %v3098 = vpop.xlane.xlu0 %3097
      %v3099 = vsel %vm1890, %v3034, 0.0
      %3100 = vadd.xlane.f32.xlu0 %v3099
      %v3101 = vpop.xlane.xlu0 %3100
      %v3102 = vsel %vm1890, %v3036, 0.0
      %3103 = vadd.xlane.f32.xlu0 %v3102
      %v3104 = vpop.xlane.xlu0 %3103
      %v3105 = vsel %vm1890, %v3038, 0.0
      %3106 = vadd.xlane.f32.xlu0 %v3105
      %v3107 = vpop.xlane.xlu0 %3106
      %v3108 = vsel %vm1890, %v3040, 0.0
      %3109 = vadd.xlane.f32.xlu0 %v3108
      %v3110 = vpop.xlane.xlu0 %3109
      %v3111 = vsel %vm1890, %v3042, 0.0
      %3112 = vadd.xlane.f32.xlu0 %v3111
      %v3113 = vpop.xlane.xlu0 %3112
      %v3114 = vsel %vm1890, %v3044, 0.0
      %3115 = vadd.xlane.f32.xlu0 %v3114
      %v3116 = vpop.xlane.xlu0 %3115
      %v3117 = vsel %vm1890, %v3046, 0.0
      %3118 = vadd.xlane.f32.xlu0 %v3117
      %v3119 = vpop.xlane.xlu0 %3118
      %v3120 = vsel %vm1890, %v3048, 0.0
      %3121 = vadd.xlane.f32.xlu0 %v3120
      %v3122 = vpop.xlane.xlu0 %3121
      %v3123 = vsel %vm1890, %v3050, 0.0
      %3124 = vadd.xlane.f32.xlu0 %v3123
      %v3125 = vpop.xlane.xlu0 %3124
      %v3126 = vsel %vm1890, %v3052, 0.0
      %3127 = vadd.xlane.f32.xlu0 %v3126
      %v3128 = vpop.xlane.xlu0 %3127
      %v3129 = vsel %vm1890, %v3054, 0.0
      %3130 = vadd.xlane.f32.xlu0 %v3129
      %v3131 = vpop.xlane.xlu0 %3130
      %v3132 = vsel %vm1890, %v3056, 0.0
      %3133 = vadd.xlane.f32.xlu0 %v3132
      %v3134 = vpop.xlane.xlu0 %3133
      %v3135 = vsel %vm1890, %v3058, 0.0
      %3136 = vadd.xlane.f32.xlu0 %v3135
      %v3137 = vpop.xlane.xlu0 %3136
      %v3138 = vsel %vm1890, %v3060, 0.0
      %3139 = vadd.xlane.f32.xlu0 %v3138
      %v3140 = vpop.xlane.xlu0 %3139
      %v3141 = vsel %vm1890, %v3062, 0.0
      %3142 = vadd.xlane.f32.xlu0 %v3141
      %v3143 = vpop.xlane.xlu0 %3142
      %v3144 = vsel %vm1890, %v3064, 0.0
      %3145 = vadd.xlane.f32.xlu0 %v3144
      %v3146 = vpop.xlane.xlu0 %3145
      %v3147 = vsel %vm1890, %v3066, 0.0
      %3148 = vadd.xlane.f32.xlu0 %v3147
      %v3149 = vpop.xlane.xlu0 %3148
      %v3150 = vsel %vm1890, %v3068, 0.0
      %3151 = vadd.xlane.f32.xlu0 %v3150
      %v3152 = vpop.xlane.xlu0 %3151
      %v3153 = vsel %vm1890, %v3070, 0.0
      %3154 = vadd.xlane.f32.xlu0 %v3153
      %v3155 = vpop.xlane.xlu0 %3154
      %v3156 = vsel %vm1890, %v3072, 0.0
      %3157 = vadd.xlane.f32.xlu0 %v3156
      %v3158 = vpop.xlane.xlu0 %3157
      %v3159 = vsel %vm1890, %v3074, 0.0
      %3160 = vadd.xlane.f32.xlu0 %v3159
      %v3161 = vpop.xlane.xlu0 %3160
      %v3162 = vsel %vm1890, %v3076, 0.0
      %3163 = vadd.xlane.f32.xlu0 %v3162
      %v3164 = vpop.xlane.xlu0 %3163
      %v3165 = vsel %vm1890, %v3078, 0.0
      %3166 = vadd.xlane.f32.xlu0 %v3165
      %v3167 = vpop.xlane.xlu0 %3166
      %v3168 = vsel %vm1890, %v3080, 0.0
      %3169 = vadd.xlane.f32.xlu0 %v3168
      %v3170 = vpop.xlane.xlu0 %3169
      %v3171 = vsel %vm1890, %v3082, 0.0
      %3172 = vadd.xlane.f32.xlu0 %v3171
      %v3173 = vpop.xlane.xlu0 %3172
      %v3174 = vsel %vm1890, %v3084, 0.0
      %3175 = vadd.xlane.f32.xlu0 %v3174
      %v3176 = vpop.xlane.xlu0 %3175
      %v3177 = vsel %vm1890, %v3086, 0.0
      %3178 = vadd.xlane.f32.xlu0 %v3177
      %v3179 = vpop.xlane.xlu0 %3178
      %v3180 = vsel %vm1890, %v3088, 0.0
      %3181 = vadd.xlane.f32.xlu0 %v3180
      %v3182 = vpop.xlane.xlu0 %3181
      %v3183 = vsel %vm1890, %v3090, 0.0
      %3184 = vadd.xlane.f32.xlu0 %v3183
      %v3185 = vpop.xlane.xlu0 %3184
      %v3186 = vsel %vm1890, %v3092, 0.0
      %3187 = vadd.xlane.f32.xlu0 %v3186
      %v3188 = vpop.xlane.xlu0 %3187
      %v3189 = vrcp.pop %v3095
      %v3190 = vrcp.pop %v3098
      %v3191 = vrcp.pop %v3101
      %v3192 = vrcp.pop %v3104
      %v3193 = vrcp.pop %v3107
      %v3194 = vrcp.pop %v3110
      %v3195 = vrcp.pop %v3113
      %v3196 = vrcp.pop %v3116
      %v3197 = vrcp.pop %v3119
      %v3198 = vrcp.pop %v3122
      %v3199 = vrcp.pop %v3125
      %v3200 = vrcp.pop %v3128
      %v3201 = vrcp.pop %v3131
      %v3202 = vrcp.pop %v3134
      %v3203 = vrcp.pop %v3137
      %v3204 = vrcp.pop %v3140
      %v3205 = vrcp.pop %v3143
      %v3206 = vrcp.pop %v3146
      %v3207 = vrcp.pop %v3149
      %v3208 = vrcp.pop %v3152
      %v3209 = vrcp.pop %v3155
      %v3210 = vrcp.pop %v3158
      %v3211 = vrcp.pop %v3161
      %v3212 = vrcp.pop %v3164
      %v3213 = vrcp.pop %v3167
      %v3214 = vrcp.pop %v3170
      %v3215 = vrcp.pop %v3173
      %v3216 = vrcp.pop %v3176
      %v3217 = vrcp.pop %v3179
      %v3218 = vrcp.pop %v3182
      %v3219 = vrcp.pop %v3185
      %v3220 = vrcp.pop %v3188
      %v3221 = vmul.f32 %v3030, %v3189
      %v3222 = vmul.f32 %v3032, %v3190
      %v3223 = vmul.f32 %v3034, %v3191
      %v3224 = vmul.f32 %v3036, %v3192
      %v3225 = vmul.f32 %v3038, %v3193
      %v3226 = vmul.f32 %v3040, %v3194
      %v3227 = vmul.f32 %v3042, %v3195
      %v3228 = vmul.f32 %v3044, %v3196
      %v3229 = vmul.f32 %v3046, %v3197
      %v3230 = vmul.f32 %v3048, %v3198
      %v3231 = vmul.f32 %v3050, %v3199
      %v3232 = vmul.f32 %v3052, %v3200
      %v3233 = vmul.f32 %v3054, %v3201
      %v3234 = vmul.f32 %v3056, %v3202
      %v3235 = vmul.f32 %v3058, %v3203
      %v3236 = vmul.f32 %v3060, %v3204
      %v3237 = vmul.f32 %v3062, %v3205
      %v3238 = vmul.f32 %v3064, %v3206
      %v3239 = vmul.f32 %v3066, %v3207
      %v3240 = vmul.f32 %v3068, %v3208
      %v3241 = vmul.f32 %v3070, %v3209
      %v3242 = vmul.f32 %v3072, %v3210
      %v3243 = vmul.f32 %v3074, %v3211
      %v3244 = vmul.f32 %v3076, %v3212
      %v3245 = vmul.f32 %v3078, %v3213
      %v3246 = vmul.f32 %v3080, %v3214
      %v3247 = vmul.f32 %v3082, %v3215
      %v3248 = vmul.f32 %v3084, %v3216
      %v3249 = vmul.f32 %v3086, %v3217
      %v3250 = vmul.f32 %v3088, %v3218
      %v3251 = vmul.f32 %v3090, %v3219
      %v3252 = vmul.f32 %v3092, %v3220
      %v3253 = vpack.c.bf16 %v3221, %v3221
      %v3254 = vpack.c.bf16 %v3222, %v3222
      %v3255 = vpack.c.bf16 %v3223, %v3223
      %v3256 = vpack.c.bf16 %v3224, %v3224
      %v3257 = vpack.c.bf16 %v3225, %v3225
      %v3258 = vpack.c.bf16 %v3226, %v3226
      %v3259 = vpack.c.bf16 %v3227, %v3227
      %v3260 = vpack.c.bf16 %v3228, %v3228
      %v3261 = vpack.c.bf16 %v3229, %v3229
      %v3262 = vpack.c.bf16 %v3230, %v3230
      %v3263 = vpack.c.bf16 %v3231, %v3231
      %v3264 = vpack.c.bf16 %v3232, %v3232
      %v3265 = vpack.c.bf16 %v3233, %v3233
      %v3266 = vpack.c.bf16 %v3234, %v3234
      %v3267 = vpack.c.bf16 %v3235, %v3235
      %v3268 = vpack.c.bf16 %v3236, %v3236
      %v3269 = vpack.c.bf16 %v3237, %v3237
      %v3270 = vpack.c.bf16 %v3238, %v3238
      %v3271 = vpack.c.bf16 %v3239, %v3239
      %v3272 = vpack.c.bf16 %v3240, %v3240
      %v3273 = vpack.c.bf16 %v3241, %v3241
      %v3274 = vpack.c.bf16 %v3242, %v3242
      %v3275 = vpack.c.bf16 %v3243, %v3243
      %v3276 = vpack.c.bf16 %v3244, %v3244
      %v3277 = vpack.c.bf16 %v3245, %v3245
      %v3278 = vpack.c.bf16 %v3246, %v3246
      %v3279 = vpack.c.bf16 %v3247, %v3247
      %v3280 = vpack.c.bf16 %v3248, %v3248
      %v3281 = vpack.c.bf16 %v3249, %v3249
      %v3282 = vpack.c.bf16 %v3250, %v3250
      %v3283 = vpack.c.bf16 %v3251, %v3251
      %v3284 = vpack.c.bf16 %v3252, %v3252
      %v3293 = vunpack.c.l.b16 %v3253
      %v3294 = vunpack.c.l.b16 %v3254
      %v3295 = vunpack.c.l.b16 %v3255
      %v3296 = vunpack.c.l.b16 %v3256
      %v3297 = vunpack.c.l.b16 %v3257
      %v3298 = vunpack.c.l.b16 %v3258
      %v3299 = vunpack.c.l.b16 %v3259
      %v3300 = vunpack.c.l.b16 %v3260
      %v3301 = vpack.c.b16 %v3294, %v3293
      %v3302 = vpack.c.b16 %v3296, %v3295
      %v3303 = vpack.c.b16 %v3298, %v3297
      %v3304 = vpack.c.b16 %v3300, %v3299
      %3305 = vrot.lane.b32.xlu0 %v1541, 56
      %v3306 = vpop.permute.xlu0 %3305
      %3307 = vrot.lane.b32.xlu0 %v1542, 56
      %v3308 = vpop.permute.xlu0 %3307
      %3309 = vrot.lane.b32.xlu0 %v1543, 56
      %v3310 = vpop.permute.xlu0 %3309
      %3311 = vrot.lane.b32.xlu0 %v1544, 56
      %v3312 = vpop.permute.xlu0 %3311
      %v3318 = vsel %vm1890, %v3301, 0
      %v3321 = vsel %vm1890, %v3302, 0
      %v3324 = vsel %vm1890, %v3303, 0
      %v3327 = vsel %vm1890, %v3304, 0
      %3329 = vmatpush.bf16.msra.mxu0 0
      %3330 = vmatpush.bf16.msra.mxu0 0
      %3331 = vmatpush.bf16.msra.mxu0 0
      %3332 = vmatpush.bf16.msra.mxu0 0
      %3333 = vmatpush.bf16.msra.mxu0 %v3312
      %3334 = vmatpush.bf16.msra.mxu0 %v3310
      %3335 = vmatpush.bf16.msra.mxu0 %v3308
      %3336 = vmatpush.bf16.msra.mxu0 %v3306
      %3337 = vmatmul.bf16.gmra.mxu0 %v3318
      %v3338 = vpop.f32.mrf.mxu0
      %v3339 = vadd.f32 0.0, %v3338
      %v3340 = vpop.f32.mrf.mxu0
      %v3341 = vadd.f32 0.0, %v3340
      %3342 = vmatmul.bf16.gmra.mxu0 %v3321
      %v3343 = vpop.f32.mrf.mxu0
      %v3344 = vadd.f32 0.0, %v3343
      %v3345 = vpop.f32.mrf.mxu0
      %v3346 = vadd.f32 0.0, %v3345
      %3347 = vmatmul.bf16.gmra.mxu0 %v3324
      %v3348 = vpop.f32.mrf.mxu0
      %v3349 = vadd.f32 0.0, %v3348
      %v3350 = vpop.f32.mrf.mxu0
      %v3351 = vadd.f32 0.0, %v3350
      %3352 = vmatmul.bf16.gmra.mxu0 %v3327
      %v3353 = vpop.f32.mrf.mxu0
      %v3354 = vadd.f32 0.0, %v3353
      %v3355 = vpop.f32.mrf.mxu0
      %v3356 = vadd.f32 0.0, %v3355
      %3357 = vdwg.mxu0
      %v3366 = vunpack.c.l.b16 %v3261
      %v3367 = vunpack.c.l.b16 %v3262
      %v3368 = vunpack.c.l.b16 %v3263
      %v3369 = vunpack.c.l.b16 %v3264
      %v3370 = vunpack.c.l.b16 %v3265
      %v3371 = vunpack.c.l.b16 %v3266
      %v3372 = vunpack.c.l.b16 %v3267
      %v3373 = vunpack.c.l.b16 %v3268
      %v3374 = vpack.c.b16 %v3367, %v3366
      %v3375 = vpack.c.b16 %v3369, %v3368
      %v3376 = vpack.c.b16 %v3371, %v3370
      %v3377 = vpack.c.b16 %v3373, %v3372
      %3378 = vrot.lane.b32.xlu0 %v1623, 56
      %v3379 = vpop.permute.xlu0 %3378
      %3380 = vrot.lane.b32.xlu0 %v1624, 56
      %v3381 = vpop.permute.xlu0 %3380
      %3382 = vrot.lane.b32.xlu0 %v1625, 56
      %v3383 = vpop.permute.xlu0 %3382
      %3384 = vrot.lane.b32.xlu0 %v1626, 56
      %v3385 = vpop.permute.xlu0 %3384
      %v3391 = vsel %vm1890, %v3374, 0
      %v3394 = vsel %vm1890, %v3375, 0
      %v3397 = vsel %vm1890, %v3376, 0
      %v3400 = vsel %vm1890, %v3377, 0
      %3402 = vmatpush.bf16.msra.mxu0 0
      %3403 = vmatpush.bf16.msra.mxu0 0
      %3404 = vmatpush.bf16.msra.mxu0 0
      %3405 = vmatpush.bf16.msra.mxu0 0
      %3406 = vmatpush.bf16.msra.mxu0 %v3385
      %3407 = vmatpush.bf16.msra.mxu0 %v3383
      %3408 = vmatpush.bf16.msra.mxu0 %v3381
      %3409 = vmatpush.bf16.msra.mxu0 %v3379
      %3410 = vmatmul.bf16.gmra.mxu0 %v3391
      %v3411 = vpop.f32.mrf.mxu0
      %v3412 = vadd.f32 0.0, %v3411
      %v3413 = vpop.f32.mrf.mxu0
      %v3414 = vadd.f32 0.0, %v3413
      %3415 = vmatmul.bf16.gmra.mxu0 %v3394
      %v3416 = vpop.f32.mrf.mxu0
      %v3417 = vadd.f32 0.0, %v3416
      %v3418 = vpop.f32.mrf.mxu0
      %v3419 = vadd.f32 0.0, %v3418
      %3420 = vmatmul.bf16.gmra.mxu0 %v3397
      %v3421 = vpop.f32.mrf.mxu0
      %v3422 = vadd.f32 0.0, %v3421
      %v3423 = vpop.f32.mrf.mxu0
      %v3424 = vadd.f32 0.0, %v3423
      %3425 = vmatmul.bf16.gmra.mxu0 %v3400
      %v3426 = vpop.f32.mrf.mxu0
      %v3427 = vadd.f32 0.0, %v3426
      %v3428 = vpop.f32.mrf.mxu0
      %v3429 = vadd.f32 0.0, %v3428
      %3430 = vdwg.mxu0
      %v3439 = vunpack.c.l.b16 %v3269
      %v3440 = vunpack.c.l.b16 %v3270
      %v3441 = vunpack.c.l.b16 %v3271
      %v3442 = vunpack.c.l.b16 %v3272
      %v3443 = vunpack.c.l.b16 %v3273
      %v3444 = vunpack.c.l.b16 %v3274
      %v3445 = vunpack.c.l.b16 %v3275
      %v3446 = vunpack.c.l.b16 %v3276
      %v3447 = vpack.c.b16 %v3440, %v3439
      %v3448 = vpack.c.b16 %v3442, %v3441
      %v3449 = vpack.c.b16 %v3444, %v3443
      %v3450 = vpack.c.b16 %v3446, %v3445
      %3451 = vrot.lane.b32.xlu0 %v1704, 56
      %v3452 = vpop.permute.xlu0 %3451
      %3453 = vrot.lane.b32.xlu0 %v1705, 56
      %v3454 = vpop.permute.xlu0 %3453
      %3455 = vrot.lane.b32.xlu0 %v1706, 56
      %v3456 = vpop.permute.xlu0 %3455
      %3457 = vrot.lane.b32.xlu0 %v1707, 56
      %v3458 = vpop.permute.xlu0 %3457
      %v3464 = vsel %vm1890, %v3447, 0
      %v3467 = vsel %vm1890, %v3448, 0
      %v3470 = vsel %vm1890, %v3449, 0
      %v3473 = vsel %vm1890, %v3450, 0
      %3475 = vmatpush.bf16.msra.mxu0 0
      %3476 = vmatpush.bf16.msra.mxu0 0
      %3477 = vmatpush.bf16.msra.mxu0 0
      %3478 = vmatpush.bf16.msra.mxu0 0
      %3479 = vmatpush.bf16.msra.mxu0 %v3458
      %3480 = vmatpush.bf16.msra.mxu0 %v3456
      %3481 = vmatpush.bf16.msra.mxu0 %v3454
      %3482 = vmatpush.bf16.msra.mxu0 %v3452
      %3483 = vmatmul.bf16.gmra.mxu0 %v3464
      %v3484 = vpop.f32.mrf.mxu0
      %v3485 = vadd.f32 0.0, %v3484
      %v3486 = vpop.f32.mrf.mxu0
      %v3487 = vadd.f32 0.0, %v3486
      %3488 = vmatmul.bf16.gmra.mxu0 %v3467
      %v3489 = vpop.f32.mrf.mxu0
      %v3490 = vadd.f32 0.0, %v3489
      %v3491 = vpop.f32.mrf.mxu0
      %v3492 = vadd.f32 0.0, %v3491
      %3493 = vmatmul.bf16.gmra.mxu0 %v3470
      %v3494 = vpop.f32.mrf.mxu0
      %v3495 = vadd.f32 0.0, %v3494
      %v3496 = vpop.f32.mrf.mxu0
      %v3497 = vadd.f32 0.0, %v3496
      %3498 = vmatmul.bf16.gmra.mxu0 %v3473
      %v3499 = vpop.f32.mrf.mxu0
      %v3500 = vadd.f32 0.0, %v3499
      %v3501 = vpop.f32.mrf.mxu0
      %v3502 = vadd.f32 0.0, %v3501
      %3503 = vdwg.mxu0
      %v3512 = vunpack.c.l.b16 %v3277
      %v3513 = vunpack.c.l.b16 %v3278
      %v3514 = vunpack.c.l.b16 %v3279
      %v3515 = vunpack.c.l.b16 %v3280
      %v3516 = vunpack.c.l.b16 %v3281
      %v3517 = vunpack.c.l.b16 %v3282
      %v3518 = vunpack.c.l.b16 %v3283
      %v3519 = vunpack.c.l.b16 %v3284
      %v3520 = vpack.c.b16 %v3513, %v3512
      %v3521 = vpack.c.b16 %v3515, %v3514
      %v3522 = vpack.c.b16 %v3517, %v3516
      %v3523 = vpack.c.b16 %v3519, %v3518
      %3524 = vrot.lane.b32.xlu0 %v1785, 56
      %v3525 = vpop.permute.xlu0 %3524
      %3526 = vrot.lane.b32.xlu0 %v1786, 56
      %v3527 = vpop.permute.xlu0 %3526
      %3528 = vrot.lane.b32.xlu0 %v1787, 56
      %v3529 = vpop.permute.xlu0 %3528
      %3530 = vrot.lane.b32.xlu0 %v1788, 56
      %v3531 = vpop.permute.xlu0 %3530
      %v3537 = vsel %vm1890, %v3520, 0
      %v3540 = vsel %vm1890, %v3521, 0
      %v3543 = vsel %vm1890, %v3522, 0
      %v3546 = vsel %vm1890, %v3523, 0
      %3548 = vmatpush.bf16.msra.mxu0 0
      %3549 = vmatpush.bf16.msra.mxu0 0
      %3550 = vmatpush.bf16.msra.mxu0 0
      %3551 = vmatpush.bf16.msra.mxu0 0
      %3552 = vmatpush.bf16.msra.mxu0 %v3531
      %3553 = vmatpush.bf16.msra.mxu0 %v3529
      %3554 = vmatpush.bf16.msra.mxu0 %v3527
      %3555 = vmatpush.bf16.msra.mxu0 %v3525
      %3556 = vmatmul.bf16.gmra.mxu0 %v3537
      %v3557 = vpop.f32.mrf.mxu0
      %v3558 = vadd.f32 0.0, %v3557
      %v3559 = vpop.f32.mrf.mxu0
      %v3560 = vadd.f32 0.0, %v3559
      %3561 = vmatmul.bf16.gmra.mxu0 %v3540
      %v3562 = vpop.f32.mrf.mxu0
      %v3563 = vadd.f32 0.0, %v3562
      %v3564 = vpop.f32.mrf.mxu0
      %v3565 = vadd.f32 0.0, %v3564
      %3566 = vmatmul.bf16.gmra.mxu0 %v3543
      %v3567 = vpop.f32.mrf.mxu0
      %v3568 = vadd.f32 0.0, %v3567
      %v3569 = vpop.f32.mrf.mxu0
      %v3570 = vadd.f32 0.0, %v3569
      %3571 = vmatmul.bf16.gmra.mxu0 %v3546
      %v3572 = vpop.f32.mrf.mxu0
      %v3573 = vadd.f32 0.0, %v3572
      %v3574 = vpop.f32.mrf.mxu0
      %v3575 = vadd.f32 0.0, %v3574
      %3576 = vdwg.mxu0
      %v3577 = vpack.c.bf16 %v3341, %v3339
      %v3578 = vpack.c.bf16 %v3346, %v3344
      %v3579 = vpack.c.bf16 %v3351, %v3349
      %v3580 = vpack.c.bf16 %v3356, %v3354
      %v3581 = vpack.c.bf16 %v3414, %v3412
      %v3582 = vpack.c.bf16 %v3419, %v3417
      %v3583 = vpack.c.bf16 %v3424, %v3422
      %v3584 = vpack.c.bf16 %v3429, %v3427
      %v3585 = vpack.c.bf16 %v3487, %v3485
      %v3586 = vpack.c.bf16 %v3492, %v3490
      %v3587 = vpack.c.bf16 %v3497, %v3495
      %v3588 = vpack.c.bf16 %v3502, %v3500
      %v3589 = vpack.c.bf16 %v3560, %v3558
      %v3590 = vpack.c.bf16 %v3565, %v3563
      %v3591 = vpack.c.bf16 %v3570, %v3568
      %v3592 = vpack.c.bf16 %v3575, %v3573
      %s3593 = scalar_lea.vmem %s7, 4
      %v3594 = vld [vmem:[%s3593] sm:$0xf]
      %v3596 = vsel %vm1553, %v3577, 0
      %v3599 = vsel %vm1553, %v3578, 0
      %v3602 = vsel %vm1553, %v3579, 0
      %v3605 = vsel %vm1553, %v3580, 0
      %v3608 = vsel %vm1553, %v3581, 0
      %v3611 = vsel %vm1553, %v3582, 0
      %v3614 = vsel %vm1553, %v3583, 0
      %v3617 = vsel %vm1553, %v3584, 0
      %v3620 = vsel %vm1553, %v3585, 0
      %v3623 = vsel %vm1553, %v3586, 0
      %v3626 = vsel %vm1553, %v3587, 0
      %v3629 = vsel %vm1553, %v3588, 0
      %v3632 = vsel %vm1553, %v3589, 0
      %v3635 = vsel %vm1553, %v3590, 0
      %v3638 = vsel %vm1553, %v3591, 0
      %v3641 = vsel %vm1553, %v3592, 0
      %vm3643 = vcmask 1043456
      %v3645 = vsel %vm3643, %v3594, 0
      %3647 = vmatpush.bf16.msra.mxu0 0
      %3648 = vmatpush.bf16.msra.mxu0 0
      %3649 = vmatpush.bf16.msra.mxu0 0
      %3650 = vmatpush.bf16.msra.mxu0 0
      %3651 = vmatpush.bf16.msra.mxu0 0
      %3652 = vmatpush.bf16.msra.mxu0 0
      %3653 = vmatpush.bf16.msra.mxu0 0
      %3654 = vmatpush.bf16.msra.mxu0 %v3645
      %3655 = vmatmul.bf16.gmra.mxu0 %v3596
      %v3656 = vpop.f32.mrf.mxu0
      %v3657 = vadd.f32 0.0, %v3656
      %v3658 = vpop.f32.mrf.mxu0
      %v3659 = vadd.f32 0.0, %v3658
      %3660 = vmatmul.bf16.gmra.mxu0 %v3599
      %v3661 = vpop.f32.mrf.mxu0
      %v3662 = vadd.f32 0.0, %v3661
      %v3663 = vpop.f32.mrf.mxu0
      %v3664 = vadd.f32 0.0, %v3663
      %3665 = vmatmul.bf16.gmra.mxu0 %v3602
      %v3666 = vpop.f32.mrf.mxu0
      %v3667 = vadd.f32 0.0, %v3666
      %v3668 = vpop.f32.mrf.mxu0
      %v3669 = vadd.f32 0.0, %v3668
      %3670 = vmatmul.bf16.gmra.mxu0 %v3605
      %v3671 = vpop.f32.mrf.mxu0
      %v3672 = vadd.f32 0.0, %v3671
      %v3673 = vpop.f32.mrf.mxu0
      %v3674 = vadd.f32 0.0, %v3673
      %3675 = vmatmul.bf16.gmra.mxu0 %v3608
      %v3676 = vpop.f32.mrf.mxu0
      %v3677 = vadd.f32 0.0, %v3676
      %v3678 = vpop.f32.mrf.mxu0
      %v3679 = vadd.f32 0.0, %v3678
      %3680 = vmatmul.bf16.gmra.mxu0 %v3611
      %v3681 = vpop.f32.mrf.mxu0
      %v3682 = vadd.f32 0.0, %v3681
      %v3683 = vpop.f32.mrf.mxu0
      %v3684 = vadd.f32 0.0, %v3683
      %3685 = vmatmul.bf16.gmra.mxu0 %v3614
      %v3686 = vpop.f32.mrf.mxu0
      %v3687 = vadd.f32 0.0, %v3686
      %v3688 = vpop.f32.mrf.mxu0
      %v3689 = vadd.f32 0.0, %v3688
      %3690 = vmatmul.bf16.gmra.mxu0 %v3617
      %v3691 = vpop.f32.mrf.mxu0
      %v3692 = vadd.f32 0.0, %v3691
      %v3693 = vpop.f32.mrf.mxu0
      %v3694 = vadd.f32 0.0, %v3693
      %3695 = vmatmul.bf16.gmra.mxu0 %v3620
      %v3696 = vpop.f32.mrf.mxu0
      %v3697 = vadd.f32 0.0, %v3696
      %v3698 = vpop.f32.mrf.mxu0
      %v3699 = vadd.f32 0.0, %v3698
      %3700 = vmatmul.bf16.gmra.mxu0 %v3623
      %v3701 = vpop.f32.mrf.mxu0
      %v3702 = vadd.f32 0.0, %v3701
      %v3703 = vpop.f32.mrf.mxu0
      %v3704 = vadd.f32 0.0, %v3703
      %3705 = vmatmul.bf16.gmra.mxu0 %v3626
      %v3706 = vpop.f32.mrf.mxu0
      %v3707 = vadd.f32 0.0, %v3706
      %v3708 = vpop.f32.mrf.mxu0
      %v3709 = vadd.f32 0.0, %v3708
      %3710 = vmatmul.bf16.gmra.mxu0 %v3629
      %v3711 = vpop.f32.mrf.mxu0
      %v3712 = vadd.f32 0.0, %v3711
      %v3713 = vpop.f32.mrf.mxu0
      %v3714 = vadd.f32 0.0, %v3713
      %3715 = vmatmul.bf16.gmra.mxu0 %v3632
      %v3716 = vpop.f32.mrf.mxu0
      %v3717 = vadd.f32 0.0, %v3716
      %v3718 = vpop.f32.mrf.mxu0
      %v3719 = vadd.f32 0.0, %v3718
      %3720 = vmatmul.bf16.gmra.mxu0 %v3635
      %v3721 = vpop.f32.mrf.mxu0
      %v3722 = vadd.f32 0.0, %v3721
      %v3723 = vpop.f32.mrf.mxu0
      %v3724 = vadd.f32 0.0, %v3723
      %3725 = vmatmul.bf16.gmra.mxu0 %v3638
      %v3726 = vpop.f32.mrf.mxu0
      %v3727 = vadd.f32 0.0, %v3726
      %v3728 = vpop.f32.mrf.mxu0
      %v3729 = vadd.f32 0.0, %v3728
      %3730 = vmatmul.bf16.gmra.mxu0 %v3641
      %v3731 = vpop.f32.mrf.mxu0
      %v3732 = vadd.f32 0.0, %v3731
      %v3733 = vpop.f32.mrf.mxu0
      %v3734 = vadd.f32 0.0, %v3733
      %3735 = vdwg.mxu0
      %v3737 = vsel %vm1553, %v2567, 0
      %v3740 = vsel %vm1553, %v2568, 0
      %v3743 = vsel %vm1553, %v2569, 0
      %v3746 = vsel %vm1553, %v2570, 0
      %v3749 = vsel %vm1553, %v2571, 0
      %v3752 = vsel %vm1553, %v2572, 0
      %v3755 = vsel %vm1553, %v2573, 0
      %v3758 = vsel %vm1553, %v2574, 0
      %v3761 = vsel %vm1553, %v2575, 0
      %v3764 = vsel %vm1553, %v2576, 0
      %v3767 = vsel %vm1553, %v2577, 0
      %v3770 = vsel %vm1553, %v2578, 0
      %v3773 = vsel %vm1553, %v2579, 0
      %v3776 = vsel %vm1553, %v2580, 0
      %v3779 = vsel %vm1553, %v2581, 0
      %v3782 = vsel %vm1553, %v2582, 0
      %v3785 = vsel %vm3643, %v2583, 0
      %3787 = vmatpush.bf16.msra.mxu0 0
      %3788 = vmatpush.bf16.msra.mxu0 0
      %3789 = vmatpush.bf16.msra.mxu0 0
      %3790 = vmatpush.bf16.msra.mxu0 0
      %3791 = vmatpush.bf16.msra.mxu0 0
      %3792 = vmatpush.bf16.msra.mxu0 0
      %3793 = vmatpush.bf16.msra.mxu0 0
      %3794 = vmatpush.bf16.msra.mxu0 %v3785
      %3795 = vmatmul.bf16.gmra.mxu0 %v3737
      %v3796 = vpop.f32.mrf.mxu0
      %v3797 = vadd.f32 %v3657, %v3796
      %v3798 = vpop.f32.mrf.mxu0
      %v3799 = vadd.f32 %v3659, %v3798
      %3800 = vmatmul.bf16.gmra.mxu0 %v3740
      %v3801 = vpop.f32.mrf.mxu0
      %v3802 = vadd.f32 %v3662, %v3801
      %v3803 = vpop.f32.mrf.mxu0
      %v3804 = vadd.f32 %v3664, %v3803
      %3805 = vmatmul.bf16.gmra.mxu0 %v3743
      %v3806 = vpop.f32.mrf.mxu0
      %v3807 = vadd.f32 %v3667, %v3806
      %v3808 = vpop.f32.mrf.mxu0
      %v3809 = vadd.f32 %v3669, %v3808
      %3810 = vmatmul.bf16.gmra.mxu0 %v3746
      %v3811 = vpop.f32.mrf.mxu0
      %v3812 = vadd.f32 %v3672, %v3811
      %v3813 = vpop.f32.mrf.mxu0
      %v3814 = vadd.f32 %v3674, %v3813
      %3815 = vmatmul.bf16.gmra.mxu0 %v3749
      %v3816 = vpop.f32.mrf.mxu0
      %v3817 = vadd.f32 %v3677, %v3816
      %v3818 = vpop.f32.mrf.mxu0
      %v3819 = vadd.f32 %v3679, %v3818
      %3820 = vmatmul.bf16.gmra.mxu0 %v3752
      %v3821 = vpop.f32.mrf.mxu0
      %v3822 = vadd.f32 %v3682, %v3821
      %v3823 = vpop.f32.mrf.mxu0
      %v3824 = vadd.f32 %v3684, %v3823
      %3825 = vmatmul.bf16.gmra.mxu0 %v3755
      %v3826 = vpop.f32.mrf.mxu0
      %v3827 = vadd.f32 %v3687, %v3826
      %v3828 = vpop.f32.mrf.mxu0
      %v3829 = vadd.f32 %v3689, %v3828
      %3830 = vmatmul.bf16.gmra.mxu0 %v3758
      %v3831 = vpop.f32.mrf.mxu0
      %v3832 = vadd.f32 %v3692, %v3831
      %v3833 = vpop.f32.mrf.mxu0
      %v3834 = vadd.f32 %v3694, %v3833
      %3835 = vmatmul.bf16.gmra.mxu0 %v3761
      %v3836 = vpop.f32.mrf.mxu0
      %v3837 = vadd.f32 %v3697, %v3836
      %v3838 = vpop.f32.mrf.mxu0
      %v3839 = vadd.f32 %v3699, %v3838
      %3840 = vmatmul.bf16.gmra.mxu0 %v3764
      %v3841 = vpop.f32.mrf.mxu0
      %v3842 = vadd.f32 %v3702, %v3841
      %v3843 = vpop.f32.mrf.mxu0
      %v3844 = vadd.f32 %v3704, %v3843
      %3845 = vmatmul.bf16.gmra.mxu0 %v3767
      %v3846 = vpop.f32.mrf.mxu0
      %v3847 = vadd.f32 %v3707, %v3846
      %v3848 = vpop.f32.mrf.mxu0
      %v3849 = vadd.f32 %v3709, %v3848
      %3850 = vmatmul.bf16.gmra.mxu0 %v3770
      %v3851 = vpop.f32.mrf.mxu0
      %v3852 = vadd.f32 %v3712, %v3851
      %v3853 = vpop.f32.mrf.mxu0
      %v3854 = vadd.f32 %v3714, %v3853
      %3855 = vmatmul.bf16.gmra.mxu0 %v3773
      %v3856 = vpop.f32.mrf.mxu0
      %v3857 = vadd.f32 %v3717, %v3856
      %v3858 = vpop.f32.mrf.mxu0
      %v3859 = vadd.f32 %v3719, %v3858
      %3860 = vmatmul.bf16.gmra.mxu0 %v3776
      %v3861 = vpop.f32.mrf.mxu0
      %v3862 = vadd.f32 %v3722, %v3861
      %v3863 = vpop.f32.mrf.mxu0
      %v3864 = vadd.f32 %v3724, %v3863
      %3865 = vmatmul.bf16.gmra.mxu0 %v3779
      %v3866 = vpop.f32.mrf.mxu0
      %v3867 = vadd.f32 %v3727, %v3866
      %v3868 = vpop.f32.mrf.mxu0
      %v3869 = vadd.f32 %v3729, %v3868
      %3870 = vmatmul.bf16.gmra.mxu0 %v3782
      %v3871 = vpop.f32.mrf.mxu0
      %v3872 = vadd.f32 %v3732, %v3871
      %v3873 = vpop.f32.mrf.mxu0
      %v3874 = vadd.f32 %v3734, %v3873
      %3875 = vdwg.mxu0
      %s3876 = scalar_lea.vmem %s1, 128
      %v3877 = vld [vmem:[%s3876] sm:$0xff]
      %v3878 = vld [vmem:[%s3876 + $0x8] sm:$0xff]
      %v3879 = vld [vmem:[%s3876 + $0x10] sm:$0xff]
      %v3880 = vld [vmem:[%s3876 + $0x18] sm:$0xff]
      %v3881 = vld [vmem:[%s3876 + $0x20] sm:$0xff]
      %v3882 = vld [vmem:[%s3876 + $0x28] sm:$0xff]
      %v3883 = vld [vmem:[%s3876 + $0x30] sm:$0xff]
      %v3884 = vld [vmem:[%s3876 + $0x38] sm:$0xff]
      %3885 = vrot.lane.b32.xlu0 %v1541, 112
      %v3886 = vpop.permute.xlu0 %3885
      %3887 = vrot.lane.b32.xlu0 %v1542, 112
      %v3888 = vpop.permute.xlu0 %3887
      %3889 = vrot.lane.b32.xlu0 %v1543, 112
      %v3890 = vpop.permute.xlu0 %3889
      %3891 = vrot.lane.b32.xlu0 %v1544, 112
      %v3892 = vpop.permute.xlu0 %3891
      %3893 = vrot.lane.b32.xlu0 %v1541, 80
      %v3894 = vpop.permute.xlu0 %3893
      %3895 = vrot.lane.b32.xlu0 %v1542, 80
      %v3896 = vpop.permute.xlu0 %3895
      %3897 = vrot.lane.b32.xlu0 %v1543, 80
      %v3898 = vpop.permute.xlu0 %3897
      %3899 = vrot.lane.b32.xlu0 %v1544, 80
      %v3900 = vpop.permute.xlu0 %3899
      %v3902 = vsel %vm1553, %v3886, 0
      %v3905 = vsel %vm1553, %v3888, 0
      %v3908 = vsel %vm1553, %v3890, 0
      %v3911 = vsel %vm1553, %v3892, 0
      %v3914 = vsel %vm1553, %v3894, 0
      %v3917 = vsel %vm1553, %v3896, 0
      %v3920 = vsel %vm1553, %v3898, 0
      %v3923 = vsel %vm1553, %v3900, 0
      %3925 = vmatpush.bf16.xpose.msra.mxu0 0
      %3926 = vmatpush.bf16.xpose.msra.mxu0 0
      %3927 = vmatpush.bf16.xpose.msra.mxu0 0
      %3928 = vmatpush.bf16.xpose.msra.mxu0 0
      %3929 = vmatpush.bf16.xpose.msra.mxu0 %v3923
      %3930 = vmatpush.bf16.xpose.msra.mxu0 %v3920
      %3931 = vmatpush.bf16.xpose.msra.mxu0 %v3917
      %3932 = vmatpush.bf16.xpose.msra.mxu0 %v3914
      %3933 = vmatmul.bf16.gmra.mxu0 %v3902
      %v3934 = vpop.f32.mrf.mxu0
      %v3935 = vadd.f32 %v3877, %v3934
      %v3936 = vpop.f32.mrf.mxu0
      %v3937 = vadd.f32 %v3878, %v3936
      %3938 = vmatmul.bf16.gmra.mxu0 %v3905
      %v3939 = vpop.f32.mrf.mxu0
      %v3940 = vadd.f32 %v3879, %v3939
      %v3941 = vpop.f32.mrf.mxu0
      %v3942 = vadd.f32 %v3880, %v3941
      %3943 = vmatmul.bf16.gmra.mxu0 %v3908
      %v3944 = vpop.f32.mrf.mxu0
      %v3945 = vadd.f32 %v3881, %v3944
      %v3946 = vpop.f32.mrf.mxu0
      %v3947 = vadd.f32 %v3882, %v3946
      %3948 = vmatmul.bf16.gmra.mxu0 %v3911
      %v3949 = vpop.f32.mrf.mxu0
      %v3950 = vadd.f32 %v3883, %v3949
      %v3951 = vpop.f32.mrf.mxu0
      %v3952 = vadd.f32 %v3884, %v3951
      %3953 = vdwg.mxu0
      %3954 = vrot.lane.b32.xlu0 %v1623, 112
      %v3955 = vpop.permute.xlu0 %3954
      %3956 = vrot.lane.b32.xlu0 %v1624, 112
      %v3957 = vpop.permute.xlu0 %3956
      %3958 = vrot.lane.b32.xlu0 %v1625, 112
      %v3959 = vpop.permute.xlu0 %3958
      %3960 = vrot.lane.b32.xlu0 %v1626, 112
      %v3961 = vpop.permute.xlu0 %3960
      %3962 = vrot.lane.b32.xlu0 %v1623, 80
      %v3963 = vpop.permute.xlu0 %3962
      %3964 = vrot.lane.b32.xlu0 %v1624, 80
      %v3965 = vpop.permute.xlu0 %3964
      %3966 = vrot.lane.b32.xlu0 %v1625, 80
      %v3967 = vpop.permute.xlu0 %3966
      %3968 = vrot.lane.b32.xlu0 %v1626, 80
      %v3969 = vpop.permute.xlu0 %3968
      %v3971 = vsel %vm1553, %v3955, 0
      %v3974 = vsel %vm1553, %v3957, 0
      %v3977 = vsel %vm1553, %v3959, 0
      %v3980 = vsel %vm1553, %v3961, 0
      %v3983 = vsel %vm1553, %v3963, 0
      %v3986 = vsel %vm1553, %v3965, 0
      %v3989 = vsel %vm1553, %v3967, 0
      %v3992 = vsel %vm1553, %v3969, 0
      %3994 = vmatpush.bf16.xpose.msra.mxu0 0
      %3995 = vmatpush.bf16.xpose.msra.mxu0 0
      %3996 = vmatpush.bf16.xpose.msra.mxu0 0
      %3997 = vmatpush.bf16.xpose.msra.mxu0 0
      %3998 = vmatpush.bf16.xpose.msra.mxu0 %v3992
      %3999 = vmatpush.bf16.xpose.msra.mxu0 %v3989
      %4000 = vmatpush.bf16.xpose.msra.mxu0 %v3986
      %4001 = vmatpush.bf16.xpose.msra.mxu0 %v3983
      %4002 = vmatmul.bf16.gmra.mxu0 %v3971
      %v4003 = vpop.f32.mrf.mxu0
      %v4004 = vadd.f32 %v3877, %v4003
      %v4005 = vpop.f32.mrf.mxu0
      %v4006 = vadd.f32 %v3878, %v4005
      %4007 = vmatmul.bf16.gmra.mxu0 %v3974
      %v4008 = vpop.f32.mrf.mxu0
      %v4009 = vadd.f32 %v3879, %v4008
      %v4010 = vpop.f32.mrf.mxu0
      %v4011 = vadd.f32 %v3880, %v4010
      %4012 = vmatmul.bf16.gmra.mxu0 %v3977
      %v4013 = vpop.f32.mrf.mxu0
      %v4014 = vadd.f32 %v3881, %v4013
      %v4015 = vpop.f32.mrf.mxu0
      %v4016 = vadd.f32 %v3882, %v4015
      %4017 = vmatmul.bf16.gmra.mxu0 %v3980
      %v4018 = vpop.f32.mrf.mxu0
      %v4019 = vadd.f32 %v3883, %v4018
      %v4020 = vpop.f32.mrf.mxu0
      %v4021 = vadd.f32 %v3884, %v4020
      %4022 = vdwg.mxu0
      %4023 = vrot.lane.b32.xlu0 %v1704, 112
      %v4024 = vpop.permute.xlu0 %4023
      %4025 = vrot.lane.b32.xlu0 %v1705, 112
      %v4026 = vpop.permute.xlu0 %4025
      %4027 = vrot.lane.b32.xlu0 %v1706, 112
      %v4028 = vpop.permute.xlu0 %4027
      %4029 = vrot.lane.b32.xlu0 %v1707, 112
      %v4030 = vpop.permute.xlu0 %4029
      %4031 = vrot.lane.b32.xlu0 %v1704, 80
      %v4032 = vpop.permute.xlu0 %4031
      %4033 = vrot.lane.b32.xlu0 %v1705, 80
      %v4034 = vpop.permute.xlu0 %4033
      %4035 = vrot.lane.b32.xlu0 %v1706, 80
      %v4036 = vpop.permute.xlu0 %4035
      %4037 = vrot.lane.b32.xlu0 %v1707, 80
      %v4038 = vpop.permute.xlu0 %4037
      %v4040 = vsel %vm1553, %v4024, 0
      %v4043 = vsel %vm1553, %v4026, 0
      %v4046 = vsel %vm1553, %v4028, 0
      %v4049 = vsel %vm1553, %v4030, 0
      %v4052 = vsel %vm1553, %v4032, 0
      %v4055 = vsel %vm1553, %v4034, 0
      %v4058 = vsel %vm1553, %v4036, 0
      %v4061 = vsel %vm1553, %v4038, 0
      %4063 = vmatpush.bf16.xpose.msra.mxu0 0
      %4064 = vmatpush.bf16.xpose.msra.mxu0 0
      %4065 = vmatpush.bf16.xpose.msra.mxu0 0
      %4066 = vmatpush.bf16.xpose.msra.mxu0 0
      %4067 = vmatpush.bf16.xpose.msra.mxu0 %v4061
      %4068 = vmatpush.bf16.xpose.msra.mxu0 %v4058
      %4069 = vmatpush.bf16.xpose.msra.mxu0 %v4055
      %4070 = vmatpush.bf16.xpose.msra.mxu0 %v4052
      %4071 = vmatmul.bf16.gmra.mxu0 %v4040
      %v4072 = vpop.f32.mrf.mxu0
      %v4073 = vadd.f32 %v3877, %v4072
      %v4074 = vpop.f32.mrf.mxu0
      %v4075 = vadd.f32 %v3878, %v4074
      %4076 = vmatmul.bf16.gmra.mxu0 %v4043
      %v4077 = vpop.f32.mrf.mxu0
      %v4078 = vadd.f32 %v3879, %v4077
      %v4079 = vpop.f32.mrf.mxu0
      %v4080 = vadd.f32 %v3880, %v4079
      %4081 = vmatmul.bf16.gmra.mxu0 %v4046
      %v4082 = vpop.f32.mrf.mxu0
      %v4083 = vadd.f32 %v3881, %v4082
      %v4084 = vpop.f32.mrf.mxu0
      %v4085 = vadd.f32 %v3882, %v4084
      %4086 = vmatmul.bf16.gmra.mxu0 %v4049
      %v4087 = vpop.f32.mrf.mxu0
      %v4088 = vadd.f32 %v3883, %v4087
      %v4089 = vpop.f32.mrf.mxu0
      %v4090 = vadd.f32 %v3884, %v4089
      %4091 = vdwg.mxu0
      %4092 = vrot.lane.b32.xlu0 %v1785, 112
      %v4093 = vpop.permute.xlu0 %4092
      %4094 = vrot.lane.b32.xlu0 %v1786, 112
      %v4095 = vpop.permute.xlu0 %4094
      %4096 = vrot.lane.b32.xlu0 %v1787, 112
      %v4097 = vpop.permute.xlu0 %4096
      %4098 = vrot.lane.b32.xlu0 %v1788, 112
      %v4099 = vpop.permute.xlu0 %4098
      %4100 = vrot.lane.b32.xlu0 %v1785, 80
      %v4101 = vpop.permute.xlu0 %4100
      %4102 = vrot.lane.b32.xlu0 %v1786, 80
      %v4103 = vpop.permute.xlu0 %4102
      %4104 = vrot.lane.b32.xlu0 %v1787, 80
      %v4105 = vpop.permute.xlu0 %4104
      %4106 = vrot.lane.b32.xlu0 %v1788, 80
      %v4107 = vpop.permute.xlu0 %4106
      %v4109 = vsel %vm1553, %v4093, 0
      %v4112 = vsel %vm1553, %v4095, 0
      %v4115 = vsel %vm1553, %v4097, 0
      %v4118 = vsel %vm1553, %v4099, 0
      %v4121 = vsel %vm1553, %v4101, 0
      %v4124 = vsel %vm1553, %v4103, 0
      %v4127 = vsel %vm1553, %v4105, 0
      %v4130 = vsel %vm1553, %v4107, 0
      %4132 = vmatpush.bf16.xpose.msra.mxu0 0
      %4133 = vmatpush.bf16.xpose.msra.mxu0 0
      %4134 = vmatpush.bf16.xpose.msra.mxu0 0
      %4135 = vmatpush.bf16.xpose.msra.mxu0 0
      %4136 = vmatpush.bf16.xpose.msra.mxu0 %v4130
      %4137 = vmatpush.bf16.xpose.msra.mxu0 %v4127
      %4138 = vmatpush.bf16.xpose.msra.mxu0 %v4124
      %4139 = vmatpush.bf16.xpose.msra.mxu0 %v4121
      %4140 = vmatmul.bf16.gmra.mxu0 %v4109
      %v4141 = vpop.f32.mrf.mxu0
      %v4142 = vadd.f32 %v3877, %v4141
      %v4143 = vpop.f32.mrf.mxu0
      %v4144 = vadd.f32 %v3878, %v4143
      %4145 = vmatmul.bf16.gmra.mxu0 %v4112
      %v4146 = vpop.f32.mrf.mxu0
      %v4147 = vadd.f32 %v3879, %v4146
      %v4148 = vpop.f32.mrf.mxu0
      %v4149 = vadd.f32 %v3880, %v4148
      %4150 = vmatmul.bf16.gmra.mxu0 %v4115
      %v4151 = vpop.f32.mrf.mxu0
      %v4152 = vadd.f32 %v3881, %v4151
      %v4153 = vpop.f32.mrf.mxu0
      %v4154 = vadd.f32 %v3882, %v4153
      %4155 = vmatmul.bf16.gmra.mxu0 %v4118
      %v4156 = vpop.f32.mrf.mxu0
      %v4157 = vadd.f32 %v3883, %v4156
      %v4158 = vpop.f32.mrf.mxu0
      %v4159 = vadd.f32 %v3884, %v4158
      %4160 = vdwg.mxu0
      %v4161 = vadd.f32 %v3935, %v1850
      %v4162 = vadd.f32 %v3937, %v1851
      %v4163 = vadd.f32 %v3940, %v1852
      %v4164 = vadd.f32 %v3942, %v1853
      %v4165 = vadd.f32 %v3945, %v1854
      %v4166 = vadd.f32 %v3947, %v1855
      %v4167 = vadd.f32 %v3950, %v1856
      %v4168 = vadd.f32 %v3952, %v1857
      %v4169 = vadd.f32 %v4004, %v1850
      %v4170 = vadd.f32 %v4006, %v1851
      %v4171 = vadd.f32 %v4009, %v1852
      %v4172 = vadd.f32 %v4011, %v1853
      %v4173 = vadd.f32 %v4014, %v1854
      %v4174 = vadd.f32 %v4016, %v1855
      %v4175 = vadd.f32 %v4019, %v1856
      %v4176 = vadd.f32 %v4021, %v1857
      %v4177 = vadd.f32 %v4073, %v1850
      %v4178 = vadd.f32 %v4075, %v1851
      %v4179 = vadd.f32 %v4078, %v1852
      %v4180 = vadd.f32 %v4080, %v1853
      %v4181 = vadd.f32 %v4083, %v1854
      %v4182 = vadd.f32 %v4085, %v1855
      %v4183 = vadd.f32 %v4088, %v1856
      %v4184 = vadd.f32 %v4090, %v1857
      %v4185 = vadd.f32 %v4142, %v1850
      %v4186 = vadd.f32 %v4144, %v1851
      %v4187 = vadd.f32 %v4147, %v1852
      %v4188 = vadd.f32 %v4149, %v1853
      %v4189 = vadd.f32 %v4152, %v1854
      %v4190 = vadd.f32 %v4154, %v1855
      %v4191 = vadd.f32 %v4157, %v1856
      %v4192 = vadd.f32 %v4159, %v1857
      %v4193 = vsel %vm1890, %v4161, -inf
      %4194 = vmax.xlane.f32.xlu0 %v4193
      %v4195 = vpop.xlane.xlu0 %4194
      %v4196 = vsel %vm1890, %v4162, -inf
      %4197 = vmax.xlane.f32.xlu0 %v4196
      %v4198 = vpop.xlane.xlu0 %4197
      %v4199 = vsel %vm1890, %v4163, -inf
      %4200 = vmax.xlane.f32.xlu0 %v4199
      %v4201 = vpop.xlane.xlu0 %4200
      %v4202 = vsel %vm1890, %v4164, -inf
      %4203 = vmax.xlane.f32.xlu0 %v4202
      %v4204 = vpop.xlane.xlu0 %4203
      %v4205 = vsel %vm1890, %v4165, -inf
      %4206 = vmax.xlane.f32.xlu0 %v4205
      %v4207 = vpop.xlane.xlu0 %4206
      %v4208 = vsel %vm1890, %v4166, -inf
      %4209 = vmax.xlane.f32.xlu0 %v4208
      %v4210 = vpop.xlane.xlu0 %4209
      %v4211 = vsel %vm1890, %v4167, -inf
      %4212 = vmax.xlane.f32.xlu0 %v4211
      %v4213 = vpop.xlane.xlu0 %4212
      %v4214 = vsel %vm1890, %v4168, -inf
      %4215 = vmax.xlane.f32.xlu0 %v4214
      %v4216 = vpop.xlane.xlu0 %4215
      %v4217 = vsel %vm1890, %v4169, -inf
      %4218 = vmax.xlane.f32.xlu0 %v4217
      %v4219 = vpop.xlane.xlu0 %4218
      %v4220 = vsel %vm1890, %v4170, -inf
      %4221 = vmax.xlane.f32.xlu0 %v4220
      %v4222 = vpop.xlane.xlu0 %4221
      %v4223 = vsel %vm1890, %v4171, -inf
      %4224 = vmax.xlane.f32.xlu0 %v4223
      %v4225 = vpop.xlane.xlu0 %4224
      %v4226 = vsel %vm1890, %v4172, -inf
      %4227 = vmax.xlane.f32.xlu0 %v4226
      %v4228 = vpop.xlane.xlu0 %4227
      %v4229 = vsel %vm1890, %v4173, -inf
      %4230 = vmax.xlane.f32.xlu0 %v4229
      %v4231 = vpop.xlane.xlu0 %4230
      %v4232 = vsel %vm1890, %v4174, -inf
      %4233 = vmax.xlane.f32.xlu0 %v4232
      %v4234 = vpop.xlane.xlu0 %4233
      %v4235 = vsel %vm1890, %v4175, -inf
      %4236 = vmax.xlane.f32.xlu0 %v4235
      %v4237 = vpop.xlane.xlu0 %4236
      %v4238 = vsel %vm1890, %v4176, -inf
      %4239 = vmax.xlane.f32.xlu0 %v4238
      %v4240 = vpop.xlane.xlu0 %4239
      %v4241 = vsel %vm1890, %v4177, -inf
      %4242 = vmax.xlane.f32.xlu0 %v4241
      %v4243 = vpop.xlane.xlu0 %4242
      %v4244 = vsel %vm1890, %v4178, -inf
      %4245 = vmax.xlane.f32.xlu0 %v4244
      %v4246 = vpop.xlane.xlu0 %4245
      %v4247 = vsel %vm1890, %v4179, -inf
      %4248 = vmax.xlane.f32.xlu0 %v4247
      %v4249 = vpop.xlane.xlu0 %4248
      %v4250 = vsel %vm1890, %v4180, -inf
      %4251 = vmax.xlane.f32.xlu0 %v4250
      %v4252 = vpop.xlane.xlu0 %4251
      %v4253 = vsel %vm1890, %v4181, -inf
      %4254 = vmax.xlane.f32.xlu0 %v4253
      %v4255 = vpop.xlane.xlu0 %4254
      %v4256 = vsel %vm1890, %v4182, -inf
      %4257 = vmax.xlane.f32.xlu0 %v4256
      %v4258 = vpop.xlane.xlu0 %4257
      %v4259 = vsel %vm1890, %v4183, -inf
      %4260 = vmax.xlane.f32.xlu0 %v4259
      %v4261 = vpop.xlane.xlu0 %4260
      %v4262 = vsel %vm1890, %v4184, -inf
      %4263 = vmax.xlane.f32.xlu0 %v4262
      %v4264 = vpop.xlane.xlu0 %4263
      %v4265 = vsel %vm1890, %v4185, -inf
      %4266 = vmax.xlane.f32.xlu0 %v4265
      %v4267 = vpop.xlane.xlu0 %4266
      %v4268 = vsel %vm1890, %v4186, -inf
      %4269 = vmax.xlane.f32.xlu0 %v4268
      %v4270 = vpop.xlane.xlu0 %4269
      %v4271 = vsel %vm1890, %v4187, -inf
      %4272 = vmax.xlane.f32.xlu0 %v4271
      %v4273 = vpop.xlane.xlu0 %4272
      %v4274 = vsel %vm1890, %v4188, -inf
      %4275 = vmax.xlane.f32.xlu0 %v4274
      %v4276 = vpop.xlane.xlu0 %4275
      %v4277 = vsel %vm1890, %v4189, -inf
      %4278 = vmax.xlane.f32.xlu0 %v4277
      %v4279 = vpop.xlane.xlu0 %4278
      %v4280 = vsel %vm1890, %v4190, -inf
      %4281 = vmax.xlane.f32.xlu0 %v4280
      %v4282 = vpop.xlane.xlu0 %4281
      %v4283 = vsel %vm1890, %v4191, -inf
      %4284 = vmax.xlane.f32.xlu0 %v4283
      %v4285 = vpop.xlane.xlu0 %4284
      %v4286 = vsel %vm1890, %v4192, -inf
      %4287 = vmax.xlane.f32.xlu0 %v4286
      %v4288 = vpop.xlane.xlu0 %4287
      %v4289 = vsub.f32 %v4161, %v4195
      %v4290 = vsub.f32 %v4162, %v4198
      %v4291 = vsub.f32 %v4163, %v4201
      %v4292 = vsub.f32 %v4164, %v4204
      %v4293 = vsub.f32 %v4165, %v4207
      %v4294 = vsub.f32 %v4166, %v4210
      %v4295 = vsub.f32 %v4167, %v4213
      %v4296 = vsub.f32 %v4168, %v4216
      %v4297 = vsub.f32 %v4169, %v4219
      %v4298 = vsub.f32 %v4170, %v4222
      %v4299 = vsub.f32 %v4171, %v4225
      %v4300 = vsub.f32 %v4172, %v4228
      %v4301 = vsub.f32 %v4173, %v4231
      %v4302 = vsub.f32 %v4174, %v4234
      %v4303 = vsub.f32 %v4175, %v4237
      %v4304 = vsub.f32 %v4176, %v4240
      %v4305 = vsub.f32 %v4177, %v4243
      %v4306 = vsub.f32 %v4178, %v4246
      %v4307 = vsub.f32 %v4179, %v4249
      %v4308 = vsub.f32 %v4180, %v4252
      %v4309 = vsub.f32 %v4181, %v4255
      %v4310 = vsub.f32 %v4182, %v4258
      %v4311 = vsub.f32 %v4183, %v4261
      %v4312 = vsub.f32 %v4184, %v4264
      %v4313 = vsub.f32 %v4185, %v4267
      %v4314 = vsub.f32 %v4186, %v4270
      %v4315 = vsub.f32 %v4187, %v4273
      %v4316 = vsub.f32 %v4188, %v4276
      %v4317 = vsub.f32 %v4189, %v4279
      %v4318 = vsub.f32 %v4190, %v4282
      %v4319 = vsub.f32 %v4191, %v4285
      %v4320 = vsub.f32 %v4192, %v4288
      %v4321 = vmul.f32 %v4289, 1.442695
      %v4322 = vpow.pop %v4321
      %v4323 = vmul.f32 %v4290, 1.442695
      %v4324 = vpow.pop %v4323
      %v4325 = vmul.f32 %v4291, 1.442695
      %v4326 = vpow.pop %v4325
      %v4327 = vmul.f32 %v4292, 1.442695
      %v4328 = vpow.pop %v4327
      %v4329 = vmul.f32 %v4293, 1.442695
      %v4330 = vpow.pop %v4329
      %v4331 = vmul.f32 %v4294, 1.442695
      %v4332 = vpow.pop %v4331
      %v4333 = vmul.f32 %v4295, 1.442695
      %v4334 = vpow.pop %v4333
      %v4335 = vmul.f32 %v4296, 1.442695
      %v4336 = vpow.pop %v4335
      %v4337 = vmul.f32 %v4297, 1.442695
      %v4338 = vpow.pop %v4337
      %v4339 = vmul.f32 %v4298, 1.442695
      %v4340 = vpow.pop %v4339
      %v4341 = vmul.f32 %v4299, 1.442695
      %v4342 = vpow.pop %v4341
      %v4343 = vmul.f32 %v4300, 1.442695
      %v4344 = vpow.pop %v4343
      %v4345 = vmul.f32 %v4301, 1.442695
      %v4346 = vpow.pop %v4345
      %v4347 = vmul.f32 %v4302, 1.442695
      %v4348 = vpow.pop %v4347
      %v4349 = vmul.f32 %v4303, 1.442695
      %v4350 = vpow.pop %v4349
      %v4351 = vmul.f32 %v4304, 1.442695
      %v4352 = vpow.pop %v4351
      %v4353 = vmul.f32 %v4305, 1.442695
      %v4354 = vpow.pop %v4353
      %v4355 = vmul.f32 %v4306, 1.442695
      %v4356 = vpow.pop %v4355
      %v4357 = vmul.f32 %v4307, 1.442695
      %v4358 = vpow.pop %v4357
      %v4359 = vmul.f32 %v4308, 1.442695
      %v4360 = vpow.pop %v4359
      %v4361 = vmul.f32 %v4309, 1.442695
      %v4362 = vpow.pop %v4361
      %v4363 = vmul.f32 %v4310, 1.442695
      %v4364 = vpow.pop %v4363
      %v4365 = vmul.f32 %v4311, 1.442695
      %v4366 = vpow.pop %v4365
      %v4367 = vmul.f32 %v4312, 1.442695
      %v4368 = vpow.pop %v4367
      %v4369 = vmul.f32 %v4313, 1.442695
      %v4370 = vpow.pop %v4369
      %v4371 = vmul.f32 %v4314, 1.442695
      %v4372 = vpow.pop %v4371
      %v4373 = vmul.f32 %v4315, 1.442695
      %v4374 = vpow.pop %v4373
      %v4375 = vmul.f32 %v4316, 1.442695
      %v4376 = vpow.pop %v4375
      %v4377 = vmul.f32 %v4317, 1.442695
      %v4378 = vpow.pop %v4377
      %v4379 = vmul.f32 %v4318, 1.442695
      %v4380 = vpow.pop %v4379
      %v4381 = vmul.f32 %v4319, 1.442695
      %v4382 = vpow.pop %v4381
      %v4383 = vmul.f32 %v4320, 1.442695
      %v4384 = vpow.pop %v4383
      %v4385 = vsel %vm1890, %v4322, 0.0
      %4386 = vadd.xlane.f32.xlu0 %v4385
      %v4387 = vpop.xlane.xlu0 %4386
      %v4388 = vsel %vm1890, %v4324, 0.0
      %4389 = vadd.xlane.f32.xlu0 %v4388
      %v4390 = vpop.xlane.xlu0 %4389
      %v4391 = vsel %vm1890, %v4326, 0.0
      %4392 = vadd.xlane.f32.xlu0 %v4391
      %v4393 = vpop.xlane.xlu0 %4392
      %v4394 = vsel %vm1890, %v4328, 0.0
      %4395 = vadd.xlane.f32.xlu0 %v4394
      %v4396 = vpop.xlane.xlu0 %4395
      %v4397 = vsel %vm1890, %v4330, 0.0
      %4398 = vadd.xlane.f32.xlu0 %v4397
      %v4399 = vpop.xlane.xlu0 %4398
      %v4400 = vsel %vm1890, %v4332, 0.0
      %4401 = vadd.xlane.f32.xlu0 %v4400
      %v4402 = vpop.xlane.xlu0 %4401
      %v4403 = vsel %vm1890, %v4334, 0.0
      %4404 = vadd.xlane.f32.xlu0 %v4403
      %v4405 = vpop.xlane.xlu0 %4404
      %v4406 = vsel %vm1890, %v4336, 0.0
      %4407 = vadd.xlane.f32.xlu0 %v4406
      %v4408 = vpop.xlane.xlu0 %4407
      %v4409 = vsel %vm1890, %v4338, 0.0
      %4410 = vadd.xlane.f32.xlu0 %v4409
      %v4411 = vpop.xlane.xlu0 %4410
      %v4412 = vsel %vm1890, %v4340, 0.0
      %4413 = vadd.xlane.f32.xlu0 %v4412
      %v4414 = vpop.xlane.xlu0 %4413
      %v4415 = vsel %vm1890, %v4342, 0.0
      %4416 = vadd.xlane.f32.xlu0 %v4415
      %v4417 = vpop.xlane.xlu0 %4416
      %v4418 = vsel %vm1890, %v4344, 0.0
      %4419 = vadd.xlane.f32.xlu0 %v4418
      %v4420 = vpop.xlane.xlu0 %4419
      %v4421 = vsel %vm1890, %v4346, 0.0
      %4422 = vadd.xlane.f32.xlu0 %v4421
      %v4423 = vpop.xlane.xlu0 %4422
      %v4424 = vsel %vm1890, %v4348, 0.0
      %4425 = vadd.xlane.f32.xlu0 %v4424
      %v4426 = vpop.xlane.xlu0 %4425
      %v4427 = vsel %vm1890, %v4350, 0.0
      %4428 = vadd.xlane.f32.xlu0 %v4427
      %v4429 = vpop.xlane.xlu0 %4428
      %v4430 = vsel %vm1890, %v4352, 0.0
      %4431 = vadd.xlane.f32.xlu0 %v4430
      %v4432 = vpop.xlane.xlu0 %4431
      %v4433 = vsel %vm1890, %v4354, 0.0
      %4434 = vadd.xlane.f32.xlu0 %v4433
      %v4435 = vpop.xlane.xlu0 %4434
      %v4436 = vsel %vm1890, %v4356, 0.0
      %4437 = vadd.xlane.f32.xlu0 %v4436
      %v4438 = vpop.xlane.xlu0 %4437
      %v4439 = vsel %vm1890, %v4358, 0.0
      %4440 = vadd.xlane.f32.xlu0 %v4439
      %v4441 = vpop.xlane.xlu0 %4440
      %v4442 = vsel %vm1890, %v4360, 0.0
      %4443 = vadd.xlane.f32.xlu0 %v4442
      %v4444 = vpop.xlane.xlu0 %4443
      %v4445 = vsel %vm1890, %v4362, 0.0
      %4446 = vadd.xlane.f32.xlu0 %v4445
      %v4447 = vpop.xlane.xlu0 %4446
      %v4448 = vsel %vm1890, %v4364, 0.0
      %4449 = vadd.xlane.f32.xlu0 %v4448
      %v4450 = vpop.xlane.xlu0 %4449
      %v4451 = vsel %vm1890, %v4366, 0.0
      %4452 = vadd.xlane.f32.xlu0 %v4451
      %v4453 = vpop.xlane.xlu0 %4452
      %v4454 = vsel %vm1890, %v4368, 0.0
      %4455 = vadd.xlane.f32.xlu0 %v4454
      %v4456 = vpop.xlane.xlu0 %4455
      %v4457 = vsel %vm1890, %v4370, 0.0
      %4458 = vadd.xlane.f32.xlu0 %v4457
      %v4459 = vpop.xlane.xlu0 %4458
      %v4460 = vsel %vm1890, %v4372, 0.0
      %4461 = vadd.xlane.f32.xlu0 %v4460
      %v4462 = vpop.xlane.xlu0 %4461
      %v4463 = vsel %vm1890, %v4374, 0.0
      %4464 = vadd.xlane.f32.xlu0 %v4463
      %v4465 = vpop.xlane.xlu0 %4464
      %v4466 = vsel %vm1890, %v4376, 0.0
      %4467 = vadd.xlane.f32.xlu0 %v4466
      %v4468 = vpop.xlane.xlu0 %4467
      %v4469 = vsel %vm1890, %v4378, 0.0
      %4470 = vadd.xlane.f32.xlu0 %v4469
      %v4471 = vpop.xlane.xlu0 %4470
      %v4472 = vsel %vm1890, %v4380, 0.0
      %4473 = vadd.xlane.f32.xlu0 %v4472
      %v4474 = vpop.xlane.xlu0 %4473
      %v4475 = vsel %vm1890, %v4382, 0.0
      %4476 = vadd.xlane.f32.xlu0 %v4475
      %v4477 = vpop.xlane.xlu0 %4476
      %v4478 = vsel %vm1890, %v4384, 0.0
      %4479 = vadd.xlane.f32.xlu0 %v4478
      %v4480 = vpop.xlane.xlu0 %4479
      %v4481 = vrcp.pop %v4387
      %v4482 = vrcp.pop %v4390
      %v4483 = vrcp.pop %v4393
      %v4484 = vrcp.pop %v4396
      %v4485 = vrcp.pop %v4399
      %v4486 = vrcp.pop %v4402
      %v4487 = vrcp.pop %v4405
      %v4488 = vrcp.pop %v4408
      %v4489 = vrcp.pop %v4411
      %v4490 = vrcp.pop %v4414
      %v4491 = vrcp.pop %v4417
      %v4492 = vrcp.pop %v4420
      %v4493 = vrcp.pop %v4423
      %v4494 = vrcp.pop %v4426
      %v4495 = vrcp.pop %v4429
      %v4496 = vrcp.pop %v4432
      %v4497 = vrcp.pop %v4435
      %v4498 = vrcp.pop %v4438
      %v4499 = vrcp.pop %v4441
      %v4500 = vrcp.pop %v4444
      %v4501 = vrcp.pop %v4447
      %v4502 = vrcp.pop %v4450
      %v4503 = vrcp.pop %v4453
      %v4504 = vrcp.pop %v4456
      %v4505 = vrcp.pop %v4459
      %v4506 = vrcp.pop %v4462
      %v4507 = vrcp.pop %v4465
      %v4508 = vrcp.pop %v4468
      %v4509 = vrcp.pop %v4471
      %v4510 = vrcp.pop %v4474
      %v4511 = vrcp.pop %v4477
      %v4512 = vrcp.pop %v4480
      %v4513 = vmul.f32 %v4322, %v4481
      %v4514 = vmul.f32 %v4324, %v4482
      %v4515 = vmul.f32 %v4326, %v4483
      %v4516 = vmul.f32 %v4328, %v4484
      %v4517 = vmul.f32 %v4330, %v4485
      %v4518 = vmul.f32 %v4332, %v4486
      %v4519 = vmul.f32 %v4334, %v4487
      %v4520 = vmul.f32 %v4336, %v4488
      %v4521 = vmul.f32 %v4338, %v4489
      %v4522 = vmul.f32 %v4340, %v4490
      %v4523 = vmul.f32 %v4342, %v4491
      %v4524 = vmul.f32 %v4344, %v4492
      %v4525 = vmul.f32 %v4346, %v4493
      %v4526 = vmul.f32 %v4348, %v4494
      %v4527 = vmul.f32 %v4350, %v4495
      %v4528 = vmul.f32 %v4352, %v4496
      %v4529 = vmul.f32 %v4354, %v4497
      %v4530 = vmul.f32 %v4356, %v4498
      %v4531 = vmul.f32 %v4358, %v4499
      %v4532 = vmul.f32 %v4360, %v4500
      %v4533 = vmul.f32 %v4362, %v4501
      %v4534 = vmul.f32 %v4364, %v4502
      %v4535 = vmul.f32 %v4366, %v4503
      %v4536 = vmul.f32 %v4368, %v4504
      %v4537 = vmul.f32 %v4370, %v4505
      %v4538 = vmul.f32 %v4372, %v4506
      %v4539 = vmul.f32 %v4374, %v4507
      %v4540 = vmul.f32 %v4376, %v4508
      %v4541 = vmul.f32 %v4378, %v4509
      %v4542 = vmul.f32 %v4380, %v4510
      %v4543 = vmul.f32 %v4382, %v4511
      %v4544 = vmul.f32 %v4384, %v4512
      %v4545 = vpack.c.bf16 %v4513, %v4513
      %v4546 = vpack.c.bf16 %v4514, %v4514
      %v4547 = vpack.c.bf16 %v4515, %v4515
      %v4548 = vpack.c.bf16 %v4516, %v4516
      %v4549 = vpack.c.bf16 %v4517, %v4517
      %v4550 = vpack.c.bf16 %v4518, %v4518
      %v4551 = vpack.c.bf16 %v4519, %v4519
      %v4552 = vpack.c.bf16 %v4520, %v4520
      %v4553 = vpack.c.bf16 %v4521, %v4521
      %v4554 = vpack.c.bf16 %v4522, %v4522
      %v4555 = vpack.c.bf16 %v4523, %v4523
      %v4556 = vpack.c.bf16 %v4524, %v4524
      %v4557 = vpack.c.bf16 %v4525, %v4525
      %v4558 = vpack.c.bf16 %v4526, %v4526
      %v4559 = vpack.c.bf16 %v4527, %v4527
      %v4560 = vpack.c.bf16 %v4528, %v4528
      %v4561 = vpack.c.bf16 %v4529, %v4529
      %v4562 = vpack.c.bf16 %v4530, %v4530
      %v4563 = vpack.c.bf16 %v4531, %v4531
      %v4564 = vpack.c.bf16 %v4532, %v4532
      %v4565 = vpack.c.bf16 %v4533, %v4533
      %v4566 = vpack.c.bf16 %v4534, %v4534
      %v4567 = vpack.c.bf16 %v4535, %v4535
      %v4568 = vpack.c.bf16 %v4536, %v4536
      %v4569 = vpack.c.bf16 %v4537, %v4537
      %v4570 = vpack.c.bf16 %v4538, %v4538
      %v4571 = vpack.c.bf16 %v4539, %v4539
      %v4572 = vpack.c.bf16 %v4540, %v4540
      %v4573 = vpack.c.bf16 %v4541, %v4541
      %v4574 = vpack.c.bf16 %v4542, %v4542
      %v4575 = vpack.c.bf16 %v4543, %v4543
      %v4576 = vpack.c.bf16 %v4544, %v4544
      %v4585 = vunpack.c.l.b16 %v4545
      %v4586 = vunpack.c.l.b16 %v4546
      %v4587 = vunpack.c.l.b16 %v4547
      %v4588 = vunpack.c.l.b16 %v4548
      %v4589 = vunpack.c.l.b16 %v4549
      %v4590 = vunpack.c.l.b16 %v4550
      %v4591 = vunpack.c.l.b16 %v4551
      %v4592 = vunpack.c.l.b16 %v4552
      %v4593 = vpack.c.b16 %v4586, %v4585
      %v4594 = vpack.c.b16 %v4588, %v4587
      %v4595 = vpack.c.b16 %v4590, %v4589
      %v4596 = vpack.c.b16 %v4592, %v4591
      %4597 = vrot.lane.b32.xlu0 %v1541, 48
      %v4598 = vpop.permute.xlu0 %4597
      %4599 = vrot.lane.b32.xlu0 %v1542, 48
      %v4600 = vpop.permute.xlu0 %4599
      %4601 = vrot.lane.b32.xlu0 %v1543, 48
      %v4602 = vpop.permute.xlu0 %4601
      %4603 = vrot.lane.b32.xlu0 %v1544, 48
      %v4604 = vpop.permute.xlu0 %4603
      %v4610 = vsel %vm1890, %v4593, 0
      %v4613 = vsel %vm1890, %v4594, 0
      %v4616 = vsel %vm1890, %v4595, 0
      %v4619 = vsel %vm1890, %v4596, 0
      %4621 = vmatpush.bf16.msra.mxu0 0
      %4622 = vmatpush.bf16.msra.mxu0 0
      %4623 = vmatpush.bf16.msra.mxu0 0
      %4624 = vmatpush.bf16.msra.mxu0 0
      %4625 = vmatpush.bf16.msra.mxu0 %v4604
      %4626 = vmatpush.bf16.msra.mxu0 %v4602
      %4627 = vmatpush.bf16.msra.mxu0 %v4600
      %4628 = vmatpush.bf16.msra.mxu0 %v4598
      %4629 = vmatmul.bf16.gmra.mxu0 %v4610
      %v4630 = vpop.f32.mrf.mxu0
      %v4631 = vadd.f32 0.0, %v4630
      %v4632 = vpop.f32.mrf.mxu0
      %v4633 = vadd.f32 0.0, %v4632
      %4634 = vmatmul.bf16.gmra.mxu0 %v4613
      %v4635 = vpop.f32.mrf.mxu0
      %v4636 = vadd.f32 0.0, %v4635
      %v4637 = vpop.f32.mrf.mxu0
      %v4638 = vadd.f32 0.0, %v4637
      %4639 = vmatmul.bf16.gmra.mxu0 %v4616
      %v4640 = vpop.f32.mrf.mxu0
      %v4641 = vadd.f32 0.0, %v4640
      %v4642 = vpop.f32.mrf.mxu0
      %v4643 = vadd.f32 0.0, %v4642
      %4644 = vmatmul.bf16.gmra.mxu0 %v4619
      %v4645 = vpop.f32.mrf.mxu0
      %v4646 = vadd.f32 0.0, %v4645
      %v4647 = vpop.f32.mrf.mxu0
      %v4648 = vadd.f32 0.0, %v4647
      %4649 = vdwg.mxu0
      %v4658 = vunpack.c.l.b16 %v4553
      %v4659 = vunpack.c.l.b16 %v4554
      %v4660 = vunpack.c.l.b16 %v4555
      %v4661 = vunpack.c.l.b16 %v4556
      %v4662 = vunpack.c.l.b16 %v4557
      %v4663 = vunpack.c.l.b16 %v4558
      %v4664 = vunpack.c.l.b16 %v4559
      %v4665 = vunpack.c.l.b16 %v4560
      %v4666 = vpack.c.b16 %v4659, %v4658
      %v4667 = vpack.c.b16 %v4661, %v4660
      %v4668 = vpack.c.b16 %v4663, %v4662
      %v4669 = vpack.c.b16 %v4665, %v4664
      %4670 = vrot.lane.b32.xlu0 %v1623, 48
      %v4671 = vpop.permute.xlu0 %4670
      %4672 = vrot.lane.b32.xlu0 %v1624, 48
      %v4673 = vpop.permute.xlu0 %4672
      %4674 = vrot.lane.b32.xlu0 %v1625, 48
      %v4675 = vpop.permute.xlu0 %4674
      %4676 = vrot.lane.b32.xlu0 %v1626, 48
      %v4677 = vpop.permute.xlu0 %4676
      %v4683 = vsel %vm1890, %v4666, 0
      %v4686 = vsel %vm1890, %v4667, 0
      %v4689 = vsel %vm1890, %v4668, 0
      %v4692 = vsel %vm1890, %v4669, 0
      %4694 = vmatpush.bf16.msra.mxu0 0
      %4695 = vmatpush.bf16.msra.mxu0 0
      %4696 = vmatpush.bf16.msra.mxu0 0
      %4697 = vmatpush.bf16.msra.mxu0 0
      %4698 = vmatpush.bf16.msra.mxu0 %v4677
      %4699 = vmatpush.bf16.msra.mxu0 %v4675
      %4700 = vmatpush.bf16.msra.mxu0 %v4673
      %4701 = vmatpush.bf16.msra.mxu0 %v4671
      %4702 = vmatmul.bf16.gmra.mxu0 %v4683
      %v4703 = vpop.f32.mrf.mxu0
      %v4704 = vadd.f32 0.0, %v4703
      %v4705 = vpop.f32.mrf.mxu0
      %v4706 = vadd.f32 0.0, %v4705
      %4707 = vmatmul.bf16.gmra.mxu0 %v4686
      %v4708 = vpop.f32.mrf.mxu0
      %v4709 = vadd.f32 0.0, %v4708
      %v4710 = vpop.f32.mrf.mxu0
      %v4711 = vadd.f32 0.0, %v4710
      %4712 = vmatmul.bf16.gmra.mxu0 %v4689
      %v4713 = vpop.f32.mrf.mxu0
      %v4714 = vadd.f32 0.0, %v4713
      %v4715 = vpop.f32.mrf.mxu0
      %v4716 = vadd.f32 0.0, %v4715
      %4717 = vmatmul.bf16.gmra.mxu0 %v4692
      %v4718 = vpop.f32.mrf.mxu0
      %v4719 = vadd.f32 0.0, %v4718
      %v4720 = vpop.f32.mrf.mxu0
      %v4721 = vadd.f32 0.0, %v4720
      %4722 = vdwg.mxu0
      %v4731 = vunpack.c.l.b16 %v4561
      %v4732 = vunpack.c.l.b16 %v4562
      %v4733 = vunpack.c.l.b16 %v4563
      %v4734 = vunpack.c.l.b16 %v4564
      %v4735 = vunpack.c.l.b16 %v4565
      %v4736 = vunpack.c.l.b16 %v4566
      %v4737 = vunpack.c.l.b16 %v4567
      %v4738 = vunpack.c.l.b16 %v4568
      %v4739 = vpack.c.b16 %v4732, %v4731
      %v4740 = vpack.c.b16 %v4734, %v4733
      %v4741 = vpack.c.b16 %v4736, %v4735
      %v4742 = vpack.c.b16 %v4738, %v4737
      %4743 = vrot.lane.b32.xlu0 %v1704, 48
      %v4744 = vpop.permute.xlu0 %4743
      %4745 = vrot.lane.b32.xlu0 %v1705, 48
      %v4746 = vpop.permute.xlu0 %4745
      %4747 = vrot.lane.b32.xlu0 %v1706, 48
      %v4748 = vpop.permute.xlu0 %4747
      %4749 = vrot.lane.b32.xlu0 %v1707, 48
      %v4750 = vpop.permute.xlu0 %4749
      %v4756 = vsel %vm1890, %v4739, 0
      %v4759 = vsel %vm1890, %v4740, 0
      %v4762 = vsel %vm1890, %v4741, 0
      %v4765 = vsel %vm1890, %v4742, 0
      %4767 = vmatpush.bf16.msra.mxu0 0
      %4768 = vmatpush.bf16.msra.mxu0 0
      %4769 = vmatpush.bf16.msra.mxu0 0
      %4770 = vmatpush.bf16.msra.mxu0 0
      %4771 = vmatpush.bf16.msra.mxu0 %v4750
      %4772 = vmatpush.bf16.msra.mxu0 %v4748
      %4773 = vmatpush.bf16.msra.mxu0 %v4746
      %4774 = vmatpush.bf16.msra.mxu0 %v4744
      %4775 = vmatmul.bf16.gmra.mxu0 %v4756
      %v4776 = vpop.f32.mrf.mxu0
      %v4777 = vadd.f32 0.0, %v4776
      %v4778 = vpop.f32.mrf.mxu0
      %v4779 = vadd.f32 0.0, %v4778
      %4780 = vmatmul.bf16.gmra.mxu0 %v4759
      %v4781 = vpop.f32.mrf.mxu0
      %v4782 = vadd.f32 0.0, %v4781
      %v4783 = vpop.f32.mrf.mxu0
      %v4784 = vadd.f32 0.0, %v4783
      %4785 = vmatmul.bf16.gmra.mxu0 %v4762
      %v4786 = vpop.f32.mrf.mxu0
      %v4787 = vadd.f32 0.0, %v4786
      %v4788 = vpop.f32.mrf.mxu0
      %v4789 = vadd.f32 0.0, %v4788
      %4790 = vmatmul.bf16.gmra.mxu0 %v4765
      %v4791 = vpop.f32.mrf.mxu0
      %v4792 = vadd.f32 0.0, %v4791
      %v4793 = vpop.f32.mrf.mxu0
      %v4794 = vadd.f32 0.0, %v4793
      %4795 = vdwg.mxu0
      %v4804 = vunpack.c.l.b16 %v4569
      %v4805 = vunpack.c.l.b16 %v4570
      %v4806 = vunpack.c.l.b16 %v4571
      %v4807 = vunpack.c.l.b16 %v4572
      %v4808 = vunpack.c.l.b16 %v4573
      %v4809 = vunpack.c.l.b16 %v4574
      %v4810 = vunpack.c.l.b16 %v4575
      %v4811 = vunpack.c.l.b16 %v4576
      %v4812 = vpack.c.b16 %v4805, %v4804
      %v4813 = vpack.c.b16 %v4807, %v4806
      %v4814 = vpack.c.b16 %v4809, %v4808
      %v4815 = vpack.c.b16 %v4811, %v4810
      %4816 = vrot.lane.b32.xlu0 %v1785, 48
      %v4817 = vpop.permute.xlu0 %4816
      %4818 = vrot.lane.b32.xlu0 %v1786, 48
      %v4819 = vpop.permute.xlu0 %4818
      %4820 = vrot.lane.b32.xlu0 %v1787, 48
      %v4821 = vpop.permute.xlu0 %4820
      %4822 = vrot.lane.b32.xlu0 %v1788, 48
      %v4823 = vpop.permute.xlu0 %4822
      %v4829 = vsel %vm1890, %v4812, 0
      %v4832 = vsel %vm1890, %v4813, 0
      %v4835 = vsel %vm1890, %v4814, 0
      %v4838 = vsel %vm1890, %v4815, 0
      %4840 = vmatpush.bf16.msra.mxu0 0
      %4841 = vmatpush.bf16.msra.mxu0 0
      %4842 = vmatpush.bf16.msra.mxu0 0
      %4843 = vmatpush.bf16.msra.mxu0 0
      %4844 = vmatpush.bf16.msra.mxu0 %v4823
      %4845 = vmatpush.bf16.msra.mxu0 %v4821
      %4846 = vmatpush.bf16.msra.mxu0 %v4819
      %4847 = vmatpush.bf16.msra.mxu0 %v4817
      %4848 = vmatmul.bf16.gmra.mxu0 %v4829
      %v4849 = vpop.f32.mrf.mxu0
      %v4850 = vadd.f32 0.0, %v4849
      %v4851 = vpop.f32.mrf.mxu0
      %v4852 = vadd.f32 0.0, %v4851
      %4853 = vmatmul.bf16.gmra.mxu0 %v4832
      %v4854 = vpop.f32.mrf.mxu0
      %v4855 = vadd.f32 0.0, %v4854
      %v4856 = vpop.f32.mrf.mxu0
      %v4857 = vadd.f32 0.0, %v4856
      %4858 = vmatmul.bf16.gmra.mxu0 %v4835
      %v4859 = vpop.f32.mrf.mxu0
      %v4860 = vadd.f32 0.0, %v4859
      %v4861 = vpop.f32.mrf.mxu0
      %v4862 = vadd.f32 0.0, %v4861
      %4863 = vmatmul.bf16.gmra.mxu0 %v4838
      %v4864 = vpop.f32.mrf.mxu0
      %v4865 = vadd.f32 0.0, %v4864
      %v4866 = vpop.f32.mrf.mxu0
      %v4867 = vadd.f32 0.0, %v4866
      %4868 = vdwg.mxu0
      %v4869 = vpack.c.bf16 %v4633, %v4631
      %v4870 = vpack.c.bf16 %v4638, %v4636
      %v4871 = vpack.c.bf16 %v4643, %v4641
      %v4872 = vpack.c.bf16 %v4648, %v4646
      %v4873 = vpack.c.bf16 %v4706, %v4704
      %v4874 = vpack.c.bf16 %v4711, %v4709
      %v4875 = vpack.c.bf16 %v4716, %v4714
      %v4876 = vpack.c.bf16 %v4721, %v4719
      %v4877 = vpack.c.bf16 %v4779, %v4777
      %v4878 = vpack.c.bf16 %v4784, %v4782
      %v4879 = vpack.c.bf16 %v4789, %v4787
      %v4880 = vpack.c.bf16 %v4794, %v4792
      %v4881 = vpack.c.bf16 %v4852, %v4850
      %v4882 = vpack.c.bf16 %v4857, %v4855
      %v4883 = vpack.c.bf16 %v4862, %v4860
      %v4884 = vpack.c.bf16 %v4867, %v4865
      %s4885 = scalar_lea.vmem %s7, 8
      %v4886 = vld [vmem:[%s4885] sm:$0xf]
      %v4888 = vsel %vm1553, %v4869, 0
      %v4891 = vsel %vm1553, %v4870, 0
      %v4894 = vsel %vm1553, %v4871, 0
      %v4897 = vsel %vm1553, %v4872, 0
      %v4900 = vsel %vm1553, %v4873, 0
      %v4903 = vsel %vm1553, %v4874, 0
      %v4906 = vsel %vm1553, %v4875, 0
      %v4909 = vsel %vm1553, %v4876, 0
      %v4912 = vsel %vm1553, %v4877, 0
      %v4915 = vsel %vm1553, %v4878, 0
      %v4918 = vsel %vm1553, %v4879, 0
      %v4921 = vsel %vm1553, %v4880, 0
      %v4924 = vsel %vm1553, %v4881, 0
      %v4927 = vsel %vm1553, %v4882, 0
      %v4930 = vsel %vm1553, %v4883, 0
      %v4933 = vsel %vm1553, %v4884, 0
      %v4936 = vsel %vm3643, %v4886, 0
      %4938 = vmatpush.bf16.msra.mxu0 0
      %4939 = vmatpush.bf16.msra.mxu0 0
      %4940 = vmatpush.bf16.msra.mxu0 0
      %4941 = vmatpush.bf16.msra.mxu0 0
      %4942 = vmatpush.bf16.msra.mxu0 0
      %4943 = vmatpush.bf16.msra.mxu0 0
      %4944 = vmatpush.bf16.msra.mxu0 0
      %4945 = vmatpush.bf16.msra.mxu0 %v4936
      %4946 = vmatmul.bf16.gmra.mxu0 %v4888
      %v4947 = vpop.f32.mrf.mxu0
      %v4948 = vadd.f32 0.0, %v4947
      %v4949 = vpop.f32.mrf.mxu0
      %v4950 = vadd.f32 0.0, %v4949
      %4951 = vmatmul.bf16.gmra.mxu0 %v4891
      %v4952 = vpop.f32.mrf.mxu0
      %v4953 = vadd.f32 0.0, %v4952
      %v4954 = vpop.f32.mrf.mxu0
      %v4955 = vadd.f32 0.0, %v4954
      %4956 = vmatmul.bf16.gmra.mxu0 %v4894
      %v4957 = vpop.f32.mrf.mxu0
      %v4958 = vadd.f32 0.0, %v4957
      %v4959 = vpop.f32.mrf.mxu0
      %v4960 = vadd.f32 0.0, %v4959
      %4961 = vmatmul.bf16.gmra.mxu0 %v4897
      %v4962 = vpop.f32.mrf.mxu0
      %v4963 = vadd.f32 0.0, %v4962
      %v4964 = vpop.f32.mrf.mxu0
      %v4965 = vadd.f32 0.0, %v4964
      %4966 = vmatmul.bf16.gmra.mxu0 %v4900
      %v4967 = vpop.f32.mrf.mxu0
      %v4968 = vadd.f32 0.0, %v4967
      %v4969 = vpop.f32.mrf.mxu0
      %v4970 = vadd.f32 0.0, %v4969
      %4971 = vmatmul.bf16.gmra.mxu0 %v4903
      %v4972 = vpop.f32.mrf.mxu0
      %v4973 = vadd.f32 0.0, %v4972
      %v4974 = vpop.f32.mrf.mxu0
      %v4975 = vadd.f32 0.0, %v4974
      %4976 = vmatmul.bf16.gmra.mxu0 %v4906
      %v4977 = vpop.f32.mrf.mxu0
      %v4978 = vadd.f32 0.0, %v4977
      %v4979 = vpop.f32.mrf.mxu0
      %v4980 = vadd.f32 0.0, %v4979
      %4981 = vmatmul.bf16.gmra.mxu0 %v4909
      %v4982 = vpop.f32.mrf.mxu0
      %v4983 = vadd.f32 0.0, %v4982
      %v4984 = vpop.f32.mrf.mxu0
      %v4985 = vadd.f32 0.0, %v4984
      %4986 = vmatmul.bf16.gmra.mxu0 %v4912
      %v4987 = vpop.f32.mrf.mxu0
      %v4988 = vadd.f32 0.0, %v4987
      %v4989 = vpop.f32.mrf.mxu0
      %v4990 = vadd.f32 0.0, %v4989
      %4991 = vmatmul.bf16.gmra.mxu0 %v4915
      %v4992 = vpop.f32.mrf.mxu0
      %v4993 = vadd.f32 0.0, %v4992
      %v4994 = vpop.f32.mrf.mxu0
      %v4995 = vadd.f32 0.0, %v4994
      %4996 = vmatmul.bf16.gmra.mxu0 %v4918
      %v4997 = vpop.f32.mrf.mxu0
      %v4998 = vadd.f32 0.0, %v4997
      %v4999 = vpop.f32.mrf.mxu0
      %v5000 = vadd.f32 0.0, %v4999
      %5001 = vmatmul.bf16.gmra.mxu0 %v4921
      %v5002 = vpop.f32.mrf.mxu0
      %v5003 = vadd.f32 0.0, %v5002
      %v5004 = vpop.f32.mrf.mxu0
      %v5005 = vadd.f32 0.0, %v5004
      %5006 = vmatmul.bf16.gmra.mxu0 %v4924
      %v5007 = vpop.f32.mrf.mxu0
      %v5008 = vadd.f32 0.0, %v5007
      %v5009 = vpop.f32.mrf.mxu0
      %v5010 = vadd.f32 0.0, %v5009
      %5011 = vmatmul.bf16.gmra.mxu0 %v4927
      %v5012 = vpop.f32.mrf.mxu0
      %v5013 = vadd.f32 0.0, %v5012
      %v5014 = vpop.f32.mrf.mxu0
      %v5015 = vadd.f32 0.0, %v5014
      %5016 = vmatmul.bf16.gmra.mxu0 %v4930
      %v5017 = vpop.f32.mrf.mxu0
      %v5018 = vadd.f32 0.0, %v5017
      %v5019 = vpop.f32.mrf.mxu0
      %v5020 = vadd.f32 0.0, %v5019
      %5021 = vmatmul.bf16.gmra.mxu0 %v4933
      %v5022 = vpop.f32.mrf.mxu0
      %v5023 = vadd.f32 0.0, %v5022
      %v5024 = vpop.f32.mrf.mxu0
      %v5025 = vadd.f32 0.0, %v5024
      %5026 = vdwg.mxu0
      %v5027 = vadd.f32 %v3797, %v4948
      %v5028 = vadd.f32 %v3799, %v4950
      %v5029 = vadd.f32 %v3802, %v4953
      %v5030 = vadd.f32 %v3804, %v4955
      %v5031 = vadd.f32 %v3807, %v4958
      %v5032 = vadd.f32 %v3809, %v4960
      %v5033 = vadd.f32 %v3812, %v4963
      %v5034 = vadd.f32 %v3814, %v4965
      %v5035 = vadd.f32 %v3817, %v4968
      %v5036 = vadd.f32 %v3819, %v4970
      %v5037 = vadd.f32 %v3822, %v4973
      %v5038 = vadd.f32 %v3824, %v4975
      %v5039 = vadd.f32 %v3827, %v4978
      %v5040 = vadd.f32 %v3829, %v4980
      %v5041 = vadd.f32 %v3832, %v4983
      %v5042 = vadd.f32 %v3834, %v4985
      %v5043 = vadd.f32 %v3837, %v4988
      %v5044 = vadd.f32 %v3839, %v4990
      %v5045 = vadd.f32 %v3842, %v4993
      %v5046 = vadd.f32 %v3844, %v4995
      %v5047 = vadd.f32 %v3847, %v4998
      %v5048 = vadd.f32 %v3849, %v5000
      %v5049 = vadd.f32 %v3852, %v5003
      %v5050 = vadd.f32 %v3854, %v5005
      %v5051 = vadd.f32 %v3857, %v5008
      %v5052 = vadd.f32 %v3859, %v5010
      %v5053 = vadd.f32 %v3862, %v5013
      %v5054 = vadd.f32 %v3864, %v5015
      %v5055 = vadd.f32 %v3867, %v5018
      %v5056 = vadd.f32 %v3869, %v5020
      %v5057 = vadd.f32 %v3872, %v5023
      %v5058 = vadd.f32 %v3874, %v5025
      %s5059 = scalar_lea.vmem %s1, 192
      %v5060 = vld [vmem:[%s5059] sm:$0xff]
      %v5061 = vld [vmem:[%s5059 + $0x8] sm:$0xff]
      %v5062 = vld [vmem:[%s5059 + $0x10] sm:$0xff]
      %v5063 = vld [vmem:[%s5059 + $0x18] sm:$0xff]
      %v5064 = vld [vmem:[%s5059 + $0x20] sm:$0xff]
      %v5065 = vld [vmem:[%s5059 + $0x28] sm:$0xff]
      %v5066 = vld [vmem:[%s5059 + $0x30] sm:$0xff]
      %v5067 = vld [vmem:[%s5059 + $0x38] sm:$0xff]
      %5068 = vrot.lane.b32.xlu0 %v1541, 104
      %v5069 = vpop.permute.xlu0 %5068
      %5070 = vrot.lane.b32.xlu0 %v1542, 104
      %v5071 = vpop.permute.xlu0 %5070
      %5072 = vrot.lane.b32.xlu0 %v1543, 104
      %v5073 = vpop.permute.xlu0 %5072
      %5074 = vrot.lane.b32.xlu0 %v1544, 104
      %v5075 = vpop.permute.xlu0 %5074
      %5076 = vrot.lane.b32.xlu0 %v1541, 72
      %v5077 = vpop.permute.xlu0 %5076
      %5078 = vrot.lane.b32.xlu0 %v1542, 72
      %v5079 = vpop.permute.xlu0 %5078
      %5080 = vrot.lane.b32.xlu0 %v1543, 72
      %v5081 = vpop.permute.xlu0 %5080
      %5082 = vrot.lane.b32.xlu0 %v1544, 72
      %v5083 = vpop.permute.xlu0 %5082
      %v5085 = vsel %vm1553, %v5069, 0
      %v5088 = vsel %vm1553, %v5071, 0
      %v5091 = vsel %vm1553, %v5073, 0
      %v5094 = vsel %vm1553, %v5075, 0
      %v5097 = vsel %vm1553, %v5077, 0
      %v5100 = vsel %vm1553, %v5079, 0
      %v5103 = vsel %vm1553, %v5081, 0
      %v5106 = vsel %vm1553, %v5083, 0
      %5108 = vmatpush.bf16.xpose.msra.mxu0 0
      %5109 = vmatpush.bf16.xpose.msra.mxu0 0
      %5110 = vmatpush.bf16.xpose.msra.mxu0 0
      %5111 = vmatpush.bf16.xpose.msra.mxu0 0
      %5112 = vmatpush.bf16.xpose.msra.mxu0 %v5106
      %5113 = vmatpush.bf16.xpose.msra.mxu0 %v5103
      %5114 = vmatpush.bf16.xpose.msra.mxu0 %v5100
      %5115 = vmatpush.bf16.xpose.msra.mxu0 %v5097
      %5116 = vmatmul.bf16.gmra.mxu0 %v5085
      %v5117 = vpop.f32.mrf.mxu0
      %v5118 = vadd.f32 %v5060, %v5117
      %v5119 = vpop.f32.mrf.mxu0
      %v5120 = vadd.f32 %v5061, %v5119
      %5121 = vmatmul.bf16.gmra.mxu0 %v5088
      %v5122 = vpop.f32.mrf.mxu0
      %v5123 = vadd.f32 %v5062, %v5122
      %v5124 = vpop.f32.mrf.mxu0
      %v5125 = vadd.f32 %v5063, %v5124
      %5126 = vmatmul.bf16.gmra.mxu0 %v5091
      %v5127 = vpop.f32.mrf.mxu0
      %v5128 = vadd.f32 %v5064, %v5127
      %v5129 = vpop.f32.mrf.mxu0
      %v5130 = vadd.f32 %v5065, %v5129
      %5131 = vmatmul.bf16.gmra.mxu0 %v5094
      %v5132 = vpop.f32.mrf.mxu0
      %v5133 = vadd.f32 %v5066, %v5132
      %v5134 = vpop.f32.mrf.mxu0
      %v5135 = vadd.f32 %v5067, %v5134
      %5136 = vdwg.mxu0
      %5137 = vrot.lane.b32.xlu0 %v1623, 104
      %v5138 = vpop.permute.xlu0 %5137
      %5139 = vrot.lane.b32.xlu0 %v1624, 104
      %v5140 = vpop.permute.xlu0 %5139
      %5141 = vrot.lane.b32.xlu0 %v1625, 104
      %v5142 = vpop.permute.xlu0 %5141
      %5143 = vrot.lane.b32.xlu0 %v1626, 104
      %v5144 = vpop.permute.xlu0 %5143
      %5145 = vrot.lane.b32.xlu0 %v1623, 72
      %v5146 = vpop.permute.xlu0 %5145
      %5147 = vrot.lane.b32.xlu0 %v1624, 72
      %v5148 = vpop.permute.xlu0 %5147
      %5149 = vrot.lane.b32.xlu0 %v1625, 72
      %v5150 = vpop.permute.xlu0 %5149
      %5151 = vrot.lane.b32.xlu0 %v1626, 72
      %v5152 = vpop.permute.xlu0 %5151
      %v5154 = vsel %vm1553, %v5138, 0
      %v5157 = vsel %vm1553, %v5140, 0
      %v5160 = vsel %vm1553, %v5142, 0
      %v5163 = vsel %vm1553, %v5144, 0
      %v5166 = vsel %vm1553, %v5146, 0
      %v5169 = vsel %vm1553, %v5148, 0
      %v5172 = vsel %vm1553, %v5150, 0
      %v5175 = vsel %vm1553, %v5152, 0
      %5177 = vmatpush.bf16.xpose.msra.mxu0 0
      %5178 = vmatpush.bf16.xpose.msra.mxu0 0
      %5179 = vmatpush.bf16.xpose.msra.mxu0 0
      %5180 = vmatpush.bf16.xpose.msra.mxu0 0
      %5181 = vmatpush.bf16.xpose.msra.mxu0 %v5175
      %5182 = vmatpush.bf16.xpose.msra.mxu0 %v5172
      %5183 = vmatpush.bf16.xpose.msra.mxu0 %v5169
      %5184 = vmatpush.bf16.xpose.msra.mxu0 %v5166
      %5185 = vmatmul.bf16.gmra.mxu0 %v5154
      %v5186 = vpop.f32.mrf.mxu0
      %v5187 = vadd.f32 %v5060, %v5186
      %v5188 = vpop.f32.mrf.mxu0
      %v5189 = vadd.f32 %v5061, %v5188
      %5190 = vmatmul.bf16.gmra.mxu0 %v5157
      %v5191 = vpop.f32.mrf.mxu0
      %v5192 = vadd.f32 %v5062, %v5191
      %v5193 = vpop.f32.mrf.mxu0
      %v5194 = vadd.f32 %v5063, %v5193
      %5195 = vmatmul.bf16.gmra.mxu0 %v5160
      %v5196 = vpop.f32.mrf.mxu0
      %v5197 = vadd.f32 %v5064, %v5196
      %v5198 = vpop.f32.mrf.mxu0
      %v5199 = vadd.f32 %v5065, %v5198
      %5200 = vmatmul.bf16.gmra.mxu0 %v5163
      %v5201 = vpop.f32.mrf.mxu0
      %v5202 = vadd.f32 %v5066, %v5201
      %v5203 = vpop.f32.mrf.mxu0
      %v5204 = vadd.f32 %v5067, %v5203
      %5205 = vdwg.mxu0
      %5206 = vrot.lane.b32.xlu0 %v1704, 104
      %v5207 = vpop.permute.xlu0 %5206
      %5208 = vrot.lane.b32.xlu0 %v1705, 104
      %v5209 = vpop.permute.xlu0 %5208
      %5210 = vrot.lane.b32.xlu0 %v1706, 104
      %v5211 = vpop.permute.xlu0 %5210
      %5212 = vrot.lane.b32.xlu0 %v1707, 104
      %v5213 = vpop.permute.xlu0 %5212
      %5214 = vrot.lane.b32.xlu0 %v1704, 72
      %v5215 = vpop.permute.xlu0 %5214
      %5216 = vrot.lane.b32.xlu0 %v1705, 72
      %v5217 = vpop.permute.xlu0 %5216
      %5218 = vrot.lane.b32.xlu0 %v1706, 72
      %v5219 = vpop.permute.xlu0 %5218
      %5220 = vrot.lane.b32.xlu0 %v1707, 72
      %v5221 = vpop.permute.xlu0 %5220
      %v5223 = vsel %vm1553, %v5207, 0
      %v5226 = vsel %vm1553, %v5209, 0
      %v5229 = vsel %vm1553, %v5211, 0
      %v5232 = vsel %vm1553, %v5213, 0
      %v5235 = vsel %vm1553, %v5215, 0
      %v5238 = vsel %vm1553, %v5217, 0
      %v5241 = vsel %vm1553, %v5219, 0
      %v5244 = vsel %vm1553, %v5221, 0
      %5246 = vmatpush.bf16.xpose.msra.mxu0 0
      %5247 = vmatpush.bf16.xpose.msra.mxu0 0
      %5248 = vmatpush.bf16.xpose.msra.mxu0 0
      %5249 = vmatpush.bf16.xpose.msra.mxu0 0
      %5250 = vmatpush.bf16.xpose.msra.mxu0 %v5244
      %5251 = vmatpush.bf16.xpose.msra.mxu0 %v5241
      %5252 = vmatpush.bf16.xpose.msra.mxu0 %v5238
      %5253 = vmatpush.bf16.xpose.msra.mxu0 %v5235
      %5254 = vmatmul.bf16.gmra.mxu0 %v5223
      %v5255 = vpop.f32.mrf.mxu0
      %v5256 = vadd.f32 %v5060, %v5255
      %v5257 = vpop.f32.mrf.mxu0
      %v5258 = vadd.f32 %v5061, %v5257
      %5259 = vmatmul.bf16.gmra.mxu0 %v5226
      %v5260 = vpop.f32.mrf.mxu0
      %v5261 = vadd.f32 %v5062, %v5260
      %v5262 = vpop.f32.mrf.mxu0
      %v5263 = vadd.f32 %v5063, %v5262
      %5264 = vmatmul.bf16.gmra.mxu0 %v5229
      %v5265 = vpop.f32.mrf.mxu0
      %v5266 = vadd.f32 %v5064, %v5265
      %v5267 = vpop.f32.mrf.mxu0
      %v5268 = vadd.f32 %v5065, %v5267
      %5269 = vmatmul.bf16.gmra.mxu0 %v5232
      %v5270 = vpop.f32.mrf.mxu0
      %v5271 = vadd.f32 %v5066, %v5270
      %v5272 = vpop.f32.mrf.mxu0
      %v5273 = vadd.f32 %v5067, %v5272
      %5274 = vdwg.mxu0
      %5275 = vrot.lane.b32.xlu0 %v1785, 104
      %v5276 = vpop.permute.xlu0 %5275
      %5277 = vrot.lane.b32.xlu0 %v1786, 104
      %v5278 = vpop.permute.xlu0 %5277
      %5279 = vrot.lane.b32.xlu0 %v1787, 104
      %v5280 = vpop.permute.xlu0 %5279
      %5281 = vrot.lane.b32.xlu0 %v1788, 104
      %v5282 = vpop.permute.xlu0 %5281
      %5283 = vrot.lane.b32.xlu0 %v1785, 72
      %v5284 = vpop.permute.xlu0 %5283
      %5285 = vrot.lane.b32.xlu0 %v1786, 72
      %v5286 = vpop.permute.xlu0 %5285
      %5287 = vrot.lane.b32.xlu0 %v1787, 72
      %v5288 = vpop.permute.xlu0 %5287
      %5289 = vrot.lane.b32.xlu0 %v1788, 72
      %v5290 = vpop.permute.xlu0 %5289
      %v5292 = vsel %vm1553, %v5276, 0
      %v5295 = vsel %vm1553, %v5278, 0
      %v5298 = vsel %vm1553, %v5280, 0
      %v5301 = vsel %vm1553, %v5282, 0
      %v5304 = vsel %vm1553, %v5284, 0
      %v5307 = vsel %vm1553, %v5286, 0
      %v5310 = vsel %vm1553, %v5288, 0
      %v5313 = vsel %vm1553, %v5290, 0
      %5315 = vmatpush.bf16.xpose.msra.mxu0 0
      %5316 = vmatpush.bf16.xpose.msra.mxu0 0
      %5317 = vmatpush.bf16.xpose.msra.mxu0 0
      %5318 = vmatpush.bf16.xpose.msra.mxu0 0
      %5319 = vmatpush.bf16.xpose.msra.mxu0 %v5313
      %5320 = vmatpush.bf16.xpose.msra.mxu0 %v5310
      %5321 = vmatpush.bf16.xpose.msra.mxu0 %v5307
      %5322 = vmatpush.bf16.xpose.msra.mxu0 %v5304
      %5323 = vmatmul.bf16.gmra.mxu0 %v5292
      %v5324 = vpop.f32.mrf.mxu0
      %v5325 = vadd.f32 %v5060, %v5324
      %v5326 = vpop.f32.mrf.mxu0
      %v5327 = vadd.f32 %v5061, %v5326
      %5328 = vmatmul.bf16.gmra.mxu0 %v5295
      %v5329 = vpop.f32.mrf.mxu0
      %v5330 = vadd.f32 %v5062, %v5329
      %v5331 = vpop.f32.mrf.mxu0
      %v5332 = vadd.f32 %v5063, %v5331
      %5333 = vmatmul.bf16.gmra.mxu0 %v5298
      %v5334 = vpop.f32.mrf.mxu0
      %v5335 = vadd.f32 %v5064, %v5334
      %v5336 = vpop.f32.mrf.mxu0
      %v5337 = vadd.f32 %v5065, %v5336
      %5338 = vmatmul.bf16.gmra.mxu0 %v5301
      %v5339 = vpop.f32.mrf.mxu0
      %v5340 = vadd.f32 %v5066, %v5339
      %v5341 = vpop.f32.mrf.mxu0
      %v5342 = vadd.f32 %v5067, %v5341
      %5343 = vdwg.mxu0
      %v5344 = vadd.f32 %v5118, %v1850
      %v5345 = vadd.f32 %v5120, %v1851
      %v5346 = vadd.f32 %v5123, %v1852
      %v5347 = vadd.f32 %v5125, %v1853
      %v5348 = vadd.f32 %v5128, %v1854
      %v5349 = vadd.f32 %v5130, %v1855
      %v5350 = vadd.f32 %v5133, %v1856
      %v5351 = vadd.f32 %v5135, %v1857
      %v5352 = vadd.f32 %v5187, %v1850
      %v5353 = vadd.f32 %v5189, %v1851
      %v5354 = vadd.f32 %v5192, %v1852
      %v5355 = vadd.f32 %v5194, %v1853
      %v5356 = vadd.f32 %v5197, %v1854
      %v5357 = vadd.f32 %v5199, %v1855
      %v5358 = vadd.f32 %v5202, %v1856
      %v5359 = vadd.f32 %v5204, %v1857
      %v5360 = vadd.f32 %v5256, %v1850
      %v5361 = vadd.f32 %v5258, %v1851
      %v5362 = vadd.f32 %v5261, %v1852
      %v5363 = vadd.f32 %v5263, %v1853
      %v5364 = vadd.f32 %v5266, %v1854
      %v5365 = vadd.f32 %v5268, %v1855
      %v5366 = vadd.f32 %v5271, %v1856
      %v5367 = vadd.f32 %v5273, %v1857
      %v5368 = vadd.f32 %v5325, %v1850
      %v5369 = vadd.f32 %v5327, %v1851
      %v5370 = vadd.f32 %v5330, %v1852
      %v5371 = vadd.f32 %v5332, %v1853
      %v5372 = vadd.f32 %v5335, %v1854
      %v5373 = vadd.f32 %v5337, %v1855
      %v5374 = vadd.f32 %v5340, %v1856
      %v5375 = vadd.f32 %v5342, %v1857
      %v5376 = vsel %vm1890, %v5344, -inf
      %5377 = vmax.xlane.f32.xlu0 %v5376
      %v5378 = vpop.xlane.xlu0 %5377
      %v5379 = vsel %vm1890, %v5345, -inf
      %5380 = vmax.xlane.f32.xlu0 %v5379
      %v5381 = vpop.xlane.xlu0 %5380
      %v5382 = vsel %vm1890, %v5346, -inf
      %5383 = vmax.xlane.f32.xlu0 %v5382
      %v5384 = vpop.xlane.xlu0 %5383
      %v5385 = vsel %vm1890, %v5347, -inf
      %5386 = vmax.xlane.f32.xlu0 %v5385
      %v5387 = vpop.xlane.xlu0 %5386
      %v5388 = vsel %vm1890, %v5348, -inf
      %5389 = vmax.xlane.f32.xlu0 %v5388
      %v5390 = vpop.xlane.xlu0 %5389
      %v5391 = vsel %vm1890, %v5349, -inf
      %5392 = vmax.xlane.f32.xlu0 %v5391
      %v5393 = vpop.xlane.xlu0 %5392
      %v5394 = vsel %vm1890, %v5350, -inf
      %5395 = vmax.xlane.f32.xlu0 %v5394
      %v5396 = vpop.xlane.xlu0 %5395
      %v5397 = vsel %vm1890, %v5351, -inf
      %5398 = vmax.xlane.f32.xlu0 %v5397
      %v5399 = vpop.xlane.xlu0 %5398
      %v5400 = vsel %vm1890, %v5352, -inf
      %5401 = vmax.xlane.f32.xlu0 %v5400
      %v5402 = vpop.xlane.xlu0 %5401
      %v5403 = vsel %vm1890, %v5353, -inf
      %5404 = vmax.xlane.f32.xlu0 %v5403
      %v5405 = vpop.xlane.xlu0 %5404
      %v5406 = vsel %vm1890, %v5354, -inf
      %5407 = vmax.xlane.f32.xlu0 %v5406
      %v5408 = vpop.xlane.xlu0 %5407
      %v5409 = vsel %vm1890, %v5355, -inf
      %5410 = vmax.xlane.f32.xlu0 %v5409
      %v5411 = vpop.xlane.xlu0 %5410
      %v5412 = vsel %vm1890, %v5356, -inf
      %5413 = vmax.xlane.f32.xlu0 %v5412
      %v5414 = vpop.xlane.xlu0 %5413
      %v5415 = vsel %vm1890, %v5357, -inf
      %5416 = vmax.xlane.f32.xlu0 %v5415
      %v5417 = vpop.xlane.xlu0 %5416
      %v5418 = vsel %vm1890, %v5358, -inf
      %5419 = vmax.xlane.f32.xlu0 %v5418
      %v5420 = vpop.xlane.xlu0 %5419
      %v5421 = vsel %vm1890, %v5359, -inf
      %5422 = vmax.xlane.f32.xlu0 %v5421
      %v5423 = vpop.xlane.xlu0 %5422
      %v5424 = vsel %vm1890, %v5360, -inf
      %5425 = vmax.xlane.f32.xlu0 %v5424
      %v5426 = vpop.xlane.xlu0 %5425
      %v5427 = vsel %vm1890, %v5361, -inf
      %5428 = vmax.xlane.f32.xlu0 %v5427
      %v5429 = vpop.xlane.xlu0 %5428
      %v5430 = vsel %vm1890, %v5362, -inf
      %5431 = vmax.xlane.f32.xlu0 %v5430
      %v5432 = vpop.xlane.xlu0 %5431
      %v5433 = vsel %vm1890, %v5363, -inf
      %5434 = vmax.xlane.f32.xlu0 %v5433
      %v5435 = vpop.xlane.xlu0 %5434
      %v5436 = vsel %vm1890, %v5364, -inf
      %5437 = vmax.xlane.f32.xlu0 %v5436
      %v5438 = vpop.xlane.xlu0 %5437
      %v5439 = vsel %vm1890, %v5365, -inf
      %5440 = vmax.xlane.f32.xlu0 %v5439
      %v5441 = vpop.xlane.xlu0 %5440
      %v5442 = vsel %vm1890, %v5366, -inf
      %5443 = vmax.xlane.f32.xlu0 %v5442
      %v5444 = vpop.xlane.xlu0 %5443
      %v5445 = vsel %vm1890, %v5367, -inf
      %5446 = vmax.xlane.f32.xlu0 %v5445
      %v5447 = vpop.xlane.xlu0 %5446
      %v5448 = vsel %vm1890, %v5368, -inf
      %5449 = vmax.xlane.f32.xlu0 %v5448
      %v5450 = vpop.xlane.xlu0 %5449
      %v5451 = vsel %vm1890, %v5369, -inf
      %5452 = vmax.xlane.f32.xlu0 %v5451
      %v5453 = vpop.xlane.xlu0 %5452
      %v5454 = vsel %vm1890, %v5370, -inf
      %5455 = vmax.xlane.f32.xlu0 %v5454
      %v5456 = vpop.xlane.xlu0 %5455
      %v5457 = vsel %vm1890, %v5371, -inf
      %5458 = vmax.xlane.f32.xlu0 %v5457
      %v5459 = vpop.xlane.xlu0 %5458
      %v5460 = vsel %vm1890, %v5372, -inf
      %5461 = vmax.xlane.f32.xlu0 %v5460
      %v5462 = vpop.xlane.xlu0 %5461
      %v5463 = vsel %vm1890, %v5373, -inf
      %5464 = vmax.xlane.f32.xlu0 %v5463
      %v5465 = vpop.xlane.xlu0 %5464
      %v5466 = vsel %vm1890, %v5374, -inf
      %5467 = vmax.xlane.f32.xlu0 %v5466
      %v5468 = vpop.xlane.xlu0 %5467
      %v5469 = vsel %vm1890, %v5375, -inf
      %5470 = vmax.xlane.f32.xlu0 %v5469
      %v5471 = vpop.xlane.xlu0 %5470
      %v5472 = vsub.f32 %v5344, %v5378
      %v5473 = vsub.f32 %v5345, %v5381
      %v5474 = vsub.f32 %v5346, %v5384
      %v5475 = vsub.f32 %v5347, %v5387
      %v5476 = vsub.f32 %v5348, %v5390
      %v5477 = vsub.f32 %v5349, %v5393
      %v5478 = vsub.f32 %v5350, %v5396
      %v5479 = vsub.f32 %v5351, %v5399
      %v5480 = vsub.f32 %v5352, %v5402
      %v5481 = vsub.f32 %v5353, %v5405
      %v5482 = vsub.f32 %v5354, %v5408
      %v5483 = vsub.f32 %v5355, %v5411
      %v5484 = vsub.f32 %v5356, %v5414
      %v5485 = vsub.f32 %v5357, %v5417
      %v5486 = vsub.f32 %v5358, %v5420
      %v5487 = vsub.f32 %v5359, %v5423
      %v5488 = vsub.f32 %v5360, %v5426
      %v5489 = vsub.f32 %v5361, %v5429
      %v5490 = vsub.f32 %v5362, %v5432
      %v5491 = vsub.f32 %v5363, %v5435
      %v5492 = vsub.f32 %v5364, %v5438
      %v5493 = vsub.f32 %v5365, %v5441
      %v5494 = vsub.f32 %v5366, %v5444
      %v5495 = vsub.f32 %v5367, %v5447
      %v5496 = vsub.f32 %v5368, %v5450
      %v5497 = vsub.f32 %v5369, %v5453
      %v5498 = vsub.f32 %v5370, %v5456
      %v5499 = vsub.f32 %v5371, %v5459
      %v5500 = vsub.f32 %v5372, %v5462
      %v5501 = vsub.f32 %v5373, %v5465
      %v5502 = vsub.f32 %v5374, %v5468
      %v5503 = vsub.f32 %v5375, %v5471
      %v5504 = vmul.f32 %v5472, 1.442695
      %v5505 = vpow.pop %v5504
      %v5506 = vmul.f32 %v5473, 1.442695
      %v5507 = vpow.pop %v5506
      %v5508 = vmul.f32 %v5474, 1.442695
      %v5509 = vpow.pop %v5508
      %v5510 = vmul.f32 %v5475, 1.442695
      %v5511 = vpow.pop %v5510
      %v5512 = vmul.f32 %v5476, 1.442695
      %v5513 = vpow.pop %v5512
      %v5514 = vmul.f32 %v5477, 1.442695
      %v5515 = vpow.pop %v5514
      %v5516 = vmul.f32 %v5478, 1.442695
      %v5517 = vpow.pop %v5516
      %v5518 = vmul.f32 %v5479, 1.442695
      %v5519 = vpow.pop %v5518
      %v5520 = vmul.f32 %v5480, 1.442695
      %v5521 = vpow.pop %v5520
      %v5522 = vmul.f32 %v5481, 1.442695
      %v5523 = vpow.pop %v5522
      %v5524 = vmul.f32 %v5482, 1.442695
      %v5525 = vpow.pop %v5524
      %v5526 = vmul.f32 %v5483, 1.442695
      %v5527 = vpow.pop %v5526
      %v5528 = vmul.f32 %v5484, 1.442695
      %v5529 = vpow.pop %v5528
      %v5530 = vmul.f32 %v5485, 1.442695
      %v5531 = vpow.pop %v5530
      %v5532 = vmul.f32 %v5486, 1.442695
      %v5533 = vpow.pop %v5532
      %v5534 = vmul.f32 %v5487, 1.442695
      %v5535 = vpow.pop %v5534
      %v5536 = vmul.f32 %v5488, 1.442695
      %v5537 = vpow.pop %v5536
      %v5538 = vmul.f32 %v5489, 1.442695
      %v5539 = vpow.pop %v5538
      %v5540 = vmul.f32 %v5490, 1.442695
      %v5541 = vpow.pop %v5540
      %v5542 = vmul.f32 %v5491, 1.442695
      %v5543 = vpow.pop %v5542
      %v5544 = vmul.f32 %v5492, 1.442695
      %v5545 = vpow.pop %v5544
      %v5546 = vmul.f32 %v5493, 1.442695
      %v5547 = vpow.pop %v5546
      %v5548 = vmul.f32 %v5494, 1.442695
      %v5549 = vpow.pop %v5548
      %v5550 = vmul.f32 %v5495, 1.442695
      %v5551 = vpow.pop %v5550
      %v5552 = vmul.f32 %v5496, 1.442695
      %v5553 = vpow.pop %v5552
      %v5554 = vmul.f32 %v5497, 1.442695
      %v5555 = vpow.pop %v5554
      %v5556 = vmul.f32 %v5498, 1.442695
      %v5557 = vpow.pop %v5556
      %v5558 = vmul.f32 %v5499, 1.442695
      %v5559 = vpow.pop %v5558
      %v5560 = vmul.f32 %v5500, 1.442695
      %v5561 = vpow.pop %v5560
      %v5562 = vmul.f32 %v5501, 1.442695
      %v5563 = vpow.pop %v5562
      %v5564 = vmul.f32 %v5502, 1.442695
      %v5565 = vpow.pop %v5564
      %v5566 = vmul.f32 %v5503, 1.442695
      %v5567 = vpow.pop %v5566
      %v5568 = vsel %vm1890, %v5505, 0.0
      %5569 = vadd.xlane.f32.xlu0 %v5568
      %v5570 = vpop.xlane.xlu0 %5569
      %v5571 = vsel %vm1890, %v5507, 0.0
      %5572 = vadd.xlane.f32.xlu0 %v5571
      %v5573 = vpop.xlane.xlu0 %5572
      %v5574 = vsel %vm1890, %v5509, 0.0
      %5575 = vadd.xlane.f32.xlu0 %v5574
      %v5576 = vpop.xlane.xlu0 %5575
      %v5577 = vsel %vm1890, %v5511, 0.0
      %5578 = vadd.xlane.f32.xlu0 %v5577
      %v5579 = vpop.xlane.xlu0 %5578
      %v5580 = vsel %vm1890, %v5513, 0.0
      %5581 = vadd.xlane.f32.xlu0 %v5580
      %v5582 = vpop.xlane.xlu0 %5581
      %v5583 = vsel %vm1890, %v5515, 0.0
      %5584 = vadd.xlane.f32.xlu0 %v5583
      %v5585 = vpop.xlane.xlu0 %5584
      %v5586 = vsel %vm1890, %v5517, 0.0
      %5587 = vadd.xlane.f32.xlu0 %v5586
      %v5588 = vpop.xlane.xlu0 %5587
      %v5589 = vsel %vm1890, %v5519, 0.0
      %5590 = vadd.xlane.f32.xlu0 %v5589
      %v5591 = vpop.xlane.xlu0 %5590
      %v5592 = vsel %vm1890, %v5521, 0.0
      %5593 = vadd.xlane.f32.xlu0 %v5592
      %v5594 = vpop.xlane.xlu0 %5593
      %v5595 = vsel %vm1890, %v5523, 0.0
      %5596 = vadd.xlane.f32.xlu0 %v5595
      %v5597 = vpop.xlane.xlu0 %5596
      %v5598 = vsel %vm1890, %v5525, 0.0
      %5599 = vadd.xlane.f32.xlu0 %v5598
      %v5600 = vpop.xlane.xlu0 %5599
      %v5601 = vsel %vm1890, %v5527, 0.0
      %5602 = vadd.xlane.f32.xlu0 %v5601
      %v5603 = vpop.xlane.xlu0 %5602
      %v5604 = vsel %vm1890, %v5529, 0.0
      %5605 = vadd.xlane.f32.xlu0 %v5604
      %v5606 = vpop.xlane.xlu0 %5605
      %v5607 = vsel %vm1890, %v5531, 0.0
      %5608 = vadd.xlane.f32.xlu0 %v5607
      %v5609 = vpop.xlane.xlu0 %5608
      %v5610 = vsel %vm1890, %v5533, 0.0
      %5611 = vadd.xlane.f32.xlu0 %v5610
      %v5612 = vpop.xlane.xlu0 %5611
      %v5613 = vsel %vm1890, %v5535, 0.0
      %5614 = vadd.xlane.f32.xlu0 %v5613
      %v5615 = vpop.xlane.xlu0 %5614
      %v5616 = vsel %vm1890, %v5537, 0.0
      %5617 = vadd.xlane.f32.xlu0 %v5616
      %v5618 = vpop.xlane.xlu0 %5617
      %v5619 = vsel %vm1890, %v5539, 0.0
      %5620 = vadd.xlane.f32.xlu0 %v5619
      %v5621 = vpop.xlane.xlu0 %5620
      %v5622 = vsel %vm1890, %v5541, 0.0
      %5623 = vadd.xlane.f32.xlu0 %v5622
      %v5624 = vpop.xlane.xlu0 %5623
      %v5625 = vsel %vm1890, %v5543, 0.0
      %5626 = vadd.xlane.f32.xlu0 %v5625
      %v5627 = vpop.xlane.xlu0 %5626
      %v5628 = vsel %vm1890, %v5545, 0.0
      %5629 = vadd.xlane.f32.xlu0 %v5628
      %v5630 = vpop.xlane.xlu0 %5629
      %v5631 = vsel %vm1890, %v5547, 0.0
      %5632 = vadd.xlane.f32.xlu0 %v5631
      %v5633 = vpop.xlane.xlu0 %5632
      %v5634 = vsel %vm1890, %v5549, 0.0
      %5635 = vadd.xlane.f32.xlu0 %v5634
      %v5636 = vpop.xlane.xlu0 %5635
      %v5637 = vsel %vm1890, %v5551, 0.0
      %5638 = vadd.xlane.f32.xlu0 %v5637
      %v5639 = vpop.xlane.xlu0 %5638
      %v5640 = vsel %vm1890, %v5553, 0.0
      %5641 = vadd.xlane.f32.xlu0 %v5640
      %v5642 = vpop.xlane.xlu0 %5641
      %v5643 = vsel %vm1890, %v5555, 0.0
      %5644 = vadd.xlane.f32.xlu0 %v5643
      %v5645 = vpop.xlane.xlu0 %5644
      %v5646 = vsel %vm1890, %v5557, 0.0
      %5647 = vadd.xlane.f32.xlu0 %v5646
      %v5648 = vpop.xlane.xlu0 %5647
      %v5649 = vsel %vm1890, %v5559, 0.0
      %5650 = vadd.xlane.f32.xlu0 %v5649
      %v5651 = vpop.xlane.xlu0 %5650
      %v5652 = vsel %vm1890, %v5561, 0.0
      %5653 = vadd.xlane.f32.xlu0 %v5652
      %v5654 = vpop.xlane.xlu0 %5653
      %v5655 = vsel %vm1890, %v5563, 0.0
      %5656 = vadd.xlane.f32.xlu0 %v5655
      %v5657 = vpop.xlane.xlu0 %5656
      %v5658 = vsel %vm1890, %v5565, 0.0
      %5659 = vadd.xlane.f32.xlu0 %v5658
      %v5660 = vpop.xlane.xlu0 %5659
      %v5661 = vsel %vm1890, %v5567, 0.0
      %5662 = vadd.xlane.f32.xlu0 %v5661
      %v5663 = vpop.xlane.xlu0 %5662
      %v5664 = vrcp.pop %v5570
      %v5665 = vrcp.pop %v5573
      %v5666 = vrcp.pop %v5576
      %v5667 = vrcp.pop %v5579
      %v5668 = vrcp.pop %v5582
      %v5669 = vrcp.pop %v5585
      %v5670 = vrcp.pop %v5588
      %v5671 = vrcp.pop %v5591
      %v5672 = vrcp.pop %v5594
      %v5673 = vrcp.pop %v5597
      %v5674 = vrcp.pop %v5600
      %v5675 = vrcp.pop %v5603
      %v5676 = vrcp.pop %v5606
      %v5677 = vrcp.pop %v5609
      %v5678 = vrcp.pop %v5612
      %v5679 = vrcp.pop %v5615
      %v5680 = vrcp.pop %v5618
      %v5681 = vrcp.pop %v5621
      %v5682 = vrcp.pop %v5624
      %v5683 = vrcp.pop %v5627
      %v5684 = vrcp.pop %v5630
      %v5685 = vrcp.pop %v5633
      %v5686 = vrcp.pop %v5636
      %v5687 = vrcp.pop %v5639
      %v5688 = vrcp.pop %v5642
      %v5689 = vrcp.pop %v5645
      %v5690 = vrcp.pop %v5648
      %v5691 = vrcp.pop %v5651
      %v5692 = vrcp.pop %v5654
      %v5693 = vrcp.pop %v5657
      %v5694 = vrcp.pop %v5660
      %v5695 = vrcp.pop %v5663
      %v5696 = vmul.f32 %v5505, %v5664
      %v5697 = vmul.f32 %v5507, %v5665
      %v5698 = vmul.f32 %v5509, %v5666
      %v5699 = vmul.f32 %v5511, %v5667
      %v5700 = vmul.f32 %v5513, %v5668
      %v5701 = vmul.f32 %v5515, %v5669
      %v5702 = vmul.f32 %v5517, %v5670
      %v5703 = vmul.f32 %v5519, %v5671
      %v5704 = vmul.f32 %v5521, %v5672
      %v5705 = vmul.f32 %v5523, %v5673
      %v5706 = vmul.f32 %v5525, %v5674
      %v5707 = vmul.f32 %v5527, %v5675
      %v5708 = vmul.f32 %v5529, %v5676
      %v5709 = vmul.f32 %v5531, %v5677
      %v5710 = vmul.f32 %v5533, %v5678
      %v5711 = vmul.f32 %v5535, %v5679
      %v5712 = vmul.f32 %v5537, %v5680
      %v5713 = vmul.f32 %v5539, %v5681
      %v5714 = vmul.f32 %v5541, %v5682
      %v5715 = vmul.f32 %v5543, %v5683
      %v5716 = vmul.f32 %v5545, %v5684
      %v5717 = vmul.f32 %v5547, %v5685
      %v5718 = vmul.f32 %v5549, %v5686
      %v5719 = vmul.f32 %v5551, %v5687
      %v5720 = vmul.f32 %v5553, %v5688
      %v5721 = vmul.f32 %v5555, %v5689
      %v5722 = vmul.f32 %v5557, %v5690
      %v5723 = vmul.f32 %v5559, %v5691
      %v5724 = vmul.f32 %v5561, %v5692
      %v5725 = vmul.f32 %v5563, %v5693
      %v5726 = vmul.f32 %v5565, %v5694
      %v5727 = vmul.f32 %v5567, %v5695
      %v5728 = vpack.c.bf16 %v5696, %v5696
      %v5729 = vpack.c.bf16 %v5697, %v5697
      %v5730 = vpack.c.bf16 %v5698, %v5698
      %v5731 = vpack.c.bf16 %v5699, %v5699
      %v5732 = vpack.c.bf16 %v5700, %v5700
      %v5733 = vpack.c.bf16 %v5701, %v5701
      %v5734 = vpack.c.bf16 %v5702, %v5702
      %v5735 = vpack.c.bf16 %v5703, %v5703
      %v5736 = vpack.c.bf16 %v5704, %v5704
      %v5737 = vpack.c.bf16 %v5705, %v5705
      %v5738 = vpack.c.bf16 %v5706, %v5706
      %v5739 = vpack.c.bf16 %v5707, %v5707
      %v5740 = vpack.c.bf16 %v5708, %v5708
      %v5741 = vpack.c.bf16 %v5709, %v5709
      %v5742 = vpack.c.bf16 %v5710, %v5710
      %v5743 = vpack.c.bf16 %v5711, %v5711
      %v5744 = vpack.c.bf16 %v5712, %v5712
      %v5745 = vpack.c.bf16 %v5713, %v5713
      %v5746 = vpack.c.bf16 %v5714, %v5714
      %v5747 = vpack.c.bf16 %v5715, %v5715
      %v5748 = vpack.c.bf16 %v5716, %v5716
      %v5749 = vpack.c.bf16 %v5717, %v5717
      %v5750 = vpack.c.bf16 %v5718, %v5718
      %v5751 = vpack.c.bf16 %v5719, %v5719
      %v5752 = vpack.c.bf16 %v5720, %v5720
      %v5753 = vpack.c.bf16 %v5721, %v5721
      %v5754 = vpack.c.bf16 %v5722, %v5722
      %v5755 = vpack.c.bf16 %v5723, %v5723
      %v5756 = vpack.c.bf16 %v5724, %v5724
      %v5757 = vpack.c.bf16 %v5725, %v5725
      %v5758 = vpack.c.bf16 %v5726, %v5726
      %v5759 = vpack.c.bf16 %v5727, %v5727
      %v5768 = vunpack.c.l.b16 %v5728
      %v5769 = vunpack.c.l.b16 %v5729
      %v5770 = vunpack.c.l.b16 %v5730
      %v5771 = vunpack.c.l.b16 %v5731
      %v5772 = vunpack.c.l.b16 %v5732
      %v5773 = vunpack.c.l.b16 %v5733
      %v5774 = vunpack.c.l.b16 %v5734
      %v5775 = vunpack.c.l.b16 %v5735
      %v5776 = vpack.c.b16 %v5769, %v5768
      %v5777 = vpack.c.b16 %v5771, %v5770
      %v5778 = vpack.c.b16 %v5773, %v5772
      %v5779 = vpack.c.b16 %v5775, %v5774
      %5780 = vrot.lane.b32.xlu0 %v1541, 40
      %v5781 = vpop.permute.xlu0 %5780
      %5782 = vrot.lane.b32.xlu0 %v1542, 40
      %v5783 = vpop.permute.xlu0 %5782
      %5784 = vrot.lane.b32.xlu0 %v1543, 40
      %v5785 = vpop.permute.xlu0 %5784
      %5786 = vrot.lane.b32.xlu0 %v1544, 40
      %v5787 = vpop.permute.xlu0 %5786
      %v5793 = vsel %vm1890, %v5776, 0
      %v5796 = vsel %vm1890, %v5777, 0
      %v5799 = vsel %vm1890, %v5778, 0
      %v5802 = vsel %vm1890, %v5779, 0
      %5804 = vmatpush.bf16.msra.mxu0 0
      %5805 = vmatpush.bf16.msra.mxu0 0
      %5806 = vmatpush.bf16.msra.mxu0 0
      %5807 = vmatpush.bf16.msra.mxu0 0
      %5808 = vmatpush.bf16.msra.mxu0 %v5787
      %5809 = vmatpush.bf16.msra.mxu0 %v5785
      %5810 = vmatpush.bf16.msra.mxu0 %v5783
      %5811 = vmatpush.bf16.msra.mxu0 %v5781
      %5812 = vmatmul.bf16.gmra.mxu0 %v5793
      %v5813 = vpop.f32.mrf.mxu0
      %v5814 = vadd.f32 0.0, %v5813
      %v5815 = vpop.f32.mrf.mxu0
      %v5816 = vadd.f32 0.0, %v5815
      %5817 = vmatmul.bf16.gmra.mxu0 %v5796
      %v5818 = vpop.f32.mrf.mxu0
      %v5819 = vadd.f32 0.0, %v5818
      %v5820 = vpop.f32.mrf.mxu0
      %v5821 = vadd.f32 0.0, %v5820
      %5822 = vmatmul.bf16.gmra.mxu0 %v5799
      %v5823 = vpop.f32.mrf.mxu0
      %v5824 = vadd.f32 0.0, %v5823
      %v5825 = vpop.f32.mrf.mxu0
      %v5826 = vadd.f32 0.0, %v5825
      %5827 = vmatmul.bf16.gmra.mxu0 %v5802
      %v5828 = vpop.f32.mrf.mxu0
      %v5829 = vadd.f32 0.0, %v5828
      %v5830 = vpop.f32.mrf.mxu0
      %v5831 = vadd.f32 0.0, %v5830
      %5832 = vdwg.mxu0
      %v5841 = vunpack.c.l.b16 %v5736
      %v5842 = vunpack.c.l.b16 %v5737
      %v5843 = vunpack.c.l.b16 %v5738
      %v5844 = vunpack.c.l.b16 %v5739
      %v5845 = vunpack.c.l.b16 %v5740
      %v5846 = vunpack.c.l.b16 %v5741
      %v5847 = vunpack.c.l.b16 %v5742
      %v5848 = vunpack.c.l.b16 %v5743
      %v5849 = vpack.c.b16 %v5842, %v5841
      %v5850 = vpack.c.b16 %v5844, %v5843
      %v5851 = vpack.c.b16 %v5846, %v5845
      %v5852 = vpack.c.b16 %v5848, %v5847
      %5853 = vrot.lane.b32.xlu0 %v1623, 40
      %v5854 = vpop.permute.xlu0 %5853
      %5855 = vrot.lane.b32.xlu0 %v1624, 40
      %v5856 = vpop.permute.xlu0 %5855
      %5857 = vrot.lane.b32.xlu0 %v1625, 40
      %v5858 = vpop.permute.xlu0 %5857
      %5859 = vrot.lane.b32.xlu0 %v1626, 40
      %v5860 = vpop.permute.xlu0 %5859
      %v5866 = vsel %vm1890, %v5849, 0
      %v5869 = vsel %vm1890, %v5850, 0
      %v5872 = vsel %vm1890, %v5851, 0
      %v5875 = vsel %vm1890, %v5852, 0
      %5877 = vmatpush.bf16.msra.mxu0 0
      %5878 = vmatpush.bf16.msra.mxu0 0
      %5879 = vmatpush.bf16.msra.mxu0 0
      %5880 = vmatpush.bf16.msra.mxu0 0
      %5881 = vmatpush.bf16.msra.mxu0 %v5860
      %5882 = vmatpush.bf16.msra.mxu0 %v5858
      %5883 = vmatpush.bf16.msra.mxu0 %v5856
      %5884 = vmatpush.bf16.msra.mxu0 %v5854
      %5885 = vmatmul.bf16.gmra.mxu0 %v5866
      %v5886 = vpop.f32.mrf.mxu0
      %v5887 = vadd.f32 0.0, %v5886
      %v5888 = vpop.f32.mrf.mxu0
      %v5889 = vadd.f32 0.0, %v5888
      %5890 = vmatmul.bf16.gmra.mxu0 %v5869
      %v5891 = vpop.f32.mrf.mxu0
      %v5892 = vadd.f32 0.0, %v5891
      %v5893 = vpop.f32.mrf.mxu0
      %v5894 = vadd.f32 0.0, %v5893
      %5895 = vmatmul.bf16.gmra.mxu0 %v5872
      %v5896 = vpop.f32.mrf.mxu0
      %v5897 = vadd.f32 0.0, %v5896
      %v5898 = vpop.f32.mrf.mxu0
      %v5899 = vadd.f32 0.0, %v5898
      %5900 = vmatmul.bf16.gmra.mxu0 %v5875
      %v5901 = vpop.f32.mrf.mxu0
      %v5902 = vadd.f32 0.0, %v5901
      %v5903 = vpop.f32.mrf.mxu0
      %v5904 = vadd.f32 0.0, %v5903
      %5905 = vdwg.mxu0
      %v5914 = vunpack.c.l.b16 %v5744
      %v5915 = vunpack.c.l.b16 %v5745
      %v5916 = vunpack.c.l.b16 %v5746
      %v5917 = vunpack.c.l.b16 %v5747
      %v5918 = vunpack.c.l.b16 %v5748
      %v5919 = vunpack.c.l.b16 %v5749
      %v5920 = vunpack.c.l.b16 %v5750
      %v5921 = vunpack.c.l.b16 %v5751
      %v5922 = vpack.c.b16 %v5915, %v5914
      %v5923 = vpack.c.b16 %v5917, %v5916
      %v5924 = vpack.c.b16 %v5919, %v5918
      %v5925 = vpack.c.b16 %v5921, %v5920
      %5926 = vrot.lane.b32.xlu0 %v1704, 40
      %v5927 = vpop.permute.xlu0 %5926
      %5928 = vrot.lane.b32.xlu0 %v1705, 40
      %v5929 = vpop.permute.xlu0 %5928
      %5930 = vrot.lane.b32.xlu0 %v1706, 40
      %v5931 = vpop.permute.xlu0 %5930
      %5932 = vrot.lane.b32.xlu0 %v1707, 40
      %v5933 = vpop.permute.xlu0 %5932
      %v5939 = vsel %vm1890, %v5922, 0
      %v5942 = vsel %vm1890, %v5923, 0
      %v5945 = vsel %vm1890, %v5924, 0
      %v5948 = vsel %vm1890, %v5925, 0
      %5950 = vmatpush.bf16.msra.mxu0 0
      %5951 = vmatpush.bf16.msra.mxu0 0
      %5952 = vmatpush.bf16.msra.mxu0 0
      %5953 = vmatpush.bf16.msra.mxu0 0
      %5954 = vmatpush.bf16.msra.mxu0 %v5933
      %5955 = vmatpush.bf16.msra.mxu0 %v5931
      %5956 = vmatpush.bf16.msra.mxu0 %v5929
      %5957 = vmatpush.bf16.msra.mxu0 %v5927
      %5958 = vmatmul.bf16.gmra.mxu0 %v5939
      %v5959 = vpop.f32.mrf.mxu0
      %v5960 = vadd.f32 0.0, %v5959
      %v5961 = vpop.f32.mrf.mxu0
      %v5962 = vadd.f32 0.0, %v5961
      %5963 = vmatmul.bf16.gmra.mxu0 %v5942
      %v5964 = vpop.f32.mrf.mxu0
      %v5965 = vadd.f32 0.0, %v5964
      %v5966 = vpop.f32.mrf.mxu0
      %v5967 = vadd.f32 0.0, %v5966
      %5968 = vmatmul.bf16.gmra.mxu0 %v5945
      %v5969 = vpop.f32.mrf.mxu0
      %v5970 = vadd.f32 0.0, %v5969
      %v5971 = vpop.f32.mrf.mxu0
      %v5972 = vadd.f32 0.0, %v5971
      %5973 = vmatmul.bf16.gmra.mxu0 %v5948
      %v5974 = vpop.f32.mrf.mxu0
      %v5975 = vadd.f32 0.0, %v5974
      %v5976 = vpop.f32.mrf.mxu0
      %v5977 = vadd.f32 0.0, %v5976
      %5978 = vdwg.mxu0
      %v5987 = vunpack.c.l.b16 %v5752
      %v5988 = vunpack.c.l.b16 %v5753
      %v5989 = vunpack.c.l.b16 %v5754
      %v5990 = vunpack.c.l.b16 %v5755
      %v5991 = vunpack.c.l.b16 %v5756
      %v5992 = vunpack.c.l.b16 %v5757
      %v5993 = vunpack.c.l.b16 %v5758
      %v5994 = vunpack.c.l.b16 %v5759
      %v5995 = vpack.c.b16 %v5988, %v5987
      %v5996 = vpack.c.b16 %v5990, %v5989
      %v5997 = vpack.c.b16 %v5992, %v5991
      %v5998 = vpack.c.b16 %v5994, %v5993
      %5999 = vrot.lane.b32.xlu0 %v1785, 40
      %v6000 = vpop.permute.xlu0 %5999
      %6001 = vrot.lane.b32.xlu0 %v1786, 40
      %v6002 = vpop.permute.xlu0 %6001
      %6003 = vrot.lane.b32.xlu0 %v1787, 40
      %v6004 = vpop.permute.xlu0 %6003
      %6005 = vrot.lane.b32.xlu0 %v1788, 40
      %v6006 = vpop.permute.xlu0 %6005
      %v6012 = vsel %vm1890, %v5995, 0
      %v6015 = vsel %vm1890, %v5996, 0
      %v6018 = vsel %vm1890, %v5997, 0
      %v6021 = vsel %vm1890, %v5998, 0
      %6023 = vmatpush.bf16.msra.mxu0 0
      %6024 = vmatpush.bf16.msra.mxu0 0
      %6025 = vmatpush.bf16.msra.mxu0 0
      %6026 = vmatpush.bf16.msra.mxu0 0
      %6027 = vmatpush.bf16.msra.mxu0 %v6006
      %6028 = vmatpush.bf16.msra.mxu0 %v6004
      %6029 = vmatpush.bf16.msra.mxu0 %v6002
      %6030 = vmatpush.bf16.msra.mxu0 %v6000
      %6031 = vmatmul.bf16.gmra.mxu0 %v6012
      %v6032 = vpop.f32.mrf.mxu0
      %v6033 = vadd.f32 0.0, %v6032
      %v6034 = vpop.f32.mrf.mxu0
      %v6035 = vadd.f32 0.0, %v6034
      %6036 = vmatmul.bf16.gmra.mxu0 %v6015
      %v6037 = vpop.f32.mrf.mxu0
      %v6038 = vadd.f32 0.0, %v6037
      %v6039 = vpop.f32.mrf.mxu0
      %v6040 = vadd.f32 0.0, %v6039
      %6041 = vmatmul.bf16.gmra.mxu0 %v6018
      %v6042 = vpop.f32.mrf.mxu0
      %v6043 = vadd.f32 0.0, %v6042
      %v6044 = vpop.f32.mrf.mxu0
      %v6045 = vadd.f32 0.0, %v6044
      %6046 = vmatmul.bf16.gmra.mxu0 %v6021
      %v6047 = vpop.f32.mrf.mxu0
      %v6048 = vadd.f32 0.0, %v6047
      %v6049 = vpop.f32.mrf.mxu0
      %v6050 = vadd.f32 0.0, %v6049
      %6051 = vdwg.mxu0
      %v6052 = vpack.c.bf16 %v5816, %v5814
      %v6053 = vpack.c.bf16 %v5821, %v5819
      %v6054 = vpack.c.bf16 %v5826, %v5824
      %v6055 = vpack.c.bf16 %v5831, %v5829
      %v6056 = vpack.c.bf16 %v5889, %v5887
      %v6057 = vpack.c.bf16 %v5894, %v5892
      %v6058 = vpack.c.bf16 %v5899, %v5897
      %v6059 = vpack.c.bf16 %v5904, %v5902
      %v6060 = vpack.c.bf16 %v5962, %v5960
      %v6061 = vpack.c.bf16 %v5967, %v5965
      %v6062 = vpack.c.bf16 %v5972, %v5970
      %v6063 = vpack.c.bf16 %v5977, %v5975
      %v6064 = vpack.c.bf16 %v6035, %v6033
      %v6065 = vpack.c.bf16 %v6040, %v6038
      %v6066 = vpack.c.bf16 %v6045, %v6043
      %v6067 = vpack.c.bf16 %v6050, %v6048
      %s6068 = scalar_lea.vmem %s7, 12
      %v6069 = vld [vmem:[%s6068] sm:$0xf]
      %v6071 = vsel %vm1553, %v6052, 0
      %v6074 = vsel %vm1553, %v6053, 0
      %v6077 = vsel %vm1553, %v6054, 0
      %v6080 = vsel %vm1553, %v6055, 0
      %v6083 = vsel %vm1553, %v6056, 0
      %v6086 = vsel %vm1553, %v6057, 0
      %v6089 = vsel %vm1553, %v6058, 0
      %v6092 = vsel %vm1553, %v6059, 0
      %v6095 = vsel %vm1553, %v6060, 0
      %v6098 = vsel %vm1553, %v6061, 0
      %v6101 = vsel %vm1553, %v6062, 0
      %v6104 = vsel %vm1553, %v6063, 0
      %v6107 = vsel %vm1553, %v6064, 0
      %v6110 = vsel %vm1553, %v6065, 0
      %v6113 = vsel %vm1553, %v6066, 0
      %v6116 = vsel %vm1553, %v6067, 0
      %v6119 = vsel %vm3643, %v6069, 0
      %6121 = vmatpush.bf16.msra.mxu0 0
      %6122 = vmatpush.bf16.msra.mxu0 0
      %6123 = vmatpush.bf16.msra.mxu0 0
      %6124 = vmatpush.bf16.msra.mxu0 0
      %6125 = vmatpush.bf16.msra.mxu0 0
      %6126 = vmatpush.bf16.msra.mxu0 0
      %6127 = vmatpush.bf16.msra.mxu0 0
      %6128 = vmatpush.bf16.msra.mxu0 %v6119
      %6129 = vmatmul.bf16.gmra.mxu0 %v6071
      %v6130 = vpop.f32.mrf.mxu0
      %v6131 = vadd.f32 0.0, %v6130
      %v6132 = vpop.f32.mrf.mxu0
      %v6133 = vadd.f32 0.0, %v6132
      %6134 = vmatmul.bf16.gmra.mxu0 %v6074
      %v6135 = vpop.f32.mrf.mxu0
      %v6136 = vadd.f32 0.0, %v6135
      %v6137 = vpop.f32.mrf.mxu0
      %v6138 = vadd.f32 0.0, %v6137
      %6139 = vmatmul.bf16.gmra.mxu0 %v6077
      %v6140 = vpop.f32.mrf.mxu0
      %v6141 = vadd.f32 0.0, %v6140
      %v6142 = vpop.f32.mrf.mxu0
      %v6143 = vadd.f32 0.0, %v6142
      %6144 = vmatmul.bf16.gmra.mxu0 %v6080
      %v6145 = vpop.f32.mrf.mxu0
      %v6146 = vadd.f32 0.0, %v6145
      %v6147 = vpop.f32.mrf.mxu0
      %v6148 = vadd.f32 0.0, %v6147
      %6149 = vmatmul.bf16.gmra.mxu0 %v6083
      %v6150 = vpop.f32.mrf.mxu0
      %v6151 = vadd.f32 0.0, %v6150
      %v6152 = vpop.f32.mrf.mxu0
      %v6153 = vadd.f32 0.0, %v6152
      %6154 = vmatmul.bf16.gmra.mxu0 %v6086
      %v6155 = vpop.f32.mrf.mxu0
      %v6156 = vadd.f32 0.0, %v6155
      %v6157 = vpop.f32.mrf.mxu0
      %v6158 = vadd.f32 0.0, %v6157
      %6159 = vmatmul.bf16.gmra.mxu0 %v6089
      %v6160 = vpop.f32.mrf.mxu0
      %v6161 = vadd.f32 0.0, %v6160
      %v6162 = vpop.f32.mrf.mxu0
      %v6163 = vadd.f32 0.0, %v6162
      %6164 = vmatmul.bf16.gmra.mxu0 %v6092
      %v6165 = vpop.f32.mrf.mxu0
      %v6166 = vadd.f32 0.0, %v6165
      %v6167 = vpop.f32.mrf.mxu0
      %v6168 = vadd.f32 0.0, %v6167
      %6169 = vmatmul.bf16.gmra.mxu0 %v6095
      %v6170 = vpop.f32.mrf.mxu0
      %v6171 = vadd.f32 0.0, %v6170
      %v6172 = vpop.f32.mrf.mxu0
      %v6173 = vadd.f32 0.0, %v6172
      %6174 = vmatmul.bf16.gmra.mxu0 %v6098
      %v6175 = vpop.f32.mrf.mxu0
      %v6176 = vadd.f32 0.0, %v6175
      %v6177 = vpop.f32.mrf.mxu0
      %v6178 = vadd.f32 0.0, %v6177
      %6179 = vmatmul.bf16.gmra.mxu0 %v6101
      %v6180 = vpop.f32.mrf.mxu0
      %v6181 = vadd.f32 0.0, %v6180
      %v6182 = vpop.f32.mrf.mxu0
      %v6183 = vadd.f32 0.0, %v6182
      %6184 = vmatmul.bf16.gmra.mxu0 %v6104
      %v6185 = vpop.f32.mrf.mxu0
      %v6186 = vadd.f32 0.0, %v6185
      %v6187 = vpop.f32.mrf.mxu0
      %v6188 = vadd.f32 0.0, %v6187
      %6189 = vmatmul.bf16.gmra.mxu0 %v6107
      %v6190 = vpop.f32.mrf.mxu0
      %v6191 = vadd.f32 0.0, %v6190
      %v6192 = vpop.f32.mrf.mxu0
      %v6193 = vadd.f32 0.0, %v6192
      %6194 = vmatmul.bf16.gmra.mxu0 %v6110
      %v6195 = vpop.f32.mrf.mxu0
      %v6196 = vadd.f32 0.0, %v6195
      %v6197 = vpop.f32.mrf.mxu0
      %v6198 = vadd.f32 0.0, %v6197
      %6199 = vmatmul.bf16.gmra.mxu0 %v6113
      %v6200 = vpop.f32.mrf.mxu0
      %v6201 = vadd.f32 0.0, %v6200
      %v6202 = vpop.f32.mrf.mxu0
      %v6203 = vadd.f32 0.0, %v6202
      %6204 = vmatmul.bf16.gmra.mxu0 %v6116
      %v6205 = vpop.f32.mrf.mxu0
      %v6206 = vadd.f32 0.0, %v6205
      %v6207 = vpop.f32.mrf.mxu0
      %v6208 = vadd.f32 0.0, %v6207
      %6209 = vdwg.mxu0
      %v6210 = vadd.f32 %v5027, %v6131
      %v6211 = vadd.f32 %v5028, %v6133
      %v6212 = vadd.f32 %v5029, %v6136
      %v6213 = vadd.f32 %v5030, %v6138
      %v6214 = vadd.f32 %v5031, %v6141
      %v6215 = vadd.f32 %v5032, %v6143
      %v6216 = vadd.f32 %v5033, %v6146
      %v6217 = vadd.f32 %v5034, %v6148
      %v6218 = vadd.f32 %v5035, %v6151
      %v6219 = vadd.f32 %v5036, %v6153
      %v6220 = vadd.f32 %v5037, %v6156
      %v6221 = vadd.f32 %v5038, %v6158
      %v6222 = vadd.f32 %v5039, %v6161
      %v6223 = vadd.f32 %v5040, %v6163
      %v6224 = vadd.f32 %v5041, %v6166
      %v6225 = vadd.f32 %v5042, %v6168
      %v6226 = vadd.f32 %v5043, %v6171
      %v6227 = vadd.f32 %v5044, %v6173
      %v6228 = vadd.f32 %v5045, %v6176
      %v6229 = vadd.f32 %v5046, %v6178
      %v6230 = vadd.f32 %v5047, %v6181
      %v6231 = vadd.f32 %v5048, %v6183
      %v6232 = vadd.f32 %v5049, %v6186
      %v6233 = vadd.f32 %v5050, %v6188
      %v6234 = vadd.f32 %v5051, %v6191
      %v6235 = vadd.f32 %v5052, %v6193
      %v6236 = vadd.f32 %v5053, %v6196
      %v6237 = vadd.f32 %v5054, %v6198
      %v6238 = vadd.f32 %v5055, %v6201
      %v6239 = vadd.f32 %v5056, %v6203
      %v6240 = vadd.f32 %v5057, %v6206
      %v6241 = vadd.f32 %v5058, %v6208
      %v6242 = vadd.f32 %v496, %v6210
      %v6243 = vadd.f32 %v497, %v6211
      %v6244 = vadd.f32 %v498, %v6212
      %v6245 = vadd.f32 %v499, %v6213
      %v6246 = vadd.f32 %v500, %v6214
      %v6247 = vadd.f32 %v501, %v6215
      %v6248 = vadd.f32 %v502, %v6216
      %v6249 = vadd.f32 %v503, %v6217
      %v6250 = vadd.f32 %v504, %v6218
      %v6251 = vadd.f32 %v505, %v6219
      %v6252 = vadd.f32 %v506, %v6220
      %v6253 = vadd.f32 %v507, %v6221
      %v6254 = vadd.f32 %v508, %v6222
      %v6255 = vadd.f32 %v509, %v6223
      %v6256 = vadd.f32 %v510, %v6224
      %v6257 = vadd.f32 %v511, %v6225
      %v6258 = vadd.f32 %v512, %v6226
      %v6259 = vadd.f32 %v513, %v6227
      %v6260 = vadd.f32 %v514, %v6228
      %v6261 = vadd.f32 %v515, %v6229
      %v6262 = vadd.f32 %v516, %v6230
      %v6263 = vadd.f32 %v517, %v6231
      %v6264 = vadd.f32 %v518, %v6232
      %v6265 = vadd.f32 %v519, %v6233
      %v6266 = vadd.f32 %v520, %v6234
      %v6267 = vadd.f32 %v521, %v6235
      %v6268 = vadd.f32 %v522, %v6236
      %v6269 = vadd.f32 %v523, %v6237
      %v6270 = vadd.f32 %v524, %v6238
      %v6271 = vadd.f32 %v525, %v6239
      %v6272 = vadd.f32 %v526, %v6240
      %v6273 = vadd.f32 %v527, %v6241
      %v6274 = vld [vmem:[%s8] sm:$0x1]
      %v6276 = vperm.slane %v6274, 0
      %v6278 = vadd.f32 %v6242, %v6276
      %v6279 = vadd.f32 %v6243, %v6276
      %v6280 = vadd.f32 %v6244, %v6276
      %v6281 = vadd.f32 %v6245, %v6276
      %v6282 = vadd.f32 %v6246, %v6276
      %v6283 = vadd.f32 %v6247, %v6276
      %v6284 = vadd.f32 %v6248, %v6276
      %v6285 = vadd.f32 %v6249, %v6276
      %v6286 = vadd.f32 %v6250, %v6276
      %v6287 = vadd.f32 %v6251, %v6276
      %v6288 = vadd.f32 %v6252, %v6276
      %v6289 = vadd.f32 %v6253, %v6276
      %v6290 = vadd.f32 %v6254, %v6276
      %v6291 = vadd.f32 %v6255, %v6276
      %v6292 = vadd.f32 %v6256, %v6276
      %v6293 = vadd.f32 %v6257, %v6276
      %v6294 = vadd.f32 %v6258, %v6276
      %v6295 = vadd.f32 %v6259, %v6276
      %v6296 = vadd.f32 %v6260, %v6276
      %v6297 = vadd.f32 %v6261, %v6276
      %v6298 = vadd.f32 %v6262, %v6276
      %v6299 = vadd.f32 %v6263, %v6276
      %v6300 = vadd.f32 %v6264, %v6276
      %v6301 = vadd.f32 %v6265, %v6276
      %v6302 = vadd.f32 %v6266, %v6276
      %v6303 = vadd.f32 %v6267, %v6276
      %v6304 = vadd.f32 %v6268, %v6276
      %v6305 = vadd.f32 %v6269, %v6276
      %v6306 = vadd.f32 %v6270, %v6276
      %v6307 = vadd.f32 %v6271, %v6276
      %v6308 = vadd.f32 %v6272, %v6276
      %v6309 = vadd.f32 %v6273, %v6276
      %v6310 = vld [vmem:[%s9] sm:$0x1]
      %v6311 = vld [vmem:[%s10] sm:$0x1]
      %v6312 = vsel %vm530, %v6278, 0.0
      %6313 = vadd.xlane.f32.xlu0 %v6312
      %v6314 = vpop.xlane.xlu0 %6313
      %v6315 = vsel %vm530, %v6279, 0.0
      %6316 = vadd.xlane.f32.xlu0 %v6315
      %v6317 = vpop.xlane.xlu0 %6316
      %v6318 = vsel %vm530, %v6280, 0.0
      %6319 = vadd.xlane.f32.xlu0 %v6318
      %v6320 = vpop.xlane.xlu0 %6319
      %v6321 = vsel %vm530, %v6281, 0.0
      %6322 = vadd.xlane.f32.xlu0 %v6321
      %v6323 = vpop.xlane.xlu0 %6322
      %v6324 = vsel %vm530, %v6282, 0.0
      %6325 = vadd.xlane.f32.xlu0 %v6324
      %v6326 = vpop.xlane.xlu0 %6325
      %v6327 = vsel %vm530, %v6283, 0.0
      %6328 = vadd.xlane.f32.xlu0 %v6327
      %v6329 = vpop.xlane.xlu0 %6328
      %v6330 = vsel %vm530, %v6284, 0.0
      %6331 = vadd.xlane.f32.xlu0 %v6330
      %v6332 = vpop.xlane.xlu0 %6331
      %v6333 = vsel %vm530, %v6285, 0.0
      %6334 = vadd.xlane.f32.xlu0 %v6333
      %v6335 = vpop.xlane.xlu0 %6334
      %v6336 = vsel %vm530, %v6286, 0.0
      %6337 = vadd.xlane.f32.xlu0 %v6336
      %v6338 = vpop.xlane.xlu0 %6337
      %v6339 = vsel %vm530, %v6287, 0.0
      %6340 = vadd.xlane.f32.xlu0 %v6339
      %v6341 = vpop.xlane.xlu0 %6340
      %v6342 = vsel %vm530, %v6288, 0.0
      %6343 = vadd.xlane.f32.xlu0 %v6342
      %v6344 = vpop.xlane.xlu0 %6343
      %v6345 = vsel %vm530, %v6289, 0.0
      %6346 = vadd.xlane.f32.xlu0 %v6345
      %v6347 = vpop.xlane.xlu0 %6346
      %v6348 = vsel %vm530, %v6290, 0.0
      %6349 = vadd.xlane.f32.xlu0 %v6348
      %v6350 = vpop.xlane.xlu0 %6349
      %v6351 = vsel %vm530, %v6291, 0.0
      %6352 = vadd.xlane.f32.xlu0 %v6351
      %v6353 = vpop.xlane.xlu0 %6352
      %v6354 = vsel %vm530, %v6292, 0.0
      %6355 = vadd.xlane.f32.xlu0 %v6354
      %v6356 = vpop.xlane.xlu0 %6355
      %v6357 = vsel %vm530, %v6293, 0.0
      %6358 = vadd.xlane.f32.xlu0 %v6357
      %v6359 = vpop.xlane.xlu0 %6358
      %v6360 = vsel %vm530, %v6294, 0.0
      %6361 = vadd.xlane.f32.xlu0 %v6360
      %v6362 = vpop.xlane.xlu0 %6361
      %v6363 = vsel %vm530, %v6295, 0.0
      %6364 = vadd.xlane.f32.xlu0 %v6363
      %v6365 = vpop.xlane.xlu0 %6364
      %v6366 = vsel %vm530, %v6296, 0.0
      %6367 = vadd.xlane.f32.xlu0 %v6366
      %v6368 = vpop.xlane.xlu0 %6367
      %v6369 = vsel %vm530, %v6297, 0.0
      %6370 = vadd.xlane.f32.xlu0 %v6369
      %v6371 = vpop.xlane.xlu0 %6370
      %v6372 = vsel %vm530, %v6298, 0.0
      %6373 = vadd.xlane.f32.xlu0 %v6372
      %v6374 = vpop.xlane.xlu0 %6373
      %v6375 = vsel %vm530, %v6299, 0.0
      %6376 = vadd.xlane.f32.xlu0 %v6375
      %v6377 = vpop.xlane.xlu0 %6376
      %v6378 = vsel %vm530, %v6300, 0.0
      %6379 = vadd.xlane.f32.xlu0 %v6378
      %v6380 = vpop.xlane.xlu0 %6379
      %v6381 = vsel %vm530, %v6301, 0.0
      %6382 = vadd.xlane.f32.xlu0 %v6381
      %v6383 = vpop.xlane.xlu0 %6382
      %v6384 = vsel %vm530, %v6302, 0.0
      %6385 = vadd.xlane.f32.xlu0 %v6384
      %v6386 = vpop.xlane.xlu0 %6385
      %v6387 = vsel %vm530, %v6303, 0.0
      %6388 = vadd.xlane.f32.xlu0 %v6387
      %v6389 = vpop.xlane.xlu0 %6388
      %v6390 = vsel %vm530, %v6304, 0.0
      %6391 = vadd.xlane.f32.xlu0 %v6390
      %v6392 = vpop.xlane.xlu0 %6391
      %v6393 = vsel %vm530, %v6305, 0.0
      %6394 = vadd.xlane.f32.xlu0 %v6393
      %v6395 = vpop.xlane.xlu0 %6394
      %v6396 = vsel %vm530, %v6306, 0.0
      %6397 = vadd.xlane.f32.xlu0 %v6396
      %v6398 = vpop.xlane.xlu0 %6397
      %v6399 = vsel %vm530, %v6307, 0.0
      %6400 = vadd.xlane.f32.xlu0 %v6399
      %v6401 = vpop.xlane.xlu0 %6400
      %v6402 = vsel %vm530, %v6308, 0.0
      %6403 = vadd.xlane.f32.xlu0 %v6402
      %v6404 = vpop.xlane.xlu0 %6403
      %v6405 = vsel %vm530, %v6309, 0.0
      %6406 = vadd.xlane.f32.xlu0 %v6405
      %v6407 = vpop.xlane.xlu0 %6406
      %v6408 = vmul.f32 %v6314, %v633
      %v6409 = vmul.f32 %v6317, %v633
      %v6410 = vmul.f32 %v6320, %v633
      %v6411 = vmul.f32 %v6323, %v633
      %v6412 = vmul.f32 %v6326, %v633
      %v6413 = vmul.f32 %v6329, %v633
      %v6414 = vmul.f32 %v6332, %v633
      %v6415 = vmul.f32 %v6335, %v633
      %v6416 = vmul.f32 %v6338, %v633
      %v6417 = vmul.f32 %v6341, %v633
      %v6418 = vmul.f32 %v6344, %v633
      %v6419 = vmul.f32 %v6347, %v633
      %v6420 = vmul.f32 %v6350, %v633
      %v6421 = vmul.f32 %v6353, %v633
      %v6422 = vmul.f32 %v6356, %v633
      %v6423 = vmul.f32 %v6359, %v633
      %v6424 = vmul.f32 %v6362, %v633
      %v6425 = vmul.f32 %v6365, %v633
      %v6426 = vmul.f32 %v6368, %v633
      %v6427 = vmul.f32 %v6371, %v633
      %v6428 = vmul.f32 %v6374, %v633
      %v6429 = vmul.f32 %v6377, %v633
      %v6430 = vmul.f32 %v6380, %v633
      %v6431 = vmul.f32 %v6383, %v633
      %v6432 = vmul.f32 %v6386, %v633
      %v6433 = vmul.f32 %v6389, %v633
      %v6434 = vmul.f32 %v6392, %v633
      %v6435 = vmul.f32 %v6395, %v633
      %v6436 = vmul.f32 %v6398, %v633
      %v6437 = vmul.f32 %v6401, %v633
      %v6438 = vmul.f32 %v6404, %v633
      %v6439 = vmul.f32 %v6407, %v633
      %v6440 = vsub.f32 %v6278, %v6408
      %v6441 = vsub.f32 %v6279, %v6409
      %v6442 = vsub.f32 %v6280, %v6410
      %v6443 = vsub.f32 %v6281, %v6411
      %v6444 = vsub.f32 %v6282, %v6412
      %v6445 = vsub.f32 %v6283, %v6413
      %v6446 = vsub.f32 %v6284, %v6414
      %v6447 = vsub.f32 %v6285, %v6415
      %v6448 = vsub.f32 %v6286, %v6416
      %v6449 = vsub.f32 %v6287, %v6417
      %v6450 = vsub.f32 %v6288, %v6418
      %v6451 = vsub.f32 %v6289, %v6419
      %v6452 = vsub.f32 %v6290, %v6420
      %v6453 = vsub.f32 %v6291, %v6421
      %v6454 = vsub.f32 %v6292, %v6422
      %v6455 = vsub.f32 %v6293, %v6423
      %v6456 = vsub.f32 %v6294, %v6424
      %v6457 = vsub.f32 %v6295, %v6425
      %v6458 = vsub.f32 %v6296, %v6426
      %v6459 = vsub.f32 %v6297, %v6427
      %v6460 = vsub.f32 %v6298, %v6428
      %v6461 = vsub.f32 %v6299, %v6429
      %v6462 = vsub.f32 %v6300, %v6430
      %v6463 = vsub.f32 %v6301, %v6431
      %v6464 = vsub.f32 %v6302, %v6432
      %v6465 = vsub.f32 %v6303, %v6433
      %v6466 = vsub.f32 %v6304, %v6434
      %v6467 = vsub.f32 %v6305, %v6435
      %v6468 = vsub.f32 %v6306, %v6436
      %v6469 = vsub.f32 %v6307, %v6437
      %v6470 = vsub.f32 %v6308, %v6438
      %v6471 = vsub.f32 %v6309, %v6439
      %v6472 = vmul.f32 %v6440, %v6440
      %v6473 = vmul.f32 %v6441, %v6441
      %v6474 = vmul.f32 %v6442, %v6442
      %v6475 = vmul.f32 %v6443, %v6443
      %v6476 = vmul.f32 %v6444, %v6444
      %v6477 = vmul.f32 %v6445, %v6445
      %v6478 = vmul.f32 %v6446, %v6446
      %v6479 = vmul.f32 %v6447, %v6447
      %v6480 = vmul.f32 %v6448, %v6448
      %v6481 = vmul.f32 %v6449, %v6449
      %v6482 = vmul.f32 %v6450, %v6450
      %v6483 = vmul.f32 %v6451, %v6451
      %v6484 = vmul.f32 %v6452, %v6452
      %v6485 = vmul.f32 %v6453, %v6453
      %v6486 = vmul.f32 %v6454, %v6454
      %v6487 = vmul.f32 %v6455, %v6455
      %v6488 = vmul.f32 %v6456, %v6456
      %v6489 = vmul.f32 %v6457, %v6457
      %v6490 = vmul.f32 %v6458, %v6458
      %v6491 = vmul.f32 %v6459, %v6459
      %v6492 = vmul.f32 %v6460, %v6460
      %v6493 = vmul.f32 %v6461, %v6461
      %v6494 = vmul.f32 %v6462, %v6462
      %v6495 = vmul.f32 %v6463, %v6463
      %v6496 = vmul.f32 %v6464, %v6464
      %v6497 = vmul.f32 %v6465, %v6465
      %v6498 = vmul.f32 %v6466, %v6466
      %v6499 = vmul.f32 %v6467, %v6467
      %v6500 = vmul.f32 %v6468, %v6468
      %v6501 = vmul.f32 %v6469, %v6469
      %v6502 = vmul.f32 %v6470, %v6470
      %v6503 = vmul.f32 %v6471, %v6471
      %v6504 = vsel %vm530, %v6472, 0.0
      %6505 = vadd.xlane.f32.xlu0 %v6504
      %v6506 = vpop.xlane.xlu0 %6505
      %v6507 = vsel %vm530, %v6473, 0.0
      %6508 = vadd.xlane.f32.xlu0 %v6507
      %v6509 = vpop.xlane.xlu0 %6508
      %v6510 = vsel %vm530, %v6474, 0.0
      %6511 = vadd.xlane.f32.xlu0 %v6510
      %v6512 = vpop.xlane.xlu0 %6511
      %v6513 = vsel %vm530, %v6475, 0.0
      %6514 = vadd.xlane.f32.xlu0 %v6513
      %v6515 = vpop.xlane.xlu0 %6514
      %v6516 = vsel %vm530, %v6476, 0.0
      %6517 = vadd.xlane.f32.xlu0 %v6516
      %v6518 = vpop.xlane.xlu0 %6517
      %v6519 = vsel %vm530, %v6477, 0.0
      %6520 = vadd.xlane.f32.xlu0 %v6519
      %v6521 = vpop.xlane.xlu0 %6520
      %v6522 = vsel %vm530, %v6478, 0.0
      %6523 = vadd.xlane.f32.xlu0 %v6522
      %v6524 = vpop.xlane.xlu0 %6523
      %v6525 = vsel %vm530, %v6479, 0.0
      %6526 = vadd.xlane.f32.xlu0 %v6525
      %v6527 = vpop.xlane.xlu0 %6526
      %v6528 = vsel %vm530, %v6480, 0.0
      %6529 = vadd.xlane.f32.xlu0 %v6528
      %v6530 = vpop.xlane.xlu0 %6529
      %v6531 = vsel %vm530, %v6481, 0.0
      %6532 = vadd.xlane.f32.xlu0 %v6531
      %v6533 = vpop.xlane.xlu0 %6532
      %v6534 = vsel %vm530, %v6482, 0.0
      %6535 = vadd.xlane.f32.xlu0 %v6534
      %v6536 = vpop.xlane.xlu0 %6535
      %v6537 = vsel %vm530, %v6483, 0.0
      %6538 = vadd.xlane.f32.xlu0 %v6537
      %v6539 = vpop.xlane.xlu0 %6538
      %v6540 = vsel %vm530, %v6484, 0.0
      %6541 = vadd.xlane.f32.xlu0 %v6540
      %v6542 = vpop.xlane.xlu0 %6541
      %v6543 = vsel %vm530, %v6485, 0.0
      %6544 = vadd.xlane.f32.xlu0 %v6543
      %v6545 = vpop.xlane.xlu0 %6544
      %v6546 = vsel %vm530, %v6486, 0.0
      %6547 = vadd.xlane.f32.xlu0 %v6546
      %v6548 = vpop.xlane.xlu0 %6547
      %v6549 = vsel %vm530, %v6487, 0.0
      %6550 = vadd.xlane.f32.xlu0 %v6549
      %v6551 = vpop.xlane.xlu0 %6550
      %v6552 = vsel %vm530, %v6488, 0.0
      %6553 = vadd.xlane.f32.xlu0 %v6552
      %v6554 = vpop.xlane.xlu0 %6553
      %v6555 = vsel %vm530, %v6489, 0.0
      %6556 = vadd.xlane.f32.xlu0 %v6555
      %v6557 = vpop.xlane.xlu0 %6556
      %v6558 = vsel %vm530, %v6490, 0.0
      %6559 = vadd.xlane.f32.xlu0 %v6558
      %v6560 = vpop.xlane.xlu0 %6559
      %v6561 = vsel %vm530, %v6491, 0.0
      %6562 = vadd.xlane.f32.xlu0 %v6561
      %v6563 = vpop.xlane.xlu0 %6562
      %v6564 = vsel %vm530, %v6492, 0.0
      %6565 = vadd.xlane.f32.xlu0 %v6564
      %v6566 = vpop.xlane.xlu0 %6565
      %v6567 = vsel %vm530, %v6493, 0.0
      %6568 = vadd.xlane.f32.xlu0 %v6567
      %v6569 = vpop.xlane.xlu0 %6568
      %v6570 = vsel %vm530, %v6494, 0.0
      %6571 = vadd.xlane.f32.xlu0 %v6570
      %v6572 = vpop.xlane.xlu0 %6571
      %v6573 = vsel %vm530, %v6495, 0.0
      %6574 = vadd.xlane.f32.xlu0 %v6573
      %v6575 = vpop.xlane.xlu0 %6574
      %v6576 = vsel %vm530, %v6496, 0.0
      %6577 = vadd.xlane.f32.xlu0 %v6576
      %v6578 = vpop.xlane.xlu0 %6577
      %v6579 = vsel %vm530, %v6497, 0.0
      %6580 = vadd.xlane.f32.xlu0 %v6579
      %v6581 = vpop.xlane.xlu0 %6580
      %v6582 = vsel %vm530, %v6498, 0.0
      %6583 = vadd.xlane.f32.xlu0 %v6582
      %v6584 = vpop.xlane.xlu0 %6583
      %v6585 = vsel %vm530, %v6499, 0.0
      %6586 = vadd.xlane.f32.xlu0 %v6585
      %v6587 = vpop.xlane.xlu0 %6586
      %v6588 = vsel %vm530, %v6500, 0.0
      %6589 = vadd.xlane.f32.xlu0 %v6588
      %v6590 = vpop.xlane.xlu0 %6589
      %v6591 = vsel %vm530, %v6501, 0.0
      %6592 = vadd.xlane.f32.xlu0 %v6591
      %v6593 = vpop.xlane.xlu0 %6592
      %v6594 = vsel %vm530, %v6502, 0.0
      %6595 = vadd.xlane.f32.xlu0 %v6594
      %v6596 = vpop.xlane.xlu0 %6595
      %v6597 = vsel %vm530, %v6503, 0.0
      %6598 = vadd.xlane.f32.xlu0 %v6597
      %v6599 = vpop.xlane.xlu0 %6598
      %v6600 = vmul.f32 %v6506, %v633
      %v6601 = vmul.f32 %v6509, %v633
      %v6602 = vmul.f32 %v6512, %v633
      %v6603 = vmul.f32 %v6515, %v633
      %v6604 = vmul.f32 %v6518, %v633
      %v6605 = vmul.f32 %v6521, %v633
      %v6606 = vmul.f32 %v6524, %v633
      %v6607 = vmul.f32 %v6527, %v633
      %v6608 = vmul.f32 %v6530, %v633
      %v6609 = vmul.f32 %v6533, %v633
      %v6610 = vmul.f32 %v6536, %v633
      %v6611 = vmul.f32 %v6539, %v633
      %v6612 = vmul.f32 %v6542, %v633
      %v6613 = vmul.f32 %v6545, %v633
      %v6614 = vmul.f32 %v6548, %v633
      %v6615 = vmul.f32 %v6551, %v633
      %v6616 = vmul.f32 %v6554, %v633
      %v6617 = vmul.f32 %v6557, %v633
      %v6618 = vmul.f32 %v6560, %v633
      %v6619 = vmul.f32 %v6563, %v633
      %v6620 = vmul.f32 %v6566, %v633
      %v6621 = vmul.f32 %v6569, %v633
      %v6622 = vmul.f32 %v6572, %v633
      %v6623 = vmul.f32 %v6575, %v633
      %v6624 = vmul.f32 %v6578, %v633
      %v6625 = vmul.f32 %v6581, %v633
      %v6626 = vmul.f32 %v6584, %v633
      %v6627 = vmul.f32 %v6587, %v633
      %v6628 = vmul.f32 %v6590, %v633
      %v6629 = vmul.f32 %v6593, %v633
      %v6630 = vmul.f32 %v6596, %v633
      %v6631 = vmul.f32 %v6599, %v633
      %v6632 = vadd.f32 %v6600, 1e-05
      %v6633 = vadd.f32 %v6601, 1e-05
      %v6634 = vadd.f32 %v6602, 1e-05
      %v6635 = vadd.f32 %v6603, 1e-05
      %v6636 = vadd.f32 %v6604, 1e-05
      %v6637 = vadd.f32 %v6605, 1e-05
      %v6638 = vadd.f32 %v6606, 1e-05
      %v6639 = vadd.f32 %v6607, 1e-05
      %v6640 = vadd.f32 %v6608, 1e-05
      %v6641 = vadd.f32 %v6609, 1e-05
      %v6642 = vadd.f32 %v6610, 1e-05
      %v6643 = vadd.f32 %v6611, 1e-05
      %v6644 = vadd.f32 %v6612, 1e-05
      %v6645 = vadd.f32 %v6613, 1e-05
      %v6646 = vadd.f32 %v6614, 1e-05
      %v6647 = vadd.f32 %v6615, 1e-05
      %v6648 = vadd.f32 %v6616, 1e-05
      %v6649 = vadd.f32 %v6617, 1e-05
      %v6650 = vadd.f32 %v6618, 1e-05
      %v6651 = vadd.f32 %v6619, 1e-05
      %v6652 = vadd.f32 %v6620, 1e-05
      %v6653 = vadd.f32 %v6621, 1e-05
      %v6654 = vadd.f32 %v6622, 1e-05
      %v6655 = vadd.f32 %v6623, 1e-05
      %v6656 = vadd.f32 %v6624, 1e-05
      %v6657 = vadd.f32 %v6625, 1e-05
      %v6658 = vadd.f32 %v6626, 1e-05
      %v6659 = vadd.f32 %v6627, 1e-05
      %v6660 = vadd.f32 %v6628, 1e-05
      %v6661 = vadd.f32 %v6629, 1e-05
      %v6662 = vadd.f32 %v6630, 1e-05
      %v6663 = vadd.f32 %v6631, 1e-05
      %v6664 = vrsqrt.pop %v6632
      %v6665 = vmul.f32 %v6664, %v6632
      %v6666 = vmul.f32 %v6665, %v6664
      %v6667 = vmul.f32 0.5, %v6666
      %v6668 = vsub.f32 1.5, %v6667
      %v6669 = vmul.f32 %v6664, %v6668
      %vm6670 = vweird.f32 %v6632
      %vm6671 = vweird.f32 %v6664
      %vm6672 = vmor %vm6670, %vm6671
      %v6673 = vsel %vm6672, %v6664, %v6669
      %v6674 = vrsqrt.pop %v6633
      %v6675 = vmul.f32 %v6674, %v6633
      %v6676 = vmul.f32 %v6675, %v6674
      %v6677 = vmul.f32 0.5, %v6676
      %v6678 = vsub.f32 1.5, %v6677
      %v6679 = vmul.f32 %v6674, %v6678
      %vm6680 = vweird.f32 %v6633
      %vm6681 = vweird.f32 %v6674
      %vm6682 = vmor %vm6680, %vm6681
      %v6683 = vsel %vm6682, %v6674, %v6679
      %v6684 = vrsqrt.pop %v6634
      %v6685 = vmul.f32 %v6684, %v6634
      %v6686 = vmul.f32 %v6685, %v6684
      %v6687 = vmul.f32 0.5, %v6686
      %v6688 = vsub.f32 1.5, %v6687
      %v6689 = vmul.f32 %v6684, %v6688
      %vm6690 = vweird.f32 %v6634
      %vm6691 = vweird.f32 %v6684
      %vm6692 = vmor %vm6690, %vm6691
      %v6693 = vsel %vm6692, %v6684, %v6689
      %v6694 = vrsqrt.pop %v6635
      %v6695 = vmul.f32 %v6694, %v6635
      %v6696 = vmul.f32 %v6695, %v6694
      %v6697 = vmul.f32 0.5, %v6696
      %v6698 = vsub.f32 1.5, %v6697
      %v6699 = vmul.f32 %v6694, %v6698
      %vm6700 = vweird.f32 %v6635
      %vm6701 = vweird.f32 %v6694
      %vm6702 = vmor %vm6700, %vm6701
      %v6703 = vsel %vm6702, %v6694, %v6699
      %v6704 = vrsqrt.pop %v6636
      %v6705 = vmul.f32 %v6704, %v6636
      %v6706 = vmul.f32 %v6705, %v6704
      %v6707 = vmul.f32 0.5, %v6706
      %v6708 = vsub.f32 1.5, %v6707
      %v6709 = vmul.f32 %v6704, %v6708
      %vm6710 = vweird.f32 %v6636
      %vm6711 = vweird.f32 %v6704
      %vm6712 = vmor %vm6710, %vm6711
      %v6713 = vsel %vm6712, %v6704, %v6709
      %v6714 = vrsqrt.pop %v6637
      %v6715 = vmul.f32 %v6714, %v6637
      %v6716 = vmul.f32 %v6715, %v6714
      %v6717 = vmul.f32 0.5, %v6716
      %v6718 = vsub.f32 1.5, %v6717
      %v6719 = vmul.f32 %v6714, %v6718
      %vm6720 = vweird.f32 %v6637
      %vm6721 = vweird.f32 %v6714
      %vm6722 = vmor %vm6720, %vm6721
      %v6723 = vsel %vm6722, %v6714, %v6719
      %v6724 = vrsqrt.pop %v6638
      %v6725 = vmul.f32 %v6724, %v6638
      %v6726 = vmul.f32 %v6725, %v6724
      %v6727 = vmul.f32 0.5, %v6726
      %v6728 = vsub.f32 1.5, %v6727
      %v6729 = vmul.f32 %v6724, %v6728
      %vm6730 = vweird.f32 %v6638
      %vm6731 = vweird.f32 %v6724
      %vm6732 = vmor %vm6730, %vm6731
      %v6733 = vsel %vm6732, %v6724, %v6729
      %v6734 = vrsqrt.pop %v6639
      %v6735 = vmul.f32 %v6734, %v6639
      %v6736 = vmul.f32 %v6735, %v6734
      %v6737 = vmul.f32 0.5, %v6736
      %v6738 = vsub.f32 1.5, %v6737
      %v6739 = vmul.f32 %v6734, %v6738
      %vm6740 = vweird.f32 %v6639
      %vm6741 = vweird.f32 %v6734
      %vm6742 = vmor %vm6740, %vm6741
      %v6743 = vsel %vm6742, %v6734, %v6739
      %v6744 = vrsqrt.pop %v6640
      %v6745 = vmul.f32 %v6744, %v6640
      %v6746 = vmul.f32 %v6745, %v6744
      %v6747 = vmul.f32 0.5, %v6746
      %v6748 = vsub.f32 1.5, %v6747
      %v6749 = vmul.f32 %v6744, %v6748
      %vm6750 = vweird.f32 %v6640
      %vm6751 = vweird.f32 %v6744
      %vm6752 = vmor %vm6750, %vm6751
      %v6753 = vsel %vm6752, %v6744, %v6749
      %v6754 = vrsqrt.pop %v6641
      %v6755 = vmul.f32 %v6754, %v6641
      %v6756 = vmul.f32 %v6755, %v6754
      %v6757 = vmul.f32 0.5, %v6756
      %v6758 = vsub.f32 1.5, %v6757
      %v6759 = vmul.f32 %v6754, %v6758
      %vm6760 = vweird.f32 %v6641
      %vm6761 = vweird.f32 %v6754
      %vm6762 = vmor %vm6760, %vm6761
      %v6763 = vsel %vm6762, %v6754, %v6759
      %v6764 = vrsqrt.pop %v6642
      %v6765 = vmul.f32 %v6764, %v6642
      %v6766 = vmul.f32 %v6765, %v6764
      %v6767 = vmul.f32 0.5, %v6766
      %v6768 = vsub.f32 1.5, %v6767
      %v6769 = vmul.f32 %v6764, %v6768
      %vm6770 = vweird.f32 %v6642
      %vm6771 = vweird.f32 %v6764
      %vm6772 = vmor %vm6770, %vm6771
      %v6773 = vsel %vm6772, %v6764, %v6769
      %v6774 = vrsqrt.pop %v6643
      %v6775 = vmul.f32 %v6774, %v6643
      %v6776 = vmul.f32 %v6775, %v6774
      %v6777 = vmul.f32 0.5, %v6776
      %v6778 = vsub.f32 1.5, %v6777
      %v6779 = vmul.f32 %v6774, %v6778
      %vm6780 = vweird.f32 %v6643
      %vm6781 = vweird.f32 %v6774
      %vm6782 = vmor %vm6780, %vm6781
      %v6783 = vsel %vm6782, %v6774, %v6779
      %v6784 = vrsqrt.pop %v6644
      %v6785 = vmul.f32 %v6784, %v6644
      %v6786 = vmul.f32 %v6785, %v6784
      %v6787 = vmul.f32 0.5, %v6786
      %v6788 = vsub.f32 1.5, %v6787
      %v6789 = vmul.f32 %v6784, %v6788
      %vm6790 = vweird.f32 %v6644
      %vm6791 = vweird.f32 %v6784
      %vm6792 = vmor %vm6790, %vm6791
      %v6793 = vsel %vm6792, %v6784, %v6789
      %v6794 = vrsqrt.pop %v6645
      %v6795 = vmul.f32 %v6794, %v6645
      %v6796 = vmul.f32 %v6795, %v6794
      %v6797 = vmul.f32 0.5, %v6796
      %v6798 = vsub.f32 1.5, %v6797
      %v6799 = vmul.f32 %v6794, %v6798
      %vm6800 = vweird.f32 %v6645
      %vm6801 = vweird.f32 %v6794
      %vm6802 = vmor %vm6800, %vm6801
      %v6803 = vsel %vm6802, %v6794, %v6799
      %v6804 = vrsqrt.pop %v6646
      %v6805 = vmul.f32 %v6804, %v6646
      %v6806 = vmul.f32 %v6805, %v6804
      %v6807 = vmul.f32 0.5, %v6806
      %v6808 = vsub.f32 1.5, %v6807
      %v6809 = vmul.f32 %v6804, %v6808
      %vm6810 = vweird.f32 %v6646
      %vm6811 = vweird.f32 %v6804
      %vm6812 = vmor %vm6810, %vm6811
      %v6813 = vsel %vm6812, %v6804, %v6809
      %v6814 = vrsqrt.pop %v6647
      %v6815 = vmul.f32 %v6814, %v6647
      %v6816 = vmul.f32 %v6815, %v6814
      %v6817 = vmul.f32 0.5, %v6816
      %v6818 = vsub.f32 1.5, %v6817
      %v6819 = vmul.f32 %v6814, %v6818
      %vm6820 = vweird.f32 %v6647
      %vm6821 = vweird.f32 %v6814
      %vm6822 = vmor %vm6820, %vm6821
      %v6823 = vsel %vm6822, %v6814, %v6819
      %v6824 = vrsqrt.pop %v6648
      %v6825 = vmul.f32 %v6824, %v6648
      %v6826 = vmul.f32 %v6825, %v6824
      %v6827 = vmul.f32 0.5, %v6826
      %v6828 = vsub.f32 1.5, %v6827
      %v6829 = vmul.f32 %v6824, %v6828
      %vm6830 = vweird.f32 %v6648
      %vm6831 = vweird.f32 %v6824
      %vm6832 = vmor %vm6830, %vm6831
      %v6833 = vsel %vm6832, %v6824, %v6829
      %v6834 = vrsqrt.pop %v6649
      %v6835 = vmul.f32 %v6834, %v6649
      %v6836 = vmul.f32 %v6835, %v6834
      %v6837 = vmul.f32 0.5, %v6836
      %v6838 = vsub.f32 1.5, %v6837
      %v6839 = vmul.f32 %v6834, %v6838
      %vm6840 = vweird.f32 %v6649
      %vm6841 = vweird.f32 %v6834
      %vm6842 = vmor %vm6840, %vm6841
      %v6843 = vsel %vm6842, %v6834, %v6839
      %v6844 = vrsqrt.pop %v6650
      %v6845 = vmul.f32 %v6844, %v6650
      %v6846 = vmul.f32 %v6845, %v6844
      %v6847 = vmul.f32 0.5, %v6846
      %v6848 = vsub.f32 1.5, %v6847
      %v6849 = vmul.f32 %v6844, %v6848
      %vm6850 = vweird.f32 %v6650
      %vm6851 = vweird.f32 %v6844
      %vm6852 = vmor %vm6850, %vm6851
      %v6853 = vsel %vm6852, %v6844, %v6849
      %v6854 = vrsqrt.pop %v6651
      %v6855 = vmul.f32 %v6854, %v6651
      %v6856 = vmul.f32 %v6855, %v6854
      %v6857 = vmul.f32 0.5, %v6856
      %v6858 = vsub.f32 1.5, %v6857
      %v6859 = vmul.f32 %v6854, %v6858
      %vm6860 = vweird.f32 %v6651
      %vm6861 = vweird.f32 %v6854
      %vm6862 = vmor %vm6860, %vm6861
      %v6863 = vsel %vm6862, %v6854, %v6859
      %v6864 = vrsqrt.pop %v6652
      %v6865 = vmul.f32 %v6864, %v6652
      %v6866 = vmul.f32 %v6865, %v6864
      %v6867 = vmul.f32 0.5, %v6866
      %v6868 = vsub.f32 1.5, %v6867
      %v6869 = vmul.f32 %v6864, %v6868
      %vm6870 = vweird.f32 %v6652
      %vm6871 = vweird.f32 %v6864
      %vm6872 = vmor %vm6870, %vm6871
      %v6873 = vsel %vm6872, %v6864, %v6869
      %v6874 = vrsqrt.pop %v6653
      %v6875 = vmul.f32 %v6874, %v6653
      %v6876 = vmul.f32 %v6875, %v6874
      %v6877 = vmul.f32 0.5, %v6876
      %v6878 = vsub.f32 1.5, %v6877
      %v6879 = vmul.f32 %v6874, %v6878
      %vm6880 = vweird.f32 %v6653
      %vm6881 = vweird.f32 %v6874
      %vm6882 = vmor %vm6880, %vm6881
      %v6883 = vsel %vm6882, %v6874, %v6879
      %v6884 = vrsqrt.pop %v6654
      %v6885 = vmul.f32 %v6884, %v6654
      %v6886 = vmul.f32 %v6885, %v6884
      %v6887 = vmul.f32 0.5, %v6886
      %v6888 = vsub.f32 1.5, %v6887
      %v6889 = vmul.f32 %v6884, %v6888
      %vm6890 = vweird.f32 %v6654
      %vm6891 = vweird.f32 %v6884
      %vm6892 = vmor %vm6890, %vm6891
      %v6893 = vsel %vm6892, %v6884, %v6889
      %v6894 = vrsqrt.pop %v6655
      %v6895 = vmul.f32 %v6894, %v6655
      %v6896 = vmul.f32 %v6895, %v6894
      %v6897 = vmul.f32 0.5, %v6896
      %v6898 = vsub.f32 1.5, %v6897
      %v6899 = vmul.f32 %v6894, %v6898
      %vm6900 = vweird.f32 %v6655
      %vm6901 = vweird.f32 %v6894
      %vm6902 = vmor %vm6900, %vm6901
      %v6903 = vsel %vm6902, %v6894, %v6899
      %v6904 = vrsqrt.pop %v6656
      %v6905 = vmul.f32 %v6904, %v6656
      %v6906 = vmul.f32 %v6905, %v6904
      %v6907 = vmul.f32 0.5, %v6906
      %v6908 = vsub.f32 1.5, %v6907
      %v6909 = vmul.f32 %v6904, %v6908
      %vm6910 = vweird.f32 %v6656
      %vm6911 = vweird.f32 %v6904
      %vm6912 = vmor %vm6910, %vm6911
      %v6913 = vsel %vm6912, %v6904, %v6909
      %v6914 = vrsqrt.pop %v6657
      %v6915 = vmul.f32 %v6914, %v6657
      %v6916 = vmul.f32 %v6915, %v6914
      %v6917 = vmul.f32 0.5, %v6916
      %v6918 = vsub.f32 1.5, %v6917
      %v6919 = vmul.f32 %v6914, %v6918
      %vm6920 = vweird.f32 %v6657
      %vm6921 = vweird.f32 %v6914
      %vm6922 = vmor %vm6920, %vm6921
      %v6923 = vsel %vm6922, %v6914, %v6919
      %v6924 = vrsqrt.pop %v6658
      %v6925 = vmul.f32 %v6924, %v6658
      %v6926 = vmul.f32 %v6925, %v6924
      %v6927 = vmul.f32 0.5, %v6926
      %v6928 = vsub.f32 1.5, %v6927
      %v6929 = vmul.f32 %v6924, %v6928
      %vm6930 = vweird.f32 %v6658
      %vm6931 = vweird.f32 %v6924
      %vm6932 = vmor %vm6930, %vm6931
      %v6933 = vsel %vm6932, %v6924, %v6929
      %v6934 = vrsqrt.pop %v6659
      %v6935 = vmul.f32 %v6934, %v6659
      %v6936 = vmul.f32 %v6935, %v6934
      %v6937 = vmul.f32 0.5, %v6936
      %v6938 = vsub.f32 1.5, %v6937
      %v6939 = vmul.f32 %v6934, %v6938
      %vm6940 = vweird.f32 %v6659
      %vm6941 = vweird.f32 %v6934
      %vm6942 = vmor %vm6940, %vm6941
      %v6943 = vsel %vm6942, %v6934, %v6939
      %v6944 = vrsqrt.pop %v6660
      %v6945 = vmul.f32 %v6944, %v6660
      %v6946 = vmul.f32 %v6945, %v6944
      %v6947 = vmul.f32 0.5, %v6946
      %v6948 = vsub.f32 1.5, %v6947
      %v6949 = vmul.f32 %v6944, %v6948
      %vm6950 = vweird.f32 %v6660
      %vm6951 = vweird.f32 %v6944
      %vm6952 = vmor %vm6950, %vm6951
      %v6953 = vsel %vm6952, %v6944, %v6949
      %v6954 = vrsqrt.pop %v6661
      %v6955 = vmul.f32 %v6954, %v6661
      %v6956 = vmul.f32 %v6955, %v6954
      %v6957 = vmul.f32 0.5, %v6956
      %v6958 = vsub.f32 1.5, %v6957
      %v6959 = vmul.f32 %v6954, %v6958
      %vm6960 = vweird.f32 %v6661
      %vm6961 = vweird.f32 %v6954
      %vm6962 = vmor %vm6960, %vm6961
      %v6963 = vsel %vm6962, %v6954, %v6959
      %v6964 = vrsqrt.pop %v6662
      %v6965 = vmul.f32 %v6964, %v6662
      %v6966 = vmul.f32 %v6965, %v6964
      %v6967 = vmul.f32 0.5, %v6966
      %v6968 = vsub.f32 1.5, %v6967
      %v6969 = vmul.f32 %v6964, %v6968
      %vm6970 = vweird.f32 %v6662
      %vm6971 = vweird.f32 %v6964
      %vm6972 = vmor %vm6970, %vm6971
      %v6973 = vsel %vm6972, %v6964, %v6969
      %v6974 = vrsqrt.pop %v6663
      %v6975 = vmul.f32 %v6974, %v6663
      %v6976 = vmul.f32 %v6975, %v6974
      %v6977 = vmul.f32 0.5, %v6976
      %v6978 = vsub.f32 1.5, %v6977
      %v6979 = vmul.f32 %v6974, %v6978
      %vm6980 = vweird.f32 %v6663
      %vm6981 = vweird.f32 %v6974
      %vm6982 = vmor %vm6980, %vm6981
      %v6983 = vsel %vm6982, %v6974, %v6979
      %v6984 = vmul.f32 %v6440, %v6673
      %v6985 = vmul.f32 %v6441, %v6683
      %v6986 = vmul.f32 %v6442, %v6693
      %v6987 = vmul.f32 %v6443, %v6703
      %v6988 = vmul.f32 %v6444, %v6713
      %v6989 = vmul.f32 %v6445, %v6723
      %v6990 = vmul.f32 %v6446, %v6733
      %v6991 = vmul.f32 %v6447, %v6743
      %v6992 = vmul.f32 %v6448, %v6753
      %v6993 = vmul.f32 %v6449, %v6763
      %v6994 = vmul.f32 %v6450, %v6773
      %v6995 = vmul.f32 %v6451, %v6783
      %v6996 = vmul.f32 %v6452, %v6793
      %v6997 = vmul.f32 %v6453, %v6803
      %v6998 = vmul.f32 %v6454, %v6813
      %v6999 = vmul.f32 %v6455, %v6823
      %v7000 = vmul.f32 %v6456, %v6833
      %v7001 = vmul.f32 %v6457, %v6843
      %v7002 = vmul.f32 %v6458, %v6853
      %v7003 = vmul.f32 %v6459, %v6863
      %v7004 = vmul.f32 %v6460, %v6873
      %v7005 = vmul.f32 %v6461, %v6883
      %v7006 = vmul.f32 %v6462, %v6893
      %v7007 = vmul.f32 %v6463, %v6903
      %v7008 = vmul.f32 %v6464, %v6913
      %v7009 = vmul.f32 %v6465, %v6923
      %v7010 = vmul.f32 %v6466, %v6933
      %v7011 = vmul.f32 %v6467, %v6943
      %v7012 = vmul.f32 %v6468, %v6953
      %v7013 = vmul.f32 %v6469, %v6963
      %v7014 = vmul.f32 %v6470, %v6973
      %v7015 = vmul.f32 %v6471, %v6983
      %v7017 = vperm.slane %v6310, 0
      %v7019 = vmul.f32 %v6984, %v7017
      %v7020 = vmul.f32 %v6985, %v7017
      %v7021 = vmul.f32 %v6986, %v7017
      %v7022 = vmul.f32 %v6987, %v7017
      %v7023 = vmul.f32 %v6988, %v7017
      %v7024 = vmul.f32 %v6989, %v7017
      %v7025 = vmul.f32 %v6990, %v7017
      %v7026 = vmul.f32 %v6991, %v7017
      %v7027 = vmul.f32 %v6992, %v7017
      %v7028 = vmul.f32 %v6993, %v7017
      %v7029 = vmul.f32 %v6994, %v7017
      %v7030 = vmul.f32 %v6995, %v7017
      %v7031 = vmul.f32 %v6996, %v7017
      %v7032 = vmul.f32 %v6997, %v7017
      %v7033 = vmul.f32 %v6998, %v7017
      %v7034 = vmul.f32 %v6999, %v7017
      %v7035 = vmul.f32 %v7000, %v7017
      %v7036 = vmul.f32 %v7001, %v7017
      %v7037 = vmul.f32 %v7002, %v7017
      %v7038 = vmul.f32 %v7003, %v7017
      %v7039 = vmul.f32 %v7004, %v7017
      %v7040 = vmul.f32 %v7005, %v7017
      %v7041 = vmul.f32 %v7006, %v7017
      %v7042 = vmul.f32 %v7007, %v7017
      %v7043 = vmul.f32 %v7008, %v7017
      %v7044 = vmul.f32 %v7009, %v7017
      %v7045 = vmul.f32 %v7010, %v7017
      %v7046 = vmul.f32 %v7011, %v7017
      %v7047 = vmul.f32 %v7012, %v7017
      %v7048 = vmul.f32 %v7013, %v7017
      %v7049 = vmul.f32 %v7014, %v7017
      %v7050 = vmul.f32 %v7015, %v7017
      %v7052 = vperm.slane %v6311, 0
      %v7054 = vadd.f32 %v7019, %v7052
      %v7055 = vadd.f32 %v7020, %v7052
      %v7056 = vadd.f32 %v7021, %v7052
      %v7057 = vadd.f32 %v7022, %v7052
      %v7058 = vadd.f32 %v7023, %v7052
      %v7059 = vadd.f32 %v7024, %v7052
      %v7060 = vadd.f32 %v7025, %v7052
      %v7061 = vadd.f32 %v7026, %v7052
      %v7062 = vadd.f32 %v7027, %v7052
      %v7063 = vadd.f32 %v7028, %v7052
      %v7064 = vadd.f32 %v7029, %v7052
      %v7065 = vadd.f32 %v7030, %v7052
      %v7066 = vadd.f32 %v7031, %v7052
      %v7067 = vadd.f32 %v7032, %v7052
      %v7068 = vadd.f32 %v7033, %v7052
      %v7069 = vadd.f32 %v7034, %v7052
      %v7070 = vadd.f32 %v7035, %v7052
      %v7071 = vadd.f32 %v7036, %v7052
      %v7072 = vadd.f32 %v7037, %v7052
      %v7073 = vadd.f32 %v7038, %v7052
      %v7074 = vadd.f32 %v7039, %v7052
      %v7075 = vadd.f32 %v7040, %v7052
      %v7076 = vadd.f32 %v7041, %v7052
      %v7077 = vadd.f32 %v7042, %v7052
      %v7078 = vadd.f32 %v7043, %v7052
      %v7079 = vadd.f32 %v7044, %v7052
      %v7080 = vadd.f32 %v7045, %v7052
      %v7081 = vadd.f32 %v7046, %v7052
      %v7082 = vadd.f32 %v7047, %v7052
      %v7083 = vadd.f32 %v7048, %v7052
      %v7084 = vadd.f32 %v7049, %v7052
      %v7085 = vadd.f32 %v7050, %v7052
      %v7086 = vpack.c.bf16 %v7055, %v7054
      %v7087 = vpack.c.bf16 %v7057, %v7056
      %v7088 = vpack.c.bf16 %v7059, %v7058
      %v7089 = vpack.c.bf16 %v7061, %v7060
      %v7090 = vpack.c.bf16 %v7063, %v7062
      %v7091 = vpack.c.bf16 %v7065, %v7064
      %v7092 = vpack.c.bf16 %v7067, %v7066
      %v7093 = vpack.c.bf16 %v7069, %v7068
      %v7094 = vpack.c.bf16 %v7071, %v7070
      %v7095 = vpack.c.bf16 %v7073, %v7072
      %v7096 = vpack.c.bf16 %v7075, %v7074
      %v7097 = vpack.c.bf16 %v7077, %v7076
      %v7098 = vpack.c.bf16 %v7079, %v7078
      %v7099 = vpack.c.bf16 %v7081, %v7080
      %v7100 = vpack.c.bf16 %v7083, %v7082
      %v7101 = vpack.c.bf16 %v7085, %v7084
      %v7102 = vld [vmem:[%s11] sm:$0xf]
      %v7103 = vld [vmem:[%s11 + $0x4] sm:$0xf]
      %v7104 = vld [vmem:[%s11 + $0x8] sm:$0xf]
      %v7105 = vld [vmem:[%s11 + $0xc] sm:$0xf]
      %v7106 = vld [vmem:[%s12] sm:$0x1]
      %v7108 = vperm.slane %v7106, 0
      %v7114 = vunpack.c.l.b16 %v7102
      %v7115 = vunpack.c.l.b16 %v7103
      %v7116 = vunpack.c.l.b16 %v7104
      %v7117 = vunpack.c.l.b16 %v7105
      %v7118 = vpack.c.b16 %v7115, %v7114
      %v7119 = vpack.c.b16 %v7117, %v7116
      %v7123 = vsel %vm530, %v7086, 0
      %v7126 = vsel %vm530, %v7087, 0
      %v7129 = vsel %vm530, %v7088, 0
      %v7132 = vsel %vm530, %v7089, 0
      %v7135 = vsel %vm530, %v7090, 0
      %v7138 = vsel %vm530, %v7091, 0
      %v7141 = vsel %vm530, %v7092, 0
      %v7144 = vsel %vm530, %v7093, 0
      %v7147 = vsel %vm530, %v7094, 0
      %v7150 = vsel %vm530, %v7095, 0
      %v7153 = vsel %vm530, %v7096, 0
      %v7156 = vsel %vm530, %v7097, 0
      %v7159 = vsel %vm530, %v7098, 0
      %v7162 = vsel %vm530, %v7099, 0
      %v7165 = vsel %vm530, %v7100, 0
      %v7168 = vsel %vm530, %v7101, 0
      %7170 = vmatpush.bf16.msra.mxu0 0
      %7171 = vmatpush.bf16.msra.mxu0 0
      %7172 = vmatpush.bf16.msra.mxu0 0
      %7173 = vmatpush.bf16.msra.mxu0 0
      %7174 = vmatpush.bf16.msra.mxu0 0
      %7175 = vmatpush.bf16.msra.mxu0 0
      %7176 = vmatpush.bf16.msra.mxu0 %v7119
      %7177 = vmatpush.bf16.msra.mxu0 %v7118
      %7178 = vmatmul.bf16.gmra.mxu0 %v7123
      %v7179 = vpop.f32.mrf.mxu0
      %v7180 = vadd.f32 %v7108, %v7179
      %v7181 = vpop.f32.mrf.mxu0
      %v7182 = vadd.f32 %v7108, %v7181
      %7183 = vmatmul.bf16.gmra.mxu0 %v7126
      %v7184 = vpop.f32.mrf.mxu0
      %v7185 = vadd.f32 %v7108, %v7184
      %v7186 = vpop.f32.mrf.mxu0
      %v7187 = vadd.f32 %v7108, %v7186
      %7188 = vmatmul.bf16.gmra.mxu0 %v7129
      %v7189 = vpop.f32.mrf.mxu0
      %v7190 = vadd.f32 %v7108, %v7189
      %v7191 = vpop.f32.mrf.mxu0
      %v7192 = vadd.f32 %v7108, %v7191
      %7193 = vmatmul.bf16.gmra.mxu0 %v7132
      %v7194 = vpop.f32.mrf.mxu0
      %v7195 = vadd.f32 %v7108, %v7194
      %v7196 = vpop.f32.mrf.mxu0
      %v7197 = vadd.f32 %v7108, %v7196
      %7198 = vmatmul.bf16.gmra.mxu0 %v7135
      %v7199 = vpop.f32.mrf.mxu0
      %v7200 = vadd.f32 %v7108, %v7199
      %v7201 = vpop.f32.mrf.mxu0
      %v7202 = vadd.f32 %v7108, %v7201
      %7203 = vmatmul.bf16.gmra.mxu0 %v7138
      %v7204 = vpop.f32.mrf.mxu0
      %v7205 = vadd.f32 %v7108, %v7204
      %v7206 = vpop.f32.mrf.mxu0
      %v7207 = vadd.f32 %v7108, %v7206
      %7208 = vmatmul.bf16.gmra.mxu0 %v7141
      %v7209 = vpop.f32.mrf.mxu0
      %v7210 = vadd.f32 %v7108, %v7209
      %v7211 = vpop.f32.mrf.mxu0
      %v7212 = vadd.f32 %v7108, %v7211
      %7213 = vmatmul.bf16.gmra.mxu0 %v7144
      %v7214 = vpop.f32.mrf.mxu0
      %v7215 = vadd.f32 %v7108, %v7214
      %v7216 = vpop.f32.mrf.mxu0
      %v7217 = vadd.f32 %v7108, %v7216
      %7218 = vmatmul.bf16.gmra.mxu0 %v7147
      %v7219 = vpop.f32.mrf.mxu0
      %v7220 = vadd.f32 %v7108, %v7219
      %v7221 = vpop.f32.mrf.mxu0
      %v7222 = vadd.f32 %v7108, %v7221
      %7223 = vmatmul.bf16.gmra.mxu0 %v7150
      %v7224 = vpop.f32.mrf.mxu0
      %v7225 = vadd.f32 %v7108, %v7224
      %v7226 = vpop.f32.mrf.mxu0
      %v7227 = vadd.f32 %v7108, %v7226
      %7228 = vmatmul.bf16.gmra.mxu0 %v7153
      %v7229 = vpop.f32.mrf.mxu0
      %v7230 = vadd.f32 %v7108, %v7229
      %v7231 = vpop.f32.mrf.mxu0
      %v7232 = vadd.f32 %v7108, %v7231
      %7233 = vmatmul.bf16.gmra.mxu0 %v7156
      %v7234 = vpop.f32.mrf.mxu0
      %v7235 = vadd.f32 %v7108, %v7234
      %v7236 = vpop.f32.mrf.mxu0
      %v7237 = vadd.f32 %v7108, %v7236
      %7238 = vmatmul.bf16.gmra.mxu0 %v7159
      %v7239 = vpop.f32.mrf.mxu0
      %v7240 = vadd.f32 %v7108, %v7239
      %v7241 = vpop.f32.mrf.mxu0
      %v7242 = vadd.f32 %v7108, %v7241
      %7243 = vmatmul.bf16.gmra.mxu0 %v7162
      %v7244 = vpop.f32.mrf.mxu0
      %v7245 = vadd.f32 %v7108, %v7244
      %v7246 = vpop.f32.mrf.mxu0
      %v7247 = vadd.f32 %v7108, %v7246
      %7248 = vmatmul.bf16.gmra.mxu0 %v7165
      %v7249 = vpop.f32.mrf.mxu0
      %v7250 = vadd.f32 %v7108, %v7249
      %v7251 = vpop.f32.mrf.mxu0
      %v7252 = vadd.f32 %v7108, %v7251
      %7253 = vmatmul.bf16.gmra.mxu0 %v7168
      %v7254 = vpop.f32.mrf.mxu0
      %v7255 = vadd.f32 %v7108, %v7254
      %v7256 = vpop.f32.mrf.mxu0
      %v7257 = vadd.f32 %v7108, %v7256
      %7258 = vdwg.mxu0
      %v7259 = vmul.f32 %v7180, 0.70710677
      %v7260 = vmul.f32 %v7182, 0.70710677
      %v7261 = vmul.f32 %v7185, 0.70710677
      %v7262 = vmul.f32 %v7187, 0.70710677
      %v7263 = vmul.f32 %v7190, 0.70710677
      %v7264 = vmul.f32 %v7192, 0.70710677
      %v7265 = vmul.f32 %v7195, 0.70710677
      %v7266 = vmul.f32 %v7197, 0.70710677
      %v7267 = vmul.f32 %v7200, 0.70710677
      %v7268 = vmul.f32 %v7202, 0.70710677
      %v7269 = vmul.f32 %v7205, 0.70710677
      %v7270 = vmul.f32 %v7207, 0.70710677
      %v7271 = vmul.f32 %v7210, 0.70710677
      %v7272 = vmul.f32 %v7212, 0.70710677
      %v7273 = vmul.f32 %v7215, 0.70710677
      %v7274 = vmul.f32 %v7217, 0.70710677
      %v7275 = vmul.f32 %v7220, 0.70710677
      %v7276 = vmul.f32 %v7222, 0.70710677
      %v7277 = vmul.f32 %v7225, 0.70710677
      %v7278 = vmul.f32 %v7227, 0.70710677
      %v7279 = vmul.f32 %v7230, 0.70710677
      %v7280 = vmul.f32 %v7232, 0.70710677
      %v7281 = vmul.f32 %v7235, 0.70710677
      %v7282 = vmul.f32 %v7237, 0.70710677
      %v7283 = vmul.f32 %v7240, 0.70710677
      %v7284 = vmul.f32 %v7242, 0.70710677
      %v7285 = vmul.f32 %v7245, 0.70710677
      %v7286 = vmul.f32 %v7247, 0.70710677
      %v7287 = vmul.f32 %v7250, 0.70710677
      %v7288 = vmul.f32 %v7252, 0.70710677
      %v7289 = vmul.f32 %v7255, 0.70710677
      %v7290 = vmul.f32 %v7257, 0.70710677
      %v7291 = vand.u32 2147483647, %v7259
      %v7292 = vand.u32 2147483647, %v7260
      %v7293 = vand.u32 2147483647, %v7261
      %v7294 = vand.u32 2147483647, %v7262
      %v7295 = vand.u32 2147483647, %v7263
      %v7296 = vand.u32 2147483647, %v7264
      %v7297 = vand.u32 2147483647, %v7265
      %v7298 = vand.u32 2147483647, %v7266
      %v7299 = vand.u32 2147483647, %v7267
      %v7300 = vand.u32 2147483647, %v7268
      %v7301 = vand.u32 2147483647, %v7269
      %v7302 = vand.u32 2147483647, %v7270
      %v7303 = vand.u32 2147483647, %v7271
      %v7304 = vand.u32 2147483647, %v7272
      %v7305 = vand.u32 2147483647, %v7273
      %v7306 = vand.u32 2147483647, %v7274
      %v7307 = vand.u32 2147483647, %v7275
      %v7308 = vand.u32 2147483647, %v7276
      %v7309 = vand.u32 2147483647, %v7277
      %v7310 = vand.u32 2147483647, %v7278
      %v7311 = vand.u32 2147483647, %v7279
      %v7312 = vand.u32 2147483647, %v7280
      %v7313 = vand.u32 2147483647, %v7281
      %v7314 = vand.u32 2147483647, %v7282
      %v7315 = vand.u32 2147483647, %v7283
      %v7316 = vand.u32 2147483647, %v7284
      %v7317 = vand.u32 2147483647, %v7285
      %v7318 = vand.u32 2147483647, %v7286
      %v7319 = vand.u32 2147483647, %v7287
      %v7320 = vand.u32 2147483647, %v7288
      %v7321 = vand.u32 2147483647, %v7289
      %v7322 = vand.u32 2147483647, %v7290
      %v7323 = vmul.f32 %v7291, 0.3275911
      %v7324 = vmul.f32 %v7292, 0.3275911
      %v7325 = vmul.f32 %v7293, 0.3275911
      %v7326 = vmul.f32 %v7294, 0.3275911
      %v7327 = vmul.f32 %v7295, 0.3275911
      %v7328 = vmul.f32 %v7296, 0.3275911
      %v7329 = vmul.f32 %v7297, 0.3275911
      %v7330 = vmul.f32 %v7298, 0.3275911
      %v7331 = vmul.f32 %v7299, 0.3275911
      %v7332 = vmul.f32 %v7300, 0.3275911
      %v7333 = vmul.f32 %v7301, 0.3275911
      %v7334 = vmul.f32 %v7302, 0.3275911
      %v7335 = vmul.f32 %v7303, 0.3275911
      %v7336 = vmul.f32 %v7304, 0.3275911
      %v7337 = vmul.f32 %v7305, 0.3275911
      %v7338 = vmul.f32 %v7306, 0.3275911
      %v7339 = vmul.f32 %v7307, 0.3275911
      %v7340 = vmul.f32 %v7308, 0.3275911
      %v7341 = vmul.f32 %v7309, 0.3275911
      %v7342 = vmul.f32 %v7310, 0.3275911
      %v7343 = vmul.f32 %v7311, 0.3275911
      %v7344 = vmul.f32 %v7312, 0.3275911
      %v7345 = vmul.f32 %v7313, 0.3275911
      %v7346 = vmul.f32 %v7314, 0.3275911
      %v7347 = vmul.f32 %v7315, 0.3275911
      %v7348 = vmul.f32 %v7316, 0.3275911
      %v7349 = vmul.f32 %v7317, 0.3275911
      %v7350 = vmul.f32 %v7318, 0.3275911
      %v7351 = vmul.f32 %v7319, 0.3275911
      %v7352 = vmul.f32 %v7320, 0.3275911
      %v7353 = vmul.f32 %v7321, 0.3275911
      %v7354 = vmul.f32 %v7322, 0.3275911
      %v7355 = vadd.f32 %v7323, 1.0
      %v7356 = vadd.f32 %v7324, 1.0
      %v7357 = vadd.f32 %v7325, 1.0
      %v7358 = vadd.f32 %v7326, 1.0
      %v7359 = vadd.f32 %v7327, 1.0
      %v7360 = vadd.f32 %v7328, 1.0
      %v7361 = vadd.f32 %v7329, 1.0
      %v7362 = vadd.f32 %v7330, 1.0
      %v7363 = vadd.f32 %v7331, 1.0
      %v7364 = vadd.f32 %v7332, 1.0
      %v7365 = vadd.f32 %v7333, 1.0
      %v7366 = vadd.f32 %v7334, 1.0
      %v7367 = vadd.f32 %v7335, 1.0
      %v7368 = vadd.f32 %v7336, 1.0
      %v7369 = vadd.f32 %v7337, 1.0
      %v7370 = vadd.f32 %v7338, 1.0
      %v7371 = vadd.f32 %v7339, 1.0
      %v7372 = vadd.f32 %v7340, 1.0
      %v7373 = vadd.f32 %v7341, 1.0
      %v7374 = vadd.f32 %v7342, 1.0
      %v7375 = vadd.f32 %v7343, 1.0
      %v7376 = vadd.f32 %v7344, 1.0
      %v7377 = vadd.f32 %v7345, 1.0
      %v7378 = vadd.f32 %v7346, 1.0
      %v7379 = vadd.f32 %v7347, 1.0
      %v7380 = vadd.f32 %v7348, 1.0
      %v7381 = vadd.f32 %v7349, 1.0
      %v7382 = vadd.f32 %v7350, 1.0
      %v7383 = vadd.f32 %v7351, 1.0
      %v7384 = vadd.f32 %v7352, 1.0
      %v7385 = vadd.f32 %v7353, 1.0
      %v7386 = vadd.f32 %v7354, 1.0
      %v7387 = vrcp.pop %v7355
      %v7388 = vrcp.pop %v7356
      %v7389 = vrcp.pop %v7357
      %v7390 = vrcp.pop %v7358
      %v7391 = vrcp.pop %v7359
      %v7392 = vrcp.pop %v7360
      %v7393 = vrcp.pop %v7361
      %v7394 = vrcp.pop %v7362
      %v7395 = vrcp.pop %v7363
      %v7396 = vrcp.pop %v7364
      %v7397 = vrcp.pop %v7365
      %v7398 = vrcp.pop %v7366
      %v7399 = vrcp.pop %v7367
      %v7400 = vrcp.pop %v7368
      %v7401 = vrcp.pop %v7369
      %v7402 = vrcp.pop %v7370
      %v7403 = vrcp.pop %v7371
      %v7404 = vrcp.pop %v7372
      %v7405 = vrcp.pop %v7373
      %v7406 = vrcp.pop %v7374
      %v7407 = vrcp.pop %v7375
      %v7408 = vrcp.pop %v7376
      %v7409 = vrcp.pop %v7377
      %v7410 = vrcp.pop %v7378
      %v7411 = vrcp.pop %v7379
      %v7412 = vrcp.pop %v7380
      %v7413 = vrcp.pop %v7381
      %v7414 = vrcp.pop %v7382
      %v7415 = vrcp.pop %v7383
      %v7416 = vrcp.pop %v7384
      %v7417 = vrcp.pop %v7385
      %v7418 = vrcp.pop %v7386
      %v7419 = vmul.f32 %v7387, 1.0614054
      %v7420 = vmul.f32 %v7388, 1.0614054
      %v7421 = vmul.f32 %v7389, 1.0614054
      %v7422 = vmul.f32 %v7390, 1.0614054
      %v7423 = vmul.f32 %v7391, 1.0614054
      %v7424 = vmul.f32 %v7392, 1.0614054
      %v7425 = vmul.f32 %v7393, 1.0614054
      %v7426 = vmul.f32 %v7394, 1.0614054
      %v7427 = vmul.f32 %v7395, 1.0614054
      %v7428 = vmul.f32 %v7396, 1.0614054
      %v7429 = vmul.f32 %v7397, 1.0614054
      %v7430 = vmul.f32 %v7398, 1.0614054
      %v7431 = vmul.f32 %v7399, 1.0614054
      %v7432 = vmul.f32 %v7400, 1.0614054
      %v7433 = vmul.f32 %v7401, 1.0614054
      %v7434 = vmul.f32 %v7402, 1.0614054
      %v7435 = vmul.f32 %v7403, 1.0614054
      %v7436 = vmul.f32 %v7404, 1.0614054
      %v7437 = vmul.f32 %v7405, 1.0614054
      %v7438 = vmul.f32 %v7406, 1.0614054
      %v7439 = vmul.f32 %v7407, 1.0614054
      %v7440 = vmul.f32 %v7408, 1.0614054
      %v7441 = vmul.f32 %v7409, 1.0614054
      %v7442 = vmul.f32 %v7410, 1.0614054
      %v7443 = vmul.f32 %v7411, 1.0614054
      %v7444 = vmul.f32 %v7412, 1.0614054
      %v7445 = vmul.f32 %v7413, 1.0614054
      %v7446 = vmul.f32 %v7414, 1.0614054
      %v7447 = vmul.f32 %v7415, 1.0614054
      %v7448 = vmul.f32 %v7416, 1.0614054
      %v7449 = vmul.f32 %v7417, 1.0614054
      %v7450 = vmul.f32 %v7418, 1.0614054
      %v7451 = vadd.f32 %v7419, -1.4531521
      %v7452 = vadd.f32 %v7420, -1.4531521
      %v7453 = vadd.f32 %v7421, -1.4531521
      %v7454 = vadd.f32 %v7422, -1.4531521
      %v7455 = vadd.f32 %v7423, -1.4531521
      %v7456 = vadd.f32 %v7424, -1.4531521
      %v7457 = vadd.f32 %v7425, -1.4531521
      %v7458 = vadd.f32 %v7426, -1.4531521
      %v7459 = vadd.f32 %v7427, -1.4531521
      %v7460 = vadd.f32 %v7428, -1.4531521
      %v7461 = vadd.f32 %v7429, -1.4531521
      %v7462 = vadd.f32 %v7430, -1.4531521
      %v7463 = vadd.f32 %v7431, -1.4531521
      %v7464 = vadd.f32 %v7432, -1.4531521
      %v7465 = vadd.f32 %v7433, -1.4531521
      %v7466 = vadd.f32 %v7434, -1.4531521
      %v7467 = vadd.f32 %v7435, -1.4531521
      %v7468 = vadd.f32 %v7436, -1.4531521
      %v7469 = vadd.f32 %v7437, -1.4531521
      %v7470 = vadd.f32 %v7438, -1.4531521
      %v7471 = vadd.f32 %v7439, -1.4531521
      %v7472 = vadd.f32 %v7440, -1.4531521
      %v7473 = vadd.f32 %v7441, -1.4531521
      %v7474 = vadd.f32 %v7442, -1.4531521
      %v7475 = vadd.f32 %v7443, -1.4531521
      %v7476 = vadd.f32 %v7444, -1.4531521
      %v7477 = vadd.f32 %v7445, -1.4531521
      %v7478 = vadd.f32 %v7446, -1.4531521
      %v7479 = vadd.f32 %v7447, -1.4531521
      %v7480 = vadd.f32 %v7448, -1.4531521
      %v7481 = vadd.f32 %v7449, -1.4531521
      %v7482 = vadd.f32 %v7450, -1.4531521
      %v7483 = vmul.f32 %v7387, %v7451
      %v7484 = vmul.f32 %v7388, %v7452
      %v7485 = vmul.f32 %v7389, %v7453
      %v7486 = vmul.f32 %v7390, %v7454
      %v7487 = vmul.f32 %v7391, %v7455
      %v7488 = vmul.f32 %v7392, %v7456
      %v7489 = vmul.f32 %v7393, %v7457
      %v7490 = vmul.f32 %v7394, %v7458
      %v7491 = vmul.f32 %v7395, %v7459
      %v7492 = vmul.f32 %v7396, %v7460
      %v7493 = vmul.f32 %v7397, %v7461
      %v7494 = vmul.f32 %v7398, %v7462
      %v7495 = vmul.f32 %v7399, %v7463
      %v7496 = vmul.f32 %v7400, %v7464
      %v7497 = vmul.f32 %v7401, %v7465
      %v7498 = vmul.f32 %v7402, %v7466
      %v7499 = vmul.f32 %v7403, %v7467
      %v7500 = vmul.f32 %v7404, %v7468
      %v7501 = vmul.f32 %v7405, %v7469
      %v7502 = vmul.f32 %v7406, %v7470
      %v7503 = vmul.f32 %v7407, %v7471
      %v7504 = vmul.f32 %v7408, %v7472
      %v7505 = vmul.f32 %v7409, %v7473
      %v7506 = vmul.f32 %v7410, %v7474
      %v7507 = vmul.f32 %v7411, %v7475
      %v7508 = vmul.f32 %v7412, %v7476
      %v7509 = vmul.f32 %v7413, %v7477
      %v7510 = vmul.f32 %v7414, %v7478
      %v7511 = vmul.f32 %v7415, %v7479
      %v7512 = vmul.f32 %v7416, %v7480
      %v7513 = vmul.f32 %v7417, %v7481
      %v7514 = vmul.f32 %v7418, %v7482
      %v7515 = vadd.f32 %v7483, 1.4214138
      %v7516 = vadd.f32 %v7484, 1.4214138
      %v7517 = vadd.f32 %v7485, 1.4214138
      %v7518 = vadd.f32 %v7486, 1.4214138
      %v7519 = vadd.f32 %v7487, 1.4214138
      %v7520 = vadd.f32 %v7488, 1.4214138
      %v7521 = vadd.f32 %v7489, 1.4214138
      %v7522 = vadd.f32 %v7490, 1.4214138
      %v7523 = vadd.f32 %v7491, 1.4214138
      %v7524 = vadd.f32 %v7492, 1.4214138
      %v7525 = vadd.f32 %v7493, 1.4214138
      %v7526 = vadd.f32 %v7494, 1.4214138
      %v7527 = vadd.f32 %v7495, 1.4214138
      %v7528 = vadd.f32 %v7496, 1.4214138
      %v7529 = vadd.f32 %v7497, 1.4214138
      %v7530 = vadd.f32 %v7498, 1.4214138
      %v7531 = vadd.f32 %v7499, 1.4214138
      %v7532 = vadd.f32 %v7500, 1.4214138
      %v7533 = vadd.f32 %v7501, 1.4214138
      %v7534 = vadd.f32 %v7502, 1.4214138
      %v7535 = vadd.f32 %v7503, 1.4214138
      %v7536 = vadd.f32 %v7504, 1.4214138
      %v7537 = vadd.f32 %v7505, 1.4214138
      %v7538 = vadd.f32 %v7506, 1.4214138
      %v7539 = vadd.f32 %v7507, 1.4214138
      %v7540 = vadd.f32 %v7508, 1.4214138
      %v7541 = vadd.f32 %v7509, 1.4214138
      %v7542 = vadd.f32 %v7510, 1.4214138
      %v7543 = vadd.f32 %v7511, 1.4214138
      %v7544 = vadd.f32 %v7512, 1.4214138
      %v7545 = vadd.f32 %v7513, 1.4214138
      %v7546 = vadd.f32 %v7514, 1.4214138
      %v7547 = vmul.f32 %v7387, %v7515
      %v7548 = vmul.f32 %v7388, %v7516
      %v7549 = vmul.f32 %v7389, %v7517
      %v7550 = vmul.f32 %v7390, %v7518
      %v7551 = vmul.f32 %v7391, %v7519
      %v7552 = vmul.f32 %v7392, %v7520
      %v7553 = vmul.f32 %v7393, %v7521
      %v7554 = vmul.f32 %v7394, %v7522
      %v7555 = vmul.f32 %v7395, %v7523
      %v7556 = vmul.f32 %v7396, %v7524
      %v7557 = vmul.f32 %v7397, %v7525
      %v7558 = vmul.f32 %v7398, %v7526
      %v7559 = vmul.f32 %v7399, %v7527
      %v7560 = vmul.f32 %v7400, %v7528
      %v7561 = vmul.f32 %v7401, %v7529
      %v7562 = vmul.f32 %v7402, %v7530
      %v7563 = vmul.f32 %v7403, %v7531
      %v7564 = vmul.f32 %v7404, %v7532
      %v7565 = vmul.f32 %v7405, %v7533
      %v7566 = vmul.f32 %v7406, %v7534
      %v7567 = vmul.f32 %v7407, %v7535
      %v7568 = vmul.f32 %v7408, %v7536
      %v7569 = vmul.f32 %v7409, %v7537
      %v7570 = vmul.f32 %v7410, %v7538
      %v7571 = vmul.f32 %v7411, %v7539
      %v7572 = vmul.f32 %v7412, %v7540
      %v7573 = vmul.f32 %v7413, %v7541
      %v7574 = vmul.f32 %v7414, %v7542
      %v7575 = vmul.f32 %v7415, %v7543
      %v7576 = vmul.f32 %v7416, %v7544
      %v7577 = vmul.f32 %v7417, %v7545
      %v7578 = vmul.f32 %v7418, %v7546
      %v7579 = vadd.f32 %v7547, -0.28449672
      %v7580 = vadd.f32 %v7548, -0.28449672
      %v7581 = vadd.f32 %v7549, -0.28449672
      %v7582 = vadd.f32 %v7550, -0.28449672
      %v7583 = vadd.f32 %v7551, -0.28449672
      %v7584 = vadd.f32 %v7552, -0.28449672
      %v7585 = vadd.f32 %v7553, -0.28449672
      %v7586 = vadd.f32 %v7554, -0.28449672
      %v7587 = vadd.f32 %v7555, -0.28449672
      %v7588 = vadd.f32 %v7556, -0.28449672
      %v7589 = vadd.f32 %v7557, -0.28449672
      %v7590 = vadd.f32 %v7558, -0.28449672
      %v7591 = vadd.f32 %v7559, -0.28449672
      %v7592 = vadd.f32 %v7560, -0.28449672
      %v7593 = vadd.f32 %v7561, -0.28449672
      %v7594 = vadd.f32 %v7562, -0.28449672
      %v7595 = vadd.f32 %v7563, -0.28449672
      %v7596 = vadd.f32 %v7564, -0.28449672
      %v7597 = vadd.f32 %v7565, -0.28449672
      %v7598 = vadd.f32 %v7566, -0.28449672
      %v7599 = vadd.f32 %v7567, -0.28449672
      %v7600 = vadd.f32 %v7568, -0.28449672
      %v7601 = vadd.f32 %v7569, -0.28449672
      %v7602 = vadd.f32 %v7570, -0.28449672
      %v7603 = vadd.f32 %v7571, -0.28449672
      %v7604 = vadd.f32 %v7572, -0.28449672
      %v7605 = vadd.f32 %v7573, -0.28449672
      %v7606 = vadd.f32 %v7574, -0.28449672
      %v7607 = vadd.f32 %v7575, -0.28449672
      %v7608 = vadd.f32 %v7576, -0.28449672
      %v7609 = vadd.f32 %v7577, -0.28449672
      %v7610 = vadd.f32 %v7578, -0.28449672
      %v7611 = vmul.f32 %v7387, %v7579
      %v7612 = vmul.f32 %v7388, %v7580
      %v7613 = vmul.f32 %v7389, %v7581
      %v7614 = vmul.f32 %v7390, %v7582
      %v7615 = vmul.f32 %v7391, %v7583
      %v7616 = vmul.f32 %v7392, %v7584
      %v7617 = vmul.f32 %v7393, %v7585
      %v7618 = vmul.f32 %v7394, %v7586
      %v7619 = vmul.f32 %v7395, %v7587
      %v7620 = vmul.f32 %v7396, %v7588
      %v7621 = vmul.f32 %v7397, %v7589
      %v7622 = vmul.f32 %v7398, %v7590
      %v7623 = vmul.f32 %v7399, %v7591
      %v7624 = vmul.f32 %v7400, %v7592
      %v7625 = vmul.f32 %v7401, %v7593
      %v7626 = vmul.f32 %v7402, %v7594
      %v7627 = vmul.f32 %v7403, %v7595
      %v7628 = vmul.f32 %v7404, %v7596
      %v7629 = vmul.f32 %v7405, %v7597
      %v7630 = vmul.f32 %v7406, %v7598
      %v7631 = vmul.f32 %v7407, %v7599
      %v7632 = vmul.f32 %v7408, %v7600
      %v7633 = vmul.f32 %v7409, %v7601
      %v7634 = vmul.f32 %v7410, %v7602
      %v7635 = vmul.f32 %v7411, %v7603
      %v7636 = vmul.f32 %v7412, %v7604
      %v7637 = vmul.f32 %v7413, %v7605
      %v7638 = vmul.f32 %v7414, %v7606
      %v7639 = vmul.f32 %v7415, %v7607
      %v7640 = vmul.f32 %v7416, %v7608
      %v7641 = vmul.f32 %v7417, %v7609
      %v7642 = vmul.f32 %v7418, %v7610
      %v7643 = vadd.f32 %v7611, 0.2548296
      %v7644 = vadd.f32 %v7612, 0.2548296
      %v7645 = vadd.f32 %v7613, 0.2548296
      %v7646 = vadd.f32 %v7614, 0.2548296
      %v7647 = vadd.f32 %v7615, 0.2548296
      %v7648 = vadd.f32 %v7616, 0.2548296
      %v7649 = vadd.f32 %v7617, 0.2548296
      %v7650 = vadd.f32 %v7618, 0.2548296
      %v7651 = vadd.f32 %v7619, 0.2548296
      %v7652 = vadd.f32 %v7620, 0.2548296
      %v7653 = vadd.f32 %v7621, 0.2548296
      %v7654 = vadd.f32 %v7622, 0.2548296
      %v7655 = vadd.f32 %v7623, 0.2548296
      %v7656 = vadd.f32 %v7624, 0.2548296
      %v7657 = vadd.f32 %v7625, 0.2548296
      %v7658 = vadd.f32 %v7626, 0.2548296
      %v7659 = vadd.f32 %v7627, 0.2548296
      %v7660 = vadd.f32 %v7628, 0.2548296
      %v7661 = vadd.f32 %v7629, 0.2548296
      %v7662 = vadd.f32 %v7630, 0.2548296
      %v7663 = vadd.f32 %v7631, 0.2548296
      %v7664 = vadd.f32 %v7632, 0.2548296
      %v7665 = vadd.f32 %v7633, 0.2548296
      %v7666 = vadd.f32 %v7634, 0.2548296
      %v7667 = vadd.f32 %v7635, 0.2548296
      %v7668 = vadd.f32 %v7636, 0.2548296
      %v7669 = vadd.f32 %v7637, 0.2548296
      %v7670 = vadd.f32 %v7638, 0.2548296
      %v7671 = vadd.f32 %v7639, 0.2548296
      %v7672 = vadd.f32 %v7640, 0.2548296
      %v7673 = vadd.f32 %v7641, 0.2548296
      %v7674 = vadd.f32 %v7642, 0.2548296
      %v7675 = vmul.f32 %v7387, %v7643
      %v7676 = vmul.f32 %v7388, %v7644
      %v7677 = vmul.f32 %v7389, %v7645
      %v7678 = vmul.f32 %v7390, %v7646
      %v7679 = vmul.f32 %v7391, %v7647
      %v7680 = vmul.f32 %v7392, %v7648
      %v7681 = vmul.f32 %v7393, %v7649
      %v7682 = vmul.f32 %v7394, %v7650
      %v7683 = vmul.f32 %v7395, %v7651
      %v7684 = vmul.f32 %v7396, %v7652
      %v7685 = vmul.f32 %v7397, %v7653
      %v7686 = vmul.f32 %v7398, %v7654
      %v7687 = vmul.f32 %v7399, %v7655
      %v7688 = vmul.f32 %v7400, %v7656
      %v7689 = vmul.f32 %v7401, %v7657
      %v7690 = vmul.f32 %v7402, %v7658
      %v7691 = vmul.f32 %v7403, %v7659
      %v7692 = vmul.f32 %v7404, %v7660
      %v7693 = vmul.f32 %v7405, %v7661
      %v7694 = vmul.f32 %v7406, %v7662
      %v7695 = vmul.f32 %v7407, %v7663
      %v7696 = vmul.f32 %v7408, %v7664
      %v7697 = vmul.f32 %v7409, %v7665
      %v7698 = vmul.f32 %v7410, %v7666
      %v7699 = vmul.f32 %v7411, %v7667
      %v7700 = vmul.f32 %v7412, %v7668
      %v7701 = vmul.f32 %v7413, %v7669
      %v7702 = vmul.f32 %v7414, %v7670
      %v7703 = vmul.f32 %v7415, %v7671
      %v7704 = vmul.f32 %v7416, %v7672
      %v7705 = vmul.f32 %v7417, %v7673
      %v7706 = vmul.f32 %v7418, %v7674
      %v7707 = vsub.f32 0.0, %v7291
      %v7708 = vsub.f32 0.0, %v7292
      %v7709 = vsub.f32 0.0, %v7293
      %v7710 = vsub.f32 0.0, %v7294
      %v7711 = vsub.f32 0.0, %v7295
      %v7712 = vsub.f32 0.0, %v7296
      %v7713 = vsub.f32 0.0, %v7297
      %v7714 = vsub.f32 0.0, %v7298
      %v7715 = vsub.f32 0.0, %v7299
      %v7716 = vsub.f32 0.0, %v7300
      %v7717 = vsub.f32 0.0, %v7301
      %v7718 = vsub.f32 0.0, %v7302
      %v7719 = vsub.f32 0.0, %v7303
      %v7720 = vsub.f32 0.0, %v7304
      %v7721 = vsub.f32 0.0, %v7305
      %v7722 = vsub.f32 0.0, %v7306
      %v7723 = vsub.f32 0.0, %v7307
      %v7724 = vsub.f32 0.0, %v7308
      %v7725 = vsub.f32 0.0, %v7309
      %v7726 = vsub.f32 0.0, %v7310
      %v7727 = vsub.f32 0.0, %v7311
      %v7728 = vsub.f32 0.0, %v7312
      %v7729 = vsub.f32 0.0, %v7313
      %v7730 = vsub.f32 0.0, %v7314
      %v7731 = vsub.f32 0.0, %v7315
      %v7732 = vsub.f32 0.0, %v7316
      %v7733 = vsub.f32 0.0, %v7317
      %v7734 = vsub.f32 0.0, %v7318
      %v7735 = vsub.f32 0.0, %v7319
      %v7736 = vsub.f32 0.0, %v7320
      %v7737 = vsub.f32 0.0, %v7321
      %v7738 = vsub.f32 0.0, %v7322
      %v7739 = vmul.f32 %v7707, %v7291
      %v7740 = vmul.f32 %v7708, %v7292
      %v7741 = vmul.f32 %v7709, %v7293
      %v7742 = vmul.f32 %v7710, %v7294
      %v7743 = vmul.f32 %v7711, %v7295
      %v7744 = vmul.f32 %v7712, %v7296
      %v7745 = vmul.f32 %v7713, %v7297
      %v7746 = vmul.f32 %v7714, %v7298
      %v7747 = vmul.f32 %v7715, %v7299
      %v7748 = vmul.f32 %v7716, %v7300
      %v7749 = vmul.f32 %v7717, %v7301
      %v7750 = vmul.f32 %v7718, %v7302
      %v7751 = vmul.f32 %v7719, %v7303
      %v7752 = vmul.f32 %v7720, %v7304
      %v7753 = vmul.f32 %v7721, %v7305
      %v7754 = vmul.f32 %v7722, %v7306
      %v7755 = vmul.f32 %v7723, %v7307
      %v7756 = vmul.f32 %v7724, %v7308
      %v7757 = vmul.f32 %v7725, %v7309
      %v7758 = vmul.f32 %v7726, %v7310
      %v7759 = vmul.f32 %v7727, %v7311
      %v7760 = vmul.f32 %v7728, %v7312
      %v7761 = vmul.f32 %v7729, %v7313
      %v7762 = vmul.f32 %v7730, %v7314
      %v7763 = vmul.f32 %v7731, %v7315
      %v7764 = vmul.f32 %v7732, %v7316
      %v7765 = vmul.f32 %v7733, %v7317
      %v7766 = vmul.f32 %v7734, %v7318
      %v7767 = vmul.f32 %v7735, %v7319
      %v7768 = vmul.f32 %v7736, %v7320
      %v7769 = vmul.f32 %v7737, %v7321
      %v7770 = vmul.f32 %v7738, %v7322
      %v7771 = vmul.f32 %v7739, 1.442695
      %v7772 = vpow.pop %v7771
      %v7773 = vmul.f32 %v7740, 1.442695
      %v7774 = vpow.pop %v7773
      %v7775 = vmul.f32 %v7741, 1.442695
      %v7776 = vpow.pop %v7775
      %v7777 = vmul.f32 %v7742, 1.442695
      %v7778 = vpow.pop %v7777
      %v7779 = vmul.f32 %v7743, 1.442695
      %v7780 = vpow.pop %v7779
      %v7781 = vmul.f32 %v7744, 1.442695
      %v7782 = vpow.pop %v7781
      %v7783 = vmul.f32 %v7745, 1.442695
      %v7784 = vpow.pop %v7783
      %v7785 = vmul.f32 %v7746, 1.442695
      %v7786 = vpow.pop %v7785
      %v7787 = vmul.f32 %v7747, 1.442695
      %v7788 = vpow.pop %v7787
      %v7789 = vmul.f32 %v7748, 1.442695
      %v7790 = vpow.pop %v7789
      %v7791 = vmul.f32 %v7749, 1.442695
      %v7792 = vpow.pop %v7791
      %v7793 = vmul.f32 %v7750, 1.442695
      %v7794 = vpow.pop %v7793
      %v7795 = vmul.f32 %v7751, 1.442695
      %v7796 = vpow.pop %v7795
      %v7797 = vmul.f32 %v7752, 1.442695
      %v7798 = vpow.pop %v7797
      %v7799 = vmul.f32 %v7753, 1.442695
      %v7800 = vpow.pop %v7799
      %v7801 = vmul.f32 %v7754, 1.442695
      %v7802 = vpow.pop %v7801
      %v7803 = vmul.f32 %v7755, 1.442695
      %v7804 = vpow.pop %v7803
      %v7805 = vmul.f32 %v7756, 1.442695
      %v7806 = vpow.pop %v7805
      %v7807 = vmul.f32 %v7757, 1.442695
      %v7808 = vpow.pop %v7807
      %v7809 = vmul.f32 %v7758, 1.442695
      %v7810 = vpow.pop %v7809
      %v7811 = vmul.f32 %v7759, 1.442695
      %v7812 = vpow.pop %v7811
      %v7813 = vmul.f32 %v7760, 1.442695
      %v7814 = vpow.pop %v7813
      %v7815 = vmul.f32 %v7761, 1.442695
      %v7816 = vpow.pop %v7815
      %v7817 = vmul.f32 %v7762, 1.442695
      %v7818 = vpow.pop %v7817
      %v7819 = vmul.f32 %v7763, 1.442695
      %v7820 = vpow.pop %v7819
      %v7821 = vmul.f32 %v7764, 1.442695
      %v7822 = vpow.pop %v7821
      %v7823 = vmul.f32 %v7765, 1.442695
      %v7824 = vpow.pop %v7823
      %v7825 = vmul.f32 %v7766, 1.442695
      %v7826 = vpow.pop %v7825
      %v7827 = vmul.f32 %v7767, 1.442695
      %v7828 = vpow.pop %v7827
      %v7829 = vmul.f32 %v7768, 1.442695
      %v7830 = vpow.pop %v7829
      %v7831 = vmul.f32 %v7769, 1.442695
      %v7832 = vpow.pop %v7831
      %v7833 = vmul.f32 %v7770, 1.442695
      %v7834 = vpow.pop %v7833
      %v7835 = vmul.f32 %v7675, %v7772
      %v7836 = vmul.f32 %v7676, %v7774
      %v7837 = vmul.f32 %v7677, %v7776
      %v7838 = vmul.f32 %v7678, %v7778
      %v7839 = vmul.f32 %v7679, %v7780
      %v7840 = vmul.f32 %v7680, %v7782
      %v7841 = vmul.f32 %v7681, %v7784
      %v7842 = vmul.f32 %v7682, %v7786
      %v7843 = vmul.f32 %v7683, %v7788
      %v7844 = vmul.f32 %v7684, %v7790
      %v7845 = vmul.f32 %v7685, %v7792
      %v7846 = vmul.f32 %v7686, %v7794
      %v7847 = vmul.f32 %v7687, %v7796
      %v7848 = vmul.f32 %v7688, %v7798
      %v7849 = vmul.f32 %v7689, %v7800
      %v7850 = vmul.f32 %v7690, %v7802
      %v7851 = vmul.f32 %v7691, %v7804
      %v7852 = vmul.f32 %v7692, %v7806
      %v7853 = vmul.f32 %v7693, %v7808
      %v7854 = vmul.f32 %v7694, %v7810
      %v7855 = vmul.f32 %v7695, %v7812
      %v7856 = vmul.f32 %v7696, %v7814
      %v7857 = vmul.f32 %v7697, %v7816
      %v7858 = vmul.f32 %v7698, %v7818
      %v7859 = vmul.f32 %v7699, %v7820
      %v7860 = vmul.f32 %v7700, %v7822
      %v7861 = vmul.f32 %v7701, %v7824
      %v7862 = vmul.f32 %v7702, %v7826
      %v7863 = vmul.f32 %v7703, %v7828
      %v7864 = vmul.f32 %v7704, %v7830
      %v7865 = vmul.f32 %v7705, %v7832
      %v7866 = vmul.f32 %v7706, %v7834
      %v7867 = vsub.f32 1.0, %v7835
      %v7868 = vsub.f32 1.0, %v7836
      %v7869 = vsub.f32 1.0, %v7837
      %v7870 = vsub.f32 1.0, %v7838
      %v7871 = vsub.f32 1.0, %v7839
      %v7872 = vsub.f32 1.0, %v7840
      %v7873 = vsub.f32 1.0, %v7841
      %v7874 = vsub.f32 1.0, %v7842
      %v7875 = vsub.f32 1.0, %v7843
      %v7876 = vsub.f32 1.0, %v7844
      %v7877 = vsub.f32 1.0, %v7845
      %v7878 = vsub.f32 1.0, %v7846
      %v7879 = vsub.f32 1.0, %v7847
      %v7880 = vsub.f32 1.0, %v7848
      %v7881 = vsub.f32 1.0, %v7849
      %v7882 = vsub.f32 1.0, %v7850
      %v7883 = vsub.f32 1.0, %v7851
      %v7884 = vsub.f32 1.0, %v7852
      %v7885 = vsub.f32 1.0, %v7853
      %v7886 = vsub.f32 1.0, %v7854
      %v7887 = vsub.f32 1.0, %v7855
      %v7888 = vsub.f32 1.0, %v7856
      %v7889 = vsub.f32 1.0, %v7857
      %v7890 = vsub.f32 1.0, %v7858
      %v7891 = vsub.f32 1.0, %v7859
      %v7892 = vsub.f32 1.0, %v7860
      %v7893 = vsub.f32 1.0, %v7861
      %v7894 = vsub.f32 1.0, %v7862
      %v7895 = vsub.f32 1.0, %v7863
      %v7896 = vsub.f32 1.0, %v7864
      %v7897 = vsub.f32 1.0, %v7865
      %v7898 = vsub.f32 1.0, %v7866
      %vm7899 = vcmp.ge.f32.partialorder %v7259, 0.0
      %vm7900 = vcmp.ge.f32.partialorder %v7260, 0.0
      %vm7901 = vcmp.ge.f32.partialorder %v7261, 0.0
      %vm7902 = vcmp.ge.f32.partialorder %v7262, 0.0
      %vm7903 = vcmp.ge.f32.partialorder %v7263, 0.0
      %vm7904 = vcmp.ge.f32.partialorder %v7264, 0.0
      %vm7905 = vcmp.ge.f32.partialorder %v7265, 0.0
      %vm7906 = vcmp.ge.f32.partialorder %v7266, 0.0
      %vm7907 = vcmp.ge.f32.partialorder %v7267, 0.0
      %vm7908 = vcmp.ge.f32.partialorder %v7268, 0.0
      %vm7909 = vcmp.ge.f32.partialorder %v7269, 0.0
      %vm7910 = vcmp.ge.f32.partialorder %v7270, 0.0
      %vm7911 = vcmp.ge.f32.partialorder %v7271, 0.0
      %vm7912 = vcmp.ge.f32.partialorder %v7272, 0.0
      %vm7913 = vcmp.ge.f32.partialorder %v7273, 0.0
      %vm7914 = vcmp.ge.f32.partialorder %v7274, 0.0
      %vm7915 = vcmp.ge.f32.partialorder %v7275, 0.0
      %vm7916 = vcmp.ge.f32.partialorder %v7276, 0.0
      %vm7917 = vcmp.ge.f32.partialorder %v7277, 0.0
      %vm7918 = vcmp.ge.f32.partialorder %v7278, 0.0
      %vm7919 = vcmp.ge.f32.partialorder %v7279, 0.0
      %vm7920 = vcmp.ge.f32.partialorder %v7280, 0.0
      %vm7921 = vcmp.ge.f32.partialorder %v7281, 0.0
      %vm7922 = vcmp.ge.f32.partialorder %v7282, 0.0
      %vm7923 = vcmp.ge.f32.partialorder %v7283, 0.0
      %vm7924 = vcmp.ge.f32.partialorder %v7284, 0.0
      %vm7925 = vcmp.ge.f32.partialorder %v7285, 0.0
      %vm7926 = vcmp.ge.f32.partialorder %v7286, 0.0
      %vm7927 = vcmp.ge.f32.partialorder %v7287, 0.0
      %vm7928 = vcmp.ge.f32.partialorder %v7288, 0.0
      %vm7929 = vcmp.ge.f32.partialorder %v7289, 0.0
      %vm7930 = vcmp.ge.f32.partialorder %v7290, 0.0
      %v7931 = vsub.f32 0.0, %v7867
      %v7932 = vsub.f32 0.0, %v7868
      %v7933 = vsub.f32 0.0, %v7869
      %v7934 = vsub.f32 0.0, %v7870
      %v7935 = vsub.f32 0.0, %v7871
      %v7936 = vsub.f32 0.0, %v7872
      %v7937 = vsub.f32 0.0, %v7873
      %v7938 = vsub.f32 0.0, %v7874
      %v7939 = vsub.f32 0.0, %v7875
      %v7940 = vsub.f32 0.0, %v7876
      %v7941 = vsub.f32 0.0, %v7877
      %v7942 = vsub.f32 0.0, %v7878
      %v7943 = vsub.f32 0.0, %v7879
      %v7944 = vsub.f32 0.0, %v7880
      %v7945 = vsub.f32 0.0, %v7881
      %v7946 = vsub.f32 0.0, %v7882
      %v7947 = vsub.f32 0.0, %v7883
      %v7948 = vsub.f32 0.0, %v7884
      %v7949 = vsub.f32 0.0, %v7885
      %v7950 = vsub.f32 0.0, %v7886
      %v7951 = vsub.f32 0.0, %v7887
      %v7952 = vsub.f32 0.0, %v7888
      %v7953 = vsub.f32 0.0, %v7889
      %v7954 = vsub.f32 0.0, %v7890
      %v7955 = vsub.f32 0.0, %v7891
      %v7956 = vsub.f32 0.0, %v7892
      %v7957 = vsub.f32 0.0, %v7893
      %v7958 = vsub.f32 0.0, %v7894
      %v7959 = vsub.f32 0.0, %v7895
      %v7960 = vsub.f32 0.0, %v7896
      %v7961 = vsub.f32 0.0, %v7897
      %v7962 = vsub.f32 0.0, %v7898
      %v7963 = vsel %vm7899, %v7867, %v7931
      %v7964 = vsel %vm7900, %v7868, %v7932
      %v7965 = vsel %vm7901, %v7869, %v7933
      %v7966 = vsel %vm7902, %v7870, %v7934
      %v7967 = vsel %vm7903, %v7871, %v7935
      %v7968 = vsel %vm7904, %v7872, %v7936
      %v7969 = vsel %vm7905, %v7873, %v7937
      %v7970 = vsel %vm7906, %v7874, %v7938
      %v7971 = vsel %vm7907, %v7875, %v7939
      %v7972 = vsel %vm7908, %v7876, %v7940
      %v7973 = vsel %vm7909, %v7877, %v7941
      %v7974 = vsel %vm7910, %v7878, %v7942
      %v7975 = vsel %vm7911, %v7879, %v7943
      %v7976 = vsel %vm7912, %v7880, %v7944
      %v7977 = vsel %vm7913, %v7881, %v7945
      %v7978 = vsel %vm7914, %v7882, %v7946
      %v7979 = vsel %vm7915, %v7883, %v7947
      %v7980 = vsel %vm7916, %v7884, %v7948
      %v7981 = vsel %vm7917, %v7885, %v7949
      %v7982 = vsel %vm7918, %v7886, %v7950
      %v7983 = vsel %vm7919, %v7887, %v7951
      %v7984 = vsel %vm7920, %v7888, %v7952
      %v7985 = vsel %vm7921, %v7889, %v7953
      %v7986 = vsel %vm7922, %v7890, %v7954
      %v7987 = vsel %vm7923, %v7891, %v7955
      %v7988 = vsel %vm7924, %v7892, %v7956
      %v7989 = vsel %vm7925, %v7893, %v7957
      %v7990 = vsel %vm7926, %v7894, %v7958
      %v7991 = vsel %vm7927, %v7895, %v7959
      %v7992 = vsel %vm7928, %v7896, %v7960
      %v7993 = vsel %vm7929, %v7897, %v7961
      %v7994 = vsel %vm7930, %v7898, %v7962
      %v7995 = vmul.f32 %v7180, 0.5
      %v7996 = vmul.f32 %v7182, 0.5
      %v7997 = vmul.f32 %v7185, 0.5
      %v7998 = vmul.f32 %v7187, 0.5
      %v7999 = vmul.f32 %v7190, 0.5
      %v8000 = vmul.f32 %v7192, 0.5
      %v8001 = vmul.f32 %v7195, 0.5
      %v8002 = vmul.f32 %v7197, 0.5
      %v8003 = vmul.f32 %v7200, 0.5
      %v8004 = vmul.f32 %v7202, 0.5
      %v8005 = vmul.f32 %v7205, 0.5
      %v8006 = vmul.f32 %v7207, 0.5
      %v8007 = vmul.f32 %v7210, 0.5
      %v8008 = vmul.f32 %v7212, 0.5
      %v8009 = vmul.f32 %v7215, 0.5
      %v8010 = vmul.f32 %v7217, 0.5
      %v8011 = vmul.f32 %v7220, 0.5
      %v8012 = vmul.f32 %v7222, 0.5
      %v8013 = vmul.f32 %v7225, 0.5
      %v8014 = vmul.f32 %v7227, 0.5
      %v8015 = vmul.f32 %v7230, 0.5
      %v8016 = vmul.f32 %v7232, 0.5
      %v8017 = vmul.f32 %v7235, 0.5
      %v8018 = vmul.f32 %v7237, 0.5
      %v8019 = vmul.f32 %v7240, 0.5
      %v8020 = vmul.f32 %v7242, 0.5
      %v8021 = vmul.f32 %v7245, 0.5
      %v8022 = vmul.f32 %v7247, 0.5
      %v8023 = vmul.f32 %v7250, 0.5
      %v8024 = vmul.f32 %v7252, 0.5
      %v8025 = vmul.f32 %v7255, 0.5
      %v8026 = vmul.f32 %v7257, 0.5
      %v8027 = vadd.f32 %v7963, 1.0
      %v8028 = vadd.f32 %v7964, 1.0
      %v8029 = vadd.f32 %v7965, 1.0
      %v8030 = vadd.f32 %v7966, 1.0
      %v8031 = vadd.f32 %v7967, 1.0
      %v8032 = vadd.f32 %v7968, 1.0
      %v8033 = vadd.f32 %v7969, 1.0
      %v8034 = vadd.f32 %v7970, 1.0
      %v8035 = vadd.f32 %v7971, 1.0
      %v8036 = vadd.f32 %v7972, 1.0
      %v8037 = vadd.f32 %v7973, 1.0
      %v8038 = vadd.f32 %v7974, 1.0
      %v8039 = vadd.f32 %v7975, 1.0
      %v8040 = vadd.f32 %v7976, 1.0
      %v8041 = vadd.f32 %v7977, 1.0
      %v8042 = vadd.f32 %v7978, 1.0
      %v8043 = vadd.f32 %v7979, 1.0
      %v8044 = vadd.f32 %v7980, 1.0
      %v8045 = vadd.f32 %v7981, 1.0
      %v8046 = vadd.f32 %v7982, 1.0
      %v8047 = vadd.f32 %v7983, 1.0
      %v8048 = vadd.f32 %v7984, 1.0
      %v8049 = vadd.f32 %v7985, 1.0
      %v8050 = vadd.f32 %v7986, 1.0
      %v8051 = vadd.f32 %v7987, 1.0
      %v8052 = vadd.f32 %v7988, 1.0
      %v8053 = vadd.f32 %v7989, 1.0
      %v8054 = vadd.f32 %v7990, 1.0
      %v8055 = vadd.f32 %v7991, 1.0
      %v8056 = vadd.f32 %v7992, 1.0
      %v8057 = vadd.f32 %v7993, 1.0
      %v8058 = vadd.f32 %v7994, 1.0
      %v8059 = vmul.f32 %v7995, %v8027
      %v8060 = vmul.f32 %v7996, %v8028
      %v8061 = vmul.f32 %v7997, %v8029
      %v8062 = vmul.f32 %v7998, %v8030
      %v8063 = vmul.f32 %v7999, %v8031
      %v8064 = vmul.f32 %v8000, %v8032
      %v8065 = vmul.f32 %v8001, %v8033
      %v8066 = vmul.f32 %v8002, %v8034
      %v8067 = vmul.f32 %v8003, %v8035
      %v8068 = vmul.f32 %v8004, %v8036
      %v8069 = vmul.f32 %v8005, %v8037
      %v8070 = vmul.f32 %v8006, %v8038
      %v8071 = vmul.f32 %v8007, %v8039
      %v8072 = vmul.f32 %v8008, %v8040
      %v8073 = vmul.f32 %v8009, %v8041
      %v8074 = vmul.f32 %v8010, %v8042
      %v8075 = vmul.f32 %v8011, %v8043
      %v8076 = vmul.f32 %v8012, %v8044
      %v8077 = vmul.f32 %v8013, %v8045
      %v8078 = vmul.f32 %v8014, %v8046
      %v8079 = vmul.f32 %v8015, %v8047
      %v8080 = vmul.f32 %v8016, %v8048
      %v8081 = vmul.f32 %v8017, %v8049
      %v8082 = vmul.f32 %v8018, %v8050
      %v8083 = vmul.f32 %v8019, %v8051
      %v8084 = vmul.f32 %v8020, %v8052
      %v8085 = vmul.f32 %v8021, %v8053
      %v8086 = vmul.f32 %v8022, %v8054
      %v8087 = vmul.f32 %v8023, %v8055
      %v8088 = vmul.f32 %v8024, %v8056
      %v8089 = vmul.f32 %v8025, %v8057
      %v8090 = vmul.f32 %v8026, %v8058
      %v8091 = vpack.c.bf16 %v8060, %v8059
      %v8092 = vpack.c.bf16 %v8062, %v8061
      %v8093 = vpack.c.bf16 %v8064, %v8063
      %v8094 = vpack.c.bf16 %v8066, %v8065
      %v8095 = vpack.c.bf16 %v8068, %v8067
      %v8096 = vpack.c.bf16 %v8070, %v8069
      %v8097 = vpack.c.bf16 %v8072, %v8071
      %v8098 = vpack.c.bf16 %v8074, %v8073
      %v8099 = vpack.c.bf16 %v8076, %v8075
      %v8100 = vpack.c.bf16 %v8078, %v8077
      %v8101 = vpack.c.bf16 %v8080, %v8079
      %v8102 = vpack.c.bf16 %v8082, %v8081
      %v8103 = vpack.c.bf16 %v8084, %v8083
      %v8104 = vpack.c.bf16 %v8086, %v8085
      %v8105 = vpack.c.bf16 %v8088, %v8087
      %v8106 = vpack.c.bf16 %v8090, %v8089
      %v8107 = vld [vmem:[%s13] sm:$0xf]
      %v8108 = vld [vmem:[%s13 + $0x4] sm:$0xf]
      %v8109 = vld [vmem:[%s13 + $0x8] sm:$0xf]
      %v8110 = vld [vmem:[%s13 + $0xc] sm:$0xf]
      %v8111 = vld [vmem:[%s13 + $0x10] sm:$0xf]
      %v8112 = vld [vmem:[%s13 + $0x14] sm:$0xf]
      %v8113 = vld [vmem:[%s13 + $0x18] sm:$0xf]
      %v8114 = vld [vmem:[%s13 + $0x1c] sm:$0xf]
      %v8115 = vld [vmem:[%s13 + $0x20] sm:$0xf]
      %v8116 = vld [vmem:[%s13 + $0x24] sm:$0xf]
      %v8117 = vld [vmem:[%s13 + $0x28] sm:$0xf]
      %v8118 = vld [vmem:[%s13 + $0x2c] sm:$0xf]
      %v8119 = vld [vmem:[%s13 + $0x30] sm:$0xf]
      %v8120 = vld [vmem:[%s13 + $0x34] sm:$0xf]
      %v8121 = vld [vmem:[%s13 + $0x38] sm:$0xf]
      %v8122 = vld [vmem:[%s13 + $0x3c] sm:$0xf]
      %v8123 = vld [vmem:[%s14] sm:$0x1]
      %v8125 = vperm.slane %v8123, 0
      %v8143 = vunpack.c.l.b16 %v8107
      %v8144 = vunpack.c.l.b16 %v8108
      %v8145 = vunpack.c.l.b16 %v8109
      %v8146 = vunpack.c.l.b16 %v8110
      %v8147 = vunpack.c.l.b16 %v8111
      %v8148 = vunpack.c.l.b16 %v8112
      %v8149 = vunpack.c.l.b16 %v8113
      %v8150 = vunpack.c.l.b16 %v8114
      %v8151 = vunpack.c.l.b16 %v8115
      %v8152 = vunpack.c.l.b16 %v8116
      %v8153 = vunpack.c.l.b16 %v8117
      %v8154 = vunpack.c.l.b16 %v8118
      %v8155 = vunpack.c.l.b16 %v8119
      %v8156 = vunpack.c.l.b16 %v8120
      %v8157 = vunpack.c.l.b16 %v8121
      %v8158 = vunpack.c.l.b16 %v8122
      %v8159 = vpack.c.b16 %v8144, %v8143
      %v8160 = vpack.c.b16 %v8146, %v8145
      %v8161 = vpack.c.b16 %v8148, %v8147
      %v8162 = vpack.c.b16 %v8150, %v8149
      %v8163 = vpack.c.b16 %v8152, %v8151
      %v8164 = vpack.c.b16 %v8154, %v8153
      %v8165 = vpack.c.b16 %v8156, %v8155
      %v8166 = vpack.c.b16 %v8158, %v8157
      %8175 = vmatpush.bf16.msra.mxu0 %v8166
      %8176 = vmatpush.bf16.msra.mxu0 %v8165
      %8177 = vmatpush.bf16.msra.mxu0 %v8164
      %8178 = vmatpush.bf16.msra.mxu0 %v8163
      %8179 = vmatpush.bf16.msra.mxu0 %v8162
      %8180 = vmatpush.bf16.msra.mxu0 %v8161
      %8181 = vmatpush.bf16.msra.mxu0 %v8160
      %8182 = vmatpush.bf16.msra.mxu0 %v8159
      %8183 = vmatmul.bf16.gmra.mxu0 %v8091
      %v8184 = vpop.f32.mrf.mxu0
      %v8185 = vadd.f32 %v8125, %v8184
      %v8186 = vpop.f32.mrf.mxu0
      %v8187 = vadd.f32 %v8125, %v8186
      %8188 = vmatmul.bf16.gmra.mxu0 %v8092
      %v8189 = vpop.f32.mrf.mxu0
      %v8190 = vadd.f32 %v8125, %v8189
      %v8191 = vpop.f32.mrf.mxu0
      %v8192 = vadd.f32 %v8125, %v8191
      %8193 = vmatmul.bf16.gmra.mxu0 %v8093
      %v8194 = vpop.f32.mrf.mxu0
      %v8195 = vadd.f32 %v8125, %v8194
      %v8196 = vpop.f32.mrf.mxu0
      %v8197 = vadd.f32 %v8125, %v8196
      %8198 = vmatmul.bf16.gmra.mxu0 %v8094
      %v8199 = vpop.f32.mrf.mxu0
      %v8200 = vadd.f32 %v8125, %v8199
      %v8201 = vpop.f32.mrf.mxu0
      %v8202 = vadd.f32 %v8125, %v8201
      %8203 = vmatmul.bf16.gmra.mxu0 %v8095
      %v8204 = vpop.f32.mrf.mxu0
      %v8205 = vadd.f32 %v8125, %v8204
      %v8206 = vpop.f32.mrf.mxu0
      %v8207 = vadd.f32 %v8125, %v8206
      %8208 = vmatmul.bf16.gmra.mxu0 %v8096
      %v8209 = vpop.f32.mrf.mxu0
      %v8210 = vadd.f32 %v8125, %v8209
      %v8211 = vpop.f32.mrf.mxu0
      %v8212 = vadd.f32 %v8125, %v8211
      %8213 = vmatmul.bf16.gmra.mxu0 %v8097
      %v8214 = vpop.f32.mrf.mxu0
      %v8215 = vadd.f32 %v8125, %v8214
      %v8216 = vpop.f32.mrf.mxu0
      %v8217 = vadd.f32 %v8125, %v8216
      %8218 = vmatmul.bf16.gmra.mxu0 %v8098
      %v8219 = vpop.f32.mrf.mxu0
      %v8220 = vadd.f32 %v8125, %v8219
      %v8221 = vpop.f32.mrf.mxu0
      %v8222 = vadd.f32 %v8125, %v8221
      %8223 = vmatmul.bf16.gmra.mxu0 %v8099
      %v8224 = vpop.f32.mrf.mxu0
      %v8225 = vadd.f32 %v8125, %v8224
      %v8226 = vpop.f32.mrf.mxu0
      %v8227 = vadd.f32 %v8125, %v8226
      %8228 = vmatmul.bf16.gmra.mxu0 %v8100
      %v8229 = vpop.f32.mrf.mxu0
      %v8230 = vadd.f32 %v8125, %v8229
      %v8231 = vpop.f32.mrf.mxu0
      %v8232 = vadd.f32 %v8125, %v8231
      %8233 = vmatmul.bf16.gmra.mxu0 %v8101
      %v8234 = vpop.f32.mrf.mxu0
      %v8235 = vadd.f32 %v8125, %v8234
      %v8236 = vpop.f32.mrf.mxu0
      %v8237 = vadd.f32 %v8125, %v8236
      %8238 = vmatmul.bf16.gmra.mxu0 %v8102
      %v8239 = vpop.f32.mrf.mxu0
      %v8240 = vadd.f32 %v8125, %v8239
      %v8241 = vpop.f32.mrf.mxu0
      %v8242 = vadd.f32 %v8125, %v8241
      %8243 = vmatmul.bf16.gmra.mxu0 %v8103
      %v8244 = vpop.f32.mrf.mxu0
      %v8245 = vadd.f32 %v8125, %v8244
      %v8246 = vpop.f32.mrf.mxu0
      %v8247 = vadd.f32 %v8125, %v8246
      %8248 = vmatmul.bf16.gmra.mxu0 %v8104
      %v8249 = vpop.f32.mrf.mxu0
      %v8250 = vadd.f32 %v8125, %v8249
      %v8251 = vpop.f32.mrf.mxu0
      %v8252 = vadd.f32 %v8125, %v8251
      %8253 = vmatmul.bf16.gmra.mxu0 %v8105
      %v8254 = vpop.f32.mrf.mxu0
      %v8255 = vadd.f32 %v8125, %v8254
      %v8256 = vpop.f32.mrf.mxu0
      %v8257 = vadd.f32 %v8125, %v8256
      %8258 = vmatmul.bf16.gmra.mxu0 %v8106
      %v8259 = vpop.f32.mrf.mxu0
      %v8260 = vadd.f32 %v8125, %v8259
      %v8261 = vpop.f32.mrf.mxu0
      %v8262 = vadd.f32 %v8125, %v8261
      %8263 = vdwg.mxu0
      %v8264 = vadd.f32 %v6278, %v8185
      %v8265 = vadd.f32 %v6279, %v8187
      %v8266 = vadd.f32 %v6280, %v8190
      %v8267 = vadd.f32 %v6281, %v8192
      %v8268 = vadd.f32 %v6282, %v8195
      %v8269 = vadd.f32 %v6283, %v8197
      %v8270 = vadd.f32 %v6284, %v8200
      %v8271 = vadd.f32 %v6285, %v8202
      %v8272 = vadd.f32 %v6286, %v8205
      %v8273 = vadd.f32 %v6287, %v8207
      %v8274 = vadd.f32 %v6288, %v8210
      %v8275 = vadd.f32 %v6289, %v8212
      %v8276 = vadd.f32 %v6290, %v8215
      %v8277 = vadd.f32 %v6291, %v8217
      %v8278 = vadd.f32 %v6292, %v8220
      %v8279 = vadd.f32 %v6293, %v8222
      %v8280 = vadd.f32 %v6294, %v8225
      %v8281 = vadd.f32 %v6295, %v8227
      %v8282 = vadd.f32 %v6296, %v8230
      %v8283 = vadd.f32 %v6297, %v8232
      %v8284 = vadd.f32 %v6298, %v8235
      %v8285 = vadd.f32 %v6299, %v8237
      %v8286 = vadd.f32 %v6300, %v8240
      %v8287 = vadd.f32 %v6301, %v8242
      %v8288 = vadd.f32 %v6302, %v8245
      %v8289 = vadd.f32 %v6303, %v8247
      %v8290 = vadd.f32 %v6304, %v8250
      %v8291 = vadd.f32 %v6305, %v8252
      %v8292 = vadd.f32 %v6306, %v8255
      %v8293 = vadd.f32 %v6307, %v8257
      %v8294 = vadd.f32 %v6308, %v8260
      %v8295 = vadd.f32 %v6309, %v8262
      %8296 = vst.msk [vmem:[%s494] sm:$0xff] %vm530, %v8264
      %8297 = vst.msk [vmem:[%s494 + $0x8] sm:$0xff] %vm530, %v8265
      %8298 = vst.msk [vmem:[%s494 + $0x10] sm:$0xff] %vm530, %v8266
      %8299 = vst.msk [vmem:[%s494 + $0x18] sm:$0xff] %vm530, %v8267
      %8300 = vst.msk [vmem:[%s494 + $0x20] sm:$0xff] %vm530, %v8268
      %8301 = vst.msk [vmem:[%s494 + $0x28] sm:$0xff] %vm530, %v8269
      %8302 = vst.msk [vmem:[%s494 + $0x30] sm:$0xff] %vm530, %v8270
      %8303 = vst.msk [vmem:[%s494 + $0x38] sm:$0xff] %vm530, %v8271
      %8304 = vst.msk [vmem:[%s494 + $0x40] sm:$0xff] %vm530, %v8272
      %8305 = vst.msk [vmem:[%s494 + $0x48] sm:$0xff] %vm530, %v8273
      %8306 = vst.msk [vmem:[%s494 + $0x50] sm:$0xff] %vm530, %v8274
      %8307 = vst.msk [vmem:[%s494 + $0x58] sm:$0xff] %vm530, %v8275
      %8308 = vst.msk [vmem:[%s494 + $0x60] sm:$0xff] %vm530, %v8276
      %8309 = vst.msk [vmem:[%s494 + $0x68] sm:$0xff] %vm530, %v8277
      %8310 = vst.msk [vmem:[%s494 + $0x70] sm:$0xff] %vm530, %v8278
      %8311 = vst.msk [vmem:[%s494 + $0x78] sm:$0xff] %vm530, %v8279
      %8312 = vst.msk [vmem:[%s494 + $0x80] sm:$0xff] %vm530, %v8280
      %8313 = vst.msk [vmem:[%s494 + $0x88] sm:$0xff] %vm530, %v8281
      %8314 = vst.msk [vmem:[%s494 + $0x90] sm:$0xff] %vm530, %v8282
      %8315 = vst.msk [vmem:[%s494 + $0x98] sm:$0xff] %vm530, %v8283
      %8316 = vst.msk [vmem:[%s494 + $0xa0] sm:$0xff] %vm530, %v8284
      %8317 = vst.msk [vmem:[%s494 + $0xa8] sm:$0xff] %vm530, %v8285
      %8318 = vst.msk [vmem:[%s494 + $0xb0] sm:$0xff] %vm530, %v8286
      %8319 = vst.msk [vmem:[%s494 + $0xb8] sm:$0xff] %vm530, %v8287
      %8320 = vst.msk [vmem:[%s494 + $0xc0] sm:$0xff] %vm530, %v8288
      %8321 = vst.msk [vmem:[%s494 + $0xc8] sm:$0xff] %vm530, %v8289
      %8322 = vst.msk [vmem:[%s494 + $0xd0] sm:$0xff] %vm530, %v8290
      %8323 = vst.msk [vmem:[%s494 + $0xd8] sm:$0xff] %vm530, %v8291
      %8324 = vst.msk [vmem:[%s494 + $0xe0] sm:$0xff] %vm530, %v8292
      %8325 = vst.msk [vmem:[%s494 + $0xe8] sm:$0xff] %vm530, %v8293
      %8326 = vst.msk [vmem:[%s494 + $0xf0] sm:$0xff] %vm530, %v8294
      %8327 = vst.msk [vmem:[%s494 + $0xf8] sm:$0xff] %vm530, %v8295
      %p8328 = scmp.lt.s32.totalorder %s26, 1
      %s8329 = scalar_select %p8328, %s26, 1
      %s8330 = smul.addr %s8329, 32
      %s8331 = smul.addr %s8330, 8
      %s8332 = scalar_lea.vmem %s15, %s8331
      // Predicated region
      $region81: #{swin_forward_pallas.1} parent=79 // pred_check
        %p8333 = pneg %p364
      $region82: #{swin_forward_pallas.1} parent=79 // pred_check_branch
        %8335 = sbr.rel (%p8333) target = $region84
      $region83: #{swin_forward_pallas.1} parent=79 // pred_region
        _
      $region84: #{swin_forward_pallas.1} parent=79 // pred_fallthru
        _
    $region80: #{swin_forward_pallas.1} parent=5 // pred_fallthru
      _
    %p8336 = scmp.le.s32.totalorder 2, %s21
    // Predicated region
    $region85: #{swin_forward_pallas.1} parent=5 // pred_check
      %p8337 = pneg %p8336
    $region86: #{swin_forward_pallas.1} parent=5 // pred_check_branch
      %8339 = sbr.rel (%p8337) target = $region88
    $region87: #{swin_forward_pallas.1} parent=5 // pred_region
      %s8340 = ssub.s32 %s21, 2
      // Predicated region
      $region89: #{swin_forward_pallas.1} parent=87 // pred_check
        %p8341 = pneg %p370
      $region90: #{swin_forward_pallas.1} parent=87 // pred_check_branch
        %8343 = sbr.rel (%p8341) target = $region92
      $region91: #{swin_forward_pallas.1} parent=87 // pred_region
        %p8344 = scmp.lt.s32.totalorder %s27, 1
        %s8345 = scalar_select %p8344, %s27, 1
        %s8346 = smul.addr %s8345, 32
        %s8347 = smul.addr %s8346, 8
        %s8348 = scalar_lea.vmem %s15, %s8347
      $region92: #{swin_forward_pallas.1} parent=87 // pred_fallthru
        _
    $region88: #{swin_forward_pallas.1} parent=5 // pred_fallthru
      _
  $region6: #{swin_forward_pallas.1} parent=0 // loop_footer
    %s25 = sadd.s32 1, %s21
  $region7: #{swin_forward_pallas.1} parent=0 // loop_footer_branch
    %20 = sbr.rel target = $region3
  $region8: #{swin_forward_pallas.1} parent=0 // loop_exit
    _

</llo_original>
